<compile_context>
chip_gen: v7x
topology: tpu7x:2x2x1
jax: 0.10.0
libtpu: 0.0.40
codegen_flags: <defaults>
</compile_context>

<pallas_src>
import math

import jax
import jax.numpy as jnp
from jax import lax
from jax.experimental import pallas as pl
from jax.experimental.pallas import tpu as pltpu

# ----------------------------- small synthetic config -----------------------
BATCH        = 2          # batch
SPLIT_NUM    = 4          # split_num  (GRU time dimension)
SEQ_LEN      = 8          # BERT sequence length
VOCAB        = 100
BERT_HIDDEN  = 32         # config.bert_hidden
NUM_HEADS    = 4
HEAD_DIM     = BERT_HIDDEN // NUM_HEADS
INTERMEDIATE = 64
NUM_LAYERS   = 2
MAX_POS      = 32
TYPE_VOCAB   = 2
LSTM_HIDDEN  = 16         # config.lstm_hidden
NUM_CLASSES  = 3          # config.num_classes
LN_EPS       = 1e-12


# ===================== single fused encoder+pooler+GRU+FC kernel =============

def _fused_model_kernel(x_ref, bias_ref, sel_ref, eg_ref, eb_ref,
                        wqkv_ref, bqkv_ref, wo_ref, bo_ref,
                        ln1g_ref, ln1b_ref, wi_ref, bi_ref,
                        wf_ref, bf_ref, ln2g_ref, ln2b_ref,
                        poolw_ref, poolb_ref,
                        gwih_ref, gbih_ref, gwhh_ref, gbhh_ref,
                        fcw_ref, fcb_ref, o_ref):
    """Whole forward in one body; all weights resident in VMEM."""
    rows, H = x_ref.shape                      # rows = N * SEQ_LEN
    NH, Dh = NUM_HEADS, HEAD_DIM
    L = NUM_LAYERS
    B, T, LH = BATCH, SPLIT_NUM, LSTM_HIDDEN
    scale = 1.0 / math.sqrt(Dh)

    def layer_norm(x, g, b):
        mu = jnp.mean(x, axis=-1, keepdims=True)
        var = jnp.mean((x - mu) ** 2, axis=-1, keepdims=True)
        return (x - mu) * lax.rsqrt(var + LN_EPS) * g + b

    bias = bias_ref[...]                                   # (rows, rows) additive
    x2 = layer_norm(x_ref[...], eg_ref[...], eb_ref[...])  # embedding LayerNorm

    # contract last dims: q @ k^T without an explicit XLU transpose
    dn_qkT = (((1,), (1,)), ((), ()))

    for l in range(L):                                     # static unrolled layers
        # ---- self attention: fused QKV projection, all heads in this body ----
        qkv = jnp.dot(x2, wqkv_ref[l],
                      preferred_element_type=jnp.float32) + bqkv_ref[l]  # (rows, 3H)
        ctx_heads = []
        for h in range(NH):                                # static unrolled heads
            q = qkv[:, h * Dh:(h + 1) * Dh]                # (rows, Dh)
            k = qkv[:, H + h * Dh:H + (h + 1) * Dh]
            v = qkv[:, 2 * H + h * Dh:2 * H + (h + 1) * Dh]
            s = lax.dot_general(q, k, dn_qkT,
                                preferred_element_type=jnp.float32) * scale + bias
            s = s - jnp.max(s, axis=-1, keepdims=True)
            p = jnp.exp(s)
            p = p / jnp.sum(p, axis=-1, keepdims=True)      # exact softmax denom
            ctx_heads.append(jnp.dot(p, v, preferred_element_type=jnp.float32))
        ctx = jnp.concatenate(ctx_heads, axis=-1)           # (rows, H)
        attn = jnp.dot(ctx, wo_ref[l],                       # one K=H output proj
                       preferred_element_type=jnp.float32)
        x2 = layer_norm(x2 + attn + bo_ref[l], ln1g_ref[l], ln1b_ref[l])

        # ---- feed-forward ----
        inter = jnp.dot(x2, wi_ref[l],
                        preferred_element_type=jnp.float32) + bi_ref[l]
        # TODO(synk): exact erf-GELU replaced by the tanh approximation (Mosaic-friendly).
        inter = 0.5 * inter * (1.0 + jnp.tanh(
            0.7978845608028654 * (inter + 0.044715 * inter * inter * inter)))
        ffn = jnp.dot(inter, wf_ref[l],
                      preferred_element_type=jnp.float32) + bf_ref[l]
        x2 = layer_norm(x2 + ffn, ln2g_ref[l], ln2b_ref[l])

    # ---- pooler on the CLS token of each sequence (selector matmul).
    # Selector rows are ordered time-major (row = t*B + b) so the GRU below can
    # read contiguous per-timestep blocks.
    cls = jnp.dot(sel_ref[...], x2, preferred_element_type=jnp.float32)   # (T*B, H)
    pooled = jnp.tanh(jnp.dot(cls, poolw_ref[...],
                              preferred_element_type=jnp.float32) + poolb_ref[...])

    # ---- bidirectional GRU: input gates for BOTH directions hoisted out of the
    # serial loop into one dense matmul; only the final hidden states are kept.
    gx_all = jnp.dot(pooled, gwih_ref[...],
                     preferred_element_type=jnp.float32) + gbih_ref[...]  # (T*B, 6*LH)
    h_finals = []
    for d in range(2):                                   # 0 = forward, 1 = backward
        w_hh = gwhh_ref[d]
        b_hh = gbhh_ref[d]
        h = jnp.zeros((B, LH), jnp.float32)
        steps = range(T) if d == 0 else range(T - 1, -1, -1)
        for t in steps:                                  # small static trip count
            gx = gx_all[t * B:(t + 1) * B, d * 3 * LH:(d + 1) * 3 * LH]   # (B, 3LH)
            gh = jnp.dot(h, w_hh, preferred_element_type=jnp.float32) + b_hh
            rz = jax.nn.sigmoid(gx[:, :2 * LH] + gh[:, :2 * LH])          # fused r/z
            r = rz[:, :LH]
            z = rz[:, LH:]
            n = jnp.tanh(gx[:, 2 * LH:] + r * gh[:, 2 * LH:])
            h = (1.0 - z) * n + z * h
        h_finals.append(h)

    # hidden.permute(1,0,2).reshape(B, 2H) @ fc_w  ==  h_fwd @ fc_w[:H] + h_bwd @ fc_w[H:]
    out = (jnp.dot(h_finals[0], fcw_ref[0:LH, :], preferred_element_type=jnp.float32)
           + jnp.dot(h_finals[1], fcw_ref[LH:2 * LH, :], preferred_element_type=jnp.float32)
           + fcb_ref[...])
    o_ref[...] = out


# =============================== model (JAX glue) ============================

def model_forward(params, input_ids, input_mask, segment_ids):
    batch, split_num, seq_len = input_ids.shape
    flat_ids = input_ids.reshape(-1, seq_len)            # (N, S)
    flat_mask = input_mask.reshape(-1, seq_len)
    flat_seg = segment_ids.reshape(-1, seq_len)
    N, S = flat_ids.shape
    rows = N * S

    bp = params['bert']
    # embedding gathers stay in plain XLA
    emb = (bp['word_emb'][flat_ids]
           + bp['pos_emb'][:S][None, :, :]
           + bp['type_emb'][flat_seg])                   # (N, S, H)
    x2 = emb.reshape(rows, BERT_HIDDEN)

    # Block-diagonal additive attention bias over the rows of the flattened
    # batch: bias[b*S+i, c*S+j] = 0 if (b == c and key j of sequence b is
    # attended) else -10000.  Cross-sequence exps underflow to exactly 0, so
    # this equals independent per-sequence softmax attention.
    key_allow = flat_mask.astype(jnp.float32)                         # (N, S)
    same_seq = jnp.eye(N, dtype=jnp.float32)                          # (N, N)
    allow = same_seq[:, :, None] * key_allow[None, :, :]              # (N, N, S)
    allow = jnp.broadcast_to(allow[:, None, :, :], (N, S, N, S))
    bias = (1.0 - allow.reshape(rows, rows)) * -10000.0

    # CLS-row selector, output rows ordered time-major (row = t*B + b) so the
    # GRU inside the kernel reads contiguous per-timestep blocks.
    r = jnp.arange(N)
    t_idx = r // batch
    b_idx = r % batch
    cols = (b_idx * split_num + t_idx) * S
    sel = jnp.zeros((N, rows), jnp.float32).at[r, cols].set(1.0)

    gp = params['gru']
    w_ih_cat = jnp.concatenate([gp['w_ih'][0], gp['w_ih'][1]], axis=-1)  # (H, 6*LH)
    b_ih_cat = jnp.concatenate([gp['b_ih'][0], gp['b_ih'][1]], axis=-1)  # (1, 6*LH)

    out = pl.pallas_call(                                 # single fused kernel
        _fused_model_kernel,
        out_shape=jax.ShapeDtypeStruct((batch, NUM_CLASSES), jnp.float32),
    )(x2, bias, sel,
      bp['emb_ln_g'], bp['emb_ln_b'],
      bp['wqkv'], bp['bqkv'], bp['wo'], bp['bo'],
      bp['ln1_g'], bp['ln1_b'], bp['wi'], bp['bi'],
      bp['wf'], bp['bf'], bp['ln2_g'], bp['ln2_b'],
      bp['pool_w'], bp['pool_b'],
      w_ih_cat, b_ih_cat, gp['w_hh'], gp['b_hh'],
      params['fc_w'], params['fc_b'])
    # dropout layers: eval-mode identity
    return out


# =============================== param init =================================

def init_params(key):
    keys = jax.random.split(key, 32)
    it = iter(keys)

    def nrm(shape):
        return jax.random.normal(next(it), shape, dtype=jnp.float32) * 0.02

    H, I, L = BERT_HIDDEN, INTERMEDIATE, NUM_LAYERS
    bert = dict(
        word_emb=nrm((VOCAB, H)),
        pos_emb=nrm((MAX_POS, H)),
        type_emb=nrm((TYPE_VOCAB, H)),
        emb_ln_g=jnp.ones((1, H), jnp.float32),
        emb_ln_b=jnp.zeros((1, H), jnp.float32),
        # per-layer weights stacked on a leading layer axis; QKV pre-fused
        wqkv=nrm((L, H, 3 * H)), bqkv=jnp.zeros((L, 1, 3 * H), jnp.float32),
        wo=nrm((L, H, H)),       bo=jnp.zeros((L, 1, H), jnp.float32),
        ln1_g=jnp.ones((L, 1, H), jnp.float32), ln1_b=jnp.zeros((L, 1, H), jnp.float32),
        wi=nrm((L, H, I)),       bi=jnp.zeros((L, 1, I), jnp.float32),
        wf=nrm((L, I, H)),       bf=jnp.zeros((L, 1, H), jnp.float32),
        ln2_g=jnp.ones((L, 1, H), jnp.float32), ln2_b=jnp.zeros((L, 1, H), jnp.float32),
        pool_w=nrm((H, H)),      pool_b=jnp.zeros((1, H), jnp.float32),
    )
    LH = LSTM_HIDDEN
    gru = dict(
        w_ih=nrm((2, H, 3 * LH)),                  # [fwd, bwd], stored as (in, 3H)
        b_ih=jnp.zeros((2, 1, 3 * LH), jnp.float32),
        w_hh=nrm((2, LH, 3 * LH)),                 # stored as (H, 3H)
        b_hh=jnp.zeros((2, 1, 3 * LH), jnp.float32),
    )
    return dict(bert=bert, gru=gru,
                fc_w=nrm((2 * LH, NUM_CLASSES)),
                fc_b=jnp.zeros((1, NUM_CLASSES), jnp.float32))


# =================================== main ====================================

if __name__ == "__main__":
    key = jax.random.PRNGKey(0)
    k_ids, k_params = jax.random.split(key)

    input_ids = jax.random.randint(
        k_ids, (BATCH, SPLIT_NUM, SEQ_LEN), 0, VOCAB, dtype=jnp.int32)
    # mask out the last two tokens of every segment to exercise attention masking
    input_mask = jnp.concatenate(
        [jnp.ones((BATCH, SPLIT_NUM, SEQ_LEN - 2), jnp.int32),
         jnp.zeros((BATCH, SPLIT_NUM, 2), jnp.int32)], axis=-1)
    segment_ids = jnp.zeros((BATCH, SPLIT_NUM, SEQ_LEN), jnp.int32)

    params = init_params(k_params)

    fwd = jax.jit(model_forward)
    out = fwd(params, input_ids, input_mask, segment_ids)
    jax.block_until_ready(out)
    assert out.shape == (BATCH, NUM_CLASSES)
    print("KERNEL_OK")
</pallas_src>

<mosaic_0001>
module attributes {stable_mosaic.version = 11 : i64} {
  func.func @_fused_model_kernel(%arg0: memref<64x32xf32, #tpu.memory_space<vmem>>, %arg1: memref<64x64xf32, #tpu.memory_space<vmem>>, %arg2: memref<8x64xf32, #tpu.memory_space<vmem>>, %arg3: memref<1x32xf32, #tpu.memory_space<vmem>>, %arg4: memref<1x32xf32, #tpu.memory_space<vmem>>, %arg5: memref<2x32x96xf32, #tpu.memory_space<vmem>>, %arg6: memref<2x1x96xf32, #tpu.memory_space<vmem>>, %arg7: memref<2x32x32xf32, #tpu.memory_space<vmem>>, %arg8: memref<2x1x32xf32, #tpu.memory_space<vmem>>, %arg9: memref<2x1x32xf32, #tpu.memory_space<vmem>>, %arg10: memref<2x1x32xf32, #tpu.memory_space<vmem>>, %arg11: memref<2x32x64xf32, #tpu.memory_space<vmem>>, %arg12: memref<2x1x64xf32, #tpu.memory_space<vmem>>, %arg13: memref<2x64x32xf32, #tpu.memory_space<vmem>>, %arg14: memref<2x1x32xf32, #tpu.memory_space<vmem>>, %arg15: memref<2x1x32xf32, #tpu.memory_space<vmem>>, %arg16: memref<2x1x32xf32, #tpu.memory_space<vmem>>, %arg17: memref<32x32xf32, #tpu.memory_space<vmem>>, %arg18: memref<1x32xf32, #tpu.memory_space<vmem>>, %arg19: memref<32x96xf32, #tpu.memory_space<vmem>>, %arg20: memref<1x96xf32, #tpu.memory_space<vmem>>, %arg21: memref<2x16x48xf32, #tpu.memory_space<vmem>>, %arg22: memref<2x1x48xf32, #tpu.memory_space<vmem>>, %arg23: memref<32x3xf32, #tpu.memory_space<vmem>>, %arg24: memref<1x3xf32, #tpu.memory_space<vmem>>, %arg25: memref<2x3xf32, #tpu.memory_space<vmem>>) attributes {dimension_semantics = [], scalar_prefetch = 0 : i64, scratch_operands = 0 : i64, tpu.core_type = #tpu.core_type<tc>} {
    %c0 = arith.constant 0 : index
    %c0_0 = arith.constant 0 : index
    %0 = vector.load %arg1[%c0, %c0_0] : memref<64x64xf32, #tpu.memory_space<vmem>>, vector<64x64xf32>
    %c0_1 = arith.constant 0 : index
    %c0_2 = arith.constant 0 : index
    %1 = vector.load %arg0[%c0_1, %c0_2] : memref<64x32xf32, #tpu.memory_space<vmem>>, vector<64x32xf32>
    %c0_3 = arith.constant 0 : index
    %c0_4 = arith.constant 0 : index
    %2 = vector.load %arg3[%c0_3, %c0_4] : memref<1x32xf32, #tpu.memory_space<vmem>>, vector<1x32xf32>
    %c0_5 = arith.constant 0 : index
    %c0_6 = arith.constant 0 : index
    %3 = vector.load %arg4[%c0_5, %c0_6] : memref<1x32xf32, #tpu.memory_space<vmem>>, vector<1x32xf32>
    %cst = arith.constant dense<0.000000e+00> : vector<64xf32>
    %4 = vector.multi_reduction <add>, %1, %cst [1] : vector<64x32xf32> to vector<64xf32>
    %5 = vector.shape_cast %4 : vector<64xf32> to vector<64x1xf32>
    %cst_7 = arith.constant 3.200000e+01 : f32
    %6 = vector.broadcast %cst_7 : f32 to vector<64x1xf32>
    %7 = arith.divf %5, %6 : vector<64x1xf32>
    %8 = vector.broadcast %7 : vector<64x1xf32> to vector<64x32xf32>
    %9 = arith.subf %1, %8 : vector<64x32xf32>
    %10 = arith.mulf %9, %9 : vector<64x32xf32>
    %cst_8 = arith.constant dense<0.000000e+00> : vector<64xf32>
    %11 = vector.multi_reduction <add>, %10, %cst_8 [1] : vector<64x32xf32> to vector<64xf32>
    %12 = vector.shape_cast %11 : vector<64xf32> to vector<64x1xf32>
    %cst_9 = arith.constant 3.200000e+01 : f32
    %13 = vector.broadcast %cst_9 : f32 to vector<64x1xf32>
    %14 = arith.divf %12, %13 : vector<64x1xf32>
    %15 = vector.broadcast %7 : vector<64x1xf32> to vector<64x32xf32>
    %16 = arith.subf %1, %15 : vector<64x32xf32>
    %cst_10 = arith.constant 9.99999996E-13 : f32
    %17 = vector.broadcast %cst_10 : f32 to vector<64x1xf32>
    %18 = arith.addf %14, %17 : vector<64x1xf32>
    %19 = math.rsqrt %18 : vector<64x1xf32>
    %20 = vector.broadcast %19 : vector<64x1xf32> to vector<64x32xf32>
    %21 = arith.mulf %16, %20 : vector<64x32xf32>
    %22 = vector.broadcast %2 : vector<1x32xf32> to vector<64x32xf32>
    %23 = arith.mulf %21, %22 : vector<64x32xf32>
    %24 = vector.broadcast %3 : vector<1x32xf32> to vector<64x32xf32>
    %25 = arith.addf %23, %24 : vector<64x32xf32>
    %c0_11 = arith.constant 0 : index
    %c0_12 = arith.constant 0 : index
    %c0_13 = arith.constant 0 : index
    %26 = vector.load %arg5[%c0_11, %c0_12, %c0_13] : memref<2x32x96xf32, #tpu.memory_space<vmem>>, vector<1x32x96xf32>
    %27 = vector.shape_cast %26 : vector<1x32x96xf32> to vector<32x96xf32>
    %cst_14 = arith.constant dense<0.000000e+00> : vector<64x96xf32>
    %28 = tpu.matmul %25, %27, %cst_14 {dimension_numbers = #tpu.dot_dimension_numbers<[1], [0], [0], [1], [0, 0, 1, 1], [], []>} : vector<64x32xf32>, vector<32x96xf32>, vector<64x96xf32> -> vector<64x96xf32>
    %c0_15 = arith.constant 0 : index
    %c0_16 = arith.constant 0 : index
    %c0_17 = arith.constant 0 : index
    %29 = vector.load %arg6[%c0_15, %c0_16, %c0_17] : memref<2x1x96xf32, #tpu.memory_space<vmem>>, vector<1x1x96xf32>
    %30 = vector.shape_cast %29 : vector<1x1x96xf32> to vector<1x96xf32>
    %31 = vector.broadcast %30 : vector<1x96xf32> to vector<64x96xf32>
    %32 = arith.addf %28, %31 : vector<64x96xf32>
    %33 = vector.extract_strided_slice %32 {offsets = [0, 0], sizes = [64, 8], strides = [1, 1]} : vector<64x96xf32> to vector<64x8xf32>
    %34 = vector.extract_strided_slice %32 {offsets = [0, 32], sizes = [64, 8], strides = [1, 1]} : vector<64x96xf32> to vector<64x8xf32>
    %35 = vector.extract_strided_slice %32 {offsets = [0, 64], sizes = [64, 8], strides = [1, 1]} : vector<64x96xf32> to vector<64x8xf32>
    %cst_18 = arith.constant dense<0.000000e+00> : vector<64x64xf32>
    %36 = tpu.matmul %33, %34, %cst_18 {dimension_numbers = #tpu.dot_dimension_numbers<[1], [1], [0], [0], [0, 0, 1, 0], [], []>} : vector<64x8xf32>, vector<64x8xf32>, vector<64x64xf32> -> vector<64x64xf32>
    %cst_19 = arith.constant 0.353553385 : f32
    %37 = vector.broadcast %cst_19 : f32 to vector<64x64xf32>
    %38 = arith.mulf %36, %37 : vector<64x64xf32>
    %39 = arith.addf %38, %0 : vector<64x64xf32>
    %cst_20 = arith.constant dense<0xFF800000> : vector<64xf32>
    %40 = vector.multi_reduction <maximumf>, %39, %cst_20 [1] : vector<64x64xf32> to vector<64xf32>
    %41 = vector.shape_cast %40 : vector<64xf32> to vector<64x1xf32>
    %42 = vector.broadcast %41 : vector<64x1xf32> to vector<64x64xf32>
    %43 = arith.subf %39, %42 : vector<64x64xf32>
    %44 = math.exp %43 : vector<64x64xf32>
    %cst_21 = arith.constant dense<0.000000e+00> : vector<64xf32>
    %45 = vector.multi_reduction <add>, %44, %cst_21 [1] : vector<64x64xf32> to vector<64xf32>
    %46 = vector.shape_cast %45 : vector<64xf32> to vector<64x1xf32>
    %47 = vector.broadcast %46 : vector<64x1xf32> to vector<64x64xf32>
    %48 = arith.divf %44, %47 : vector<64x64xf32>
    %cst_22 = arith.constant dense<0.000000e+00> : vector<64x8xf32>
    %49 = tpu.matmul %48, %35, %cst_22 {dimension_numbers = #tpu.dot_dimension_numbers<[1], [0], [0], [1], [0, 0, 1, 1], [], []>} : vector<64x64xf32>, vector<64x8xf32>, vector<64x8xf32> -> vector<64x8xf32>
    %50 = vector.extract_strided_slice %32 {offsets = [0, 8], sizes = [64, 8], strides = [1, 1]} : vector<64x96xf32> to vector<64x8xf32>
    %51 = vector.extract_strided_slice %32 {offsets = [0, 40], sizes = [64, 8], strides = [1, 1]} : vector<64x96xf32> to vector<64x8xf32>
    %52 = vector.extract_strided_slice %32 {offsets = [0, 72], sizes = [64, 8], strides = [1, 1]} : vector<64x96xf32> to vector<64x8xf32>
    %cst_23 = arith.constant dense<0.000000e+00> : vector<64x64xf32>
    %53 = tpu.matmul %50, %51, %cst_23 {dimension_numbers = #tpu.dot_dimension_numbers<[1], [1], [0], [0], [0, 0, 1, 0], [], []>} : vector<64x8xf32>, vector<64x8xf32>, vector<64x64xf32> -> vector<64x64xf32>
    %cst_24 = arith.constant 0.353553385 : f32
    %54 = vector.broadcast %cst_24 : f32 to vector<64x64xf32>
    %55 = arith.mulf %53, %54 : vector<64x64xf32>
    %56 = arith.addf %55, %0 : vector<64x64xf32>
    %cst_25 = arith.constant dense<0xFF800000> : vector<64xf32>
    %57 = vector.multi_reduction <maximumf>, %56, %cst_25 [1] : vector<64x64xf32> to vector<64xf32>
    %58 = vector.shape_cast %57 : vector<64xf32> to vector<64x1xf32>
    %59 = vector.broadcast %58 : vector<64x1xf32> to vector<64x64xf32>
    %60 = arith.subf %56, %59 : vector<64x64xf32>
    %61 = math.exp %60 : vector<64x64xf32>
    %cst_26 = arith.constant dense<0.000000e+00> : vector<64xf32>
    %62 = vector.multi_reduction <add>, %61, %cst_26 [1] : vector<64x64xf32> to vector<64xf32>
    %63 = vector.shape_cast %62 : vector<64xf32> to vector<64x1xf32>
    %64 = vector.broadcast %63 : vector<64x1xf32> to vector<64x64xf32>
    %65 = arith.divf %61, %64 : vector<64x64xf32>
    %cst_27 = arith.constant dense<0.000000e+00> : vector<64x8xf32>
    %66 = tpu.matmul %65, %52, %cst_27 {dimension_numbers = #tpu.dot_dimension_numbers<[1], [0], [0], [1], [0, 0, 1, 1], [], []>} : vector<64x64xf32>, vector<64x8xf32>, vector<64x8xf32> -> vector<64x8xf32>
    %67 = vector.extract_strided_slice %32 {offsets = [0, 16], sizes = [64, 8], strides = [1, 1]} : vector<64x96xf32> to vector<64x8xf32>
    %68 = vector.extract_strided_slice %32 {offsets = [0, 48], sizes = [64, 8], strides = [1, 1]} : vector<64x96xf32> to vector<64x8xf32>
    %69 = vector.extract_strided_slice %32 {offsets = [0, 80], sizes = [64, 8], strides = [1, 1]} : vector<64x96xf32> to vector<64x8xf32>
    %cst_28 = arith.constant dense<0.000000e+00> : vector<64x64xf32>
    %70 = tpu.matmul %67, %68, %cst_28 {dimension_numbers = #tpu.dot_dimension_numbers<[1], [1], [0], [0], [0, 0, 1, 0], [], []>} : vector<64x8xf32>, vector<64x8xf32>, vector<64x64xf32> -> vector<64x64xf32>
    %cst_29 = arith.constant 0.353553385 : f32
    %71 = vector.broadcast %cst_29 : f32 to vector<64x64xf32>
    %72 = arith.mulf %70, %71 : vector<64x64xf32>
    %73 = arith.addf %72, %0 : vector<64x64xf32>
    %cst_30 = arith.constant dense<0xFF800000> : vector<64xf32>
    %74 = vector.multi_reduction <maximumf>, %73, %cst_30 [1] : vector<64x64xf32> to vector<64xf32>
    %75 = vector.shape_cast %74 : vector<64xf32> to vector<64x1xf32>
    %76 = vector.broadcast %75 : vector<64x1xf32> to vector<64x64xf32>
    %77 = arith.subf %73, %76 : vector<64x64xf32>
    %78 = math.exp %77 : vector<64x64xf32>
    %cst_31 = arith.constant dense<0.000000e+00> : vector<64xf32>
    %79 = vector.multi_reduction <add>, %78, %cst_31 [1] : vector<64x64xf32> to vector<64xf32>
    %80 = vector.shape_cast %79 : vector<64xf32> to vector<64x1xf32>
    %81 = vector.broadcast %80 : vector<64x1xf32> to vector<64x64xf32>
    %82 = arith.divf %78, %81 : vector<64x64xf32>
    %cst_32 = arith.constant dense<0.000000e+00> : vector<64x8xf32>
    %83 = tpu.matmul %82, %69, %cst_32 {dimension_numbers = #tpu.dot_dimension_numbers<[1], [0], [0], [1], [0, 0, 1, 1], [], []>} : vector<64x64xf32>, vector<64x8xf32>, vector<64x8xf32> -> vector<64x8xf32>
    %84 = vector.extract_strided_slice %32 {offsets = [0, 24], sizes = [64, 8], strides = [1, 1]} : vector<64x96xf32> to vector<64x8xf32>
    %85 = vector.extract_strided_slice %32 {offsets = [0, 56], sizes = [64, 8], strides = [1, 1]} : vector<64x96xf32> to vector<64x8xf32>
    %86 = vector.extract_strided_slice %32 {offsets = [0, 88], sizes = [64, 8], strides = [1, 1]} : vector<64x96xf32> to vector<64x8xf32>
    %cst_33 = arith.constant dense<0.000000e+00> : vector<64x64xf32>
    %87 = tpu.matmul %84, %85, %cst_33 {dimension_numbers = #tpu.dot_dimension_numbers<[1], [1], [0], [0], [0, 0, 1, 0], [], []>} : vector<64x8xf32>, vector<64x8xf32>, vector<64x64xf32> -> vector<64x64xf32>
    %cst_34 = arith.constant 0.353553385 : f32
    %88 = vector.broadcast %cst_34 : f32 to vector<64x64xf32>
    %89 = arith.mulf %87, %88 : vector<64x64xf32>
    %90 = arith.addf %89, %0 : vector<64x64xf32>
    %cst_35 = arith.constant dense<0xFF800000> : vector<64xf32>
    %91 = vector.multi_reduction <maximumf>, %90, %cst_35 [1] : vector<64x64xf32> to vector<64xf32>
    %92 = vector.shape_cast %91 : vector<64xf32> to vector<64x1xf32>
    %93 = vector.broadcast %92 : vector<64x1xf32> to vector<64x64xf32>
    %94 = arith.subf %90, %93 : vector<64x64xf32>
    %95 = math.exp %94 : vector<64x64xf32>
    %cst_36 = arith.constant dense<0.000000e+00> : vector<64xf32>
    %96 = vector.multi_reduction <add>, %95, %cst_36 [1] : vector<64x64xf32> to vector<64xf32>
    %97 = vector.shape_cast %96 : vector<64xf32> to vector<64x1xf32>
    %98 = vector.broadcast %97 : vector<64x1xf32> to vector<64x64xf32>
    %99 = arith.divf %95, %98 : vector<64x64xf32>
    %cst_37 = arith.constant dense<0.000000e+00> : vector<64x8xf32>
    %100 = tpu.matmul %99, %86, %cst_37 {dimension_numbers = #tpu.dot_dimension_numbers<[1], [0], [0], [1], [0, 0, 1, 1], [], []>} : vector<64x64xf32>, vector<64x8xf32>, vector<64x8xf32> -> vector<64x8xf32>
    %101 = tpu.concatenate %49, %66, %83, %100 in 1 : vector<64x8xf32>, vector<64x8xf32>, vector<64x8xf32>, vector<64x8xf32> -> vector<64x32xf32>
    %c0_38 = arith.constant 0 : index
    %c0_39 = arith.constant 0 : index
    %c0_40 = arith.constant 0 : index
    %102 = vector.load %arg7[%c0_38, %c0_39, %c0_40] : memref<2x32x32xf32, #tpu.memory_space<vmem>>, vector<1x32x32xf32>
    %103 = vector.shape_cast %102 : vector<1x32x32xf32> to vector<32x32xf32>
    %cst_41 = arith.constant dense<0.000000e+00> : vector<64x32xf32>
    %104 = tpu.matmul %101, %103, %cst_41 {dimension_numbers = #tpu.dot_dimension_numbers<[1], [0], [0], [1], [0, 0, 1, 1], [], []>} : vector<64x32xf32>, vector<32x32xf32>, vector<64x32xf32> -> vector<64x32xf32>
    %105 = arith.addf %25, %104 : vector<64x32xf32>
    %c0_42 = arith.constant 0 : index
    %c0_43 = arith.constant 0 : index
    %c0_44 = arith.constant 0 : index
    %106 = vector.load %arg8[%c0_42, %c0_43, %c0_44] : memref<2x1x32xf32, #tpu.memory_space<vmem>>, vector<1x1x32xf32>
    %107 = vector.shape_cast %106 : vector<1x1x32xf32> to vector<1x32xf32>
    %108 = vector.broadcast %107 : vector<1x32xf32> to vector<64x32xf32>
    %109 = arith.addf %105, %108 : vector<64x32xf32>
    %c0_45 = arith.constant 0 : index
    %c0_46 = arith.constant 0 : index
    %c0_47 = arith.constant 0 : index
    %110 = vector.load %arg9[%c0_45, %c0_46, %c0_47] : memref<2x1x32xf32, #tpu.memory_space<vmem>>, vector<1x1x32xf32>
    %111 = vector.shape_cast %110 : vector<1x1x32xf32> to vector<1x32xf32>
    %c0_48 = arith.constant 0 : index
    %c0_49 = arith.constant 0 : index
    %c0_50 = arith.constant 0 : index
    %112 = vector.load %arg10[%c0_48, %c0_49, %c0_50] : memref<2x1x32xf32, #tpu.memory_space<vmem>>, vector<1x1x32xf32>
    %113 = vector.shape_cast %112 : vector<1x1x32xf32> to vector<1x32xf32>
    %cst_51 = arith.constant dense<0.000000e+00> : vector<64xf32>
    %114 = vector.multi_reduction <add>, %109, %cst_51 [1] : vector<64x32xf32> to vector<64xf32>
    %115 = vector.shape_cast %114 : vector<64xf32> to vector<64x1xf32>
    %cst_52 = arith.constant 3.200000e+01 : f32
    %116 = vector.broadcast %cst_52 : f32 to vector<64x1xf32>
    %117 = arith.divf %115, %116 : vector<64x1xf32>
    %118 = vector.broadcast %117 : vector<64x1xf32> to vector<64x32xf32>
    %119 = arith.subf %109, %118 : vector<64x32xf32>
    %120 = arith.mulf %119, %119 : vector<64x32xf32>
    %cst_53 = arith.constant dense<0.000000e+00> : vector<64xf32>
    %121 = vector.multi_reduction <add>, %120, %cst_53 [1] : vector<64x32xf32> to vector<64xf32>
    %122 = vector.shape_cast %121 : vector<64xf32> to vector<64x1xf32>
    %cst_54 = arith.constant 3.200000e+01 : f32
    %123 = vector.broadcast %cst_54 : f32 to vector<64x1xf32>
    %124 = arith.divf %122, %123 : vector<64x1xf32>
    %125 = vector.broadcast %117 : vector<64x1xf32> to vector<64x32xf32>
    %126 = arith.subf %109, %125 : vector<64x32xf32>
    %cst_55 = arith.constant 9.99999996E-13 : f32
    %127 = vector.broadcast %cst_55 : f32 to vector<64x1xf32>
    %128 = arith.addf %124, %127 : vector<64x1xf32>
    %129 = math.rsqrt %128 : vector<64x1xf32>
    %130 = vector.broadcast %129 : vector<64x1xf32> to vector<64x32xf32>
    %131 = arith.mulf %126, %130 : vector<64x32xf32>
    %132 = vector.broadcast %111 : vector<1x32xf32> to vector<64x32xf32>
    %133 = arith.mulf %131, %132 : vector<64x32xf32>
    %134 = vector.broadcast %113 : vector<1x32xf32> to vector<64x32xf32>
    %135 = arith.addf %133, %134 : vector<64x32xf32>
    %c0_56 = arith.constant 0 : index
    %c0_57 = arith.constant 0 : index
    %c0_58 = arith.constant 0 : index
    %136 = vector.load %arg11[%c0_56, %c0_57, %c0_58] : memref<2x32x64xf32, #tpu.memory_space<vmem>>, vector<1x32x64xf32>
    %137 = vector.shape_cast %136 : vector<1x32x64xf32> to vector<32x64xf32>
    %cst_59 = arith.constant dense<0.000000e+00> : vector<64x64xf32>
    %138 = tpu.matmul %135, %137, %cst_59 {dimension_numbers = #tpu.dot_dimension_numbers<[1], [0], [0], [1], [0, 0, 1, 1], [], []>} : vector<64x32xf32>, vector<32x64xf32>, vector<64x64xf32> -> vector<64x64xf32>
    %c0_60 = arith.constant 0 : index
    %c0_61 = arith.constant 0 : index
    %c0_62 = arith.constant 0 : index
    %139 = vector.load %arg12[%c0_60, %c0_61, %c0_62] : memref<2x1x64xf32, #tpu.memory_space<vmem>>, vector<1x1x64xf32>
    %140 = vector.shape_cast %139 : vector<1x1x64xf32> to vector<1x64xf32>
    %141 = vector.broadcast %140 : vector<1x64xf32> to vector<64x64xf32>
    %142 = arith.addf %138, %141 : vector<64x64xf32>
    %cst_63 = arith.constant 5.000000e-01 : f32
    %143 = vector.broadcast %cst_63 : f32 to vector<64x64xf32>
    %144 = arith.mulf %143, %142 : vector<64x64xf32>
    %cst_64 = arith.constant 4.471500e-02 : f32
    %145 = vector.broadcast %cst_64 : f32 to vector<64x64xf32>
    %146 = arith.mulf %145, %142 : vector<64x64xf32>
    %147 = arith.mulf %146, %142 : vector<64x64xf32>
    %148 = arith.mulf %147, %142 : vector<64x64xf32>
    %149 = arith.addf %142, %148 : vector<64x64xf32>
    %cst_65 = arith.constant 0.797884583 : f32
    %150 = vector.broadcast %cst_65 : f32 to vector<64x64xf32>
    %151 = arith.mulf %150, %149 : vector<64x64xf32>
    %152 = math.tanh %151 : vector<64x64xf32>
    %cst_66 = arith.constant 1.000000e+00 : f32
    %153 = vector.broadcast %cst_66 : f32 to vector<64x64xf32>
    %154 = arith.addf %153, %152 : vector<64x64xf32>
    %155 = arith.mulf %144, %154 : vector<64x64xf32>
    %c0_67 = arith.constant 0 : index
    %c0_68 = arith.constant 0 : index
    %c0_69 = arith.constant 0 : index
    %156 = vector.load %arg13[%c0_67, %c0_68, %c0_69] : memref<2x64x32xf32, #tpu.memory_space<vmem>>, vector<1x64x32xf32>
    %157 = vector.shape_cast %156 : vector<1x64x32xf32> to vector<64x32xf32>
    %cst_70 = arith.constant dense<0.000000e+00> : vector<64x32xf32>
    %158 = tpu.matmul %155, %157, %cst_70 {dimension_numbers = #tpu.dot_dimension_numbers<[1], [0], [0], [1], [0, 0, 1, 1], [], []>} : vector<64x64xf32>, vector<64x32xf32>, vector<64x32xf32> -> vector<64x32xf32>
    %c0_71 = arith.constant 0 : index
    %c0_72 = arith.constant 0 : index
    %c0_73 = arith.constant 0 : index
    %159 = vector.load %arg14[%c0_71, %c0_72, %c0_73] : memref<2x1x32xf32, #tpu.memory_space<vmem>>, vector<1x1x32xf32>
    %160 = vector.shape_cast %159 : vector<1x1x32xf32> to vector<1x32xf32>
    %161 = vector.broadcast %160 : vector<1x32xf32> to vector<64x32xf32>
    %162 = arith.addf %158, %161 : vector<64x32xf32>
    %163 = arith.addf %135, %162 : vector<64x32xf32>
    %c0_74 = arith.constant 0 : index
    %c0_75 = arith.constant 0 : index
    %c0_76 = arith.constant 0 : index
    %164 = vector.load %arg15[%c0_74, %c0_75, %c0_76] : memref<2x1x32xf32, #tpu.memory_space<vmem>>, vector<1x1x32xf32>
    %165 = vector.shape_cast %164 : vector<1x1x32xf32> to vector<1x32xf32>
    %c0_77 = arith.constant 0 : index
    %c0_78 = arith.constant 0 : index
    %c0_79 = arith.constant 0 : index
    %166 = vector.load %arg16[%c0_77, %c0_78, %c0_79] : memref<2x1x32xf32, #tpu.memory_space<vmem>>, vector<1x1x32xf32>
    %167 = vector.shape_cast %166 : vector<1x1x32xf32> to vector<1x32xf32>
    %cst_80 = arith.constant dense<0.000000e+00> : vector<64xf32>
    %168 = vector.multi_reduction <add>, %163, %cst_80 [1] : vector<64x32xf32> to vector<64xf32>
    %169 = vector.shape_cast %168 : vector<64xf32> to vector<64x1xf32>
    %cst_81 = arith.constant 3.200000e+01 : f32
    %170 = vector.broadcast %cst_81 : f32 to vector<64x1xf32>
    %171 = arith.divf %169, %170 : vector<64x1xf32>
    %172 = vector.broadcast %171 : vector<64x1xf32> to vector<64x32xf32>
    %173 = arith.subf %163, %172 : vector<64x32xf32>
    %174 = arith.mulf %173, %173 : vector<64x32xf32>
    %cst_82 = arith.constant dense<0.000000e+00> : vector<64xf32>
    %175 = vector.multi_reduction <add>, %174, %cst_82 [1] : vector<64x32xf32> to vector<64xf32>
    %176 = vector.shape_cast %175 : vector<64xf32> to vector<64x1xf32>
    %cst_83 = arith.constant 3.200000e+01 : f32
    %177 = vector.broadcast %cst_83 : f32 to vector<64x1xf32>
    %178 = arith.divf %176, %177 : vector<64x1xf32>
    %179 = vector.broadcast %171 : vector<64x1xf32> to vector<64x32xf32>
    %180 = arith.subf %163, %179 : vector<64x32xf32>
    %cst_84 = arith.constant 9.99999996E-13 : f32
    %181 = vector.broadcast %cst_84 : f32 to vector<64x1xf32>
    %182 = arith.addf %178, %181 : vector<64x1xf32>
    %183 = math.rsqrt %182 : vector<64x1xf32>
    %184 = vector.broadcast %183 : vector<64x1xf32> to vector<64x32xf32>
    %185 = arith.mulf %180, %184 : vector<64x32xf32>
    %186 = vector.broadcast %165 : vector<1x32xf32> to vector<64x32xf32>
    %187 = arith.mulf %185, %186 : vector<64x32xf32>
    %188 = vector.broadcast %167 : vector<1x32xf32> to vector<64x32xf32>
    %189 = arith.addf %187, %188 : vector<64x32xf32>
    %c1 = arith.constant 1 : index
    %c0_85 = arith.constant 0 : index
    %c0_86 = arith.constant 0 : index
    %190 = vector.load %arg5[%c1, %c0_85, %c0_86] : memref<2x32x96xf32, #tpu.memory_space<vmem>>, vector<1x32x96xf32>
    %191 = vector.shape_cast %190 : vector<1x32x96xf32> to vector<32x96xf32>
    %cst_87 = arith.constant dense<0.000000e+00> : vector<64x96xf32>
    %192 = tpu.matmul %189, %191, %cst_87 {dimension_numbers = #tpu.dot_dimension_numbers<[1], [0], [0], [1], [0, 0, 1, 1], [], []>} : vector<64x32xf32>, vector<32x96xf32>, vector<64x96xf32> -> vector<64x96xf32>
    %c1_88 = arith.constant 1 : index
    %c0_89 = arith.constant 0 : index
    %c0_90 = arith.constant 0 : index
    %193 = vector.load %arg6[%c1_88, %c0_89, %c0_90] : memref<2x1x96xf32, #tpu.memory_space<vmem>>, vector<1x1x96xf32>
    %194 = vector.shape_cast %193 : vector<1x1x96xf32> to vector<1x96xf32>
    %195 = vector.broadcast %194 : vector<1x96xf32> to vector<64x96xf32>
    %196 = arith.addf %192, %195 : vector<64x96xf32>
    %197 = vector.extract_strided_slice %196 {offsets = [0, 0], sizes = [64, 8], strides = [1, 1]} : vector<64x96xf32> to vector<64x8xf32>
    %198 = vector.extract_strided_slice %196 {offsets = [0, 32], sizes = [64, 8], strides = [1, 1]} : vector<64x96xf32> to vector<64x8xf32>
    %199 = vector.extract_strided_slice %196 {offsets = [0, 64], sizes = [64, 8], strides = [1, 1]} : vector<64x96xf32> to vector<64x8xf32>
    %cst_91 = arith.constant dense<0.000000e+00> : vector<64x64xf32>
    %200 = tpu.matmul %197, %198, %cst_91 {dimension_numbers = #tpu.dot_dimension_numbers<[1], [1], [0], [0], [0, 0, 1, 0], [], []>} : vector<64x8xf32>, vector<64x8xf32>, vector<64x64xf32> -> vector<64x64xf32>
    %cst_92 = arith.constant 0.353553385 : f32
    %201 = vector.broadcast %cst_92 : f32 to vector<64x64xf32>
    %202 = arith.mulf %200, %201 : vector<64x64xf32>
    %203 = arith.addf %202, %0 : vector<64x64xf32>
    %cst_93 = arith.constant dense<0xFF800000> : vector<64xf32>
    %204 = vector.multi_reduction <maximumf>, %203, %cst_93 [1] : vector<64x64xf32> to vector<64xf32>
    %205 = vector.shape_cast %204 : vector<64xf32> to vector<64x1xf32>
    %206 = vector.broadcast %205 : vector<64x1xf32> to vector<64x64xf32>
    %207 = arith.subf %203, %206 : vector<64x64xf32>
    %208 = math.exp %207 : vector<64x64xf32>
    %cst_94 = arith.constant dense<0.000000e+00> : vector<64xf32>
    %209 = vector.multi_reduction <add>, %208, %cst_94 [1] : vector<64x64xf32> to vector<64xf32>
    %210 = vector.shape_cast %209 : vector<64xf32> to vector<64x1xf32>
    %211 = vector.broadcast %210 : vector<64x1xf32> to vector<64x64xf32>
    %212 = arith.divf %208, %211 : vector<64x64xf32>
    %cst_95 = arith.constant dense<0.000000e+00> : vector<64x8xf32>
    %213 = tpu.matmul %212, %199, %cst_95 {dimension_numbers = #tpu.dot_dimension_numbers<[1], [0], [0], [1], [0, 0, 1, 1], [], []>} : vector<64x64xf32>, vector<64x8xf32>, vector<64x8xf32> -> vector<64x8xf32>
    %214 = vector.extract_strided_slice %196 {offsets = [0, 8], sizes = [64, 8], strides = [1, 1]} : vector<64x96xf32> to vector<64x8xf32>
    %215 = vector.extract_strided_slice %196 {offsets = [0, 40], sizes = [64, 8], strides = [1, 1]} : vector<64x96xf32> to vector<64x8xf32>
    %216 = vector.extract_strided_slice %196 {offsets = [0, 72], sizes = [64, 8], strides = [1, 1]} : vector<64x96xf32> to vector<64x8xf32>
    %cst_96 = arith.constant dense<0.000000e+00> : vector<64x64xf32>
    %217 = tpu.matmul %214, %215, %cst_96 {dimension_numbers = #tpu.dot_dimension_numbers<[1], [1], [0], [0], [0, 0, 1, 0], [], []>} : vector<64x8xf32>, vector<64x8xf32>, vector<64x64xf32> -> vector<64x64xf32>
    %cst_97 = arith.constant 0.353553385 : f32
    %218 = vector.broadcast %cst_97 : f32 to vector<64x64xf32>
    %219 = arith.mulf %217, %218 : vector<64x64xf32>
    %220 = arith.addf %219, %0 : vector<64x64xf32>
    %cst_98 = arith.constant dense<0xFF800000> : vector<64xf32>
    %221 = vector.multi_reduction <maximumf>, %220, %cst_98 [1] : vector<64x64xf32> to vector<64xf32>
    %222 = vector.shape_cast %221 : vector<64xf32> to vector<64x1xf32>
    %223 = vector.broadcast %222 : vector<64x1xf32> to vector<64x64xf32>
    %224 = arith.subf %220, %223 : vector<64x64xf32>
    %225 = math.exp %224 : vector<64x64xf32>
    %cst_99 = arith.constant dense<0.000000e+00> : vector<64xf32>
    %226 = vector.multi_reduction <add>, %225, %cst_99 [1] : vector<64x64xf32> to vector<64xf32>
    %227 = vector.shape_cast %226 : vector<64xf32> to vector<64x1xf32>
    %228 = vector.broadcast %227 : vector<64x1xf32> to vector<64x64xf32>
    %229 = arith.divf %225, %228 : vector<64x64xf32>
    %cst_100 = arith.constant dense<0.000000e+00> : vector<64x8xf32>
    %230 = tpu.matmul %229, %216, %cst_100 {dimension_numbers = #tpu.dot_dimension_numbers<[1], [0], [0], [1], [0, 0, 1, 1], [], []>} : vector<64x64xf32>, vector<64x8xf32>, vector<64x8xf32> -> vector<64x8xf32>
    %231 = vector.extract_strided_slice %196 {offsets = [0, 16], sizes = [64, 8], strides = [1, 1]} : vector<64x96xf32> to vector<64x8xf32>
    %232 = vector.extract_strided_slice %196 {offsets = [0, 48], sizes = [64, 8], strides = [1, 1]} : vector<64x96xf32> to vector<64x8xf32>
    %233 = vector.extract_strided_slice %196 {offsets = [0, 80], sizes = [64, 8], strides = [1, 1]} : vector<64x96xf32> to vector<64x8xf32>
    %cst_101 = arith.constant dense<0.000000e+00> : vector<64x64xf32>
    %234 = tpu.matmul %231, %232, %cst_101 {dimension_numbers = #tpu.dot_dimension_numbers<[1], [1], [0], [0], [0, 0, 1, 0], [], []>} : vector<64x8xf32>, vector<64x8xf32>, vector<64x64xf32> -> vector<64x64xf32>
    %cst_102 = arith.constant 0.353553385 : f32
    %235 = vector.broadcast %cst_102 : f32 to vector<64x64xf32>
    %236 = arith.mulf %234, %235 : vector<64x64xf32>
    %237 = arith.addf %236, %0 : vector<64x64xf32>
    %cst_103 = arith.constant dense<0xFF800000> : vector<64xf32>
    %238 = vector.multi_reduction <maximumf>, %237, %cst_103 [1] : vector<64x64xf32> to vector<64xf32>
    %239 = vector.shape_cast %238 : vector<64xf32> to vector<64x1xf32>
    %240 = vector.broadcast %239 : vector<64x1xf32> to vector<64x64xf32>
    %241 = arith.subf %237, %240 : vector<64x64xf32>
    %242 = math.exp %241 : vector<64x64xf32>
    %cst_104 = arith.constant dense<0.000000e+00> : vector<64xf32>
    %243 = vector.multi_reduction <add>, %242, %cst_104 [1] : vector<64x64xf32> to vector<64xf32>
    %244 = vector.shape_cast %243 : vector<64xf32> to vector<64x1xf32>
    %245 = vector.broadcast %244 : vector<64x1xf32> to vector<64x64xf32>
    %246 = arith.divf %242, %245 : vector<64x64xf32>
    %cst_105 = arith.constant dense<0.000000e+00> : vector<64x8xf32>
    %247 = tpu.matmul %246, %233, %cst_105 {dimension_numbers = #tpu.dot_dimension_numbers<[1], [0], [0], [1], [0, 0, 1, 1], [], []>} : vector<64x64xf32>, vector<64x8xf32>, vector<64x8xf32> -> vector<64x8xf32>
    %248 = vector.extract_strided_slice %196 {offsets = [0, 24], sizes = [64, 8], strides = [1, 1]} : vector<64x96xf32> to vector<64x8xf32>
    %249 = vector.extract_strided_slice %196 {offsets = [0, 56], sizes = [64, 8], strides = [1, 1]} : vector<64x96xf32> to vector<64x8xf32>
    %250 = vector.extract_strided_slice %196 {offsets = [0, 88], sizes = [64, 8], strides = [1, 1]} : vector<64x96xf32> to vector<64x8xf32>
    %cst_106 = arith.constant dense<0.000000e+00> : vector<64x64xf32>
    %251 = tpu.matmul %248, %249, %cst_106 {dimension_numbers = #tpu.dot_dimension_numbers<[1], [1], [0], [0], [0, 0, 1, 0], [], []>} : vector<64x8xf32>, vector<64x8xf32>, vector<64x64xf32> -> vector<64x64xf32>
    %cst_107 = arith.constant 0.353553385 : f32
    %252 = vector.broadcast %cst_107 : f32 to vector<64x64xf32>
    %253 = arith.mulf %251, %252 : vector<64x64xf32>
    %254 = arith.addf %253, %0 : vector<64x64xf32>
    %cst_108 = arith.constant dense<0xFF800000> : vector<64xf32>
    %255 = vector.multi_reduction <maximumf>, %254, %cst_108 [1] : vector<64x64xf32> to vector<64xf32>
    %256 = vector.shape_cast %255 : vector<64xf32> to vector<64x1xf32>
    %257 = vector.broadcast %256 : vector<64x1xf32> to vector<64x64xf32>
    %258 = arith.subf %254, %257 : vector<64x64xf32>
    %259 = math.exp %258 : vector<64x64xf32>
    %cst_109 = arith.constant dense<0.000000e+00> : vector<64xf32>
    %260 = vector.multi_reduction <add>, %259, %cst_109 [1] : vector<64x64xf32> to vector<64xf32>
    %261 = vector.shape_cast %260 : vector<64xf32> to vector<64x1xf32>
    %262 = vector.broadcast %261 : vector<64x1xf32> to vector<64x64xf32>
    %263 = arith.divf %259, %262 : vector<64x64xf32>
    %cst_110 = arith.constant dense<0.000000e+00> : vector<64x8xf32>
    %264 = tpu.matmul %263, %250, %cst_110 {dimension_numbers = #tpu.dot_dimension_numbers<[1], [0], [0], [1], [0, 0, 1, 1], [], []>} : vector<64x64xf32>, vector<64x8xf32>, vector<64x8xf32> -> vector<64x8xf32>
    %265 = tpu.concatenate %213, %230, %247, %264 in 1 : vector<64x8xf32>, vector<64x8xf32>, vector<64x8xf32>, vector<64x8xf32> -> vector<64x32xf32>
    %c1_111 = arith.constant 1 : index
    %c0_112 = arith.constant 0 : index
    %c0_113 = arith.constant 0 : index
    %266 = vector.load %arg7[%c1_111, %c0_112, %c0_113] : memref<2x32x32xf32, #tpu.memory_space<vmem>>, vector<1x32x32xf32>
    %267 = vector.shape_cast %266 : vector<1x32x32xf32> to vector<32x32xf32>
    %cst_114 = arith.constant dense<0.000000e+00> : vector<64x32xf32>
    %268 = tpu.matmul %265, %267, %cst_114 {dimension_numbers = #tpu.dot_dimension_numbers<[1], [0], [0], [1], [0, 0, 1, 1], [], []>} : vector<64x32xf32>, vector<32x32xf32>, vector<64x32xf32> -> vector<64x32xf32>
    %269 = arith.addf %189, %268 : vector<64x32xf32>
    %c1_115 = arith.constant 1 : index
    %c0_116 = arith.constant 0 : index
    %c0_117 = arith.constant 0 : index
    %270 = vector.load %arg8[%c1_115, %c0_116, %c0_117] : memref<2x1x32xf32, #tpu.memory_space<vmem>>, vector<1x1x32xf32>
    %271 = vector.shape_cast %270 : vector<1x1x32xf32> to vector<1x32xf32>
    %272 = vector.broadcast %271 : vector<1x32xf32> to vector<64x32xf32>
    %273 = arith.addf %269, %272 : vector<64x32xf32>
    %c1_118 = arith.constant 1 : index
    %c0_119 = arith.constant 0 : index
    %c0_120 = arith.constant 0 : index
    %274 = vector.load %arg9[%c1_118, %c0_119, %c0_120] : memref<2x1x32xf32, #tpu.memory_space<vmem>>, vector<1x1x32xf32>
    %275 = vector.shape_cast %274 : vector<1x1x32xf32> to vector<1x32xf32>
    %c1_121 = arith.constant 1 : index
    %c0_122 = arith.constant 0 : index
    %c0_123 = arith.constant 0 : index
    %276 = vector.load %arg10[%c1_121, %c0_122, %c0_123] : memref<2x1x32xf32, #tpu.memory_space<vmem>>, vector<1x1x32xf32>
    %277 = vector.shape_cast %276 : vector<1x1x32xf32> to vector<1x32xf32>
    %cst_124 = arith.constant dense<0.000000e+00> : vector<64xf32>
    %278 = vector.multi_reduction <add>, %273, %cst_124 [1] : vector<64x32xf32> to vector<64xf32>
    %279 = vector.shape_cast %278 : vector<64xf32> to vector<64x1xf32>
    %cst_125 = arith.constant 3.200000e+01 : f32
    %280 = vector.broadcast %cst_125 : f32 to vector<64x1xf32>
    %281 = arith.divf %279, %280 : vector<64x1xf32>
    %282 = vector.broadcast %281 : vector<64x1xf32> to vector<64x32xf32>
    %283 = arith.subf %273, %282 : vector<64x32xf32>
    %284 = arith.mulf %283, %283 : vector<64x32xf32>
    %cst_126 = arith.constant dense<0.000000e+00> : vector<64xf32>
    %285 = vector.multi_reduction <add>, %284, %cst_126 [1] : vector<64x32xf32> to vector<64xf32>
    %286 = vector.shape_cast %285 : vector<64xf32> to vector<64x1xf32>
    %cst_127 = arith.constant 3.200000e+01 : f32
    %287 = vector.broadcast %cst_127 : f32 to vector<64x1xf32>
    %288 = arith.divf %286, %287 : vector<64x1xf32>
    %289 = vector.broadcast %281 : vector<64x1xf32> to vector<64x32xf32>
    %290 = arith.subf %273, %289 : vector<64x32xf32>
    %cst_128 = arith.constant 9.99999996E-13 : f32
    %291 = vector.broadcast %cst_128 : f32 to vector<64x1xf32>
    %292 = arith.addf %288, %291 : vector<64x1xf32>
    %293 = math.rsqrt %292 : vector<64x1xf32>
    %294 = vector.broadcast %293 : vector<64x1xf32> to vector<64x32xf32>
    %295 = arith.mulf %290, %294 : vector<64x32xf32>
    %296 = vector.broadcast %275 : vector<1x32xf32> to vector<64x32xf32>
    %297 = arith.mulf %295, %296 : vector<64x32xf32>
    %298 = vector.broadcast %277 : vector<1x32xf32> to vector<64x32xf32>
    %299 = arith.addf %297, %298 : vector<64x32xf32>
    %c1_129 = arith.constant 1 : index
    %c0_130 = arith.constant 0 : index
    %c0_131 = arith.constant 0 : index
    %300 = vector.load %arg11[%c1_129, %c0_130, %c0_131] : memref<2x32x64xf32, #tpu.memory_space<vmem>>, vector<1x32x64xf32>
    %301 = vector.shape_cast %300 : vector<1x32x64xf32> to vector<32x64xf32>
    %cst_132 = arith.constant dense<0.000000e+00> : vector<64x64xf32>
    %302 = tpu.matmul %299, %301, %cst_132 {dimension_numbers = #tpu.dot_dimension_numbers<[1], [0], [0], [1], [0, 0, 1, 1], [], []>} : vector<64x32xf32>, vector<32x64xf32>, vector<64x64xf32> -> vector<64x64xf32>
    %c1_133 = arith.constant 1 : index
    %c0_134 = arith.constant 0 : index
    %c0_135 = arith.constant 0 : index
    %303 = vector.load %arg12[%c1_133, %c0_134, %c0_135] : memref<2x1x64xf32, #tpu.memory_space<vmem>>, vector<1x1x64xf32>
    %304 = vector.shape_cast %303 : vector<1x1x64xf32> to vector<1x64xf32>
    %305 = vector.broadcast %304 : vector<1x64xf32> to vector<64x64xf32>
    %306 = arith.addf %302, %305 : vector<64x64xf32>
    %cst_136 = arith.constant 5.000000e-01 : f32
    %307 = vector.broadcast %cst_136 : f32 to vector<64x64xf32>
    %308 = arith.mulf %307, %306 : vector<64x64xf32>
    %cst_137 = arith.constant 4.471500e-02 : f32
    %309 = vector.broadcast %cst_137 : f32 to vector<64x64xf32>
    %310 = arith.mulf %309, %306 : vector<64x64xf32>
    %311 = arith.mulf %310, %306 : vector<64x64xf32>
    %312 = arith.mulf %311, %306 : vector<64x64xf32>
    %313 = arith.addf %306, %312 : vector<64x64xf32>
    %cst_138 = arith.constant 0.797884583 : f32
    %314 = vector.broadcast %cst_138 : f32 to vector<64x64xf32>
    %315 = arith.mulf %314, %313 : vector<64x64xf32>
    %316 = math.tanh %315 : vector<64x64xf32>
    %cst_139 = arith.constant 1.000000e+00 : f32
    %317 = vector.broadcast %cst_139 : f32 to vector<64x64xf32>
    %318 = arith.addf %317, %316 : vector<64x64xf32>
    %319 = arith.mulf %308, %318 : vector<64x64xf32>
    %c1_140 = arith.constant 1 : index
    %c0_141 = arith.constant 0 : index
    %c0_142 = arith.constant 0 : index
    %320 = vector.load %arg13[%c1_140, %c0_141, %c0_142] : memref<2x64x32xf32, #tpu.memory_space<vmem>>, vector<1x64x32xf32>
    %321 = vector.shape_cast %320 : vector<1x64x32xf32> to vector<64x32xf32>
    %cst_143 = arith.constant dense<0.000000e+00> : vector<64x32xf32>
    %322 = tpu.matmul %319, %321, %cst_143 {dimension_numbers = #tpu.dot_dimension_numbers<[1], [0], [0], [1], [0, 0, 1, 1], [], []>} : vector<64x64xf32>, vector<64x32xf32>, vector<64x32xf32> -> vector<64x32xf32>
    %c1_144 = arith.constant 1 : index
    %c0_145 = arith.constant 0 : index
    %c0_146 = arith.constant 0 : index
    %323 = vector.load %arg14[%c1_144, %c0_145, %c0_146] : memref<2x1x32xf32, #tpu.memory_space<vmem>>, vector<1x1x32xf32>
    %324 = vector.shape_cast %323 : vector<1x1x32xf32> to vector<1x32xf32>
    %325 = vector.broadcast %324 : vector<1x32xf32> to vector<64x32xf32>
    %326 = arith.addf %322, %325 : vector<64x32xf32>
    %327 = arith.addf %299, %326 : vector<64x32xf32>
    %c1_147 = arith.constant 1 : index
    %c0_148 = arith.constant 0 : index
    %c0_149 = arith.constant 0 : index
    %328 = vector.load %arg15[%c1_147, %c0_148, %c0_149] : memref<2x1x32xf32, #tpu.memory_space<vmem>>, vector<1x1x32xf32>
    %329 = vector.shape_cast %328 : vector<1x1x32xf32> to vector<1x32xf32>
    %c1_150 = arith.constant 1 : index
    %c0_151 = arith.constant 0 : index
    %c0_152 = arith.constant 0 : index
    %330 = vector.load %arg16[%c1_150, %c0_151, %c0_152] : memref<2x1x32xf32, #tpu.memory_space<vmem>>, vector<1x1x32xf32>
    %331 = vector.shape_cast %330 : vector<1x1x32xf32> to vector<1x32xf32>
    %cst_153 = arith.constant dense<0.000000e+00> : vector<64xf32>
    %332 = vector.multi_reduction <add>, %327, %cst_153 [1] : vector<64x32xf32> to vector<64xf32>
    %333 = vector.shape_cast %332 : vector<64xf32> to vector<64x1xf32>
    %cst_154 = arith.constant 3.200000e+01 : f32
    %334 = vector.broadcast %cst_154 : f32 to vector<64x1xf32>
    %335 = arith.divf %333, %334 : vector<64x1xf32>
    %336 = vector.broadcast %335 : vector<64x1xf32> to vector<64x32xf32>
    %337 = arith.subf %327, %336 : vector<64x32xf32>
    %338 = arith.mulf %337, %337 : vector<64x32xf32>
    %cst_155 = arith.constant dense<0.000000e+00> : vector<64xf32>
    %339 = vector.multi_reduction <add>, %338, %cst_155 [1] : vector<64x32xf32> to vector<64xf32>
    %340 = vector.shape_cast %339 : vector<64xf32> to vector<64x1xf32>
    %cst_156 = arith.constant 3.200000e+01 : f32
    %341 = vector.broadcast %cst_156 : f32 to vector<64x1xf32>
    %342 = arith.divf %340, %341 : vector<64x1xf32>
    %343 = vector.broadcast %335 : vector<64x1xf32> to vector<64x32xf32>
    %344 = arith.subf %327, %343 : vector<64x32xf32>
    %cst_157 = arith.constant 9.99999996E-13 : f32
    %345 = vector.broadcast %cst_157 : f32 to vector<64x1xf32>
    %346 = arith.addf %342, %345 : vector<64x1xf32>
    %347 = math.rsqrt %346 : vector<64x1xf32>
    %348 = vector.broadcast %347 : vector<64x1xf32> to vector<64x32xf32>
    %349 = arith.mulf %344, %348 : vector<64x32xf32>
    %350 = vector.broadcast %329 : vector<1x32xf32> to vector<64x32xf32>
    %351 = arith.mulf %349, %350 : vector<64x32xf32>
    %352 = vector.broadcast %331 : vector<1x32xf32> to vector<64x32xf32>
    %353 = arith.addf %351, %352 : vector<64x32xf32>
    %c0_158 = arith.constant 0 : index
    %c0_159 = arith.constant 0 : index
    %354 = vector.load %arg2[%c0_158, %c0_159] : memref<8x64xf32, #tpu.memory_space<vmem>>, vector<8x64xf32>
    %cst_160 = arith.constant dense<0.000000e+00> : vector<8x32xf32>
    %355 = tpu.matmul %354, %353, %cst_160 {dimension_numbers = #tpu.dot_dimension_numbers<[1], [0], [0], [1], [0, 0, 1, 1], [], []>} : vector<8x64xf32>, vector<64x32xf32>, vector<8x32xf32> -> vector<8x32xf32>
    %c0_161 = arith.constant 0 : index
    %c0_162 = arith.constant 0 : index
    %356 = vector.load %arg17[%c0_161, %c0_162] : memref<32x32xf32, #tpu.memory_space<vmem>>, vector<32x32xf32>
    %cst_163 = arith.constant dense<0.000000e+00> : vector<8x32xf32>
    %357 = tpu.matmul %355, %356, %cst_163 {dimension_numbers = #tpu.dot_dimension_numbers<[1], [0], [0], [1], [0, 0, 1, 1], [], []>} : vector<8x32xf32>, vector<32x32xf32>, vector<8x32xf32> -> vector<8x32xf32>
    %c0_164 = arith.constant 0 : index
    %c0_165 = arith.constant 0 : index
    %358 = vector.load %arg18[%c0_164, %c0_165] : memref<1x32xf32, #tpu.memory_space<vmem>>, vector<1x32xf32>
    %359 = vector.broadcast %358 : vector<1x32xf32> to vector<8x32xf32>
    %360 = arith.addf %357, %359 : vector<8x32xf32>
    %361 = math.tanh %360 : vector<8x32xf32>
    %c0_166 = arith.constant 0 : index
    %c0_167 = arith.constant 0 : index
    %362 = vector.load %arg19[%c0_166, %c0_167] : memref<32x96xf32, #tpu.memory_space<vmem>>, vector<32x96xf32>
    %cst_168 = arith.constant dense<0.000000e+00> : vector<8x96xf32>
    %363 = tpu.matmul %361, %362, %cst_168 {dimension_numbers = #tpu.dot_dimension_numbers<[1], [0], [0], [1], [0, 0, 1, 1], [], []>} : vector<8x32xf32>, vector<32x96xf32>, vector<8x96xf32> -> vector<8x96xf32>
    %c0_169 = arith.constant 0 : index
    %c0_170 = arith.constant 0 : index
    %364 = vector.load %arg20[%c0_169, %c0_170] : memref<1x96xf32, #tpu.memory_space<vmem>>, vector<1x96xf32>
    %365 = vector.broadcast %364 : vector<1x96xf32> to vector<8x96xf32>
    %366 = arith.addf %363, %365 : vector<8x96xf32>
    %c0_171 = arith.constant 0 : index
    %c0_172 = arith.constant 0 : index
    %c0_173 = arith.constant 0 : index
    %367 = vector.load %arg21[%c0_171, %c0_172, %c0_173] : memref<2x16x48xf32, #tpu.memory_space<vmem>>, vector<1x16x48xf32>
    %368 = vector.shape_cast %367 : vector<1x16x48xf32> to vector<16x48xf32>
    %c0_174 = arith.constant 0 : index
    %c0_175 = arith.constant 0 : index
    %c0_176 = arith.constant 0 : index
    %369 = vector.load %arg22[%c0_174, %c0_175, %c0_176] : memref<2x1x48xf32, #tpu.memory_space<vmem>>, vector<1x1x48xf32>
    %370 = vector.shape_cast %369 : vector<1x1x48xf32> to vector<1x48xf32>
    %cst_177 = arith.constant 0.000000e+00 : f32
    %371 = vector.broadcast %cst_177 : f32 to vector<2x16xf32>
    %372 = vector.extract_strided_slice %366 {offsets = [0, 0], sizes = [2, 48], strides = [1, 1]} : vector<8x96xf32> to vector<2x48xf32>
    %cst_178 = arith.constant dense<0.000000e+00> : vector<2x48xf32>
    %373 = tpu.matmul %371, %368, %cst_178 {dimension_numbers = #tpu.dot_dimension_numbers<[1], [0], [0], [1], [0, 0, 1, 1], [], []>} : vector<2x16xf32>, vector<16x48xf32>, vector<2x48xf32> -> vector<2x48xf32>
    %374 = vector.broadcast %370 : vector<1x48xf32> to vector<2x48xf32>
    %375 = arith.addf %373, %374 : vector<2x48xf32>
    %376 = vector.extract_strided_slice %372 {offsets = [0, 0], sizes = [2, 32], strides = [1, 1]} : vector<2x48xf32> to vector<2x32xf32>
    %377 = vector.extract_strided_slice %375 {offsets = [0, 0], sizes = [2, 32], strides = [1, 1]} : vector<2x48xf32> to vector<2x32xf32>
    %378 = arith.addf %376, %377 : vector<2x32xf32>
    %379 = arith.negf %378 : vector<2x32xf32>
    %380 = math.exp %379 : vector<2x32xf32>
    %cst_179 = arith.constant 1.000000e+00 : f32
    %381 = vector.broadcast %cst_179 : f32 to vector<2x32xf32>
    %382 = arith.addf %381, %380 : vector<2x32xf32>
    %383 = arith.divf %381, %382 : vector<2x32xf32>
    %384 = vector.extract_strided_slice %383 {offsets = [0, 0], sizes = [2, 16], strides = [1, 1]} : vector<2x32xf32> to vector<2x16xf32>
    %385 = vector.extract_strided_slice %383 {offsets = [0, 16], sizes = [2, 16], strides = [1, 1]} : vector<2x32xf32> to vector<2x16xf32>
    %386 = vector.extract_strided_slice %372 {offsets = [0, 32], sizes = [2, 16], strides = [1, 1]} : vector<2x48xf32> to vector<2x16xf32>
    %387 = vector.extract_strided_slice %375 {offsets = [0, 32], sizes = [2, 16], strides = [1, 1]} : vector<2x48xf32> to vector<2x16xf32>
    %388 = arith.mulf %384, %387 : vector<2x16xf32>
    %389 = arith.addf %386, %388 : vector<2x16xf32>
    %390 = math.tanh %389 : vector<2x16xf32>
    %cst_180 = arith.constant 1.000000e+00 : f32
    %391 = vector.broadcast %cst_180 : f32 to vector<2x16xf32>
    %392 = arith.subf %391, %385 : vector<2x16xf32>
    %393 = arith.mulf %392, %390 : vector<2x16xf32>
    %394 = arith.mulf %385, %371 : vector<2x16xf32>
    %395 = arith.addf %393, %394 : vector<2x16xf32>
    %396 = vector.extract_strided_slice %366 {offsets = [2, 0], sizes = [2, 48], strides = [1, 1]} : vector<8x96xf32> to vector<2x48xf32>
    %cst_181 = arith.constant dense<0.000000e+00> : vector<2x48xf32>
    %397 = tpu.matmul %395, %368, %cst_181 {dimension_numbers = #tpu.dot_dimension_numbers<[1], [0], [0], [1], [0, 0, 1, 1], [], []>} : vector<2x16xf32>, vector<16x48xf32>, vector<2x48xf32> -> vector<2x48xf32>
    %398 = vector.broadcast %370 : vector<1x48xf32> to vector<2x48xf32>
    %399 = arith.addf %397, %398 : vector<2x48xf32>
    %400 = vector.extract_strided_slice %396 {offsets = [0, 0], sizes = [2, 32], strides = [1, 1]} : vector<2x48xf32> to vector<2x32xf32>
    %401 = vector.extract_strided_slice %399 {offsets = [0, 0], sizes = [2, 32], strides = [1, 1]} : vector<2x48xf32> to vector<2x32xf32>
    %402 = arith.addf %400, %401 : vector<2x32xf32>
    %403 = arith.negf %402 : vector<2x32xf32>
    %404 = math.exp %403 : vector<2x32xf32>
    %cst_182 = arith.constant 1.000000e+00 : f32
    %405 = vector.broadcast %cst_182 : f32 to vector<2x32xf32>
    %406 = arith.addf %405, %404 : vector<2x32xf32>
    %407 = arith.divf %405, %406 : vector<2x32xf32>
    %408 = vector.extract_strided_slice %407 {offsets = [0, 0], sizes = [2, 16], strides = [1, 1]} : vector<2x32xf32> to vector<2x16xf32>
    %409 = vector.extract_strided_slice %407 {offsets = [0, 16], sizes = [2, 16], strides = [1, 1]} : vector<2x32xf32> to vector<2x16xf32>
    %410 = vector.extract_strided_slice %396 {offsets = [0, 32], sizes = [2, 16], strides = [1, 1]} : vector<2x48xf32> to vector<2x16xf32>
    %411 = vector.extract_strided_slice %399 {offsets = [0, 32], sizes = [2, 16], strides = [1, 1]} : vector<2x48xf32> to vector<2x16xf32>
    %412 = arith.mulf %408, %411 : vector<2x16xf32>
    %413 = arith.addf %410, %412 : vector<2x16xf32>
    %414 = math.tanh %413 : vector<2x16xf32>
    %cst_183 = arith.constant 1.000000e+00 : f32
    %415 = vector.broadcast %cst_183 : f32 to vector<2x16xf32>
    %416 = arith.subf %415, %409 : vector<2x16xf32>
    %417 = arith.mulf %416, %414 : vector<2x16xf32>
    %418 = arith.mulf %409, %395 : vector<2x16xf32>
    %419 = arith.addf %417, %418 : vector<2x16xf32>
    %420 = vector.extract_strided_slice %366 {offsets = [4, 0], sizes = [2, 48], strides = [1, 1]} : vector<8x96xf32> to vector<2x48xf32>
    %cst_184 = arith.constant dense<0.000000e+00> : vector<2x48xf32>
    %421 = tpu.matmul %419, %368, %cst_184 {dimension_numbers = #tpu.dot_dimension_numbers<[1], [0], [0], [1], [0, 0, 1, 1], [], []>} : vector<2x16xf32>, vector<16x48xf32>, vector<2x48xf32> -> vector<2x48xf32>
    %422 = vector.broadcast %370 : vector<1x48xf32> to vector<2x48xf32>
    %423 = arith.addf %421, %422 : vector<2x48xf32>
    %424 = vector.extract_strided_slice %420 {offsets = [0, 0], sizes = [2, 32], strides = [1, 1]} : vector<2x48xf32> to vector<2x32xf32>
    %425 = vector.extract_strided_slice %423 {offsets = [0, 0], sizes = [2, 32], strides = [1, 1]} : vector<2x48xf32> to vector<2x32xf32>
    %426 = arith.addf %424, %425 : vector<2x32xf32>
    %427 = arith.negf %426 : vector<2x32xf32>
    %428 = math.exp %427 : vector<2x32xf32>
    %cst_185 = arith.constant 1.000000e+00 : f32
    %429 = vector.broadcast %cst_185 : f32 to vector<2x32xf32>
    %430 = arith.addf %429, %428 : vector<2x32xf32>
    %431 = arith.divf %429, %430 : vector<2x32xf32>
    %432 = vector.extract_strided_slice %431 {offsets = [0, 0], sizes = [2, 16], strides = [1, 1]} : vector<2x32xf32> to vector<2x16xf32>
    %433 = vector.extract_strided_slice %431 {offsets = [0, 16], sizes = [2, 16], strides = [1, 1]} : vector<2x32xf32> to vector<2x16xf32>
    %434 = vector.extract_strided_slice %420 {offsets = [0, 32], sizes = [2, 16], strides = [1, 1]} : vector<2x48xf32> to vector<2x16xf32>
    %435 = vector.extract_strided_slice %423 {offsets = [0, 32], sizes = [2, 16], strides = [1, 1]} : vector<2x48xf32> to vector<2x16xf32>
    %436 = arith.mulf %432, %435 : vector<2x16xf32>
    %437 = arith.addf %434, %436 : vector<2x16xf32>
    %438 = math.tanh %437 : vector<2x16xf32>
    %cst_186 = arith.constant 1.000000e+00 : f32
    %439 = vector.broadcast %cst_186 : f32 to vector<2x16xf32>
    %440 = arith.subf %439, %433 : vector<2x16xf32>
    %441 = arith.mulf %440, %438 : vector<2x16xf32>
    %442 = arith.mulf %433, %419 : vector<2x16xf32>
    %443 = arith.addf %441, %442 : vector<2x16xf32>
    %444 = vector.extract_strided_slice %366 {offsets = [6, 0], sizes = [2, 48], strides = [1, 1]} : vector<8x96xf32> to vector<2x48xf32>
    %cst_187 = arith.constant dense<0.000000e+00> : vector<2x48xf32>
    %445 = tpu.matmul %443, %368, %cst_187 {dimension_numbers = #tpu.dot_dimension_numbers<[1], [0], [0], [1], [0, 0, 1, 1], [], []>} : vector<2x16xf32>, vector<16x48xf32>, vector<2x48xf32> -> vector<2x48xf32>
    %446 = vector.broadcast %370 : vector<1x48xf32> to vector<2x48xf32>
    %447 = arith.addf %445, %446 : vector<2x48xf32>
    %448 = vector.extract_strided_slice %444 {offsets = [0, 0], sizes = [2, 32], strides = [1, 1]} : vector<2x48xf32> to vector<2x32xf32>
    %449 = vector.extract_strided_slice %447 {offsets = [0, 0], sizes = [2, 32], strides = [1, 1]} : vector<2x48xf32> to vector<2x32xf32>
    %450 = arith.addf %448, %449 : vector<2x32xf32>
    %451 = arith.negf %450 : vector<2x32xf32>
    %452 = math.exp %451 : vector<2x32xf32>
    %cst_188 = arith.constant 1.000000e+00 : f32
    %453 = vector.broadcast %cst_188 : f32 to vector<2x32xf32>
    %454 = arith.addf %453, %452 : vector<2x32xf32>
    %455 = arith.divf %453, %454 : vector<2x32xf32>
    %456 = vector.extract_strided_slice %455 {offsets = [0, 0], sizes = [2, 16], strides = [1, 1]} : vector<2x32xf32> to vector<2x16xf32>
    %457 = vector.extract_strided_slice %455 {offsets = [0, 16], sizes = [2, 16], strides = [1, 1]} : vector<2x32xf32> to vector<2x16xf32>
    %458 = vector.extract_strided_slice %444 {offsets = [0, 32], sizes = [2, 16], strides = [1, 1]} : vector<2x48xf32> to vector<2x16xf32>
    %459 = vector.extract_strided_slice %447 {offsets = [0, 32], sizes = [2, 16], strides = [1, 1]} : vector<2x48xf32> to vector<2x16xf32>
    %460 = arith.mulf %456, %459 : vector<2x16xf32>
    %461 = arith.addf %458, %460 : vector<2x16xf32>
    %462 = math.tanh %461 : vector<2x16xf32>
    %cst_189 = arith.constant 1.000000e+00 : f32
    %463 = vector.broadcast %cst_189 : f32 to vector<2x16xf32>
    %464 = arith.subf %463, %457 : vector<2x16xf32>
    %465 = arith.mulf %464, %462 : vector<2x16xf32>
    %466 = arith.mulf %457, %443 : vector<2x16xf32>
    %467 = arith.addf %465, %466 : vector<2x16xf32>
    %c1_190 = arith.constant 1 : index
    %c0_191 = arith.constant 0 : index
    %c0_192 = arith.constant 0 : index
    %468 = vector.load %arg21[%c1_190, %c0_191, %c0_192] : memref<2x16x48xf32, #tpu.memory_space<vmem>>, vector<1x16x48xf32>
    %469 = vector.shape_cast %468 : vector<1x16x48xf32> to vector<16x48xf32>
    %c1_193 = arith.constant 1 : index
    %c0_194 = arith.constant 0 : index
    %c0_195 = arith.constant 0 : index
    %470 = vector.load %arg22[%c1_193, %c0_194, %c0_195] : memref<2x1x48xf32, #tpu.memory_space<vmem>>, vector<1x1x48xf32>
    %471 = vector.shape_cast %470 : vector<1x1x48xf32> to vector<1x48xf32>
    %cst_196 = arith.constant 0.000000e+00 : f32
    %472 = vector.broadcast %cst_196 : f32 to vector<2x16xf32>
    %473 = vector.extract_strided_slice %366 {offsets = [6, 48], sizes = [2, 48], strides = [1, 1]} : vector<8x96xf32> to vector<2x48xf32>
    %cst_197 = arith.constant dense<0.000000e+00> : vector<2x48xf32>
    %474 = tpu.matmul %472, %469, %cst_197 {dimension_numbers = #tpu.dot_dimension_numbers<[1], [0], [0], [1], [0, 0, 1, 1], [], []>} : vector<2x16xf32>, vector<16x48xf32>, vector<2x48xf32> -> vector<2x48xf32>
    %475 = vector.broadcast %471 : vector<1x48xf32> to vector<2x48xf32>
    %476 = arith.addf %474, %475 : vector<2x48xf32>
    %477 = vector.extract_strided_slice %473 {offsets = [0, 0], sizes = [2, 32], strides = [1, 1]} : vector<2x48xf32> to vector<2x32xf32>
    %478 = vector.extract_strided_slice %476 {offsets = [0, 0], sizes = [2, 32], strides = [1, 1]} : vector<2x48xf32> to vector<2x32xf32>
    %479 = arith.addf %477, %478 : vector<2x32xf32>
    %480 = arith.negf %479 : vector<2x32xf32>
    %481 = math.exp %480 : vector<2x32xf32>
    %cst_198 = arith.constant 1.000000e+00 : f32
    %482 = vector.broadcast %cst_198 : f32 to vector<2x32xf32>
    %483 = arith.addf %482, %481 : vector<2x32xf32>
    %484 = arith.divf %482, %483 : vector<2x32xf32>
    %485 = vector.extract_strided_slice %484 {offsets = [0, 0], sizes = [2, 16], strides = [1, 1]} : vector<2x32xf32> to vector<2x16xf32>
    %486 = vector.extract_strided_slice %484 {offsets = [0, 16], sizes = [2, 16], strides = [1, 1]} : vector<2x32xf32> to vector<2x16xf32>
    %487 = vector.extract_strided_slice %473 {offsets = [0, 32], sizes = [2, 16], strides = [1, 1]} : vector<2x48xf32> to vector<2x16xf32>
    %488 = vector.extract_strided_slice %476 {offsets = [0, 32], sizes = [2, 16], strides = [1, 1]} : vector<2x48xf32> to vector<2x16xf32>
    %489 = arith.mulf %485, %488 : vector<2x16xf32>
    %490 = arith.addf %487, %489 : vector<2x16xf32>
    %491 = math.tanh %490 : vector<2x16xf32>
    %cst_199 = arith.constant 1.000000e+00 : f32
    %492 = vector.broadcast %cst_199 : f32 to vector<2x16xf32>
    %493 = arith.subf %492, %486 : vector<2x16xf32>
    %494 = arith.mulf %493, %491 : vector<2x16xf32>
    %495 = arith.mulf %486, %472 : vector<2x16xf32>
    %496 = arith.addf %494, %495 : vector<2x16xf32>
    %497 = vector.extract_strided_slice %366 {offsets = [4, 48], sizes = [2, 48], strides = [1, 1]} : vector<8x96xf32> to vector<2x48xf32>
    %cst_200 = arith.constant dense<0.000000e+00> : vector<2x48xf32>
    %498 = tpu.matmul %496, %469, %cst_200 {dimension_numbers = #tpu.dot_dimension_numbers<[1], [0], [0], [1], [0, 0, 1, 1], [], []>} : vector<2x16xf32>, vector<16x48xf32>, vector<2x48xf32> -> vector<2x48xf32>
    %499 = vector.broadcast %471 : vector<1x48xf32> to vector<2x48xf32>
    %500 = arith.addf %498, %499 : vector<2x48xf32>
    %501 = vector.extract_strided_slice %497 {offsets = [0, 0], sizes = [2, 32], strides = [1, 1]} : vector<2x48xf32> to vector<2x32xf32>
    %502 = vector.extract_strided_slice %500 {offsets = [0, 0], sizes = [2, 32], strides = [1, 1]} : vector<2x48xf32> to vector<2x32xf32>
    %503 = arith.addf %501, %502 : vector<2x32xf32>
    %504 = arith.negf %503 : vector<2x32xf32>
    %505 = math.exp %504 : vector<2x32xf32>
    %cst_201 = arith.constant 1.000000e+00 : f32
    %506 = vector.broadcast %cst_201 : f32 to vector<2x32xf32>
    %507 = arith.addf %506, %505 : vector<2x32xf32>
    %508 = arith.divf %506, %507 : vector<2x32xf32>
    %509 = vector.extract_strided_slice %508 {offsets = [0, 0], sizes = [2, 16], strides = [1, 1]} : vector<2x32xf32> to vector<2x16xf32>
    %510 = vector.extract_strided_slice %508 {offsets = [0, 16], sizes = [2, 16], strides = [1, 1]} : vector<2x32xf32> to vector<2x16xf32>
    %511 = vector.extract_strided_slice %497 {offsets = [0, 32], sizes = [2, 16], strides = [1, 1]} : vector<2x48xf32> to vector<2x16xf32>
    %512 = vector.extract_strided_slice %500 {offsets = [0, 32], sizes = [2, 16], strides = [1, 1]} : vector<2x48xf32> to vector<2x16xf32>
    %513 = arith.mulf %509, %512 : vector<2x16xf32>
    %514 = arith.addf %511, %513 : vector<2x16xf32>
    %515 = math.tanh %514 : vector<2x16xf32>
    %cst_202 = arith.constant 1.000000e+00 : f32
    %516 = vector.broadcast %cst_202 : f32 to vector<2x16xf32>
    %517 = arith.subf %516, %510 : vector<2x16xf32>
    %518 = arith.mulf %517, %515 : vector<2x16xf32>
    %519 = arith.mulf %510, %496 : vector<2x16xf32>
    %520 = arith.addf %518, %519 : vector<2x16xf32>
    %521 = vector.extract_strided_slice %366 {offsets = [2, 48], sizes = [2, 48], strides = [1, 1]} : vector<8x96xf32> to vector<2x48xf32>
    %cst_203 = arith.constant dense<0.000000e+00> : vector<2x48xf32>
    %522 = tpu.matmul %520, %469, %cst_203 {dimension_numbers = #tpu.dot_dimension_numbers<[1], [0], [0], [1], [0, 0, 1, 1], [], []>} : vector<2x16xf32>, vector<16x48xf32>, vector<2x48xf32> -> vector<2x48xf32>
    %523 = vector.broadcast %471 : vector<1x48xf32> to vector<2x48xf32>
    %524 = arith.addf %522, %523 : vector<2x48xf32>
    %525 = vector.extract_strided_slice %521 {offsets = [0, 0], sizes = [2, 32], strides = [1, 1]} : vector<2x48xf32> to vector<2x32xf32>
    %526 = vector.extract_strided_slice %524 {offsets = [0, 0], sizes = [2, 32], strides = [1, 1]} : vector<2x48xf32> to vector<2x32xf32>
    %527 = arith.addf %525, %526 : vector<2x32xf32>
    %528 = arith.negf %527 : vector<2x32xf32>
    %529 = math.exp %528 : vector<2x32xf32>
    %cst_204 = arith.constant 1.000000e+00 : f32
    %530 = vector.broadcast %cst_204 : f32 to vector<2x32xf32>
    %531 = arith.addf %530, %529 : vector<2x32xf32>
    %532 = arith.divf %530, %531 : vector<2x32xf32>
    %533 = vector.extract_strided_slice %532 {offsets = [0, 0], sizes = [2, 16], strides = [1, 1]} : vector<2x32xf32> to vector<2x16xf32>
    %534 = vector.extract_strided_slice %532 {offsets = [0, 16], sizes = [2, 16], strides = [1, 1]} : vector<2x32xf32> to vector<2x16xf32>
    %535 = vector.extract_strided_slice %521 {offsets = [0, 32], sizes = [2, 16], strides = [1, 1]} : vector<2x48xf32> to vector<2x16xf32>
    %536 = vector.extract_strided_slice %524 {offsets = [0, 32], sizes = [2, 16], strides = [1, 1]} : vector<2x48xf32> to vector<2x16xf32>
    %537 = arith.mulf %533, %536 : vector<2x16xf32>
    %538 = arith.addf %535, %537 : vector<2x16xf32>
    %539 = math.tanh %538 : vector<2x16xf32>
    %cst_205 = arith.constant 1.000000e+00 : f32
    %540 = vector.broadcast %cst_205 : f32 to vector<2x16xf32>
    %541 = arith.subf %540, %534 : vector<2x16xf32>
    %542 = arith.mulf %541, %539 : vector<2x16xf32>
    %543 = arith.mulf %534, %520 : vector<2x16xf32>
    %544 = arith.addf %542, %543 : vector<2x16xf32>
    %545 = vector.extract_strided_slice %366 {offsets = [0, 48], sizes = [2, 48], strides = [1, 1]} : vector<8x96xf32> to vector<2x48xf32>
    %cst_206 = arith.constant dense<0.000000e+00> : vector<2x48xf32>
    %546 = tpu.matmul %544, %469, %cst_206 {dimension_numbers = #tpu.dot_dimension_numbers<[1], [0], [0], [1], [0, 0, 1, 1], [], []>} : vector<2x16xf32>, vector<16x48xf32>, vector<2x48xf32> -> vector<2x48xf32>
    %547 = vector.broadcast %471 : vector<1x48xf32> to vector<2x48xf32>
    %548 = arith.addf %546, %547 : vector<2x48xf32>
    %549 = vector.extract_strided_slice %545 {offsets = [0, 0], sizes = [2, 32], strides = [1, 1]} : vector<2x48xf32> to vector<2x32xf32>
    %550 = vector.extract_strided_slice %548 {offsets = [0, 0], sizes = [2, 32], strides = [1, 1]} : vector<2x48xf32> to vector<2x32xf32>
    %551 = arith.addf %549, %550 : vector<2x32xf32>
    %552 = arith.negf %551 : vector<2x32xf32>
    %553 = math.exp %552 : vector<2x32xf32>
    %cst_207 = arith.constant 1.000000e+00 : f32
    %554 = vector.broadcast %cst_207 : f32 to vector<2x32xf32>
    %555 = arith.addf %554, %553 : vector<2x32xf32>
    %556 = arith.divf %554, %555 : vector<2x32xf32>
    %557 = vector.extract_strided_slice %556 {offsets = [0, 0], sizes = [2, 16], strides = [1, 1]} : vector<2x32xf32> to vector<2x16xf32>
    %558 = vector.extract_strided_slice %556 {offsets = [0, 16], sizes = [2, 16], strides = [1, 1]} : vector<2x32xf32> to vector<2x16xf32>
    %559 = vector.extract_strided_slice %545 {offsets = [0, 32], sizes = [2, 16], strides = [1, 1]} : vector<2x48xf32> to vector<2x16xf32>
    %560 = vector.extract_strided_slice %548 {offsets = [0, 32], sizes = [2, 16], strides = [1, 1]} : vector<2x48xf32> to vector<2x16xf32>
    %561 = arith.mulf %557, %560 : vector<2x16xf32>
    %562 = arith.addf %559, %561 : vector<2x16xf32>
    %563 = math.tanh %562 : vector<2x16xf32>
    %cst_208 = arith.constant 1.000000e+00 : f32
    %564 = vector.broadcast %cst_208 : f32 to vector<2x16xf32>
    %565 = arith.subf %564, %558 : vector<2x16xf32>
    %566 = arith.mulf %565, %563 : vector<2x16xf32>
    %567 = arith.mulf %558, %544 : vector<2x16xf32>
    %568 = arith.addf %566, %567 : vector<2x16xf32>
    %c0_209 = arith.constant 0 : index
    %c0_210 = arith.constant 0 : index
    %569 = vector.load %arg23[%c0_209, %c0_210] : memref<32x3xf32, #tpu.memory_space<vmem>>, vector<16x3xf32>
    %cst_211 = arith.constant dense<0.000000e+00> : vector<2x3xf32>
    %570 = tpu.matmul %467, %569, %cst_211 {dimension_numbers = #tpu.dot_dimension_numbers<[1], [0], [0], [1], [0, 0, 1, 1], [], []>} : vector<2x16xf32>, vector<16x3xf32>, vector<2x3xf32> -> vector<2x3xf32>
    %c16 = arith.constant 16 : index
    %c0_212 = arith.constant 0 : index
    %571 = vector.load %arg23[%c16, %c0_212] : memref<32x3xf32, #tpu.memory_space<vmem>>, vector<16x3xf32>
    %cst_213 = arith.constant dense<0.000000e+00> : vector<2x3xf32>
    %572 = tpu.matmul %568, %571, %cst_213 {dimension_numbers = #tpu.dot_dimension_numbers<[1], [0], [0], [1], [0, 0, 1, 1], [], []>} : vector<2x16xf32>, vector<16x3xf32>, vector<2x3xf32> -> vector<2x3xf32>
    %573 = arith.addf %570, %572 : vector<2x3xf32>
    %c0_214 = arith.constant 0 : index
    %c0_215 = arith.constant 0 : index
    %574 = vector.load %arg24[%c0_214, %c0_215] : memref<1x3xf32, #tpu.memory_space<vmem>>, vector<1x3xf32>
    %575 = vector.broadcast %574 : vector<1x3xf32> to vector<2x3xf32>
    %576 = arith.addf %573, %575 : vector<2x3xf32>
    %c0_216 = arith.constant 0 : index
    %c0_217 = arith.constant 0 : index
    %577 = vector.load %arg25[%c0_216, %c0_217] : memref<2x3xf32, #tpu.memory_space<vmem>>, vector<2x3xf32>
    tpu.vector_store %arg25[%c0_216, %c0_217], %576 {strides = array<i32>} : memref<2x3xf32, #tpu.memory_space<vmem>>, vector<2x3xf32>,
    return
  }
}

</mosaic_0001>

<llo_original>
// kernel: model_forward.1
$region0: #{model_forward.1}
  #allocation0 [shape = 'u32[]', space=smem, size = 0x4, offset = 0x4, fixed_abs, tag = 'smem constant byte address 0x4 - core index']
  #allocation1 [shape = 'u32[144,128]{1,0:T(1,128)}', space=vmem, size = 0x12000, scoped, tag = 'internal scratch']
  %s0 = inlined_call_operand.vmem [shape: f32[64,32], index: 0, kind: input, shape index: {}]
  %s1 = inlined_call_operand.vmem [shape: f32[64,64], index: 1, kind: input, shape index: {}]
  %s2 = inlined_call_operand.vmem [shape: f32[8,64], index: 2, kind: input, shape index: {}]
  %s3 = inlined_call_operand.vmem [shape: f32[1,32], index: 3, kind: input, shape index: {}]
  %s4 = inlined_call_operand.vmem [shape: f32[1,32], index: 4, kind: input, shape index: {}]
  %s5 = inlined_call_operand.vmem [shape: f32[2,32,96], index: 5, kind: input, shape index: {}]
  %s6 = inlined_call_operand.vmem [shape: f32[2,1,96], index: 6, kind: input, shape index: {}]
  %s7 = inlined_call_operand.vmem [shape: f32[2,32,32], index: 7, kind: input, shape index: {}]
  %s8 = inlined_call_operand.vmem [shape: f32[2,1,32], index: 8, kind: input, shape index: {}]
  %s9 = inlined_call_operand.vmem [shape: f32[2,1,32], index: 9, kind: input, shape index: {}]
  %s10 = inlined_call_operand.vmem [shape: f32[2,1,32], index: 10, kind: input, shape index: {}]
  %s11 = inlined_call_operand.vmem [shape: f32[2,32,64], index: 11, kind: input, shape index: {}]
  %s12 = inlined_call_operand.vmem [shape: f32[2,1,64], index: 12, kind: input, shape index: {}]
  %s13 = inlined_call_operand.vmem [shape: f32[2,64,32], index: 13, kind: input, shape index: {}]
  %s14 = inlined_call_operand.vmem [shape: f32[2,1,32], index: 14, kind: input, shape index: {}]
  %s15 = inlined_call_operand.vmem [shape: f32[2,1,32], index: 15, kind: input, shape index: {}]
  %s16 = inlined_call_operand.vmem [shape: f32[2,1,32], index: 16, kind: input, shape index: {}]
  %s17 = inlined_call_operand.vmem [shape: f32[32,32], index: 17, kind: input, shape index: {}]
  %s18 = inlined_call_operand.vmem [shape: f32[1,32], index: 18, kind: input, shape index: {}]
  %s19 = inlined_call_operand.vmem [shape: f32[32,96], index: 19, kind: input, shape index: {}]
  %s20 = inlined_call_operand.vmem [shape: f32[1,96], index: 20, kind: input, shape index: {}]
  %s21 = inlined_call_operand.vmem [shape: f32[2,16,48], index: 21, kind: input, shape index: {}]
  %s22 = inlined_call_operand.vmem [shape: f32[2,1,48], index: 22, kind: input, shape index: {}]
  %s23 = inlined_call_operand.vmem [shape: f32[32,3], index: 23, kind: input, shape index: {}]
  %s24 = inlined_call_operand.vmem [shape: f32[1,3], index: 24, kind: input, shape index: {}]
  %s25 = inlined_call_operand.hbm [shape: f32[2,3], index: 25, kind: output, shape index: {}]
  %s26 = sld [smem:[#allocation0]]
  $region110: #{model_forward.1} parent=0
    _
  %s28 = ssub.s32 1, %s26
  %s29 = scalar_select 0, %s28, %s26
  $region1: #{model_forward.1} parent=0
    #allocation2 [shape = 'u8[1024]{0}', space=vmem, size = 0x400, scoped, tag = 'output window, operand 0, single buffered']
    #allocation3 [shape = 's32[1]{0}', space=sflag, size = 0x4, scoped, tag = 'scoped memory for model_forward.1']
    %30 = vsyncpa [#allocation3], 0
    // Predicated region
    $region2: #{model_forward.1} parent=1 // pred_check
      _
    $region3: #{model_forward.1} parent=1 // pred_check_branch
      %32 = sbr.rel (0) target = $region5
    $region4: #{model_forward.1} parent=1 // pred_region
      _
    $region5: #{model_forward.1} parent=1 // pred_fallthru
      _
    // Predicated region
    $region6: #{model_forward.1} parent=1 // pred_check
      _
    $region7: #{model_forward.1} parent=1 // pred_check_branch
      %34 = sbr.rel (0) target = $region9
    $region8: #{model_forward.1} parent=1 // pred_region
      _
    $region9: #{model_forward.1} parent=1 // pred_fallthru
      _
    // Predicated region
    $region10: #{model_forward.1} parent=1 // pred_check
      _
    $region11: #{model_forward.1} parent=1 // pred_check_branch
      %36 = sbr.rel (0) target = $region13
    $region12: #{model_forward.1} parent=1 // pred_region
      _
    $region13: #{model_forward.1} parent=1 // pred_fallthru
      _
    // Predicated region
    $region14: #{model_forward.1} parent=1 // pred_check
      _
    $region15: #{model_forward.1} parent=1 // pred_check_branch
      %38 = sbr.rel (0) target = $region17
    $region16: #{model_forward.1} parent=1 // pred_region
      _
    $region17: #{model_forward.1} parent=1 // pred_fallthru
      _
    // Predicated region
    $region18: #{model_forward.1} parent=1 // pred_check
      _
    $region19: #{model_forward.1} parent=1 // pred_check_branch
      %40 = sbr.rel (0) target = $region21
    $region20: #{model_forward.1} parent=1 // pred_region
      _
    $region21: #{model_forward.1} parent=1 // pred_fallthru
      _
    // Predicated region
    $region22: #{model_forward.1} parent=1 // pred_check
      _
    $region23: #{model_forward.1} parent=1 // pred_check_branch
      %42 = sbr.rel (0) target = $region25
    $region24: #{model_forward.1} parent=1 // pred_region
      _
    $region25: #{model_forward.1} parent=1 // pred_fallthru
      _
    // Predicated region
    $region26: #{model_forward.1} parent=1 // pred_check
      _
    $region27: #{model_forward.1} parent=1 // pred_check_branch
      %44 = sbr.rel (0) target = $region29
    $region28: #{model_forward.1} parent=1 // pred_region
      _
    $region29: #{model_forward.1} parent=1 // pred_fallthru
      _
    // Predicated region
    $region30: #{model_forward.1} parent=1 // pred_check
      _
    $region31: #{model_forward.1} parent=1 // pred_check_branch
      %46 = sbr.rel (0) target = $region33
    $region32: #{model_forward.1} parent=1 // pred_region
      _
    $region33: #{model_forward.1} parent=1 // pred_fallthru
      _
    // Predicated region
    $region34: #{model_forward.1} parent=1 // pred_check
      _
    $region35: #{model_forward.1} parent=1 // pred_check_branch
      %48 = sbr.rel (0) target = $region37
    $region36: #{model_forward.1} parent=1 // pred_region
      _
    $region37: #{model_forward.1} parent=1 // pred_fallthru
      _
    // Predicated region
    $region38: #{model_forward.1} parent=1 // pred_check
      _
    $region39: #{model_forward.1} parent=1 // pred_check_branch
      %50 = sbr.rel (0) target = $region41
    $region40: #{model_forward.1} parent=1 // pred_region
      _
    $region41: #{model_forward.1} parent=1 // pred_fallthru
      _
    // Predicated region
    $region42: #{model_forward.1} parent=1 // pred_check
      _
    $region43: #{model_forward.1} parent=1 // pred_check_branch
      %52 = sbr.rel (0) target = $region45
    $region44: #{model_forward.1} parent=1 // pred_region
      _
    $region45: #{model_forward.1} parent=1 // pred_fallthru
      _
    // Predicated region
    $region46: #{model_forward.1} parent=1 // pred_check
      _
    $region47: #{model_forward.1} parent=1 // pred_check_branch
      %54 = sbr.rel (0) target = $region49
    $region48: #{model_forward.1} parent=1 // pred_region
      _
    $region49: #{model_forward.1} parent=1 // pred_fallthru
      _
    // Predicated region
    $region50: #{model_forward.1} parent=1 // pred_check
      _
    $region51: #{model_forward.1} parent=1 // pred_check_branch
      %56 = sbr.rel (0) target = $region53
    $region52: #{model_forward.1} parent=1 // pred_region
      _
    $region53: #{model_forward.1} parent=1 // pred_fallthru
      _
    // Predicated region
    $region54: #{model_forward.1} parent=1 // pred_check
      _
    $region55: #{model_forward.1} parent=1 // pred_check_branch
      %58 = sbr.rel (0) target = $region57
    $region56: #{model_forward.1} parent=1 // pred_region
      _
    $region57: #{model_forward.1} parent=1 // pred_fallthru
      _
    // Predicated region
    $region58: #{model_forward.1} parent=1 // pred_check
      _
    $region59: #{model_forward.1} parent=1 // pred_check_branch
      %60 = sbr.rel (0) target = $region61
    $region60: #{model_forward.1} parent=1 // pred_region
      _
    $region61: #{model_forward.1} parent=1 // pred_fallthru
      _
    // Predicated region
    $region62: #{model_forward.1} parent=1 // pred_check
      _
    $region63: #{model_forward.1} parent=1 // pred_check_branch
      %62 = sbr.rel (0) target = $region65
    $region64: #{model_forward.1} parent=1 // pred_region
      _
    $region65: #{model_forward.1} parent=1 // pred_fallthru
      _
    // Predicated region
    $region66: #{model_forward.1} parent=1 // pred_check
      _
    $region67: #{model_forward.1} parent=1 // pred_check_branch
      %64 = sbr.rel (0) target = $region69
    $region68: #{model_forward.1} parent=1 // pred_region
      _
    $region69: #{model_forward.1} parent=1 // pred_fallthru
      _
    // Predicated region
    $region70: #{model_forward.1} parent=1 // pred_check
      _
    $region71: #{model_forward.1} parent=1 // pred_check_branch
      %66 = sbr.rel (0) target = $region73
    $region72: #{model_forward.1} parent=1 // pred_region
      _
    $region73: #{model_forward.1} parent=1 // pred_fallthru
      _
    // Predicated region
    $region74: #{model_forward.1} parent=1 // pred_check
      _
    $region75: #{model_forward.1} parent=1 // pred_check_branch
      %68 = sbr.rel (0) target = $region77
    $region76: #{model_forward.1} parent=1 // pred_region
      _
    $region77: #{model_forward.1} parent=1 // pred_fallthru
      _
    // Predicated region
    $region78: #{model_forward.1} parent=1 // pred_check
      _
    $region79: #{model_forward.1} parent=1 // pred_check_branch
      %70 = sbr.rel (0) target = $region81
    $region80: #{model_forward.1} parent=1 // pred_region
      _
    $region81: #{model_forward.1} parent=1 // pred_fallthru
      _
    // Predicated region
    $region82: #{model_forward.1} parent=1 // pred_check
      _
    $region83: #{model_forward.1} parent=1 // pred_check_branch
      %72 = sbr.rel (0) target = $region85
    $region84: #{model_forward.1} parent=1 // pred_region
      _
    $region85: #{model_forward.1} parent=1 // pred_fallthru
      _
    // Predicated region
    $region86: #{model_forward.1} parent=1 // pred_check
      _
    $region87: #{model_forward.1} parent=1 // pred_check_branch
      %74 = sbr.rel (0) target = $region89
    $region88: #{model_forward.1} parent=1 // pred_region
      _
    $region89: #{model_forward.1} parent=1 // pred_fallthru
      _
    // Predicated region
    $region90: #{model_forward.1} parent=1 // pred_check
      _
    $region91: #{model_forward.1} parent=1 // pred_check_branch
      %76 = sbr.rel (0) target = $region93
    $region92: #{model_forward.1} parent=1 // pred_region
      _
    $region93: #{model_forward.1} parent=1 // pred_fallthru
      _
    // Predicated region
    $region94: #{model_forward.1} parent=1 // pred_check
      _
    $region95: #{model_forward.1} parent=1 // pred_check_branch
      %78 = sbr.rel (0) target = $region97
    $region96: #{model_forward.1} parent=1 // pred_region
      _
    $region97: #{model_forward.1} parent=1 // pred_fallthru
      _
    // Predicated region
    $region98: #{model_forward.1} parent=1 // pred_check
      _
    $region99: #{model_forward.1} parent=1 // pred_check_branch
      %80 = sbr.rel (0) target = $region101
    $region100: #{model_forward.1} parent=1 // pred_region
      _
    $region101: #{model_forward.1} parent=1 // pred_fallthru
      _
    %v81 = vld [vmem:[%s1] sm:$0xff]
    %v82 = vld [vmem:[%s1 + $0x8] sm:$0xff]
    %v83 = vld [vmem:[%s1 + $0x10] sm:$0xff]
    %v84 = vld [vmem:[%s1 + $0x18] sm:$0xff]
    %v85 = vld [vmem:[%s1 + $0x20] sm:$0xff]
    %v86 = vld [vmem:[%s1 + $0x28] sm:$0xff]
    %v87 = vld [vmem:[%s1 + $0x30] sm:$0xff]
    %v88 = vld [vmem:[%s1 + $0x38] sm:$0xff]
    %v89 = vld [vmem:[%s0] sm:$0xff]
    %v90 = vld [vmem:[%s0 + $0x8] sm:$0xff]
    %v91 = vld [vmem:[%s0 + $0x10] sm:$0xff]
    %v92 = vld [vmem:[%s0 + $0x18] sm:$0xff]
    %v93 = vld [vmem:[%s0 + $0x20] sm:$0xff]
    %v94 = vld [vmem:[%s0 + $0x28] sm:$0xff]
    %v95 = vld [vmem:[%s0 + $0x30] sm:$0xff]
    %v96 = vld [vmem:[%s0 + $0x38] sm:$0xff]
    %v97 = vld [vmem:[%s3] sm:$0x1]
    %v98 = vld [vmem:[%s4] sm:$0x1]
    %vm99 = vcmask 261120
    %v100 = vsel %vm99, %v89, 0.0
    %101 = vadd.xlane.f32.xlu0 %v100
    %v102 = vpop.xlane.xlu0 %101
    %v103 = vsel %vm99, %v90, 0.0
    %104 = vadd.xlane.f32.xlu0 %v103
    %v105 = vpop.xlane.xlu0 %104
    %v106 = vsel %vm99, %v91, 0.0
    %107 = vadd.xlane.f32.xlu0 %v106
    %v108 = vpop.xlane.xlu0 %107
    %v109 = vsel %vm99, %v92, 0.0
    %110 = vadd.xlane.f32.xlu0 %v109
    %v111 = vpop.xlane.xlu0 %110
    %v112 = vsel %vm99, %v93, 0.0
    %113 = vadd.xlane.f32.xlu0 %v112
    %v114 = vpop.xlane.xlu0 %113
    %v115 = vsel %vm99, %v94, 0.0
    %116 = vadd.xlane.f32.xlu0 %v115
    %v117 = vpop.xlane.xlu0 %116
    %v118 = vsel %vm99, %v95, 0.0
    %119 = vadd.xlane.f32.xlu0 %v118
    %v120 = vpop.xlane.xlu0 %119
    %v121 = vsel %vm99, %v96, 0.0
    %122 = vadd.xlane.f32.xlu0 %v121
    %v123 = vpop.xlane.xlu0 %122
    %v124 = vrcp.pop 32.0
    %v125 = vmul.f32 %v102, %v124
    %v126 = vmul.f32 %v105, %v124
    %v127 = vmul.f32 %v108, %v124
    %v128 = vmul.f32 %v111, %v124
    %v129 = vmul.f32 %v114, %v124
    %v130 = vmul.f32 %v117, %v124
    %v131 = vmul.f32 %v120, %v124
    %v132 = vmul.f32 %v123, %v124
    %v133 = vsub.f32 %v89, %v125
    %v134 = vsub.f32 %v90, %v126
    %v135 = vsub.f32 %v91, %v127
    %v136 = vsub.f32 %v92, %v128
    %v137 = vsub.f32 %v93, %v129
    %v138 = vsub.f32 %v94, %v130
    %v139 = vsub.f32 %v95, %v131
    %v140 = vsub.f32 %v96, %v132
    %v141 = vmul.f32 %v133, %v133
    %v142 = vmul.f32 %v134, %v134
    %v143 = vmul.f32 %v135, %v135
    %v144 = vmul.f32 %v136, %v136
    %v145 = vmul.f32 %v137, %v137
    %v146 = vmul.f32 %v138, %v138
    %v147 = vmul.f32 %v139, %v139
    %v148 = vmul.f32 %v140, %v140
    %v149 = vsel %vm99, %v141, 0.0
    %150 = vadd.xlane.f32.xlu0 %v149
    %v151 = vpop.xlane.xlu0 %150
    %v152 = vsel %vm99, %v142, 0.0
    %153 = vadd.xlane.f32.xlu0 %v152
    %v154 = vpop.xlane.xlu0 %153
    %v155 = vsel %vm99, %v143, 0.0
    %156 = vadd.xlane.f32.xlu0 %v155
    %v157 = vpop.xlane.xlu0 %156
    %v158 = vsel %vm99, %v144, 0.0
    %159 = vadd.xlane.f32.xlu0 %v158
    %v160 = vpop.xlane.xlu0 %159
    %v161 = vsel %vm99, %v145, 0.0
    %162 = vadd.xlane.f32.xlu0 %v161
    %v163 = vpop.xlane.xlu0 %162
    %v164 = vsel %vm99, %v146, 0.0
    %165 = vadd.xlane.f32.xlu0 %v164
    %v166 = vpop.xlane.xlu0 %165
    %v167 = vsel %vm99, %v147, 0.0
    %168 = vadd.xlane.f32.xlu0 %v167
    %v169 = vpop.xlane.xlu0 %168
    %v170 = vsel %vm99, %v148, 0.0
    %171 = vadd.xlane.f32.xlu0 %v170
    %v172 = vpop.xlane.xlu0 %171
    %v173 = vmul.f32 %v151, %v124
    %v174 = vmul.f32 %v154, %v124
    %v175 = vmul.f32 %v157, %v124
    %v176 = vmul.f32 %v160, %v124
    %v177 = vmul.f32 %v163, %v124
    %v178 = vmul.f32 %v166, %v124
    %v179 = vmul.f32 %v169, %v124
    %v180 = vmul.f32 %v172, %v124
    %v181 = vadd.f32 %v173, 1e-12
    %v182 = vadd.f32 %v174, 1e-12
    %v183 = vadd.f32 %v175, 1e-12
    %v184 = vadd.f32 %v176, 1e-12
    %v185 = vadd.f32 %v177, 1e-12
    %v186 = vadd.f32 %v178, 1e-12
    %v187 = vadd.f32 %v179, 1e-12
    %v188 = vadd.f32 %v180, 1e-12
    %v189 = vrsqrt.pop %v181
    %v190 = vrsqrt.pop %v182
    %v191 = vrsqrt.pop %v183
    %v192 = vrsqrt.pop %v184
    %v193 = vrsqrt.pop %v185
    %v194 = vrsqrt.pop %v186
    %v195 = vrsqrt.pop %v187
    %v196 = vrsqrt.pop %v188
    %v197 = vmul.f32 %v133, %v189
    %v198 = vmul.f32 %v134, %v190
    %v199 = vmul.f32 %v135, %v191
    %v200 = vmul.f32 %v136, %v192
    %v201 = vmul.f32 %v137, %v193
    %v202 = vmul.f32 %v138, %v194
    %v203 = vmul.f32 %v139, %v195
    %v204 = vmul.f32 %v140, %v196
    %v206 = vlaneseq
    %v207 = vshrl.u32 %v206, 7
    %v208 = vsub.s32 0, %v207
    %v209 = vrot.slane %v97, %v208
    %v211 = vmul.f32 %v197, %v209
    %v212 = vmul.f32 %v198, %v209
    %v213 = vmul.f32 %v199, %v209
    %v214 = vmul.f32 %v200, %v209
    %v215 = vmul.f32 %v201, %v209
    %v216 = vmul.f32 %v202, %v209
    %v217 = vmul.f32 %v203, %v209
    %v218 = vmul.f32 %v204, %v209
    %v220 = vlaneseq
    %v221 = vshrl.u32 %v220, 7
    %v222 = vsub.s32 0, %v221
    %v223 = vrot.slane %v98, %v222
    %v225 = vadd.f32 %v211, %v223
    %v226 = vadd.f32 %v212, %v223
    %v227 = vadd.f32 %v213, %v223
    %v228 = vadd.f32 %v214, %v223
    %v229 = vadd.f32 %v215, %v223
    %v230 = vadd.f32 %v216, %v223
    %v231 = vadd.f32 %v217, %v223
    %v232 = vadd.f32 %v218, %v223
    %v233 = vld [vmem:[%s5] sm:$0xff]
    %v234 = vld [vmem:[%s5 + $0x8] sm:$0xff]
    %v235 = vld [vmem:[%s5 + $0x10] sm:$0xff]
    %v236 = vld [vmem:[%s5 + $0x18] sm:$0xff]
    %v237 = vld [vmem:[%s6] sm:$0x1]
    %v239 = vlaneseq
    %v240 = vshrl.u32 %v239, 7
    %v241 = vsub.s32 0, %v240
    %v242 = vrot.slane %v237, %v241
    %v245 = vsel %vm99, %v225, 0
    %v248 = vsel %vm99, %v226, 0
    %v251 = vsel %vm99, %v227, 0
    %v254 = vsel %vm99, %v228, 0
    %v257 = vsel %vm99, %v229, 0
    %v260 = vsel %vm99, %v230, 0
    %v263 = vsel %vm99, %v231, 0
    %v266 = vsel %vm99, %v232, 0
    %268 = vmatprep.subr.mxu0 0.0
    %269 = vmatpush1.msra.mxu0 %v233
    %270 = vmatprep.subr.mxu0 0.0
    %271 = vmatpush1.msra.mxu0 %v234
    %272 = vmatprep.subr.mxu0 0.0
    %273 = vmatpush1.msra.mxu0 %v235
    %274 = vmatprep.subr.mxu0 0.0
    %275 = vmatpush1.msra.mxu0 %v236
    %276 = vmatprep.subr.mxu0 0.0
    %277 = vmatpush1.msra.mxu0 0.0
    %278 = vmatprep.subr.mxu0 0.0
    %279 = vmatpush1.msra.mxu0 0.0
    %280 = vmatprep.subr.mxu0 0.0
    %281 = vmatpush1.msra.mxu0 0.0
    %282 = vmatprep.subr.mxu0 0.0
    %283 = vmatpush1.msra.mxu0 0.0
    %284 = vmatprep.subr.mxu0 0.0
    %285 = vmatpush1.msra.mxu0 0.0
    %286 = vmatprep.subr.mxu0 0.0
    %287 = vmatpush1.msra.mxu0 0.0
    %288 = vmatprep.subr.mxu0 0.0
    %289 = vmatpush1.msra.mxu0 0.0
    %290 = vmatprep.subr.mxu0 0.0
    %291 = vmatpush1.msra.mxu0 0.0
    %292 = vmatprep.subr.mxu0 0.0
    %293 = vmatpush1.msra.mxu0 0.0
    %294 = vmatprep.subr.mxu0 0.0
    %295 = vmatpush1.msra.mxu0 0.0
    %296 = vmatprep.subr.mxu0 0.0
    %297 = vmatpush1.msra.mxu0 0.0
    %298 = vmatprep.subr.mxu0 0.0
    %299 = vmatpush1.msra.mxu0 0.0
    %300 = vmatprep.subr.mxu0 0.0
    %301 = vmatpush1.msra.mxu0 0.0
    %302 = vmatprep.subr.mxu0 0.0
    %303 = vmatpush1.msra.mxu0 0.0
    %304 = vmatprep.subr.mxu0 0.0
    %305 = vmatpush1.msra.mxu0 0.0
    %306 = vmatprep.subr.mxu0 0.0
    %307 = vmatpush1.msra.mxu0 0.0
    %308 = vmatprep.subr.mxu0 0.0
    %309 = vmatpush1.msra.mxu0 0.0
    %310 = vmatprep.subr.mxu0 0.0
    %311 = vmatpush1.msra.mxu0 0.0
    %312 = vmatprep.subr.mxu0 0.0
    %313 = vmatpush1.msra.mxu0 0.0
    %314 = vmatprep.subr.mxu0 0.0
    %315 = vmatpush1.msra.mxu0 0.0
    %316 = vmatprep.subr.mxu0 0.0
    %317 = vmatpush1.msra.mxu0 0.0
    %318 = vmatprep.subr.mxu0 0.0
    %319 = vmatpush1.msra.mxu0 0.0
    %320 = vmatprep.subr.mxu0 0.0
    %321 = vmatpush1.msra.mxu0 0.0
    %322 = vmatprep.subr.mxu0 0.0
    %323 = vmatpush1.msra.mxu0 0.0
    %324 = vmatprep.subr.mxu0 0.0
    %325 = vmatpush1.msra.mxu0 0.0
    %326 = vmatprep.subr.mxu0 0.0
    %327 = vmatpush1.msra.mxu0 0.0
    %328 = vmatprep.subr.mxu0 0.0
    %329 = vmatpush1.msra.mxu0 0.0
    %330 = vmatprep.subr.mxu0 0.0
    %331 = vmatpush1.msra.mxu0 0.0
    %332 = vmatprep.mubr.f32.mxu0 0.0
    %333 = vmatmul.mubr.f32.gmra.mrb[0].mxu0 %v245
    %v334 = vpop.f32.mrb[0].mxu0
    %v335 = vadd.f32 %v242, %v334
    %v336 = vpop.f32.mrb[0].mxu0
    %337 = vmatprep.mubr.f32.mxu0 0.0
    %338 = vmatmul.mubr.f32.gmra.mrb[0].mxu0 %v248
    %v339 = vpop.f32.mrb[0].mxu0
    %v340 = vadd.f32 %v242, %v339
    %v341 = vpop.f32.mrb[0].mxu0
    %342 = vmatprep.mubr.f32.mxu0 0.0
    %343 = vmatmul.mubr.f32.gmra.mrb[0].mxu0 %v251
    %v344 = vpop.f32.mrb[0].mxu0
    %v345 = vadd.f32 %v242, %v344
    %v346 = vpop.f32.mrb[0].mxu0
    %347 = vmatprep.mubr.f32.mxu0 0.0
    %348 = vmatmul.mubr.f32.gmra.mrb[0].mxu0 %v254
    %v349 = vpop.f32.mrb[0].mxu0
    %v350 = vadd.f32 %v242, %v349
    %v351 = vpop.f32.mrb[0].mxu0
    %352 = vmatprep.mubr.f32.mxu0 0.0
    %353 = vmatmul.mubr.f32.gmra.mrb[0].mxu0 %v257
    %v354 = vpop.f32.mrb[0].mxu0
    %v355 = vadd.f32 %v242, %v354
    %v356 = vpop.f32.mrb[0].mxu0
    %357 = vmatprep.mubr.f32.mxu0 0.0
    %358 = vmatmul.mubr.f32.gmra.mrb[0].mxu0 %v260
    %v359 = vpop.f32.mrb[0].mxu0
    %v360 = vadd.f32 %v242, %v359
    %v361 = vpop.f32.mrb[0].mxu0
    %362 = vmatprep.mubr.f32.mxu0 0.0
    %363 = vmatmul.mubr.f32.gmra.mrb[0].mxu0 %v263
    %v364 = vpop.f32.mrb[0].mxu0
    %v365 = vadd.f32 %v242, %v364
    %v366 = vpop.f32.mrb[0].mxu0
    %367 = vmatprep.mubr.f32.mxu0 0.0
    %368 = vmatmul.mubr.f32.gmra.mrb[0].mxu0 %v266
    %v369 = vpop.f32.mrb[0].mxu0
    %v370 = vadd.f32 %v242, %v369
    %v371 = vpop.f32.mrb[0].mxu0
    %372 = vdwg.mxu0
    %381 = vrot.lane.b32.xlu0 %v335, 96
    %v382 = vpop.permute.xlu0 %381
    %383 = vrot.lane.b32.xlu0 %v340, 96
    %v384 = vpop.permute.xlu0 %383
    %385 = vrot.lane.b32.xlu0 %v345, 96
    %v386 = vpop.permute.xlu0 %385
    %387 = vrot.lane.b32.xlu0 %v350, 96
    %v388 = vpop.permute.xlu0 %387
    %389 = vrot.lane.b32.xlu0 %v355, 96
    %v390 = vpop.permute.xlu0 %389
    %391 = vrot.lane.b32.xlu0 %v360, 96
    %v392 = vpop.permute.xlu0 %391
    %393 = vrot.lane.b32.xlu0 %v365, 96
    %v394 = vpop.permute.xlu0 %393
    %395 = vrot.lane.b32.xlu0 %v370, 96
    %v396 = vpop.permute.xlu0 %395
    %vm397 = vcmask 64512
    %v398 = vsel %vm397, %v335, 0
    %v400 = vsel %vm397, %v340, 0
    %v402 = vsel %vm397, %v345, 0
    %v404 = vsel %vm397, %v350, 0
    %v406 = vsel %vm397, %v355, 0
    %v408 = vsel %vm397, %v360, 0
    %v410 = vsel %vm397, %v365, 0
    %v412 = vsel %vm397, %v370, 0
    %v414 = vsel %vm397, %v382, 0
    %v416 = vsel %vm397, %v384, 0
    %v418 = vsel %vm397, %v386, 0
    %v420 = vsel %vm397, %v388, 0
    %v422 = vsel %vm397, %v390, 0
    %v424 = vsel %vm397, %v392, 0
    %v426 = vsel %vm397, %v394, 0
    %v428 = vsel %vm397, %v396, 0
    %430 = vmatprep.subr.mxu0 0.0
    %431 = vmatpush1.xpose.msra.mxu0 %v414
    %432 = vmatprep.subr.mxu0 0.0
    %433 = vmatpush1.xpose.msra.mxu0 %v416
    %434 = vmatprep.subr.mxu0 0.0
    %435 = vmatpush1.xpose.msra.mxu0 %v418
    %436 = vmatprep.subr.mxu0 0.0
    %437 = vmatpush1.xpose.msra.mxu0 %v420
    %438 = vmatprep.subr.mxu0 0.0
    %439 = vmatpush1.xpose.msra.mxu0 %v422
    %440 = vmatprep.subr.mxu0 0.0
    %441 = vmatpush1.xpose.msra.mxu0 %v424
    %442 = vmatprep.subr.mxu0 0.0
    %443 = vmatpush1.xpose.msra.mxu0 %v426
    %444 = vmatprep.subr.mxu0 0.0
    %445 = vmatpush1.xpose.msra.mxu0 %v428
    %446 = vmatprep.subr.mxu0 0.0
    %447 = vmatpush1.xpose.msra.mxu0 0.0
    %448 = vmatprep.subr.mxu0 0.0
    %449 = vmatpush1.xpose.msra.mxu0 0.0
    %450 = vmatprep.subr.mxu0 0.0
    %451 = vmatpush1.xpose.msra.mxu0 0.0
    %452 = vmatprep.subr.mxu0 0.0
    %453 = vmatpush1.xpose.msra.mxu0 0.0
    %454 = vmatprep.subr.mxu0 0.0
    %455 = vmatpush1.xpose.msra.mxu0 0.0
    %456 = vmatprep.subr.mxu0 0.0
    %457 = vmatpush1.xpose.msra.mxu0 0.0
    %458 = vmatprep.subr.mxu0 0.0
    %459 = vmatpush1.xpose.msra.mxu0 0.0
    %460 = vmatprep.subr.mxu0 0.0
    %461 = vmatpush1.xpose.msra.mxu0 0.0
    %462 = vmatprep.subr.mxu0 0.0
    %463 = vmatpush1.xpose.msra.mxu0 0.0
    %464 = vmatprep.subr.mxu0 0.0
    %465 = vmatpush1.xpose.msra.mxu0 0.0
    %466 = vmatprep.subr.mxu0 0.0
    %467 = vmatpush1.xpose.msra.mxu0 0.0
    %468 = vmatprep.subr.mxu0 0.0
    %469 = vmatpush1.xpose.msra.mxu0 0.0
    %470 = vmatprep.subr.mxu0 0.0
    %471 = vmatpush1.xpose.msra.mxu0 0.0
    %472 = vmatprep.subr.mxu0 0.0
    %473 = vmatpush1.xpose.msra.mxu0 0.0
    %474 = vmatprep.subr.mxu0 0.0
    %475 = vmatpush1.xpose.msra.mxu0 0.0
    %476 = vmatprep.subr.mxu0 0.0
    %477 = vmatpush1.xpose.msra.mxu0 0.0
    %478 = vmatprep.subr.mxu0 0.0
    %479 = vmatpush1.xpose.msra.mxu0 0.0
    %480 = vmatprep.subr.mxu0 0.0
    %481 = vmatpush1.xpose.msra.mxu0 0.0
    %482 = vmatprep.subr.mxu0 0.0
    %483 = vmatpush1.xpose.msra.mxu0 0.0
    %484 = vmatprep.subr.mxu0 0.0
    %485 = vmatpush1.xpose.msra.mxu0 0.0
    %486 = vmatprep.subr.mxu0 0.0
    %487 = vmatpush1.xpose.msra.mxu0 0.0
    %488 = vmatprep.subr.mxu0 0.0
    %489 = vmatpush1.xpose.msra.mxu0 0.0
    %490 = vmatprep.subr.mxu0 0.0
    %491 = vmatpush1.xpose.msra.mxu0 0.0
    %492 = vmatprep.subr.mxu0 0.0
    %493 = vmatpush1.xpose.msra.mxu0 0.0
    %494 = vmatprep.mubr.f32.mxu0 0.0
    %495 = vmatmul.mubr.f32.gmra.mrb[0].mxu0 %v398
    %v496 = vpop.f32.mrb[0].mxu0
    %v497 = vadd.f32 0.0, %v496
    %v498 = vpop.f32.mrb[0].mxu0
    %499 = vmatprep.mubr.f32.mxu0 0.0
    %500 = vmatmul.mubr.f32.gmra.mrb[0].mxu0 %v400
    %v501 = vpop.f32.mrb[0].mxu0
    %v502 = vadd.f32 0.0, %v501
    %v503 = vpop.f32.mrb[0].mxu0
    %504 = vmatprep.mubr.f32.mxu0 0.0
    %505 = vmatmul.mubr.f32.gmra.mrb[0].mxu0 %v402
    %v506 = vpop.f32.mrb[0].mxu0
    %v507 = vadd.f32 0.0, %v506
    %v508 = vpop.f32.mrb[0].mxu0
    %509 = vmatprep.mubr.f32.mxu0 0.0
    %510 = vmatmul.mubr.f32.gmra.mrb[0].mxu0 %v404
    %v511 = vpop.f32.mrb[0].mxu0
    %v512 = vadd.f32 0.0, %v511
    %v513 = vpop.f32.mrb[0].mxu0
    %514 = vmatprep.mubr.f32.mxu0 0.0
    %515 = vmatmul.mubr.f32.gmra.mrb[0].mxu0 %v406
    %v516 = vpop.f32.mrb[0].mxu0
    %v517 = vadd.f32 0.0, %v516
    %v518 = vpop.f32.mrb[0].mxu0
    %519 = vmatprep.mubr.f32.mxu0 0.0
    %520 = vmatmul.mubr.f32.gmra.mrb[0].mxu0 %v408
    %v521 = vpop.f32.mrb[0].mxu0
    %v522 = vadd.f32 0.0, %v521
    %v523 = vpop.f32.mrb[0].mxu0
    %524 = vmatprep.mubr.f32.mxu0 0.0
    %525 = vmatmul.mubr.f32.gmra.mrb[0].mxu0 %v410
    %v526 = vpop.f32.mrb[0].mxu0
    %v527 = vadd.f32 0.0, %v526
    %v528 = vpop.f32.mrb[0].mxu0
    %529 = vmatprep.mubr.f32.mxu0 0.0
    %530 = vmatmul.mubr.f32.gmra.mrb[0].mxu0 %v412
    %v531 = vpop.f32.mrb[0].mxu0
    %v532 = vadd.f32 0.0, %v531
    %v533 = vpop.f32.mrb[0].mxu0
    %534 = vdwg.mxu0
    %v535 = vmul.f32 %v497, 0.35355338
    %v536 = vmul.f32 %v502, 0.35355338
    %v537 = vmul.f32 %v507, 0.35355338
    %v538 = vmul.f32 %v512, 0.35355338
    %v539 = vmul.f32 %v517, 0.35355338
    %v540 = vmul.f32 %v522, 0.35355338
    %v541 = vmul.f32 %v527, 0.35355338
    %v542 = vmul.f32 %v532, 0.35355338
    %v543 = vadd.f32 %v535, %v81
    %v544 = vadd.f32 %v536, %v82
    %v545 = vadd.f32 %v537, %v83
    %v546 = vadd.f32 %v538, %v84
    %v547 = vadd.f32 %v539, %v85
    %v548 = vadd.f32 %v540, %v86
    %v549 = vadd.f32 %v541, %v87
    %v550 = vadd.f32 %v542, %v88
    %vm551 = vcmask 523264
    %v552 = vsel %vm551, %v543, -inf
    %553 = vmax.xlane.f32.xlu0 %v552
    %v554 = vpop.xlane.xlu0 %553
    %v555 = vsel %vm551, %v544, -inf
    %556 = vmax.xlane.f32.xlu0 %v555
    %v557 = vpop.xlane.xlu0 %556
    %v558 = vsel %vm551, %v545, -inf
    %559 = vmax.xlane.f32.xlu0 %v558
    %v560 = vpop.xlane.xlu0 %559
    %v561 = vsel %vm551, %v546, -inf
    %562 = vmax.xlane.f32.xlu0 %v561
    %v563 = vpop.xlane.xlu0 %562
    %v564 = vsel %vm551, %v547, -inf
    %565 = vmax.xlane.f32.xlu0 %v564
    %v566 = vpop.xlane.xlu0 %565
    %v567 = vsel %vm551, %v548, -inf
    %568 = vmax.xlane.f32.xlu0 %v567
    %v569 = vpop.xlane.xlu0 %568
    %v570 = vsel %vm551, %v549, -inf
    %571 = vmax.xlane.f32.xlu0 %v570
    %v572 = vpop.xlane.xlu0 %571
    %v573 = vsel %vm551, %v550, -inf
    %574 = vmax.xlane.f32.xlu0 %v573
    %v575 = vpop.xlane.xlu0 %574
    %v576 = vsub.f32 %v543, %v554
    %v577 = vsub.f32 %v544, %v557
    %v578 = vsub.f32 %v545, %v560
    %v579 = vsub.f32 %v546, %v563
    %v580 = vsub.f32 %v547, %v566
    %v581 = vsub.f32 %v548, %v569
    %v582 = vsub.f32 %v549, %v572
    %v583 = vsub.f32 %v550, %v575
    %v584 = vmul.f32 %v576, 1.442695
    %v585 = vpow.pop %v584
    %v586 = vmul.f32 %v577, 1.442695
    %v587 = vpow.pop %v586
    %v588 = vmul.f32 %v578, 1.442695
    %v589 = vpow.pop %v588
    %v590 = vmul.f32 %v579, 1.442695
    %v591 = vpow.pop %v590
    %v592 = vmul.f32 %v580, 1.442695
    %v593 = vpow.pop %v592
    %v594 = vmul.f32 %v581, 1.442695
    %v595 = vpow.pop %v594
    %v596 = vmul.f32 %v582, 1.442695
    %v597 = vpow.pop %v596
    %v598 = vmul.f32 %v583, 1.442695
    %v599 = vpow.pop %v598
    %v600 = vsel %vm551, %v585, 0.0
    %601 = vadd.xlane.f32.xlu0 %v600
    %v602 = vpop.xlane.xlu0 %601
    %v603 = vsel %vm551, %v587, 0.0
    %604 = vadd.xlane.f32.xlu0 %v603
    %v605 = vpop.xlane.xlu0 %604
    %v606 = vsel %vm551, %v589, 0.0
    %607 = vadd.xlane.f32.xlu0 %v606
    %v608 = vpop.xlane.xlu0 %607
    %v609 = vsel %vm551, %v591, 0.0
    %610 = vadd.xlane.f32.xlu0 %v609
    %v611 = vpop.xlane.xlu0 %610
    %v612 = vsel %vm551, %v593, 0.0
    %613 = vadd.xlane.f32.xlu0 %v612
    %v614 = vpop.xlane.xlu0 %613
    %v615 = vsel %vm551, %v595, 0.0
    %616 = vadd.xlane.f32.xlu0 %v615
    %v617 = vpop.xlane.xlu0 %616
    %v618 = vsel %vm551, %v597, 0.0
    %619 = vadd.xlane.f32.xlu0 %v618
    %v620 = vpop.xlane.xlu0 %619
    %v621 = vsel %vm551, %v599, 0.0
    %622 = vadd.xlane.f32.xlu0 %v621
    %v623 = vpop.xlane.xlu0 %622
    %v624 = vrcp.pop %v602
    %v625 = vmul.f32 %v585, %v624
    %v626 = vrcp.pop %v605
    %v627 = vmul.f32 %v587, %v626
    %v628 = vrcp.pop %v608
    %v629 = vmul.f32 %v589, %v628
    %v630 = vrcp.pop %v611
    %v631 = vmul.f32 %v591, %v630
    %v632 = vrcp.pop %v614
    %v633 = vmul.f32 %v593, %v632
    %v634 = vrcp.pop %v617
    %v635 = vmul.f32 %v595, %v634
    %v636 = vrcp.pop %v620
    %v637 = vmul.f32 %v597, %v636
    %v638 = vrcp.pop %v623
    %v639 = vmul.f32 %v599, %v638
    %640 = vrot.lane.b32.xlu0 %v335, 64
    %v641 = vpop.permute.xlu0 %640
    %642 = vrot.lane.b32.xlu0 %v340, 64
    %v643 = vpop.permute.xlu0 %642
    %644 = vrot.lane.b32.xlu0 %v345, 64
    %v645 = vpop.permute.xlu0 %644
    %646 = vrot.lane.b32.xlu0 %v350, 64
    %v647 = vpop.permute.xlu0 %646
    %648 = vrot.lane.b32.xlu0 %v355, 64
    %v649 = vpop.permute.xlu0 %648
    %650 = vrot.lane.b32.xlu0 %v360, 64
    %v651 = vpop.permute.xlu0 %650
    %652 = vrot.lane.b32.xlu0 %v365, 64
    %v653 = vpop.permute.xlu0 %652
    %654 = vrot.lane.b32.xlu0 %v370, 64
    %v655 = vpop.permute.xlu0 %654
    %v665 = vsel %vm551, %v625, 0
    %v668 = vsel %vm551, %v627, 0
    %v671 = vsel %vm551, %v629, 0
    %v674 = vsel %vm551, %v631, 0
    %v677 = vsel %vm551, %v633, 0
    %v680 = vsel %vm551, %v635, 0
    %v683 = vsel %vm551, %v637, 0
    %v686 = vsel %vm551, %v639, 0
    %688 = vmatprep.subr.mxu0 0.0
    %689 = vmatpush1.msra.mxu0 %v641
    %690 = vmatprep.subr.mxu0 0.0
    %691 = vmatpush1.msra.mxu0 %v643
    %692 = vmatprep.subr.mxu0 0.0
    %693 = vmatpush1.msra.mxu0 %v645
    %694 = vmatprep.subr.mxu0 0.0
    %695 = vmatpush1.msra.mxu0 %v647
    %696 = vmatprep.subr.mxu0 0.0
    %697 = vmatpush1.msra.mxu0 %v649
    %698 = vmatprep.subr.mxu0 0.0
    %699 = vmatpush1.msra.mxu0 %v651
    %700 = vmatprep.subr.mxu0 0.0
    %701 = vmatpush1.msra.mxu0 %v653
    %702 = vmatprep.subr.mxu0 0.0
    %703 = vmatpush1.msra.mxu0 %v655
    %704 = vmatprep.subr.mxu0 0.0
    %705 = vmatpush1.msra.mxu0 0.0
    %706 = vmatprep.subr.mxu0 0.0
    %707 = vmatpush1.msra.mxu0 0.0
    %708 = vmatprep.subr.mxu0 0.0
    %709 = vmatpush1.msra.mxu0 0.0
    %710 = vmatprep.subr.mxu0 0.0
    %711 = vmatpush1.msra.mxu0 0.0
    %712 = vmatprep.subr.mxu0 0.0
    %713 = vmatpush1.msra.mxu0 0.0
    %714 = vmatprep.subr.mxu0 0.0
    %715 = vmatpush1.msra.mxu0 0.0
    %716 = vmatprep.subr.mxu0 0.0
    %717 = vmatpush1.msra.mxu0 0.0
    %718 = vmatprep.subr.mxu0 0.0
    %719 = vmatpush1.msra.mxu0 0.0
    %720 = vmatprep.subr.mxu0 0.0
    %721 = vmatpush1.msra.mxu0 0.0
    %722 = vmatprep.subr.mxu0 0.0
    %723 = vmatpush1.msra.mxu0 0.0
    %724 = vmatprep.subr.mxu0 0.0
    %725 = vmatpush1.msra.mxu0 0.0
    %726 = vmatprep.subr.mxu0 0.0
    %727 = vmatpush1.msra.mxu0 0.0
    %728 = vmatprep.subr.mxu0 0.0
    %729 = vmatpush1.msra.mxu0 0.0
    %730 = vmatprep.subr.mxu0 0.0
    %731 = vmatpush1.msra.mxu0 0.0
    %732 = vmatprep.subr.mxu0 0.0
    %733 = vmatpush1.msra.mxu0 0.0
    %734 = vmatprep.subr.mxu0 0.0
    %735 = vmatpush1.msra.mxu0 0.0
    %736 = vmatprep.subr.mxu0 0.0
    %737 = vmatpush1.msra.mxu0 0.0
    %738 = vmatprep.subr.mxu0 0.0
    %739 = vmatpush1.msra.mxu0 0.0
    %740 = vmatprep.subr.mxu0 0.0
    %741 = vmatpush1.msra.mxu0 0.0
    %742 = vmatprep.subr.mxu0 0.0
    %743 = vmatpush1.msra.mxu0 0.0
    %744 = vmatprep.subr.mxu0 0.0
    %745 = vmatpush1.msra.mxu0 0.0
    %746 = vmatprep.subr.mxu0 0.0
    %747 = vmatpush1.msra.mxu0 0.0
    %748 = vmatprep.subr.mxu0 0.0
    %749 = vmatpush1.msra.mxu0 0.0
    %750 = vmatprep.subr.mxu0 0.0
    %751 = vmatpush1.msra.mxu0 0.0
    %752 = vmatprep.mubr.f32.mxu0 0.0
    %753 = vmatmul.mubr.f32.gmra.mrb[0].mxu0 %v665
    %v754 = vpop.f32.mrb[0].mxu0
    %v755 = vadd.f32 0.0, %v754
    %v756 = vpop.f32.mrb[0].mxu0
    %757 = vmatprep.mubr.f32.mxu0 0.0
    %758 = vmatmul.mubr.f32.gmra.mrb[0].mxu0 %v668
    %v759 = vpop.f32.mrb[0].mxu0
    %v760 = vadd.f32 0.0, %v759
    %v761 = vpop.f32.mrb[0].mxu0
    %762 = vmatprep.mubr.f32.mxu0 0.0
    %763 = vmatmul.mubr.f32.gmra.mrb[0].mxu0 %v671
    %v764 = vpop.f32.mrb[0].mxu0
    %v765 = vadd.f32 0.0, %v764
    %v766 = vpop.f32.mrb[0].mxu0
    %767 = vmatprep.mubr.f32.mxu0 0.0
    %768 = vmatmul.mubr.f32.gmra.mrb[0].mxu0 %v674
    %v769 = vpop.f32.mrb[0].mxu0
    %v770 = vadd.f32 0.0, %v769
    %v771 = vpop.f32.mrb[0].mxu0
    %772 = vmatprep.mubr.f32.mxu0 0.0
    %773 = vmatmul.mubr.f32.gmra.mrb[0].mxu0 %v677
    %v774 = vpop.f32.mrb[0].mxu0
    %v775 = vadd.f32 0.0, %v774
    %v776 = vpop.f32.mrb[0].mxu0
    %777 = vmatprep.mubr.f32.mxu0 0.0
    %778 = vmatmul.mubr.f32.gmra.mrb[0].mxu0 %v680
    %v779 = vpop.f32.mrb[0].mxu0
    %v780 = vadd.f32 0.0, %v779
    %v781 = vpop.f32.mrb[0].mxu0
    %782 = vmatprep.mubr.f32.mxu0 0.0
    %783 = vmatmul.mubr.f32.gmra.mrb[0].mxu0 %v683
    %v784 = vpop.f32.mrb[0].mxu0
    %v785 = vadd.f32 0.0, %v784
    %v786 = vpop.f32.mrb[0].mxu0
    %787 = vmatprep.mubr.f32.mxu0 0.0
    %788 = vmatmul.mubr.f32.gmra.mrb[0].mxu0 %v686
    %v789 = vpop.f32.mrb[0].mxu0
    %v790 = vadd.f32 0.0, %v789
    %v791 = vpop.f32.mrb[0].mxu0
    %792 = vdwg.mxu0
    %793 = vrot.lane.b32.xlu0 %v335, 120
    %v794 = vpop.permute.xlu0 %793
    %795 = vrot.lane.b32.xlu0 %v340, 120
    %v796 = vpop.permute.xlu0 %795
    %797 = vrot.lane.b32.xlu0 %v345, 120
    %v798 = vpop.permute.xlu0 %797
    %799 = vrot.lane.b32.xlu0 %v350, 120
    %v800 = vpop.permute.xlu0 %799
    %801 = vrot.lane.b32.xlu0 %v355, 120
    %v802 = vpop.permute.xlu0 %801
    %803 = vrot.lane.b32.xlu0 %v360, 120
    %v804 = vpop.permute.xlu0 %803
    %805 = vrot.lane.b32.xlu0 %v365, 120
    %v806 = vpop.permute.xlu0 %805
    %807 = vrot.lane.b32.xlu0 %v370, 120
    %v808 = vpop.permute.xlu0 %807
    %809 = vrot.lane.b32.xlu0 %v335, 88
    %v810 = vpop.permute.xlu0 %809
    %811 = vrot.lane.b32.xlu0 %v340, 88
    %v812 = vpop.permute.xlu0 %811
    %813 = vrot.lane.b32.xlu0 %v345, 88
    %v814 = vpop.permute.xlu0 %813
    %815 = vrot.lane.b32.xlu0 %v350, 88
    %v816 = vpop.permute.xlu0 %815
    %817 = vrot.lane.b32.xlu0 %v355, 88
    %v818 = vpop.permute.xlu0 %817
    %819 = vrot.lane.b32.xlu0 %v360, 88
    %v820 = vpop.permute.xlu0 %819
    %821 = vrot.lane.b32.xlu0 %v365, 88
    %v822 = vpop.permute.xlu0 %821
    %823 = vrot.lane.b32.xlu0 %v370, 88
    %v824 = vpop.permute.xlu0 %823
    %v825 = vsel %vm397, %v794, 0
    %v827 = vsel %vm397, %v796, 0
    %v829 = vsel %vm397, %v798, 0
    %v831 = vsel %vm397, %v800, 0
    %v833 = vsel %vm397, %v802, 0
    %v835 = vsel %vm397, %v804, 0
    %v837 = vsel %vm397, %v806, 0
    %v839 = vsel %vm397, %v808, 0
    %v841 = vsel %vm397, %v810, 0
    %v843 = vsel %vm397, %v812, 0
    %v845 = vsel %vm397, %v814, 0
    %v847 = vsel %vm397, %v816, 0
    %v849 = vsel %vm397, %v818, 0
    %v851 = vsel %vm397, %v820, 0
    %v853 = vsel %vm397, %v822, 0
    %v855 = vsel %vm397, %v824, 0
    %857 = vmatprep.subr.mxu0 0.0
    %858 = vmatpush1.xpose.msra.mxu0 %v841
    %859 = vmatprep.subr.mxu0 0.0
    %860 = vmatpush1.xpose.msra.mxu0 %v843
    %861 = vmatprep.subr.mxu0 0.0
    %862 = vmatpush1.xpose.msra.mxu0 %v845
    %863 = vmatprep.subr.mxu0 0.0
    %864 = vmatpush1.xpose.msra.mxu0 %v847
    %865 = vmatprep.subr.mxu0 0.0
    %866 = vmatpush1.xpose.msra.mxu0 %v849
    %867 = vmatprep.subr.mxu0 0.0
    %868 = vmatpush1.xpose.msra.mxu0 %v851
    %869 = vmatprep.subr.mxu0 0.0
    %870 = vmatpush1.xpose.msra.mxu0 %v853
    %871 = vmatprep.subr.mxu0 0.0
    %872 = vmatpush1.xpose.msra.mxu0 %v855
    %873 = vmatprep.subr.mxu0 0.0
    %874 = vmatpush1.xpose.msra.mxu0 0.0
    %875 = vmatprep.subr.mxu0 0.0
    %876 = vmatpush1.xpose.msra.mxu0 0.0
    %877 = vmatprep.subr.mxu0 0.0
    %878 = vmatpush1.xpose.msra.mxu0 0.0
    %879 = vmatprep.subr.mxu0 0.0
    %880 = vmatpush1.xpose.msra.mxu0 0.0
    %881 = vmatprep.subr.mxu0 0.0
    %882 = vmatpush1.xpose.msra.mxu0 0.0
    %883 = vmatprep.subr.mxu0 0.0
    %884 = vmatpush1.xpose.msra.mxu0 0.0
    %885 = vmatprep.subr.mxu0 0.0
    %886 = vmatpush1.xpose.msra.mxu0 0.0
    %887 = vmatprep.subr.mxu0 0.0
    %888 = vmatpush1.xpose.msra.mxu0 0.0
    %889 = vmatprep.subr.mxu0 0.0
    %890 = vmatpush1.xpose.msra.mxu0 0.0
    %891 = vmatprep.subr.mxu0 0.0
    %892 = vmatpush1.xpose.msra.mxu0 0.0
    %893 = vmatprep.subr.mxu0 0.0
    %894 = vmatpush1.xpose.msra.mxu0 0.0
    %895 = vmatprep.subr.mxu0 0.0
    %896 = vmatpush1.xpose.msra.mxu0 0.0
    %897 = vmatprep.subr.mxu0 0.0
    %898 = vmatpush1.xpose.msra.mxu0 0.0
    %899 = vmatprep.subr.mxu0 0.0
    %900 = vmatpush1.xpose.msra.mxu0 0.0
    %901 = vmatprep.subr.mxu0 0.0
    %902 = vmatpush1.xpose.msra.mxu0 0.0
    %903 = vmatprep.subr.mxu0 0.0
    %904 = vmatpush1.xpose.msra.mxu0 0.0
    %905 = vmatprep.subr.mxu0 0.0
    %906 = vmatpush1.xpose.msra.mxu0 0.0
    %907 = vmatprep.subr.mxu0 0.0
    %908 = vmatpush1.xpose.msra.mxu0 0.0
    %909 = vmatprep.subr.mxu0 0.0
    %910 = vmatpush1.xpose.msra.mxu0 0.0
    %911 = vmatprep.subr.mxu0 0.0
    %912 = vmatpush1.xpose.msra.mxu0 0.0
    %913 = vmatprep.subr.mxu0 0.0
    %914 = vmatpush1.xpose.msra.mxu0 0.0
    %915 = vmatprep.subr.mxu0 0.0
    %916 = vmatpush1.xpose.msra.mxu0 0.0
    %917 = vmatprep.subr.mxu0 0.0
    %918 = vmatpush1.xpose.msra.mxu0 0.0
    %919 = vmatprep.subr.mxu0 0.0
    %920 = vmatpush1.xpose.msra.mxu0 0.0
    %921 = vmatprep.mubr.f32.mxu0 0.0
    %922 = vmatmul.mubr.f32.gmra.mrb[0].mxu0 %v825
    %v923 = vpop.f32.mrb[0].mxu0
    %v924 = vadd.f32 0.0, %v923
    %v925 = vpop.f32.mrb[0].mxu0
    %926 = vmatprep.mubr.f32.mxu0 0.0
    %927 = vmatmul.mubr.f32.gmra.mrb[0].mxu0 %v827
    %v928 = vpop.f32.mrb[0].mxu0
    %v929 = vadd.f32 0.0, %v928
    %v930 = vpop.f32.mrb[0].mxu0
    %931 = vmatprep.mubr.f32.mxu0 0.0
    %932 = vmatmul.mubr.f32.gmra.mrb[0].mxu0 %v829
    %v933 = vpop.f32.mrb[0].mxu0
    %v934 = vadd.f32 0.0, %v933
    %v935 = vpop.f32.mrb[0].mxu0
    %936 = vmatprep.mubr.f32.mxu0 0.0
    %937 = vmatmul.mubr.f32.gmra.mrb[0].mxu0 %v831
    %v938 = vpop.f32.mrb[0].mxu0
    %v939 = vadd.f32 0.0, %v938
    %v940 = vpop.f32.mrb[0].mxu0
    %941 = vmatprep.mubr.f32.mxu0 0.0
    %942 = vmatmul.mubr.f32.gmra.mrb[0].mxu0 %v833
    %v943 = vpop.f32.mrb[0].mxu0
    %v944 = vadd.f32 0.0, %v943
    %v945 = vpop.f32.mrb[0].mxu0
    %946 = vmatprep.mubr.f32.mxu0 0.0
    %947 = vmatmul.mubr.f32.gmra.mrb[0].mxu0 %v835
    %v948 = vpop.f32.mrb[0].mxu0
    %v949 = vadd.f32 0.0, %v948
    %v950 = vpop.f32.mrb[0].mxu0
    %951 = vmatprep.mubr.f32.mxu0 0.0
    %952 = vmatmul.mubr.f32.gmra.mrb[0].mxu0 %v837
    %v953 = vpop.f32.mrb[0].mxu0
    %v954 = vadd.f32 0.0, %v953
    %v955 = vpop.f32.mrb[0].mxu0
    %956 = vmatprep.mubr.f32.mxu0 0.0
    %957 = vmatmul.mubr.f32.gmra.mrb[0].mxu0 %v839
    %v958 = vpop.f32.mrb[0].mxu0
    %v959 = vadd.f32 0.0, %v958
    %v960 = vpop.f32.mrb[0].mxu0
    %961 = vdwg.mxu0
    %v962 = vmul.f32 %v924, 0.35355338
    %v963 = vmul.f32 %v929, 0.35355338
    %v964 = vmul.f32 %v934, 0.35355338
    %v965 = vmul.f32 %v939, 0.35355338
    %v966 = vmul.f32 %v944, 0.35355338
    %v967 = vmul.f32 %v949, 0.35355338
    %v968 = vmul.f32 %v954, 0.35355338
    %v969 = vmul.f32 %v959, 0.35355338
    %v970 = vadd.f32 %v962, %v81
    %v971 = vadd.f32 %v963, %v82
    %v972 = vadd.f32 %v964, %v83
    %v973 = vadd.f32 %v965, %v84
    %v974 = vadd.f32 %v966, %v85
    %v975 = vadd.f32 %v967, %v86
    %v976 = vadd.f32 %v968, %v87
    %v977 = vadd.f32 %v969, %v88
    %v978 = vsel %vm551, %v970, -inf
    %979 = vmax.xlane.f32.xlu0 %v978
    %v980 = vpop.xlane.xlu0 %979
    %v981 = vsel %vm551, %v971, -inf
    %982 = vmax.xlane.f32.xlu0 %v981
    %v983 = vpop.xlane.xlu0 %982
    %v984 = vsel %vm551, %v972, -inf
    %985 = vmax.xlane.f32.xlu0 %v984
    %v986 = vpop.xlane.xlu0 %985
    %v987 = vsel %vm551, %v973, -inf
    %988 = vmax.xlane.f32.xlu0 %v987
    %v989 = vpop.xlane.xlu0 %988
    %v990 = vsel %vm551, %v974, -inf
    %991 = vmax.xlane.f32.xlu0 %v990
    %v992 = vpop.xlane.xlu0 %991
    %v993 = vsel %vm551, %v975, -inf
    %994 = vmax.xlane.f32.xlu0 %v993
    %v995 = vpop.xlane.xlu0 %994
    %v996 = vsel %vm551, %v976, -inf
    %997 = vmax.xlane.f32.xlu0 %v996
    %v998 = vpop.xlane.xlu0 %997
    %v999 = vsel %vm551, %v977, -inf
    %1000 = vmax.xlane.f32.xlu0 %v999
    %v1001 = vpop.xlane.xlu0 %1000
    %v1002 = vsub.f32 %v970, %v980
    %v1003 = vsub.f32 %v971, %v983
    %v1004 = vsub.f32 %v972, %v986
    %v1005 = vsub.f32 %v973, %v989
    %v1006 = vsub.f32 %v974, %v992
    %v1007 = vsub.f32 %v975, %v995
    %v1008 = vsub.f32 %v976, %v998
    %v1009 = vsub.f32 %v977, %v1001
    %v1010 = vmul.f32 %v1002, 1.442695
    %v1011 = vpow.pop %v1010
    %v1012 = vmul.f32 %v1003, 1.442695
    %v1013 = vpow.pop %v1012
    %v1014 = vmul.f32 %v1004, 1.442695
    %v1015 = vpow.pop %v1014
    %v1016 = vmul.f32 %v1005, 1.442695
    %v1017 = vpow.pop %v1016
    %v1018 = vmul.f32 %v1006, 1.442695
    %v1019 = vpow.pop %v1018
    %v1020 = vmul.f32 %v1007, 1.442695
    %v1021 = vpow.pop %v1020
    %v1022 = vmul.f32 %v1008, 1.442695
    %v1023 = vpow.pop %v1022
    %v1024 = vmul.f32 %v1009, 1.442695
    %v1025 = vpow.pop %v1024
    %v1026 = vsel %vm551, %v1011, 0.0
    %1027 = vadd.xlane.f32.xlu0 %v1026
    %v1028 = vpop.xlane.xlu0 %1027
    %v1029 = vsel %vm551, %v1013, 0.0
    %1030 = vadd.xlane.f32.xlu0 %v1029
    %v1031 = vpop.xlane.xlu0 %1030
    %v1032 = vsel %vm551, %v1015, 0.0
    %1033 = vadd.xlane.f32.xlu0 %v1032
    %v1034 = vpop.xlane.xlu0 %1033
    %v1035 = vsel %vm551, %v1017, 0.0
    %1036 = vadd.xlane.f32.xlu0 %v1035
    %v1037 = vpop.xlane.xlu0 %1036
    %v1038 = vsel %vm551, %v1019, 0.0
    %1039 = vadd.xlane.f32.xlu0 %v1038
    %v1040 = vpop.xlane.xlu0 %1039
    %v1041 = vsel %vm551, %v1021, 0.0
    %1042 = vadd.xlane.f32.xlu0 %v1041
    %v1043 = vpop.xlane.xlu0 %1042
    %v1044 = vsel %vm551, %v1023, 0.0
    %1045 = vadd.xlane.f32.xlu0 %v1044
    %v1046 = vpop.xlane.xlu0 %1045
    %v1047 = vsel %vm551, %v1025, 0.0
    %1048 = vadd.xlane.f32.xlu0 %v1047
    %v1049 = vpop.xlane.xlu0 %1048
    %v1050 = vrcp.pop %v1028
    %v1051 = vmul.f32 %v1011, %v1050
    %v1052 = vrcp.pop %v1031
    %v1053 = vmul.f32 %v1013, %v1052
    %v1054 = vrcp.pop %v1034
    %v1055 = vmul.f32 %v1015, %v1054
    %v1056 = vrcp.pop %v1037
    %v1057 = vmul.f32 %v1017, %v1056
    %v1058 = vrcp.pop %v1040
    %v1059 = vmul.f32 %v1019, %v1058
    %v1060 = vrcp.pop %v1043
    %v1061 = vmul.f32 %v1021, %v1060
    %v1062 = vrcp.pop %v1046
    %v1063 = vmul.f32 %v1023, %v1062
    %v1064 = vrcp.pop %v1049
    %v1065 = vmul.f32 %v1025, %v1064
    %1066 = vrot.lane.b32.xlu0 %v335, 56
    %v1067 = vpop.permute.xlu0 %1066
    %1068 = vrot.lane.b32.xlu0 %v340, 56
    %v1069 = vpop.permute.xlu0 %1068
    %1070 = vrot.lane.b32.xlu0 %v345, 56
    %v1071 = vpop.permute.xlu0 %1070
    %1072 = vrot.lane.b32.xlu0 %v350, 56
    %v1073 = vpop.permute.xlu0 %1072
    %1074 = vrot.lane.b32.xlu0 %v355, 56
    %v1075 = vpop.permute.xlu0 %1074
    %1076 = vrot.lane.b32.xlu0 %v360, 56
    %v1077 = vpop.permute.xlu0 %1076
    %1078 = vrot.lane.b32.xlu0 %v365, 56
    %v1079 = vpop.permute.xlu0 %1078
    %1080 = vrot.lane.b32.xlu0 %v370, 56
    %v1081 = vpop.permute.xlu0 %1080
    %v1091 = vsel %vm551, %v1051, 0
    %v1094 = vsel %vm551, %v1053, 0
    %v1097 = vsel %vm551, %v1055, 0
    %v1100 = vsel %vm551, %v1057, 0
    %v1103 = vsel %vm551, %v1059, 0
    %v1106 = vsel %vm551, %v1061, 0
    %v1109 = vsel %vm551, %v1063, 0
    %v1112 = vsel %vm551, %v1065, 0
    %1114 = vmatprep.subr.mxu0 0.0
    %1115 = vmatpush1.msra.mxu0 %v1067
    %1116 = vmatprep.subr.mxu0 0.0
    %1117 = vmatpush1.msra.mxu0 %v1069
    %1118 = vmatprep.subr.mxu0 0.0
    %1119 = vmatpush1.msra.mxu0 %v1071
    %1120 = vmatprep.subr.mxu0 0.0
    %1121 = vmatpush1.msra.mxu0 %v1073
    %1122 = vmatprep.subr.mxu0 0.0
    %1123 = vmatpush1.msra.mxu0 %v1075
    %1124 = vmatprep.subr.mxu0 0.0
    %1125 = vmatpush1.msra.mxu0 %v1077
    %1126 = vmatprep.subr.mxu0 0.0
    %1127 = vmatpush1.msra.mxu0 %v1079
    %1128 = vmatprep.subr.mxu0 0.0
    %1129 = vmatpush1.msra.mxu0 %v1081
    %1130 = vmatprep.subr.mxu0 0.0
    %1131 = vmatpush1.msra.mxu0 0.0
    %1132 = vmatprep.subr.mxu0 0.0
    %1133 = vmatpush1.msra.mxu0 0.0
    %1134 = vmatprep.subr.mxu0 0.0
    %1135 = vmatpush1.msra.mxu0 0.0
    %1136 = vmatprep.subr.mxu0 0.0
    %1137 = vmatpush1.msra.mxu0 0.0
    %1138 = vmatprep.subr.mxu0 0.0
    %1139 = vmatpush1.msra.mxu0 0.0
    %1140 = vmatprep.subr.mxu0 0.0
    %1141 = vmatpush1.msra.mxu0 0.0
    %1142 = vmatprep.subr.mxu0 0.0
    %1143 = vmatpush1.msra.mxu0 0.0
    %1144 = vmatprep.subr.mxu0 0.0
    %1145 = vmatpush1.msra.mxu0 0.0
    %1146 = vmatprep.subr.mxu0 0.0
    %1147 = vmatpush1.msra.mxu0 0.0
    %1148 = vmatprep.subr.mxu0 0.0
    %1149 = vmatpush1.msra.mxu0 0.0
    %1150 = vmatprep.subr.mxu0 0.0
    %1151 = vmatpush1.msra.mxu0 0.0
    %1152 = vmatprep.subr.mxu0 0.0
    %1153 = vmatpush1.msra.mxu0 0.0
    %1154 = vmatprep.subr.mxu0 0.0
    %1155 = vmatpush1.msra.mxu0 0.0
    %1156 = vmatprep.subr.mxu0 0.0
    %1157 = vmatpush1.msra.mxu0 0.0
    %1158 = vmatprep.subr.mxu0 0.0
    %1159 = vmatpush1.msra.mxu0 0.0
    %1160 = vmatprep.subr.mxu0 0.0
    %1161 = vmatpush1.msra.mxu0 0.0
    %1162 = vmatprep.subr.mxu0 0.0
    %1163 = vmatpush1.msra.mxu0 0.0
    %1164 = vmatprep.subr.mxu0 0.0
    %1165 = vmatpush1.msra.mxu0 0.0
    %1166 = vmatprep.subr.mxu0 0.0
    %1167 = vmatpush1.msra.mxu0 0.0
    %1168 = vmatprep.subr.mxu0 0.0
    %1169 = vmatpush1.msra.mxu0 0.0
    %1170 = vmatprep.subr.mxu0 0.0
    %1171 = vmatpush1.msra.mxu0 0.0
    %1172 = vmatprep.subr.mxu0 0.0
    %1173 = vmatpush1.msra.mxu0 0.0
    %1174 = vmatprep.subr.mxu0 0.0
    %1175 = vmatpush1.msra.mxu0 0.0
    %1176 = vmatprep.subr.mxu0 0.0
    %1177 = vmatpush1.msra.mxu0 0.0
    %1178 = vmatprep.mubr.f32.mxu0 0.0
    %1179 = vmatmul.mubr.f32.gmra.mrb[0].mxu0 %v1091
    %v1180 = vpop.f32.mrb[0].mxu0
    %v1181 = vadd.f32 0.0, %v1180
    %v1182 = vpop.f32.mrb[0].mxu0
    %1183 = vmatprep.mubr.f32.mxu0 0.0
    %1184 = vmatmul.mubr.f32.gmra.mrb[0].mxu0 %v1094
    %v1185 = vpop.f32.mrb[0].mxu0
    %v1186 = vadd.f32 0.0, %v1185
    %v1187 = vpop.f32.mrb[0].mxu0
    %1188 = vmatprep.mubr.f32.mxu0 0.0
    %1189 = vmatmul.mubr.f32.gmra.mrb[0].mxu0 %v1097
    %v1190 = vpop.f32.mrb[0].mxu0
    %v1191 = vadd.f32 0.0, %v1190
    %v1192 = vpop.f32.mrb[0].mxu0
    %1193 = vmatprep.mubr.f32.mxu0 0.0
    %1194 = vmatmul.mubr.f32.gmra.mrb[0].mxu0 %v1100
    %v1195 = vpop.f32.mrb[0].mxu0
    %v1196 = vadd.f32 0.0, %v1195
    %v1197 = vpop.f32.mrb[0].mxu0
    %1198 = vmatprep.mubr.f32.mxu0 0.0
    %1199 = vmatmul.mubr.f32.gmra.mrb[0].mxu0 %v1103
    %v1200 = vpop.f32.mrb[0].mxu0
    %v1201 = vadd.f32 0.0, %v1200
    %v1202 = vpop.f32.mrb[0].mxu0
    %1203 = vmatprep.mubr.f32.mxu0 0.0
    %1204 = vmatmul.mubr.f32.gmra.mrb[0].mxu0 %v1106
    %v1205 = vpop.f32.mrb[0].mxu0
    %v1206 = vadd.f32 0.0, %v1205
    %v1207 = vpop.f32.mrb[0].mxu0
    %1208 = vmatprep.mubr.f32.mxu0 0.0
    %1209 = vmatmul.mubr.f32.gmra.mrb[0].mxu0 %v1109
    %v1210 = vpop.f32.mrb[0].mxu0
    %v1211 = vadd.f32 0.0, %v1210
    %v1212 = vpop.f32.mrb[0].mxu0
    %1213 = vmatprep.mubr.f32.mxu0 0.0
    %1214 = vmatmul.mubr.f32.gmra.mrb[0].mxu0 %v1112
    %v1215 = vpop.f32.mrb[0].mxu0
    %v1216 = vadd.f32 0.0, %v1215
    %v1217 = vpop.f32.mrb[0].mxu0
    %1218 = vdwg.mxu0
    %1219 = vrot.lane.b32.xlu0 %v335, 112
    %v1220 = vpop.permute.xlu0 %1219
    %1221 = vrot.lane.b32.xlu0 %v340, 112
    %v1222 = vpop.permute.xlu0 %1221
    %1223 = vrot.lane.b32.xlu0 %v345, 112
    %v1224 = vpop.permute.xlu0 %1223
    %1225 = vrot.lane.b32.xlu0 %v350, 112
    %v1226 = vpop.permute.xlu0 %1225
    %1227 = vrot.lane.b32.xlu0 %v355, 112
    %v1228 = vpop.permute.xlu0 %1227
    %1229 = vrot.lane.b32.xlu0 %v360, 112
    %v1230 = vpop.permute.xlu0 %1229
    %1231 = vrot.lane.b32.xlu0 %v365, 112
    %v1232 = vpop.permute.xlu0 %1231
    %1233 = vrot.lane.b32.xlu0 %v370, 112
    %v1234 = vpop.permute.xlu0 %1233
    %1235 = vrot.lane.b32.xlu0 %v335, 80
    %v1236 = vpop.permute.xlu0 %1235
    %1237 = vrot.lane.b32.xlu0 %v340, 80
    %v1238 = vpop.permute.xlu0 %1237
    %1239 = vrot.lane.b32.xlu0 %v345, 80
    %v1240 = vpop.permute.xlu0 %1239
    %1241 = vrot.lane.b32.xlu0 %v350, 80
    %v1242 = vpop.permute.xlu0 %1241
    %1243 = vrot.lane.b32.xlu0 %v355, 80
    %v1244 = vpop.permute.xlu0 %1243
    %1245 = vrot.lane.b32.xlu0 %v360, 80
    %v1246 = vpop.permute.xlu0 %1245
    %1247 = vrot.lane.b32.xlu0 %v365, 80
    %v1248 = vpop.permute.xlu0 %1247
    %1249 = vrot.lane.b32.xlu0 %v370, 80
    %v1250 = vpop.permute.xlu0 %1249
    %v1251 = vsel %vm397, %v1220, 0
    %v1253 = vsel %vm397, %v1222, 0
    %v1255 = vsel %vm397, %v1224, 0
    %v1257 = vsel %vm397, %v1226, 0
    %v1259 = vsel %vm397, %v1228, 0
    %v1261 = vsel %vm397, %v1230, 0
    %v1263 = vsel %vm397, %v1232, 0
    %v1265 = vsel %vm397, %v1234, 0
    %v1267 = vsel %vm397, %v1236, 0
    %v1269 = vsel %vm397, %v1238, 0
    %v1271 = vsel %vm397, %v1240, 0
    %v1273 = vsel %vm397, %v1242, 0
    %v1275 = vsel %vm397, %v1244, 0
    %v1277 = vsel %vm397, %v1246, 0
    %v1279 = vsel %vm397, %v1248, 0
    %v1281 = vsel %vm397, %v1250, 0
    %1283 = vmatprep.subr.mxu0 0.0
    %1284 = vmatpush1.xpose.msra.mxu0 %v1267
    %1285 = vmatprep.subr.mxu0 0.0
    %1286 = vmatpush1.xpose.msra.mxu0 %v1269
    %1287 = vmatprep.subr.mxu0 0.0
    %1288 = vmatpush1.xpose.msra.mxu0 %v1271
    %1289 = vmatprep.subr.mxu0 0.0
    %1290 = vmatpush1.xpose.msra.mxu0 %v1273
    %1291 = vmatprep.subr.mxu0 0.0
    %1292 = vmatpush1.xpose.msra.mxu0 %v1275
    %1293 = vmatprep.subr.mxu0 0.0
    %1294 = vmatpush1.xpose.msra.mxu0 %v1277
    %1295 = vmatprep.subr.mxu0 0.0
    %1296 = vmatpush1.xpose.msra.mxu0 %v1279
    %1297 = vmatprep.subr.mxu0 0.0
    %1298 = vmatpush1.xpose.msra.mxu0 %v1281
    %1299 = vmatprep.subr.mxu0 0.0
    %1300 = vmatpush1.xpose.msra.mxu0 0.0
    %1301 = vmatprep.subr.mxu0 0.0
    %1302 = vmatpush1.xpose.msra.mxu0 0.0
    %1303 = vmatprep.subr.mxu0 0.0
    %1304 = vmatpush1.xpose.msra.mxu0 0.0
    %1305 = vmatprep.subr.mxu0 0.0
    %1306 = vmatpush1.xpose.msra.mxu0 0.0
    %1307 = vmatprep.subr.mxu0 0.0
    %1308 = vmatpush1.xpose.msra.mxu0 0.0
    %1309 = vmatprep.subr.mxu0 0.0
    %1310 = vmatpush1.xpose.msra.mxu0 0.0
    %1311 = vmatprep.subr.mxu0 0.0
    %1312 = vmatpush1.xpose.msra.mxu0 0.0
    %1313 = vmatprep.subr.mxu0 0.0
    %1314 = vmatpush1.xpose.msra.mxu0 0.0
    %1315 = vmatprep.subr.mxu0 0.0
    %1316 = vmatpush1.xpose.msra.mxu0 0.0
    %1317 = vmatprep.subr.mxu0 0.0
    %1318 = vmatpush1.xpose.msra.mxu0 0.0
    %1319 = vmatprep.subr.mxu0 0.0
    %1320 = vmatpush1.xpose.msra.mxu0 0.0
    %1321 = vmatprep.subr.mxu0 0.0
    %1322 = vmatpush1.xpose.msra.mxu0 0.0
    %1323 = vmatprep.subr.mxu0 0.0
    %1324 = vmatpush1.xpose.msra.mxu0 0.0
    %1325 = vmatprep.subr.mxu0 0.0
    %1326 = vmatpush1.xpose.msra.mxu0 0.0
    %1327 = vmatprep.subr.mxu0 0.0
    %1328 = vmatpush1.xpose.msra.mxu0 0.0
    %1329 = vmatprep.subr.mxu0 0.0
    %1330 = vmatpush1.xpose.msra.mxu0 0.0
    %1331 = vmatprep.subr.mxu0 0.0
    %1332 = vmatpush1.xpose.msra.mxu0 0.0
    %1333 = vmatprep.subr.mxu0 0.0
    %1334 = vmatpush1.xpose.msra.mxu0 0.0
    %1335 = vmatprep.subr.mxu0 0.0
    %1336 = vmatpush1.xpose.msra.mxu0 0.0
    %1337 = vmatprep.subr.mxu0 0.0
    %1338 = vmatpush1.xpose.msra.mxu0 0.0
    %1339 = vmatprep.subr.mxu0 0.0
    %1340 = vmatpush1.xpose.msra.mxu0 0.0
    %1341 = vmatprep.subr.mxu0 0.0
    %1342 = vmatpush1.xpose.msra.mxu0 0.0
    %1343 = vmatprep.subr.mxu0 0.0
    %1344 = vmatpush1.xpose.msra.mxu0 0.0
    %1345 = vmatprep.subr.mxu0 0.0
    %1346 = vmatpush1.xpose.msra.mxu0 0.0
    %1347 = vmatprep.mubr.f32.mxu0 0.0
    %1348 = vmatmul.mubr.f32.gmra.mrb[0].mxu0 %v1251
    %v1349 = vpop.f32.mrb[0].mxu0
    %v1350 = vadd.f32 0.0, %v1349
    %v1351 = vpop.f32.mrb[0].mxu0
    %1352 = vmatprep.mubr.f32.mxu0 0.0
    %1353 = vmatmul.mubr.f32.gmra.mrb[0].mxu0 %v1253
    %v1354 = vpop.f32.mrb[0].mxu0
    %v1355 = vadd.f32 0.0, %v1354
    %v1356 = vpop.f32.mrb[0].mxu0
    %1357 = vmatprep.mubr.f32.mxu0 0.0
    %1358 = vmatmul.mubr.f32.gmra.mrb[0].mxu0 %v1255
    %v1359 = vpop.f32.mrb[0].mxu0
    %v1360 = vadd.f32 0.0, %v1359
    %v1361 = vpop.f32.mrb[0].mxu0
    %1362 = vmatprep.mubr.f32.mxu0 0.0
    %1363 = vmatmul.mubr.f32.gmra.mrb[0].mxu0 %v1257
    %v1364 = vpop.f32.mrb[0].mxu0
    %v1365 = vadd.f32 0.0, %v1364
    %v1366 = vpop.f32.mrb[0].mxu0
    %1367 = vmatprep.mubr.f32.mxu0 0.0
    %1368 = vmatmul.mubr.f32.gmra.mrb[0].mxu0 %v1259
    %v1369 = vpop.f32.mrb[0].mxu0
    %v1370 = vadd.f32 0.0, %v1369
    %v1371 = vpop.f32.mrb[0].mxu0
    %1372 = vmatprep.mubr.f32.mxu0 0.0
    %1373 = vmatmul.mubr.f32.gmra.mrb[0].mxu0 %v1261
    %v1374 = vpop.f32.mrb[0].mxu0
    %v1375 = vadd.f32 0.0, %v1374
    %v1376 = vpop.f32.mrb[0].mxu0
    %1377 = vmatprep.mubr.f32.mxu0 0.0
    %1378 = vmatmul.mubr.f32.gmra.mrb[0].mxu0 %v1263
    %v1379 = vpop.f32.mrb[0].mxu0
    %v1380 = vadd.f32 0.0, %v1379
    %v1381 = vpop.f32.mrb[0].mxu0
    %1382 = vmatprep.mubr.f32.mxu0 0.0
    %1383 = vmatmul.mubr.f32.gmra.mrb[0].mxu0 %v1265
    %v1384 = vpop.f32.mrb[0].mxu0
    %v1385 = vadd.f32 0.0, %v1384
    %v1386 = vpop.f32.mrb[0].mxu0
    %1387 = vdwg.mxu0
    %v1388 = vmul.f32 %v1350, 0.35355338
    %v1389 = vmul.f32 %v1355, 0.35355338
    %v1390 = vmul.f32 %v1360, 0.35355338
    %v1391 = vmul.f32 %v1365, 0.35355338
    %v1392 = vmul.f32 %v1370, 0.35355338
    %v1393 = vmul.f32 %v1375, 0.35355338
    %v1394 = vmul.f32 %v1380, 0.35355338
    %v1395 = vmul.f32 %v1385, 0.35355338
    %v1396 = vadd.f32 %v1388, %v81
    %v1397 = vadd.f32 %v1389, %v82
    %v1398 = vadd.f32 %v1390, %v83
    %v1399 = vadd.f32 %v1391, %v84
    %v1400 = vadd.f32 %v1392, %v85
    %v1401 = vadd.f32 %v1393, %v86
    %v1402 = vadd.f32 %v1394, %v87
    %v1403 = vadd.f32 %v1395, %v88
    %v1404 = vsel %vm551, %v1396, -inf
    %1405 = vmax.xlane.f32.xlu0 %v1404
    %v1406 = vpop.xlane.xlu0 %1405
    %v1407 = vsel %vm551, %v1397, -inf
    %1408 = vmax.xlane.f32.xlu0 %v1407
    %v1409 = vpop.xlane.xlu0 %1408
    %v1410 = vsel %vm551, %v1398, -inf
    %1411 = vmax.xlane.f32.xlu0 %v1410
    %v1412 = vpop.xlane.xlu0 %1411
    %v1413 = vsel %vm551, %v1399, -inf
    %1414 = vmax.xlane.f32.xlu0 %v1413
    %v1415 = vpop.xlane.xlu0 %1414
    %v1416 = vsel %vm551, %v1400, -inf
    %1417 = vmax.xlane.f32.xlu0 %v1416
    %v1418 = vpop.xlane.xlu0 %1417
    %v1419 = vsel %vm551, %v1401, -inf
    %1420 = vmax.xlane.f32.xlu0 %v1419
    %v1421 = vpop.xlane.xlu0 %1420
    %v1422 = vsel %vm551, %v1402, -inf
    %1423 = vmax.xlane.f32.xlu0 %v1422
    %v1424 = vpop.xlane.xlu0 %1423
    %v1425 = vsel %vm551, %v1403, -inf
    %1426 = vmax.xlane.f32.xlu0 %v1425
    %v1427 = vpop.xlane.xlu0 %1426
    %v1428 = vsub.f32 %v1396, %v1406
    %v1429 = vsub.f32 %v1397, %v1409
    %v1430 = vsub.f32 %v1398, %v1412
    %v1431 = vsub.f32 %v1399, %v1415
    %v1432 = vsub.f32 %v1400, %v1418
    %v1433 = vsub.f32 %v1401, %v1421
    %v1434 = vsub.f32 %v1402, %v1424
    %v1435 = vsub.f32 %v1403, %v1427
    %v1436 = vmul.f32 %v1428, 1.442695
    %v1437 = vpow.pop %v1436
    %v1438 = vmul.f32 %v1429, 1.442695
    %v1439 = vpow.pop %v1438
    %v1440 = vmul.f32 %v1430, 1.442695
    %v1441 = vpow.pop %v1440
    %v1442 = vmul.f32 %v1431, 1.442695
    %v1443 = vpow.pop %v1442
    %v1444 = vmul.f32 %v1432, 1.442695
    %v1445 = vpow.pop %v1444
    %v1446 = vmul.f32 %v1433, 1.442695
    %v1447 = vpow.pop %v1446
    %v1448 = vmul.f32 %v1434, 1.442695
    %v1449 = vpow.pop %v1448
    %v1450 = vmul.f32 %v1435, 1.442695
    %v1451 = vpow.pop %v1450
    %v1452 = vsel %vm551, %v1437, 0.0
    %1453 = vadd.xlane.f32.xlu0 %v1452
    %v1454 = vpop.xlane.xlu0 %1453
    %v1455 = vsel %vm551, %v1439, 0.0
    %1456 = vadd.xlane.f32.xlu0 %v1455
    %v1457 = vpop.xlane.xlu0 %1456
    %v1458 = vsel %vm551, %v1441, 0.0
    %1459 = vadd.xlane.f32.xlu0 %v1458
    %v1460 = vpop.xlane.xlu0 %1459
    %v1461 = vsel %vm551, %v1443, 0.0
    %1462 = vadd.xlane.f32.xlu0 %v1461
    %v1463 = vpop.xlane.xlu0 %1462
    %v1464 = vsel %vm551, %v1445, 0.0
    %1465 = vadd.xlane.f32.xlu0 %v1464
    %v1466 = vpop.xlane.xlu0 %1465
    %v1467 = vsel %vm551, %v1447, 0.0
    %1468 = vadd.xlane.f32.xlu0 %v1467
    %v1469 = vpop.xlane.xlu0 %1468
    %v1470 = vsel %vm551, %v1449, 0.0
    %1471 = vadd.xlane.f32.xlu0 %v1470
    %v1472 = vpop.xlane.xlu0 %1471
    %v1473 = vsel %vm551, %v1451, 0.0
    %1474 = vadd.xlane.f32.xlu0 %v1473
    %v1475 = vpop.xlane.xlu0 %1474
    %v1476 = vrcp.pop %v1454
    %v1477 = vmul.f32 %v1437, %v1476
    %v1478 = vrcp.pop %v1457
    %v1479 = vmul.f32 %v1439, %v1478
    %v1480 = vrcp.pop %v1460
    %v1481 = vmul.f32 %v1441, %v1480
    %v1482 = vrcp.pop %v1463
    %v1483 = vmul.f32 %v1443, %v1482
    %v1484 = vrcp.pop %v1466
    %v1485 = vmul.f32 %v1445, %v1484
    %v1486 = vrcp.pop %v1469
    %v1487 = vmul.f32 %v1447, %v1486
    %v1488 = vrcp.pop %v1472
    %v1489 = vmul.f32 %v1449, %v1488
    %v1490 = vrcp.pop %v1475
    %v1491 = vmul.f32 %v1451, %v1490
    %1492 = vrot.lane.b32.xlu0 %v335, 48
    %v1493 = vpop.permute.xlu0 %1492
    %1494 = vrot.lane.b32.xlu0 %v340, 48
    %v1495 = vpop.permute.xlu0 %1494
    %1496 = vrot.lane.b32.xlu0 %v345, 48
    %v1497 = vpop.permute.xlu0 %1496
    %1498 = vrot.lane.b32.xlu0 %v350, 48
    %v1499 = vpop.permute.xlu0 %1498
    %1500 = vrot.lane.b32.xlu0 %v355, 48
    %v1501 = vpop.permute.xlu0 %1500
    %1502 = vrot.lane.b32.xlu0 %v360, 48
    %v1503 = vpop.permute.xlu0 %1502
    %1504 = vrot.lane.b32.xlu0 %v365, 48
    %v1505 = vpop.permute.xlu0 %1504
    %1506 = vrot.lane.b32.xlu0 %v370, 48
    %v1507 = vpop.permute.xlu0 %1506
    %v1517 = vsel %vm551, %v1477, 0
    %v1520 = vsel %vm551, %v1479, 0
    %v1523 = vsel %vm551, %v1481, 0
    %v1526 = vsel %vm551, %v1483, 0
    %v1529 = vsel %vm551, %v1485, 0
    %v1532 = vsel %vm551, %v1487, 0
    %v1535 = vsel %vm551, %v1489, 0
    %v1538 = vsel %vm551, %v1491, 0
    %1540 = vmatprep.subr.mxu0 0.0
    %1541 = vmatpush1.msra.mxu0 %v1493
    %1542 = vmatprep.subr.mxu0 0.0
    %1543 = vmatpush1.msra.mxu0 %v1495
    %1544 = vmatprep.subr.mxu0 0.0
    %1545 = vmatpush1.msra.mxu0 %v1497
    %1546 = vmatprep.subr.mxu0 0.0
    %1547 = vmatpush1.msra.mxu0 %v1499
    %1548 = vmatprep.subr.mxu0 0.0
    %1549 = vmatpush1.msra.mxu0 %v1501
    %1550 = vmatprep.subr.mxu0 0.0
    %1551 = vmatpush1.msra.mxu0 %v1503
    %1552 = vmatprep.subr.mxu0 0.0
    %1553 = vmatpush1.msra.mxu0 %v1505
    %1554 = vmatprep.subr.mxu0 0.0
    %1555 = vmatpush1.msra.mxu0 %v1507
    %1556 = vmatprep.subr.mxu0 0.0
    %1557 = vmatpush1.msra.mxu0 0.0
    %1558 = vmatprep.subr.mxu0 0.0
    %1559 = vmatpush1.msra.mxu0 0.0
    %1560 = vmatprep.subr.mxu0 0.0
    %1561 = vmatpush1.msra.mxu0 0.0
    %1562 = vmatprep.subr.mxu0 0.0
    %1563 = vmatpush1.msra.mxu0 0.0
    %1564 = vmatprep.subr.mxu0 0.0
    %1565 = vmatpush1.msra.mxu0 0.0
    %1566 = vmatprep.subr.mxu0 0.0
    %1567 = vmatpush1.msra.mxu0 0.0
    %1568 = vmatprep.subr.mxu0 0.0
    %1569 = vmatpush1.msra.mxu0 0.0
    %1570 = vmatprep.subr.mxu0 0.0
    %1571 = vmatpush1.msra.mxu0 0.0
    %1572 = vmatprep.subr.mxu0 0.0
    %1573 = vmatpush1.msra.mxu0 0.0
    %1574 = vmatprep.subr.mxu0 0.0
    %1575 = vmatpush1.msra.mxu0 0.0
    %1576 = vmatprep.subr.mxu0 0.0
    %1577 = vmatpush1.msra.mxu0 0.0
    %1578 = vmatprep.subr.mxu0 0.0
    %1579 = vmatpush1.msra.mxu0 0.0
    %1580 = vmatprep.subr.mxu0 0.0
    %1581 = vmatpush1.msra.mxu0 0.0
    %1582 = vmatprep.subr.mxu0 0.0
    %1583 = vmatpush1.msra.mxu0 0.0
    %1584 = vmatprep.subr.mxu0 0.0
    %1585 = vmatpush1.msra.mxu0 0.0
    %1586 = vmatprep.subr.mxu0 0.0
    %1587 = vmatpush1.msra.mxu0 0.0
    %1588 = vmatprep.subr.mxu0 0.0
    %1589 = vmatpush1.msra.mxu0 0.0
    %1590 = vmatprep.subr.mxu0 0.0
    %1591 = vmatpush1.msra.mxu0 0.0
    %1592 = vmatprep.subr.mxu0 0.0
    %1593 = vmatpush1.msra.mxu0 0.0
    %1594 = vmatprep.subr.mxu0 0.0
    %1595 = vmatpush1.msra.mxu0 0.0
    %1596 = vmatprep.subr.mxu0 0.0
    %1597 = vmatpush1.msra.mxu0 0.0
    %1598 = vmatprep.subr.mxu0 0.0
    %1599 = vmatpush1.msra.mxu0 0.0
    %1600 = vmatprep.subr.mxu0 0.0
    %1601 = vmatpush1.msra.mxu0 0.0
    %1602 = vmatprep.subr.mxu0 0.0
    %1603 = vmatpush1.msra.mxu0 0.0
    %1604 = vmatprep.mubr.f32.mxu0 0.0
    %1605 = vmatmul.mubr.f32.gmra.mrb[0].mxu0 %v1517
    %v1606 = vpop.f32.mrb[0].mxu0
    %v1607 = vadd.f32 0.0, %v1606
    %v1608 = vpop.f32.mrb[0].mxu0
    %1609 = vmatprep.mubr.f32.mxu0 0.0
    %1610 = vmatmul.mubr.f32.gmra.mrb[0].mxu0 %v1520
    %v1611 = vpop.f32.mrb[0].mxu0
    %v1612 = vadd.f32 0.0, %v1611
    %v1613 = vpop.f32.mrb[0].mxu0
    %1614 = vmatprep.mubr.f32.mxu0 0.0
    %1615 = vmatmul.mubr.f32.gmra.mrb[0].mxu0 %v1523
    %v1616 = vpop.f32.mrb[0].mxu0
    %v1617 = vadd.f32 0.0, %v1616
    %v1618 = vpop.f32.mrb[0].mxu0
    %1619 = vmatprep.mubr.f32.mxu0 0.0
    %1620 = vmatmul.mubr.f32.gmra.mrb[0].mxu0 %v1526
    %v1621 = vpop.f32.mrb[0].mxu0
    %v1622 = vadd.f32 0.0, %v1621
    %v1623 = vpop.f32.mrb[0].mxu0
    %1624 = vmatprep.mubr.f32.mxu0 0.0
    %1625 = vmatmul.mubr.f32.gmra.mrb[0].mxu0 %v1529
    %v1626 = vpop.f32.mrb[0].mxu0
    %v1627 = vadd.f32 0.0, %v1626
    %v1628 = vpop.f32.mrb[0].mxu0
    %1629 = vmatprep.mubr.f32.mxu0 0.0
    %1630 = vmatmul.mubr.f32.gmra.mrb[0].mxu0 %v1532
    %v1631 = vpop.f32.mrb[0].mxu0
    %v1632 = vadd.f32 0.0, %v1631
    %v1633 = vpop.f32.mrb[0].mxu0
    %1634 = vmatprep.mubr.f32.mxu0 0.0
    %1635 = vmatmul.mubr.f32.gmra.mrb[0].mxu0 %v1535
    %v1636 = vpop.f32.mrb[0].mxu0
    %v1637 = vadd.f32 0.0, %v1636
    %v1638 = vpop.f32.mrb[0].mxu0
    %1639 = vmatprep.mubr.f32.mxu0 0.0
    %1640 = vmatmul.mubr.f32.gmra.mrb[0].mxu0 %v1538
    %v1641 = vpop.f32.mrb[0].mxu0
    %v1642 = vadd.f32 0.0, %v1641
    %v1643 = vpop.f32.mrb[0].mxu0
    %1644 = vdwg.mxu0
    %1645 = vrot.lane.b32.xlu0 %v335, 104
    %v1646 = vpop.permute.xlu0 %1645
    %1647 = vrot.lane.b32.xlu0 %v340, 104
    %v1648 = vpop.permute.xlu0 %1647
    %1649 = vrot.lane.b32.xlu0 %v345, 104
    %v1650 = vpop.permute.xlu0 %1649
    %1651 = vrot.lane.b32.xlu0 %v350, 104
    %v1652 = vpop.permute.xlu0 %1651
    %1653 = vrot.lane.b32.xlu0 %v355, 104
    %v1654 = vpop.permute.xlu0 %1653
    %1655 = vrot.lane.b32.xlu0 %v360, 104
    %v1656 = vpop.permute.xlu0 %1655
    %1657 = vrot.lane.b32.xlu0 %v365, 104
    %v1658 = vpop.permute.xlu0 %1657
    %1659 = vrot.lane.b32.xlu0 %v370, 104
    %v1660 = vpop.permute.xlu0 %1659
    %1661 = vrot.lane.b32.xlu0 %v335, 72
    %v1662 = vpop.permute.xlu0 %1661
    %1663 = vrot.lane.b32.xlu0 %v340, 72
    %v1664 = vpop.permute.xlu0 %1663
    %1665 = vrot.lane.b32.xlu0 %v345, 72
    %v1666 = vpop.permute.xlu0 %1665
    %1667 = vrot.lane.b32.xlu0 %v350, 72
    %v1668 = vpop.permute.xlu0 %1667
    %1669 = vrot.lane.b32.xlu0 %v355, 72
    %v1670 = vpop.permute.xlu0 %1669
    %1671 = vrot.lane.b32.xlu0 %v360, 72
    %v1672 = vpop.permute.xlu0 %1671
    %1673 = vrot.lane.b32.xlu0 %v365, 72
    %v1674 = vpop.permute.xlu0 %1673
    %1675 = vrot.lane.b32.xlu0 %v370, 72
    %v1676 = vpop.permute.xlu0 %1675
    %v1677 = vsel %vm397, %v1646, 0
    %v1679 = vsel %vm397, %v1648, 0
    %v1681 = vsel %vm397, %v1650, 0
    %v1683 = vsel %vm397, %v1652, 0
    %v1685 = vsel %vm397, %v1654, 0
    %v1687 = vsel %vm397, %v1656, 0
    %v1689 = vsel %vm397, %v1658, 0
    %v1691 = vsel %vm397, %v1660, 0
    %v1693 = vsel %vm397, %v1662, 0
    %v1695 = vsel %vm397, %v1664, 0
    %v1697 = vsel %vm397, %v1666, 0
    %v1699 = vsel %vm397, %v1668, 0
    %v1701 = vsel %vm397, %v1670, 0
    %v1703 = vsel %vm397, %v1672, 0
    %v1705 = vsel %vm397, %v1674, 0
    %v1707 = vsel %vm397, %v1676, 0
    %1709 = vmatprep.subr.mxu0 0.0
    %1710 = vmatpush1.xpose.msra.mxu0 %v1693
    %1711 = vmatprep.subr.mxu0 0.0
    %1712 = vmatpush1.xpose.msra.mxu0 %v1695
    %1713 = vmatprep.subr.mxu0 0.0
    %1714 = vmatpush1.xpose.msra.mxu0 %v1697
    %1715 = vmatprep.subr.mxu0 0.0
    %1716 = vmatpush1.xpose.msra.mxu0 %v1699
    %1717 = vmatprep.subr.mxu0 0.0
    %1718 = vmatpush1.xpose.msra.mxu0 %v1701
    %1719 = vmatprep.subr.mxu0 0.0
    %1720 = vmatpush1.xpose.msra.mxu0 %v1703
    %1721 = vmatprep.subr.mxu0 0.0
    %1722 = vmatpush1.xpose.msra.mxu0 %v1705
    %1723 = vmatprep.subr.mxu0 0.0
    %1724 = vmatpush1.xpose.msra.mxu0 %v1707
    %1725 = vmatprep.subr.mxu0 0.0
    %1726 = vmatpush1.xpose.msra.mxu0 0.0
    %1727 = vmatprep.subr.mxu0 0.0
    %1728 = vmatpush1.xpose.msra.mxu0 0.0
    %1729 = vmatprep.subr.mxu0 0.0
    %1730 = vmatpush1.xpose.msra.mxu0 0.0
    %1731 = vmatprep.subr.mxu0 0.0
    %1732 = vmatpush1.xpose.msra.mxu0 0.0
    %1733 = vmatprep.subr.mxu0 0.0
    %1734 = vmatpush1.xpose.msra.mxu0 0.0
    %1735 = vmatprep.subr.mxu0 0.0
    %1736 = vmatpush1.xpose.msra.mxu0 0.0
    %1737 = vmatprep.subr.mxu0 0.0
    %1738 = vmatpush1.xpose.msra.mxu0 0.0
    %1739 = vmatprep.subr.mxu0 0.0
    %1740 = vmatpush1.xpose.msra.mxu0 0.0
    %1741 = vmatprep.subr.mxu0 0.0
    %1742 = vmatpush1.xpose.msra.mxu0 0.0
    %1743 = vmatprep.subr.mxu0 0.0
    %1744 = vmatpush1.xpose.msra.mxu0 0.0
    %1745 = vmatprep.subr.mxu0 0.0
    %1746 = vmatpush1.xpose.msra.mxu0 0.0
    %1747 = vmatprep.subr.mxu0 0.0
    %1748 = vmatpush1.xpose.msra.mxu0 0.0
    %1749 = vmatprep.subr.mxu0 0.0
    %1750 = vmatpush1.xpose.msra.mxu0 0.0
    %1751 = vmatprep.subr.mxu0 0.0
    %1752 = vmatpush1.xpose.msra.mxu0 0.0
    %1753 = vmatprep.subr.mxu0 0.0
    %1754 = vmatpush1.xpose.msra.mxu0 0.0
    %1755 = vmatprep.subr.mxu0 0.0
    %1756 = vmatpush1.xpose.msra.mxu0 0.0
    %1757 = vmatprep.subr.mxu0 0.0
    %1758 = vmatpush1.xpose.msra.mxu0 0.0
    %1759 = vmatprep.subr.mxu0 0.0
    %1760 = vmatpush1.xpose.msra.mxu0 0.0
    %1761 = vmatprep.subr.mxu0 0.0
    %1762 = vmatpush1.xpose.msra.mxu0 0.0
    %1763 = vmatprep.subr.mxu0 0.0
    %1764 = vmatpush1.xpose.msra.mxu0 0.0
    %1765 = vmatprep.subr.mxu0 0.0
    %1766 = vmatpush1.xpose.msra.mxu0 0.0
    %1767 = vmatprep.subr.mxu0 0.0
    %1768 = vmatpush1.xpose.msra.mxu0 0.0
    %1769 = vmatprep.subr.mxu0 0.0
    %1770 = vmatpush1.xpose.msra.mxu0 0.0
    %1771 = vmatprep.subr.mxu0 0.0
    %1772 = vmatpush1.xpose.msra.mxu0 0.0
    %1773 = vmatprep.mubr.f32.mxu0 0.0
    %1774 = vmatmul.mubr.f32.gmra.mrb[0].mxu0 %v1677
    %v1775 = vpop.f32.mrb[0].mxu0
    %v1776 = vadd.f32 0.0, %v1775
    %v1777 = vpop.f32.mrb[0].mxu0
    %1778 = vmatprep.mubr.f32.mxu0 0.0
    %1779 = vmatmul.mubr.f32.gmra.mrb[0].mxu0 %v1679
    %v1780 = vpop.f32.mrb[0].mxu0
    %v1781 = vadd.f32 0.0, %v1780
    %v1782 = vpop.f32.mrb[0].mxu0
    %1783 = vmatprep.mubr.f32.mxu0 0.0
    %1784 = vmatmul.mubr.f32.gmra.mrb[0].mxu0 %v1681
    %v1785 = vpop.f32.mrb[0].mxu0
    %v1786 = vadd.f32 0.0, %v1785
    %v1787 = vpop.f32.mrb[0].mxu0
    %1788 = vmatprep.mubr.f32.mxu0 0.0
    %1789 = vmatmul.mubr.f32.gmra.mrb[0].mxu0 %v1683
    %v1790 = vpop.f32.mrb[0].mxu0
    %v1791 = vadd.f32 0.0, %v1790
    %v1792 = vpop.f32.mrb[0].mxu0
    %1793 = vmatprep.mubr.f32.mxu0 0.0
    %1794 = vmatmul.mubr.f32.gmra.mrb[0].mxu0 %v1685
    %v1795 = vpop.f32.mrb[0].mxu0
    %v1796 = vadd.f32 0.0, %v1795
    %v1797 = vpop.f32.mrb[0].mxu0
    %1798 = vmatprep.mubr.f32.mxu0 0.0
    %1799 = vmatmul.mubr.f32.gmra.mrb[0].mxu0 %v1687
    %v1800 = vpop.f32.mrb[0].mxu0
    %v1801 = vadd.f32 0.0, %v1800
    %v1802 = vpop.f32.mrb[0].mxu0
    %1803 = vmatprep.mubr.f32.mxu0 0.0
    %1804 = vmatmul.mubr.f32.gmra.mrb[0].mxu0 %v1689
    %v1805 = vpop.f32.mrb[0].mxu0
    %v1806 = vadd.f32 0.0, %v1805
    %v1807 = vpop.f32.mrb[0].mxu0
    %1808 = vmatprep.mubr.f32.mxu0 0.0
    %1809 = vmatmul.mubr.f32.gmra.mrb[0].mxu0 %v1691
    %v1810 = vpop.f32.mrb[0].mxu0
    %v1811 = vadd.f32 0.0, %v1810
    %v1812 = vpop.f32.mrb[0].mxu0
    %1813 = vdwg.mxu0
    %v1814 = vmul.f32 %v1776, 0.35355338
    %v1815 = vmul.f32 %v1781, 0.35355338
    %v1816 = vmul.f32 %v1786, 0.35355338
    %v1817 = vmul.f32 %v1791, 0.35355338
    %v1818 = vmul.f32 %v1796, 0.35355338
    %v1819 = vmul.f32 %v1801, 0.35355338
    %v1820 = vmul.f32 %v1806, 0.35355338
    %v1821 = vmul.f32 %v1811, 0.35355338
    %v1822 = vadd.f32 %v1814, %v81
    %v1823 = vadd.f32 %v1815, %v82
    %v1824 = vadd.f32 %v1816, %v83
    %v1825 = vadd.f32 %v1817, %v84
    %v1826 = vadd.f32 %v1818, %v85
    %v1827 = vadd.f32 %v1819, %v86
    %v1828 = vadd.f32 %v1820, %v87
    %v1829 = vadd.f32 %v1821, %v88
    %v1830 = vsel %vm551, %v1822, -inf
    %1831 = vmax.xlane.f32.xlu0 %v1830
    %v1832 = vpop.xlane.xlu0 %1831
    %v1833 = vsel %vm551, %v1823, -inf
    %1834 = vmax.xlane.f32.xlu0 %v1833
    %v1835 = vpop.xlane.xlu0 %1834
    %v1836 = vsel %vm551, %v1824, -inf
    %1837 = vmax.xlane.f32.xlu0 %v1836
    %v1838 = vpop.xlane.xlu0 %1837
    %v1839 = vsel %vm551, %v1825, -inf
    %1840 = vmax.xlane.f32.xlu0 %v1839
    %v1841 = vpop.xlane.xlu0 %1840
    %v1842 = vsel %vm551, %v1826, -inf
    %1843 = vmax.xlane.f32.xlu0 %v1842
    %v1844 = vpop.xlane.xlu0 %1843
    %v1845 = vsel %vm551, %v1827, -inf
    %1846 = vmax.xlane.f32.xlu0 %v1845
    %v1847 = vpop.xlane.xlu0 %1846
    %v1848 = vsel %vm551, %v1828, -inf
    %1849 = vmax.xlane.f32.xlu0 %v1848
    %v1850 = vpop.xlane.xlu0 %1849
    %v1851 = vsel %vm551, %v1829, -inf
    %1852 = vmax.xlane.f32.xlu0 %v1851
    %v1853 = vpop.xlane.xlu0 %1852
    %v1854 = vsub.f32 %v1822, %v1832
    %v1855 = vsub.f32 %v1823, %v1835
    %v1856 = vsub.f32 %v1824, %v1838
    %v1857 = vsub.f32 %v1825, %v1841
    %v1858 = vsub.f32 %v1826, %v1844
    %v1859 = vsub.f32 %v1827, %v1847
    %v1860 = vsub.f32 %v1828, %v1850
    %v1861 = vsub.f32 %v1829, %v1853
    %v1862 = vmul.f32 %v1854, 1.442695
    %v1863 = vpow.pop %v1862
    %v1864 = vmul.f32 %v1855, 1.442695
    %v1865 = vpow.pop %v1864
    %v1866 = vmul.f32 %v1856, 1.442695
    %v1867 = vpow.pop %v1866
    %v1868 = vmul.f32 %v1857, 1.442695
    %v1869 = vpow.pop %v1868
    %v1870 = vmul.f32 %v1858, 1.442695
    %v1871 = vpow.pop %v1870
    %v1872 = vmul.f32 %v1859, 1.442695
    %v1873 = vpow.pop %v1872
    %v1874 = vmul.f32 %v1860, 1.442695
    %v1875 = vpow.pop %v1874
    %v1876 = vmul.f32 %v1861, 1.442695
    %v1877 = vpow.pop %v1876
    %v1878 = vsel %vm551, %v1863, 0.0
    %1879 = vadd.xlane.f32.xlu0 %v1878
    %v1880 = vpop.xlane.xlu0 %1879
    %v1881 = vsel %vm551, %v1865, 0.0
    %1882 = vadd.xlane.f32.xlu0 %v1881
    %v1883 = vpop.xlane.xlu0 %1882
    %v1884 = vsel %vm551, %v1867, 0.0
    %1885 = vadd.xlane.f32.xlu0 %v1884
    %v1886 = vpop.xlane.xlu0 %1885
    %v1887 = vsel %vm551, %v1869, 0.0
    %1888 = vadd.xlane.f32.xlu0 %v1887
    %v1889 = vpop.xlane.xlu0 %1888
    %v1890 = vsel %vm551, %v1871, 0.0
    %1891 = vadd.xlane.f32.xlu0 %v1890
    %v1892 = vpop.xlane.xlu0 %1891
    %v1893 = vsel %vm551, %v1873, 0.0
    %1894 = vadd.xlane.f32.xlu0 %v1893
    %v1895 = vpop.xlane.xlu0 %1894
    %v1896 = vsel %vm551, %v1875, 0.0
    %1897 = vadd.xlane.f32.xlu0 %v1896
    %v1898 = vpop.xlane.xlu0 %1897
    %v1899 = vsel %vm551, %v1877, 0.0
    %1900 = vadd.xlane.f32.xlu0 %v1899
    %v1901 = vpop.xlane.xlu0 %1900
    %v1902 = vrcp.pop %v1880
    %v1903 = vmul.f32 %v1863, %v1902
    %v1904 = vrcp.pop %v1883
    %v1905 = vmul.f32 %v1865, %v1904
    %v1906 = vrcp.pop %v1886
    %v1907 = vmul.f32 %v1867, %v1906
    %v1908 = vrcp.pop %v1889
    %v1909 = vmul.f32 %v1869, %v1908
    %v1910 = vrcp.pop %v1892
    %v1911 = vmul.f32 %v1871, %v1910
    %v1912 = vrcp.pop %v1895
    %v1913 = vmul.f32 %v1873, %v1912
    %v1914 = vrcp.pop %v1898
    %v1915 = vmul.f32 %v1875, %v1914
    %v1916 = vrcp.pop %v1901
    %v1917 = vmul.f32 %v1877, %v1916
    %1918 = vrot.lane.b32.xlu0 %v335, 40
    %v1919 = vpop.permute.xlu0 %1918
    %1920 = vrot.lane.b32.xlu0 %v340, 40
    %v1921 = vpop.permute.xlu0 %1920
    %1922 = vrot.lane.b32.xlu0 %v345, 40
    %v1923 = vpop.permute.xlu0 %1922
    %1924 = vrot.lane.b32.xlu0 %v350, 40
    %v1925 = vpop.permute.xlu0 %1924
    %1926 = vrot.lane.b32.xlu0 %v355, 40
    %v1927 = vpop.permute.xlu0 %1926
    %1928 = vrot.lane.b32.xlu0 %v360, 40
    %v1929 = vpop.permute.xlu0 %1928
    %1930 = vrot.lane.b32.xlu0 %v365, 40
    %v1931 = vpop.permute.xlu0 %1930
    %1932 = vrot.lane.b32.xlu0 %v370, 40
    %v1933 = vpop.permute.xlu0 %1932
    %v1943 = vsel %vm551, %v1903, 0
    %v1946 = vsel %vm551, %v1905, 0
    %v1949 = vsel %vm551, %v1907, 0
    %v1952 = vsel %vm551, %v1909, 0
    %v1955 = vsel %vm551, %v1911, 0
    %v1958 = vsel %vm551, %v1913, 0
    %v1961 = vsel %vm551, %v1915, 0
    %v1964 = vsel %vm551, %v1917, 0
    %1966 = vmatprep.subr.mxu0 0.0
    %1967 = vmatpush1.msra.mxu0 %v1919
    %1968 = vmatprep.subr.mxu0 0.0
    %1969 = vmatpush1.msra.mxu0 %v1921
    %1970 = vmatprep.subr.mxu0 0.0
    %1971 = vmatpush1.msra.mxu0 %v1923
    %1972 = vmatprep.subr.mxu0 0.0
    %1973 = vmatpush1.msra.mxu0 %v1925
    %1974 = vmatprep.subr.mxu0 0.0
    %1975 = vmatpush1.msra.mxu0 %v1927
    %1976 = vmatprep.subr.mxu0 0.0
    %1977 = vmatpush1.msra.mxu0 %v1929
    %1978 = vmatprep.subr.mxu0 0.0
    %1979 = vmatpush1.msra.mxu0 %v1931
    %1980 = vmatprep.subr.mxu0 0.0
    %1981 = vmatpush1.msra.mxu0 %v1933
    %1982 = vmatprep.subr.mxu0 0.0
    %1983 = vmatpush1.msra.mxu0 0.0
    %1984 = vmatprep.subr.mxu0 0.0
    %1985 = vmatpush1.msra.mxu0 0.0
    %1986 = vmatprep.subr.mxu0 0.0
    %1987 = vmatpush1.msra.mxu0 0.0
    %1988 = vmatprep.subr.mxu0 0.0
    %1989 = vmatpush1.msra.mxu0 0.0
    %1990 = vmatprep.subr.mxu0 0.0
    %1991 = vmatpush1.msra.mxu0 0.0
    %1992 = vmatprep.subr.mxu0 0.0
    %1993 = vmatpush1.msra.mxu0 0.0
    %1994 = vmatprep.subr.mxu0 0.0
    %1995 = vmatpush1.msra.mxu0 0.0
    %1996 = vmatprep.subr.mxu0 0.0
    %1997 = vmatpush1.msra.mxu0 0.0
    %1998 = vmatprep.subr.mxu0 0.0
    %1999 = vmatpush1.msra.mxu0 0.0
    %2000 = vmatprep.subr.mxu0 0.0
    %2001 = vmatpush1.msra.mxu0 0.0
    %2002 = vmatprep.subr.mxu0 0.0
    %2003 = vmatpush1.msra.mxu0 0.0
    %2004 = vmatprep.subr.mxu0 0.0
    %2005 = vmatpush1.msra.mxu0 0.0
    %2006 = vmatprep.subr.mxu0 0.0
    %2007 = vmatpush1.msra.mxu0 0.0
    %2008 = vmatprep.subr.mxu0 0.0
    %2009 = vmatpush1.msra.mxu0 0.0
    %2010 = vmatprep.subr.mxu0 0.0
    %2011 = vmatpush1.msra.mxu0 0.0
    %2012 = vmatprep.subr.mxu0 0.0
    %2013 = vmatpush1.msra.mxu0 0.0
    %2014 = vmatprep.subr.mxu0 0.0
    %2015 = vmatpush1.msra.mxu0 0.0
    %2016 = vmatprep.subr.mxu0 0.0
    %2017 = vmatpush1.msra.mxu0 0.0
    %2018 = vmatprep.subr.mxu0 0.0
    %2019 = vmatpush1.msra.mxu0 0.0
    %2020 = vmatprep.subr.mxu0 0.0
    %2021 = vmatpush1.msra.mxu0 0.0
    %2022 = vmatprep.subr.mxu0 0.0
    %2023 = vmatpush1.msra.mxu0 0.0
    %2024 = vmatprep.subr.mxu0 0.0
    %2025 = vmatpush1.msra.mxu0 0.0
    %2026 = vmatprep.subr.mxu0 0.0
    %2027 = vmatpush1.msra.mxu0 0.0
    %2028 = vmatprep.subr.mxu0 0.0
    %2029 = vmatpush1.msra.mxu0 0.0
    %2030 = vmatprep.mubr.f32.mxu0 0.0
    %2031 = vmatmul.mubr.f32.gmra.mrb[0].mxu0 %v1943
    %v2032 = vpop.f32.mrb[0].mxu0
    %v2033 = vadd.f32 0.0, %v2032
    %v2034 = vpop.f32.mrb[0].mxu0
    %2035 = vmatprep.mubr.f32.mxu0 0.0
    %2036 = vmatmul.mubr.f32.gmra.mrb[0].mxu0 %v1946
    %v2037 = vpop.f32.mrb[0].mxu0
    %v2038 = vadd.f32 0.0, %v2037
    %v2039 = vpop.f32.mrb[0].mxu0
    %2040 = vmatprep.mubr.f32.mxu0 0.0
    %2041 = vmatmul.mubr.f32.gmra.mrb[0].mxu0 %v1949
    %v2042 = vpop.f32.mrb[0].mxu0
    %v2043 = vadd.f32 0.0, %v2042
    %v2044 = vpop.f32.mrb[0].mxu0
    %2045 = vmatprep.mubr.f32.mxu0 0.0
    %2046 = vmatmul.mubr.f32.gmra.mrb[0].mxu0 %v1952
    %v2047 = vpop.f32.mrb[0].mxu0
    %v2048 = vadd.f32 0.0, %v2047
    %v2049 = vpop.f32.mrb[0].mxu0
    %2050 = vmatprep.mubr.f32.mxu0 0.0
    %2051 = vmatmul.mubr.f32.gmra.mrb[0].mxu0 %v1955
    %v2052 = vpop.f32.mrb[0].mxu0
    %v2053 = vadd.f32 0.0, %v2052
    %v2054 = vpop.f32.mrb[0].mxu0
    %2055 = vmatprep.mubr.f32.mxu0 0.0
    %2056 = vmatmul.mubr.f32.gmra.mrb[0].mxu0 %v1958
    %v2057 = vpop.f32.mrb[0].mxu0
    %v2058 = vadd.f32 0.0, %v2057
    %v2059 = vpop.f32.mrb[0].mxu0
    %2060 = vmatprep.mubr.f32.mxu0 0.0
    %2061 = vmatmul.mubr.f32.gmra.mrb[0].mxu0 %v1961
    %v2062 = vpop.f32.mrb[0].mxu0
    %v2063 = vadd.f32 0.0, %v2062
    %v2064 = vpop.f32.mrb[0].mxu0
    %2065 = vmatprep.mubr.f32.mxu0 0.0
    %2066 = vmatmul.mubr.f32.gmra.mrb[0].mxu0 %v1964
    %v2067 = vpop.f32.mrb[0].mxu0
    %v2068 = vadd.f32 0.0, %v2067
    %v2069 = vpop.f32.mrb[0].mxu0
    %2070 = vdwg.mxu0
    %2079 = vrot.lane.b32.xlu0 %v1181, 8
    %v2080 = vpop.permute.xlu0 %2079
    %2081 = vrot.lane.b32.xlu0 %v1186, 8
    %v2082 = vpop.permute.xlu0 %2081
    %2083 = vrot.lane.b32.xlu0 %v1191, 8
    %v2084 = vpop.permute.xlu0 %2083
    %2085 = vrot.lane.b32.xlu0 %v1196, 8
    %v2086 = vpop.permute.xlu0 %2085
    %2087 = vrot.lane.b32.xlu0 %v1201, 8
    %v2088 = vpop.permute.xlu0 %2087
    %2089 = vrot.lane.b32.xlu0 %v1206, 8
    %v2090 = vpop.permute.xlu0 %2089
    %2091 = vrot.lane.b32.xlu0 %v1211, 8
    %v2092 = vpop.permute.xlu0 %2091
    %2093 = vrot.lane.b32.xlu0 %v1216, 8
    %v2094 = vpop.permute.xlu0 %2093
    %2111 = vrot.lane.b32.xlu0 %v1607, 16
    %v2112 = vpop.permute.xlu0 %2111
    %2113 = vrot.lane.b32.xlu0 %v1612, 16
    %v2114 = vpop.permute.xlu0 %2113
    %2115 = vrot.lane.b32.xlu0 %v1617, 16
    %v2116 = vpop.permute.xlu0 %2115
    %2117 = vrot.lane.b32.xlu0 %v1622, 16
    %v2118 = vpop.permute.xlu0 %2117
    %2119 = vrot.lane.b32.xlu0 %v1627, 16
    %v2120 = vpop.permute.xlu0 %2119
    %2121 = vrot.lane.b32.xlu0 %v1632, 16
    %v2122 = vpop.permute.xlu0 %2121
    %2123 = vrot.lane.b32.xlu0 %v1637, 16
    %v2124 = vpop.permute.xlu0 %2123
    %2125 = vrot.lane.b32.xlu0 %v1642, 16
    %v2126 = vpop.permute.xlu0 %2125
    %2143 = vrot.lane.b32.xlu0 %v2033, 24
    %v2144 = vpop.permute.xlu0 %2143
    %2145 = vrot.lane.b32.xlu0 %v2038, 24
    %v2146 = vpop.permute.xlu0 %2145
    %2147 = vrot.lane.b32.xlu0 %v2043, 24
    %v2148 = vpop.permute.xlu0 %2147
    %2149 = vrot.lane.b32.xlu0 %v2048, 24
    %v2150 = vpop.permute.xlu0 %2149
    %2151 = vrot.lane.b32.xlu0 %v2053, 24
    %v2152 = vpop.permute.xlu0 %2151
    %2153 = vrot.lane.b32.xlu0 %v2058, 24
    %v2154 = vpop.permute.xlu0 %2153
    %2155 = vrot.lane.b32.xlu0 %v2063, 24
    %v2156 = vpop.permute.xlu0 %2155
    %2157 = vrot.lane.b32.xlu0 %v2068, 24
    %v2158 = vpop.permute.xlu0 %2157
    %v2167 = vsel %vm397, %v755, %v2080
    %v2168 = vsel %vm397, %v760, %v2082
    %v2169 = vsel %vm397, %v765, %v2084
    %v2170 = vsel %vm397, %v770, %v2086
    %v2171 = vsel %vm397, %v775, %v2088
    %v2172 = vsel %vm397, %v780, %v2090
    %v2173 = vsel %vm397, %v785, %v2092
    %v2174 = vsel %vm397, %v790, %v2094
    %vm2175 = vcmask 130048
    %v2176 = vsel %vm2175, %v2167, %v2112
    %v2177 = vsel %vm2175, %v2168, %v2114
    %v2178 = vsel %vm2175, %v2169, %v2116
    %v2179 = vsel %vm2175, %v2170, %v2118
    %v2180 = vsel %vm2175, %v2171, %v2120
    %v2181 = vsel %vm2175, %v2172, %v2122
    %v2182 = vsel %vm2175, %v2173, %v2124
    %v2183 = vsel %vm2175, %v2174, %v2126
    %vm2184 = vcmask 195584
    %v2185 = vsel %vm2184, %v2176, %v2144
    %v2186 = vsel %vm2184, %v2177, %v2146
    %v2187 = vsel %vm2184, %v2178, %v2148
    %v2188 = vsel %vm2184, %v2179, %v2150
    %v2189 = vsel %vm2184, %v2180, %v2152
    %v2190 = vsel %vm2184, %v2181, %v2154
    %v2191 = vsel %vm2184, %v2182, %v2156
    %v2192 = vsel %vm2184, %v2183, %v2158
    %v2193 = vld [vmem:[%s7] sm:$0xff]
    %v2194 = vld [vmem:[%s7 + $0x8] sm:$0xff]
    %v2195 = vld [vmem:[%s7 + $0x10] sm:$0xff]
    %v2196 = vld [vmem:[%s7 + $0x18] sm:$0xff]
    %v2198 = vsel %vm99, %v2185, 0
    %v2201 = vsel %vm99, %v2186, 0
    %v2204 = vsel %vm99, %v2187, 0
    %v2207 = vsel %vm99, %v2188, 0
    %v2210 = vsel %vm99, %v2189, 0
    %v2213 = vsel %vm99, %v2190, 0
    %v2216 = vsel %vm99, %v2191, 0
    %v2219 = vsel %vm99, %v2192, 0
    %2221 = vmatprep.subr.mxu0 0.0
    %2222 = vmatpush1.msra.mxu0 %v2193
    %2223 = vmatprep.subr.mxu0 0.0
    %2224 = vmatpush1.msra.mxu0 %v2194
    %2225 = vmatprep.subr.mxu0 0.0
    %2226 = vmatpush1.msra.mxu0 %v2195
    %2227 = vmatprep.subr.mxu0 0.0
    %2228 = vmatpush1.msra.mxu0 %v2196
    %2229 = vmatprep.subr.mxu0 0.0
    %2230 = vmatpush1.msra.mxu0 0.0
    %2231 = vmatprep.subr.mxu0 0.0
    %2232 = vmatpush1.msra.mxu0 0.0
    %2233 = vmatprep.subr.mxu0 0.0
    %2234 = vmatpush1.msra.mxu0 0.0
    %2235 = vmatprep.subr.mxu0 0.0
    %2236 = vmatpush1.msra.mxu0 0.0
    %2237 = vmatprep.subr.mxu0 0.0
    %2238 = vmatpush1.msra.mxu0 0.0
    %2239 = vmatprep.subr.mxu0 0.0
    %2240 = vmatpush1.msra.mxu0 0.0
    %2241 = vmatprep.subr.mxu0 0.0
    %2242 = vmatpush1.msra.mxu0 0.0
    %2243 = vmatprep.subr.mxu0 0.0
    %2244 = vmatpush1.msra.mxu0 0.0
    %2245 = vmatprep.subr.mxu0 0.0
    %2246 = vmatpush1.msra.mxu0 0.0
    %2247 = vmatprep.subr.mxu0 0.0
    %2248 = vmatpush1.msra.mxu0 0.0
    %2249 = vmatprep.subr.mxu0 0.0
    %2250 = vmatpush1.msra.mxu0 0.0
    %2251 = vmatprep.subr.mxu0 0.0
    %2252 = vmatpush1.msra.mxu0 0.0
    %2253 = vmatprep.subr.mxu0 0.0
    %2254 = vmatpush1.msra.mxu0 0.0
    %2255 = vmatprep.subr.mxu0 0.0
    %2256 = vmatpush1.msra.mxu0 0.0
    %2257 = vmatprep.subr.mxu0 0.0
    %2258 = vmatpush1.msra.mxu0 0.0
    %2259 = vmatprep.subr.mxu0 0.0
    %2260 = vmatpush1.msra.mxu0 0.0
    %2261 = vmatprep.subr.mxu0 0.0
    %2262 = vmatpush1.msra.mxu0 0.0
    %2263 = vmatprep.subr.mxu0 0.0
    %2264 = vmatpush1.msra.mxu0 0.0
    %2265 = vmatprep.subr.mxu0 0.0
    %2266 = vmatpush1.msra.mxu0 0.0
    %2267 = vmatprep.subr.mxu0 0.0
    %2268 = vmatpush1.msra.mxu0 0.0
    %2269 = vmatprep.subr.mxu0 0.0
    %2270 = vmatpush1.msra.mxu0 0.0
    %2271 = vmatprep.subr.mxu0 0.0
    %2272 = vmatpush1.msra.mxu0 0.0
    %2273 = vmatprep.subr.mxu0 0.0
    %2274 = vmatpush1.msra.mxu0 0.0
    %2275 = vmatprep.subr.mxu0 0.0
    %2276 = vmatpush1.msra.mxu0 0.0
    %2277 = vmatprep.subr.mxu0 0.0
    %2278 = vmatpush1.msra.mxu0 0.0
    %2279 = vmatprep.subr.mxu0 0.0
    %2280 = vmatpush1.msra.mxu0 0.0
    %2281 = vmatprep.subr.mxu0 0.0
    %2282 = vmatpush1.msra.mxu0 0.0
    %2283 = vmatprep.subr.mxu0 0.0
    %2284 = vmatpush1.msra.mxu0 0.0
    %2285 = vmatprep.mubr.f32.mxu0 0.0
    %2286 = vmatmul.mubr.f32.gmra.mrb[0].mxu0 %v2198
    %v2287 = vpop.f32.mrb[0].mxu0
    %v2288 = vadd.f32 0.0, %v2287
    %v2289 = vpop.f32.mrb[0].mxu0
    %2290 = vmatprep.mubr.f32.mxu0 0.0
    %2291 = vmatmul.mubr.f32.gmra.mrb[0].mxu0 %v2201
    %v2292 = vpop.f32.mrb[0].mxu0
    %v2293 = vadd.f32 0.0, %v2292
    %v2294 = vpop.f32.mrb[0].mxu0
    %2295 = vmatprep.mubr.f32.mxu0 0.0
    %2296 = vmatmul.mubr.f32.gmra.mrb[0].mxu0 %v2204
    %v2297 = vpop.f32.mrb[0].mxu0
    %v2298 = vadd.f32 0.0, %v2297
    %v2299 = vpop.f32.mrb[0].mxu0
    %2300 = vmatprep.mubr.f32.mxu0 0.0
    %2301 = vmatmul.mubr.f32.gmra.mrb[0].mxu0 %v2207
    %v2302 = vpop.f32.mrb[0].mxu0
    %v2303 = vadd.f32 0.0, %v2302
    %v2304 = vpop.f32.mrb[0].mxu0
    %2305 = vmatprep.mubr.f32.mxu0 0.0
    %2306 = vmatmul.mubr.f32.gmra.mrb[0].mxu0 %v2210
    %v2307 = vpop.f32.mrb[0].mxu0
    %v2308 = vadd.f32 0.0, %v2307
    %v2309 = vpop.f32.mrb[0].mxu0
    %2310 = vmatprep.mubr.f32.mxu0 0.0
    %2311 = vmatmul.mubr.f32.gmra.mrb[0].mxu0 %v2213
    %v2312 = vpop.f32.mrb[0].mxu0
    %v2313 = vadd.f32 0.0, %v2312
    %v2314 = vpop.f32.mrb[0].mxu0
    %2315 = vmatprep.mubr.f32.mxu0 0.0
    %2316 = vmatmul.mubr.f32.gmra.mrb[0].mxu0 %v2216
    %v2317 = vpop.f32.mrb[0].mxu0
    %v2318 = vadd.f32 0.0, %v2317
    %v2319 = vpop.f32.mrb[0].mxu0
    %2320 = vmatprep.mubr.f32.mxu0 0.0
    %2321 = vmatmul.mubr.f32.gmra.mrb[0].mxu0 %v2219
    %v2322 = vpop.f32.mrb[0].mxu0
    %v2323 = vadd.f32 0.0, %v2322
    %v2324 = vpop.f32.mrb[0].mxu0
    %2325 = vdwg.mxu0
    %v2326 = vadd.f32 %v225, %v2288
    %v2327 = vadd.f32 %v226, %v2293
    %v2328 = vadd.f32 %v227, %v2298
    %v2329 = vadd.f32 %v228, %v2303
    %v2330 = vadd.f32 %v229, %v2308
    %v2331 = vadd.f32 %v230, %v2313
    %v2332 = vadd.f32 %v231, %v2318
    %v2333 = vadd.f32 %v232, %v2323
    %v2334 = vld [vmem:[%s8] sm:$0x1]
    %v2336 = vlaneseq
    %v2337 = vshrl.u32 %v2336, 7
    %v2338 = vsub.s32 0, %v2337
    %v2339 = vrot.slane %v2334, %v2338
    %v2341 = vadd.f32 %v2326, %v2339
    %v2342 = vadd.f32 %v2327, %v2339
    %v2343 = vadd.f32 %v2328, %v2339
    %v2344 = vadd.f32 %v2329, %v2339
    %v2345 = vadd.f32 %v2330, %v2339
    %v2346 = vadd.f32 %v2331, %v2339
    %v2347 = vadd.f32 %v2332, %v2339
    %v2348 = vadd.f32 %v2333, %v2339
    %v2349 = vld [vmem:[%s9] sm:$0x1]
    %v2350 = vld [vmem:[%s10] sm:$0x1]
    %v2351 = vsel %vm99, %v2341, 0.0
    %2352 = vadd.xlane.f32.xlu0 %v2351
    %v2353 = vpop.xlane.xlu0 %2352
    %v2354 = vsel %vm99, %v2342, 0.0
    %2355 = vadd.xlane.f32.xlu0 %v2354
    %v2356 = vpop.xlane.xlu0 %2355
    %v2357 = vsel %vm99, %v2343, 0.0
    %2358 = vadd.xlane.f32.xlu0 %v2357
    %v2359 = vpop.xlane.xlu0 %2358
    %v2360 = vsel %vm99, %v2344, 0.0
    %2361 = vadd.xlane.f32.xlu0 %v2360
    %v2362 = vpop.xlane.xlu0 %2361
    %v2363 = vsel %vm99, %v2345, 0.0
    %2364 = vadd.xlane.f32.xlu0 %v2363
    %v2365 = vpop.xlane.xlu0 %2364
    %v2366 = vsel %vm99, %v2346, 0.0
    %2367 = vadd.xlane.f32.xlu0 %v2366
    %v2368 = vpop.xlane.xlu0 %2367
    %v2369 = vsel %vm99, %v2347, 0.0
    %2370 = vadd.xlane.f32.xlu0 %v2369
    %v2371 = vpop.xlane.xlu0 %2370
    %v2372 = vsel %vm99, %v2348, 0.0
    %2373 = vadd.xlane.f32.xlu0 %v2372
    %v2374 = vpop.xlane.xlu0 %2373
    %v2375 = vmul.f32 %v2353, %v124
    %v2376 = vmul.f32 %v2356, %v124
    %v2377 = vmul.f32 %v2359, %v124
    %v2378 = vmul.f32 %v2362, %v124
    %v2379 = vmul.f32 %v2365, %v124
    %v2380 = vmul.f32 %v2368, %v124
    %v2381 = vmul.f32 %v2371, %v124
    %v2382 = vmul.f32 %v2374, %v124
    %v2383 = vsub.f32 %v2341, %v2375
    %v2384 = vsub.f32 %v2342, %v2376
    %v2385 = vsub.f32 %v2343, %v2377
    %v2386 = vsub.f32 %v2344, %v2378
    %v2387 = vsub.f32 %v2345, %v2379
    %v2388 = vsub.f32 %v2346, %v2380
    %v2389 = vsub.f32 %v2347, %v2381
    %v2390 = vsub.f32 %v2348, %v2382
    %v2391 = vmul.f32 %v2383, %v2383
    %v2392 = vmul.f32 %v2384, %v2384
    %v2393 = vmul.f32 %v2385, %v2385
    %v2394 = vmul.f32 %v2386, %v2386
    %v2395 = vmul.f32 %v2387, %v2387
    %v2396 = vmul.f32 %v2388, %v2388
    %v2397 = vmul.f32 %v2389, %v2389
    %v2398 = vmul.f32 %v2390, %v2390
    %v2399 = vsel %vm99, %v2391, 0.0
    %2400 = vadd.xlane.f32.xlu0 %v2399
    %v2401 = vpop.xlane.xlu0 %2400
    %v2402 = vsel %vm99, %v2392, 0.0
    %2403 = vadd.xlane.f32.xlu0 %v2402
    %v2404 = vpop.xlane.xlu0 %2403
    %v2405 = vsel %vm99, %v2393, 0.0
    %2406 = vadd.xlane.f32.xlu0 %v2405
    %v2407 = vpop.xlane.xlu0 %2406
    %v2408 = vsel %vm99, %v2394, 0.0
    %2409 = vadd.xlane.f32.xlu0 %v2408
    %v2410 = vpop.xlane.xlu0 %2409
    %v2411 = vsel %vm99, %v2395, 0.0
    %2412 = vadd.xlane.f32.xlu0 %v2411
    %v2413 = vpop.xlane.xlu0 %2412
    %v2414 = vsel %vm99, %v2396, 0.0
    %2415 = vadd.xlane.f32.xlu0 %v2414
    %v2416 = vpop.xlane.xlu0 %2415
    %v2417 = vsel %vm99, %v2397, 0.0
    %2418 = vadd.xlane.f32.xlu0 %v2417
    %v2419 = vpop.xlane.xlu0 %2418
    %v2420 = vsel %vm99, %v2398, 0.0
    %2421 = vadd.xlane.f32.xlu0 %v2420
    %v2422 = vpop.xlane.xlu0 %2421
    %v2423 = vmul.f32 %v2401, %v124
    %v2424 = vmul.f32 %v2404, %v124
    %v2425 = vmul.f32 %v2407, %v124
    %v2426 = vmul.f32 %v2410, %v124
    %v2427 = vmul.f32 %v2413, %v124
    %v2428 = vmul.f32 %v2416, %v124
    %v2429 = vmul.f32 %v2419, %v124
    %v2430 = vmul.f32 %v2422, %v124
    %v2431 = vadd.f32 %v2423, 1e-12
    %v2432 = vadd.f32 %v2424, 1e-12
    %v2433 = vadd.f32 %v2425, 1e-12
    %v2434 = vadd.f32 %v2426, 1e-12
    %v2435 = vadd.f32 %v2427, 1e-12
    %v2436 = vadd.f32 %v2428, 1e-12
    %v2437 = vadd.f32 %v2429, 1e-12
    %v2438 = vadd.f32 %v2430, 1e-12
    %v2439 = vrsqrt.pop %v2431
    %v2440 = vrsqrt.pop %v2432
    %v2441 = vrsqrt.pop %v2433
    %v2442 = vrsqrt.pop %v2434
    %v2443 = vrsqrt.pop %v2435
    %v2444 = vrsqrt.pop %v2436
    %v2445 = vrsqrt.pop %v2437
    %v2446 = vrsqrt.pop %v2438
    %v2447 = vmul.f32 %v2383, %v2439
    %v2448 = vmul.f32 %v2384, %v2440
    %v2449 = vmul.f32 %v2385, %v2441
    %v2450 = vmul.f32 %v2386, %v2442
    %v2451 = vmul.f32 %v2387, %v2443
    %v2452 = vmul.f32 %v2388, %v2444
    %v2453 = vmul.f32 %v2389, %v2445
    %v2454 = vmul.f32 %v2390, %v2446
    %v2456 = vlaneseq
    %v2457 = vshrl.u32 %v2456, 7
    %v2458 = vsub.s32 0, %v2457
    %v2459 = vrot.slane %v2349, %v2458
    %v2461 = vmul.f32 %v2447, %v2459
    %v2462 = vmul.f32 %v2448, %v2459
    %v2463 = vmul.f32 %v2449, %v2459
    %v2464 = vmul.f32 %v2450, %v2459
    %v2465 = vmul.f32 %v2451, %v2459
    %v2466 = vmul.f32 %v2452, %v2459
    %v2467 = vmul.f32 %v2453, %v2459
    %v2468 = vmul.f32 %v2454, %v2459
    %v2470 = vlaneseq
    %v2471 = vshrl.u32 %v2470, 7
    %v2472 = vsub.s32 0, %v2471
    %v2473 = vrot.slane %v2350, %v2472
    %v2475 = vadd.f32 %v2461, %v2473
    %v2476 = vadd.f32 %v2462, %v2473
    %v2477 = vadd.f32 %v2463, %v2473
    %v2478 = vadd.f32 %v2464, %v2473
    %v2479 = vadd.f32 %v2465, %v2473
    %v2480 = vadd.f32 %v2466, %v2473
    %v2481 = vadd.f32 %v2467, %v2473
    %v2482 = vadd.f32 %v2468, %v2473
    %v2483 = vld [vmem:[%s11] sm:$0xff]
    %v2484 = vld [vmem:[%s11 + $0x8] sm:$0xff]
    %v2485 = vld [vmem:[%s11 + $0x10] sm:$0xff]
    %v2486 = vld [vmem:[%s11 + $0x18] sm:$0xff]
    %v2487 = vld [vmem:[%s12] sm:$0x1]
    %v2489 = vlaneseq
    %v2490 = vshrl.u32 %v2489, 7
    %v2491 = vsub.s32 0, %v2490
    %v2492 = vrot.slane %v2487, %v2491
    %v2495 = vsel %vm99, %v2475, 0
    %v2498 = vsel %vm99, %v2476, 0
    %v2501 = vsel %vm99, %v2477, 0
    %v2504 = vsel %vm99, %v2478, 0
    %v2507 = vsel %vm99, %v2479, 0
    %v2510 = vsel %vm99, %v2480, 0
    %v2513 = vsel %vm99, %v2481, 0
    %v2516 = vsel %vm99, %v2482, 0
    %2518 = vmatprep.subr.mxu0 0.0
    %2519 = vmatpush1.msra.mxu0 %v2483
    %2520 = vmatprep.subr.mxu0 0.0
    %2521 = vmatpush1.msra.mxu0 %v2484
    %2522 = vmatprep.subr.mxu0 0.0
    %2523 = vmatpush1.msra.mxu0 %v2485
    %2524 = vmatprep.subr.mxu0 0.0
    %2525 = vmatpush1.msra.mxu0 %v2486
    %2526 = vmatprep.subr.mxu0 0.0
    %2527 = vmatpush1.msra.mxu0 0.0
    %2528 = vmatprep.subr.mxu0 0.0
    %2529 = vmatpush1.msra.mxu0 0.0
    %2530 = vmatprep.subr.mxu0 0.0
    %2531 = vmatpush1.msra.mxu0 0.0
    %2532 = vmatprep.subr.mxu0 0.0
    %2533 = vmatpush1.msra.mxu0 0.0
    %2534 = vmatprep.subr.mxu0 0.0
    %2535 = vmatpush1.msra.mxu0 0.0
    %2536 = vmatprep.subr.mxu0 0.0
    %2537 = vmatpush1.msra.mxu0 0.0
    %2538 = vmatprep.subr.mxu0 0.0
    %2539 = vmatpush1.msra.mxu0 0.0
    %2540 = vmatprep.subr.mxu0 0.0
    %2541 = vmatpush1.msra.mxu0 0.0
    %2542 = vmatprep.subr.mxu0 0.0
    %2543 = vmatpush1.msra.mxu0 0.0
    %2544 = vmatprep.subr.mxu0 0.0
    %2545 = vmatpush1.msra.mxu0 0.0
    %2546 = vmatprep.subr.mxu0 0.0
    %2547 = vmatpush1.msra.mxu0 0.0
    %2548 = vmatprep.subr.mxu0 0.0
    %2549 = vmatpush1.msra.mxu0 0.0
    %2550 = vmatprep.subr.mxu0 0.0
    %2551 = vmatpush1.msra.mxu0 0.0
    %2552 = vmatprep.subr.mxu0 0.0
    %2553 = vmatpush1.msra.mxu0 0.0
    %2554 = vmatprep.subr.mxu0 0.0
    %2555 = vmatpush1.msra.mxu0 0.0
    %2556 = vmatprep.subr.mxu0 0.0
    %2557 = vmatpush1.msra.mxu0 0.0
    %2558 = vmatprep.subr.mxu0 0.0
    %2559 = vmatpush1.msra.mxu0 0.0
    %2560 = vmatprep.subr.mxu0 0.0
    %2561 = vmatpush1.msra.mxu0 0.0
    %2562 = vmatprep.subr.mxu0 0.0
    %2563 = vmatpush1.msra.mxu0 0.0
    %2564 = vmatprep.subr.mxu0 0.0
    %2565 = vmatpush1.msra.mxu0 0.0
    %2566 = vmatprep.subr.mxu0 0.0
    %2567 = vmatpush1.msra.mxu0 0.0
    %2568 = vmatprep.subr.mxu0 0.0
    %2569 = vmatpush1.msra.mxu0 0.0
    %2570 = vmatprep.subr.mxu0 0.0
    %2571 = vmatpush1.msra.mxu0 0.0
    %2572 = vmatprep.subr.mxu0 0.0
    %2573 = vmatpush1.msra.mxu0 0.0
    %2574 = vmatprep.subr.mxu0 0.0
    %2575 = vmatpush1.msra.mxu0 0.0
    %2576 = vmatprep.subr.mxu0 0.0
    %2577 = vmatpush1.msra.mxu0 0.0
    %2578 = vmatprep.subr.mxu0 0.0
    %2579 = vmatpush1.msra.mxu0 0.0
    %2580 = vmatprep.subr.mxu0 0.0
    %2581 = vmatpush1.msra.mxu0 0.0
    %2582 = vmatprep.mubr.f32.mxu0 0.0
    %2583 = vmatmul.mubr.f32.gmra.mrb[0].mxu0 %v2495
    %v2584 = vpop.f32.mrb[0].mxu0
    %v2585 = vadd.f32 %v2492, %v2584
    %v2586 = vpop.f32.mrb[0].mxu0
    %2587 = vmatprep.mubr.f32.mxu0 0.0
    %2588 = vmatmul.mubr.f32.gmra.mrb[0].mxu0 %v2498
    %v2589 = vpop.f32.mrb[0].mxu0
    %v2590 = vadd.f32 %v2492, %v2589
    %v2591 = vpop.f32.mrb[0].mxu0
    %2592 = vmatprep.mubr.f32.mxu0 0.0
    %2593 = vmatmul.mubr.f32.gmra.mrb[0].mxu0 %v2501
    %v2594 = vpop.f32.mrb[0].mxu0
    %v2595 = vadd.f32 %v2492, %v2594
    %v2596 = vpop.f32.mrb[0].mxu0
    %2597 = vmatprep.mubr.f32.mxu0 0.0
    %2598 = vmatmul.mubr.f32.gmra.mrb[0].mxu0 %v2504
    %v2599 = vpop.f32.mrb[0].mxu0
    %v2600 = vadd.f32 %v2492, %v2599
    %v2601 = vpop.f32.mrb[0].mxu0
    %2602 = vmatprep.mubr.f32.mxu0 0.0
    %2603 = vmatmul.mubr.f32.gmra.mrb[0].mxu0 %v2507
    %v2604 = vpop.f32.mrb[0].mxu0
    %v2605 = vadd.f32 %v2492, %v2604
    %v2606 = vpop.f32.mrb[0].mxu0
    %2607 = vmatprep.mubr.f32.mxu0 0.0
    %2608 = vmatmul.mubr.f32.gmra.mrb[0].mxu0 %v2510
    %v2609 = vpop.f32.mrb[0].mxu0
    %v2610 = vadd.f32 %v2492, %v2609
    %v2611 = vpop.f32.mrb[0].mxu0
    %2612 = vmatprep.mubr.f32.mxu0 0.0
    %2613 = vmatmul.mubr.f32.gmra.mrb[0].mxu0 %v2513
    %v2614 = vpop.f32.mrb[0].mxu0
    %v2615 = vadd.f32 %v2492, %v2614
    %v2616 = vpop.f32.mrb[0].mxu0
    %2617 = vmatprep.mubr.f32.mxu0 0.0
    %2618 = vmatmul.mubr.f32.gmra.mrb[0].mxu0 %v2516
    %v2619 = vpop.f32.mrb[0].mxu0
    %v2620 = vadd.f32 %v2492, %v2619
    %v2621 = vpop.f32.mrb[0].mxu0
    %2622 = vdwg.mxu0
    %v2623 = vmul.f32 %v2585, 0.5
    %v2624 = vmul.f32 %v2590, 0.5
    %v2625 = vmul.f32 %v2595, 0.5
    %v2626 = vmul.f32 %v2600, 0.5
    %v2627 = vmul.f32 %v2605, 0.5
    %v2628 = vmul.f32 %v2610, 0.5
    %v2629 = vmul.f32 %v2615, 0.5
    %v2630 = vmul.f32 %v2620, 0.5
    %v2631 = vmul.f32 %v2585, 0.044715
    %v2632 = vmul.f32 %v2590, 0.044715
    %v2633 = vmul.f32 %v2595, 0.044715
    %v2634 = vmul.f32 %v2600, 0.044715
    %v2635 = vmul.f32 %v2605, 0.044715
    %v2636 = vmul.f32 %v2610, 0.044715
    %v2637 = vmul.f32 %v2615, 0.044715
    %v2638 = vmul.f32 %v2620, 0.044715
    %v2639 = vmul.f32 %v2631, %v2585
    %v2640 = vmul.f32 %v2632, %v2590
    %v2641 = vmul.f32 %v2633, %v2595
    %v2642 = vmul.f32 %v2634, %v2600
    %v2643 = vmul.f32 %v2635, %v2605
    %v2644 = vmul.f32 %v2636, %v2610
    %v2645 = vmul.f32 %v2637, %v2615
    %v2646 = vmul.f32 %v2638, %v2620
    %v2647 = vmul.f32 %v2639, %v2585
    %v2648 = vmul.f32 %v2640, %v2590
    %v2649 = vmul.f32 %v2641, %v2595
    %v2650 = vmul.f32 %v2642, %v2600
    %v2651 = vmul.f32 %v2643, %v2605
    %v2652 = vmul.f32 %v2644, %v2610
    %v2653 = vmul.f32 %v2645, %v2615
    %v2654 = vmul.f32 %v2646, %v2620
    %v2655 = vadd.f32 %v2585, %v2647
    %v2656 = vadd.f32 %v2590, %v2648
    %v2657 = vadd.f32 %v2595, %v2649
    %v2658 = vadd.f32 %v2600, %v2650
    %v2659 = vadd.f32 %v2605, %v2651
    %v2660 = vadd.f32 %v2610, %v2652
    %v2661 = vadd.f32 %v2615, %v2653
    %v2662 = vadd.f32 %v2620, %v2654
    %v2663 = vmul.f32 %v2655, 0.7978846
    %v2664 = vmul.f32 %v2656, 0.7978846
    %v2665 = vmul.f32 %v2657, 0.7978846
    %v2666 = vmul.f32 %v2658, 0.7978846
    %v2667 = vmul.f32 %v2659, 0.7978846
    %v2668 = vmul.f32 %v2660, 0.7978846
    %v2669 = vmul.f32 %v2661, 0.7978846
    %v2670 = vmul.f32 %v2662, 0.7978846
    %v2671 = vtanh.pop %v2663
    %v2672 = vtanh.pop %v2664
    %v2673 = vtanh.pop %v2665
    %v2674 = vtanh.pop %v2666
    %v2675 = vtanh.pop %v2667
    %v2676 = vtanh.pop %v2668
    %v2677 = vtanh.pop %v2669
    %v2678 = vtanh.pop %v2670
    %v2679 = vadd.f32 %v2671, 1.0
    %v2680 = vadd.f32 %v2672, 1.0
    %v2681 = vadd.f32 %v2673, 1.0
    %v2682 = vadd.f32 %v2674, 1.0
    %v2683 = vadd.f32 %v2675, 1.0
    %v2684 = vadd.f32 %v2676, 1.0
    %v2685 = vadd.f32 %v2677, 1.0
    %v2686 = vadd.f32 %v2678, 1.0
    %v2687 = vmul.f32 %v2623, %v2679
    %v2688 = vmul.f32 %v2624, %v2680
    %v2689 = vmul.f32 %v2625, %v2681
    %v2690 = vmul.f32 %v2626, %v2682
    %v2691 = vmul.f32 %v2627, %v2683
    %v2692 = vmul.f32 %v2628, %v2684
    %v2693 = vmul.f32 %v2629, %v2685
    %v2694 = vmul.f32 %v2630, %v2686
    %v2695 = vld [vmem:[%s13] sm:$0xff]
    %v2696 = vld [vmem:[%s13 + $0x8] sm:$0xff]
    %v2697 = vld [vmem:[%s13 + $0x10] sm:$0xff]
    %v2698 = vld [vmem:[%s13 + $0x18] sm:$0xff]
    %v2699 = vld [vmem:[%s13 + $0x20] sm:$0xff]
    %v2700 = vld [vmem:[%s13 + $0x28] sm:$0xff]
    %v2701 = vld [vmem:[%s13 + $0x30] sm:$0xff]
    %v2702 = vld [vmem:[%s13 + $0x38] sm:$0xff]
    %v2703 = vld [vmem:[%s14] sm:$0x1]
    %v2705 = vlaneseq
    %v2706 = vshrl.u32 %v2705, 7
    %v2707 = vsub.s32 0, %v2706
    %v2708 = vrot.slane %v2703, %v2707
    %v2711 = vsel %vm551, %v2687, 0
    %v2714 = vsel %vm551, %v2688, 0
    %v2717 = vsel %vm551, %v2689, 0
    %v2720 = vsel %vm551, %v2690, 0
    %v2723 = vsel %vm551, %v2691, 0
    %v2726 = vsel %vm551, %v2692, 0
    %v2729 = vsel %vm551, %v2693, 0
    %v2732 = vsel %vm551, %v2694, 0
    %2734 = vmatprep.subr.mxu0 0.0
    %2735 = vmatpush1.msra.mxu0 %v2695
    %2736 = vmatprep.subr.mxu0 0.0
    %2737 = vmatpush1.msra.mxu0 %v2696
    %2738 = vmatprep.subr.mxu0 0.0
    %2739 = vmatpush1.msra.mxu0 %v2697
    %2740 = vmatprep.subr.mxu0 0.0
    %2741 = vmatpush1.msra.mxu0 %v2698
    %2742 = vmatprep.subr.mxu0 0.0
    %2743 = vmatpush1.msra.mxu0 %v2699
    %2744 = vmatprep.subr.mxu0 0.0
    %2745 = vmatpush1.msra.mxu0 %v2700
    %2746 = vmatprep.subr.mxu0 0.0
    %2747 = vmatpush1.msra.mxu0 %v2701
    %2748 = vmatprep.subr.mxu0 0.0
    %2749 = vmatpush1.msra.mxu0 %v2702
    %2750 = vmatprep.subr.mxu0 0.0
    %2751 = vmatpush1.msra.mxu0 0.0
    %2752 = vmatprep.subr.mxu0 0.0
    %2753 = vmatpush1.msra.mxu0 0.0
    %2754 = vmatprep.subr.mxu0 0.0
    %2755 = vmatpush1.msra.mxu0 0.0
    %2756 = vmatprep.subr.mxu0 0.0
    %2757 = vmatpush1.msra.mxu0 0.0
    %2758 = vmatprep.subr.mxu0 0.0
    %2759 = vmatpush1.msra.mxu0 0.0
    %2760 = vmatprep.subr.mxu0 0.0
    %2761 = vmatpush1.msra.mxu0 0.0
    %2762 = vmatprep.subr.mxu0 0.0
    %2763 = vmatpush1.msra.mxu0 0.0
    %2764 = vmatprep.subr.mxu0 0.0
    %2765 = vmatpush1.msra.mxu0 0.0
    %2766 = vmatprep.subr.mxu0 0.0
    %2767 = vmatpush1.msra.mxu0 0.0
    %2768 = vmatprep.subr.mxu0 0.0
    %2769 = vmatpush1.msra.mxu0 0.0
    %2770 = vmatprep.subr.mxu0 0.0
    %2771 = vmatpush1.msra.mxu0 0.0
    %2772 = vmatprep.subr.mxu0 0.0
    %2773 = vmatpush1.msra.mxu0 0.0
    %2774 = vmatprep.subr.mxu0 0.0
    %2775 = vmatpush1.msra.mxu0 0.0
    %2776 = vmatprep.subr.mxu0 0.0
    %2777 = vmatpush1.msra.mxu0 0.0
    %2778 = vmatprep.subr.mxu0 0.0
    %2779 = vmatpush1.msra.mxu0 0.0
    %2780 = vmatprep.subr.mxu0 0.0
    %2781 = vmatpush1.msra.mxu0 0.0
    %2782 = vmatprep.subr.mxu0 0.0
    %2783 = vmatpush1.msra.mxu0 0.0
    %2784 = vmatprep.subr.mxu0 0.0
    %2785 = vmatpush1.msra.mxu0 0.0
    %2786 = vmatprep.subr.mxu0 0.0
    %2787 = vmatpush1.msra.mxu0 0.0
    %2788 = vmatprep.subr.mxu0 0.0
    %2789 = vmatpush1.msra.mxu0 0.0
    %2790 = vmatprep.subr.mxu0 0.0
    %2791 = vmatpush1.msra.mxu0 0.0
    %2792 = vmatprep.subr.mxu0 0.0
    %2793 = vmatpush1.msra.mxu0 0.0
    %2794 = vmatprep.subr.mxu0 0.0
    %2795 = vmatpush1.msra.mxu0 0.0
    %2796 = vmatprep.subr.mxu0 0.0
    %2797 = vmatpush1.msra.mxu0 0.0
    %2798 = vmatprep.mubr.f32.mxu0 0.0
    %2799 = vmatmul.mubr.f32.gmra.mrb[0].mxu0 %v2711
    %v2800 = vpop.f32.mrb[0].mxu0
    %v2801 = vadd.f32 %v2708, %v2800
    %v2802 = vpop.f32.mrb[0].mxu0
    %2803 = vmatprep.mubr.f32.mxu0 0.0
    %2804 = vmatmul.mubr.f32.gmra.mrb[0].mxu0 %v2714
    %v2805 = vpop.f32.mrb[0].mxu0
    %v2806 = vadd.f32 %v2708, %v2805
    %v2807 = vpop.f32.mrb[0].mxu0
    %2808 = vmatprep.mubr.f32.mxu0 0.0
    %2809 = vmatmul.mubr.f32.gmra.mrb[0].mxu0 %v2717
    %v2810 = vpop.f32.mrb[0].mxu0
    %v2811 = vadd.f32 %v2708, %v2810
    %v2812 = vpop.f32.mrb[0].mxu0
    %2813 = vmatprep.mubr.f32.mxu0 0.0
    %2814 = vmatmul.mubr.f32.gmra.mrb[0].mxu0 %v2720
    %v2815 = vpop.f32.mrb[0].mxu0
    %v2816 = vadd.f32 %v2708, %v2815
    %v2817 = vpop.f32.mrb[0].mxu0
    %2818 = vmatprep.mubr.f32.mxu0 0.0
    %2819 = vmatmul.mubr.f32.gmra.mrb[0].mxu0 %v2723
    %v2820 = vpop.f32.mrb[0].mxu0
    %v2821 = vadd.f32 %v2708, %v2820
    %v2822 = vpop.f32.mrb[0].mxu0
    %2823 = vmatprep.mubr.f32.mxu0 0.0
    %2824 = vmatmul.mubr.f32.gmra.mrb[0].mxu0 %v2726
    %v2825 = vpop.f32.mrb[0].mxu0
    %v2826 = vadd.f32 %v2708, %v2825
    %v2827 = vpop.f32.mrb[0].mxu0
    %2828 = vmatprep.mubr.f32.mxu0 0.0
    %2829 = vmatmul.mubr.f32.gmra.mrb[0].mxu0 %v2729
    %v2830 = vpop.f32.mrb[0].mxu0
    %v2831 = vadd.f32 %v2708, %v2830
    %v2832 = vpop.f32.mrb[0].mxu0
    %2833 = vmatprep.mubr.f32.mxu0 0.0
    %2834 = vmatmul.mubr.f32.gmra.mrb[0].mxu0 %v2732
    %v2835 = vpop.f32.mrb[0].mxu0
    %v2836 = vadd.f32 %v2708, %v2835
    %v2837 = vpop.f32.mrb[0].mxu0
    %2838 = vdwg.mxu0
    %v2839 = vadd.f32 %v2475, %v2801
    %v2840 = vadd.f32 %v2476, %v2806
    %v2841 = vadd.f32 %v2477, %v2811
    %v2842 = vadd.f32 %v2478, %v2816
    %v2843 = vadd.f32 %v2479, %v2821
    %v2844 = vadd.f32 %v2480, %v2826
    %v2845 = vadd.f32 %v2481, %v2831
    %v2846 = vadd.f32 %v2482, %v2836
    %v2847 = vld [vmem:[%s15] sm:$0x1]
    %v2848 = vld [vmem:[%s16] sm:$0x1]
    %v2849 = vsel %vm99, %v2839, 0.0
    %2850 = vadd.xlane.f32.xlu0 %v2849
    %v2851 = vpop.xlane.xlu0 %2850
    %v2852 = vsel %vm99, %v2840, 0.0
    %2853 = vadd.xlane.f32.xlu0 %v2852
    %v2854 = vpop.xlane.xlu0 %2853
    %v2855 = vsel %vm99, %v2841, 0.0
    %2856 = vadd.xlane.f32.xlu0 %v2855
    %v2857 = vpop.xlane.xlu0 %2856
    %v2858 = vsel %vm99, %v2842, 0.0
    %2859 = vadd.xlane.f32.xlu0 %v2858
    %v2860 = vpop.xlane.xlu0 %2859
    %v2861 = vsel %vm99, %v2843, 0.0
    %2862 = vadd.xlane.f32.xlu0 %v2861
    %v2863 = vpop.xlane.xlu0 %2862
    %v2864 = vsel %vm99, %v2844, 0.0
    %2865 = vadd.xlane.f32.xlu0 %v2864
    %v2866 = vpop.xlane.xlu0 %2865
    %v2867 = vsel %vm99, %v2845, 0.0
    %2868 = vadd.xlane.f32.xlu0 %v2867
    %v2869 = vpop.xlane.xlu0 %2868
    %v2870 = vsel %vm99, %v2846, 0.0
    %2871 = vadd.xlane.f32.xlu0 %v2870
    %v2872 = vpop.xlane.xlu0 %2871
    %v2873 = vmul.f32 %v2851, %v124
    %v2874 = vmul.f32 %v2854, %v124
    %v2875 = vmul.f32 %v2857, %v124
    %v2876 = vmul.f32 %v2860, %v124
    %v2877 = vmul.f32 %v2863, %v124
    %v2878 = vmul.f32 %v2866, %v124
    %v2879 = vmul.f32 %v2869, %v124
    %v2880 = vmul.f32 %v2872, %v124
    %v2881 = vsub.f32 %v2839, %v2873
    %v2882 = vsub.f32 %v2840, %v2874
    %v2883 = vsub.f32 %v2841, %v2875
    %v2884 = vsub.f32 %v2842, %v2876
    %v2885 = vsub.f32 %v2843, %v2877
    %v2886 = vsub.f32 %v2844, %v2878
    %v2887 = vsub.f32 %v2845, %v2879
    %v2888 = vsub.f32 %v2846, %v2880
    %v2889 = vmul.f32 %v2881, %v2881
    %v2890 = vmul.f32 %v2882, %v2882
    %v2891 = vmul.f32 %v2883, %v2883
    %v2892 = vmul.f32 %v2884, %v2884
    %v2893 = vmul.f32 %v2885, %v2885
    %v2894 = vmul.f32 %v2886, %v2886
    %v2895 = vmul.f32 %v2887, %v2887
    %v2896 = vmul.f32 %v2888, %v2888
    %v2897 = vsel %vm99, %v2889, 0.0
    %2898 = vadd.xlane.f32.xlu0 %v2897
    %v2899 = vpop.xlane.xlu0 %2898
    %v2900 = vsel %vm99, %v2890, 0.0
    %2901 = vadd.xlane.f32.xlu0 %v2900
    %v2902 = vpop.xlane.xlu0 %2901
    %v2903 = vsel %vm99, %v2891, 0.0
    %2904 = vadd.xlane.f32.xlu0 %v2903
    %v2905 = vpop.xlane.xlu0 %2904
    %v2906 = vsel %vm99, %v2892, 0.0
    %2907 = vadd.xlane.f32.xlu0 %v2906
    %v2908 = vpop.xlane.xlu0 %2907
    %v2909 = vsel %vm99, %v2893, 0.0
    %2910 = vadd.xlane.f32.xlu0 %v2909
    %v2911 = vpop.xlane.xlu0 %2910
    %v2912 = vsel %vm99, %v2894, 0.0
    %2913 = vadd.xlane.f32.xlu0 %v2912
    %v2914 = vpop.xlane.xlu0 %2913
    %v2915 = vsel %vm99, %v2895, 0.0
    %2916 = vadd.xlane.f32.xlu0 %v2915
    %v2917 = vpop.xlane.xlu0 %2916
    %v2918 = vsel %vm99, %v2896, 0.0
    %2919 = vadd.xlane.f32.xlu0 %v2918
    %v2920 = vpop.xlane.xlu0 %2919
    %v2921 = vmul.f32 %v2899, %v124
    %v2922 = vmul.f32 %v2902, %v124
    %v2923 = vmul.f32 %v2905, %v124
    %v2924 = vmul.f32 %v2908, %v124
    %v2925 = vmul.f32 %v2911, %v124
    %v2926 = vmul.f32 %v2914, %v124
    %v2927 = vmul.f32 %v2917, %v124
    %v2928 = vmul.f32 %v2920, %v124
    %v2929 = vadd.f32 %v2921, 1e-12
    %v2930 = vadd.f32 %v2922, 1e-12
    %v2931 = vadd.f32 %v2923, 1e-12
    %v2932 = vadd.f32 %v2924, 1e-12
    %v2933 = vadd.f32 %v2925, 1e-12
    %v2934 = vadd.f32 %v2926, 1e-12
    %v2935 = vadd.f32 %v2927, 1e-12
    %v2936 = vadd.f32 %v2928, 1e-12
    %v2937 = vrsqrt.pop %v2929
    %v2938 = vrsqrt.pop %v2930
    %v2939 = vrsqrt.pop %v2931
    %v2940 = vrsqrt.pop %v2932
    %v2941 = vrsqrt.pop %v2933
    %v2942 = vrsqrt.pop %v2934
    %v2943 = vrsqrt.pop %v2935
    %v2944 = vrsqrt.pop %v2936
    %v2945 = vmul.f32 %v2881, %v2937
    %v2946 = vmul.f32 %v2882, %v2938
    %v2947 = vmul.f32 %v2883, %v2939
    %v2948 = vmul.f32 %v2884, %v2940
    %v2949 = vmul.f32 %v2885, %v2941
    %v2950 = vmul.f32 %v2886, %v2942
    %v2951 = vmul.f32 %v2887, %v2943
    %v2952 = vmul.f32 %v2888, %v2944
    %v2954 = vlaneseq
    %v2955 = vshrl.u32 %v2954, 7
    %v2956 = vsub.s32 0, %v2955
    %v2957 = vrot.slane %v2847, %v2956
    %v2959 = vmul.f32 %v2945, %v2957
    %v2960 = vmul.f32 %v2946, %v2957
    %v2961 = vmul.f32 %v2947, %v2957
    %v2962 = vmul.f32 %v2948, %v2957
    %v2963 = vmul.f32 %v2949, %v2957
    %v2964 = vmul.f32 %v2950, %v2957
    %v2965 = vmul.f32 %v2951, %v2957
    %v2966 = vmul.f32 %v2952, %v2957
    %v2968 = vlaneseq
    %v2969 = vshrl.u32 %v2968, 7
    %v2970 = vsub.s32 0, %v2969
    %v2971 = vrot.slane %v2848, %v2970
    %v2973 = vadd.f32 %v2959, %v2971
    %v2974 = vadd.f32 %v2960, %v2971
    %v2975 = vadd.f32 %v2961, %v2971
    %v2976 = vadd.f32 %v2962, %v2971
    %v2977 = vadd.f32 %v2963, %v2971
    %v2978 = vadd.f32 %v2964, %v2971
    %v2979 = vadd.f32 %v2965, %v2971
    %v2980 = vadd.f32 %v2966, %v2971
    %s2981 = scalar_lea.vmem %s5, 32
    %v2982 = vld [vmem:[%s2981] sm:$0xff]
    %v2983 = vld [vmem:[%s2981 + $0x8] sm:$0xff]
    %v2984 = vld [vmem:[%s2981 + $0x10] sm:$0xff]
    %v2985 = vld [vmem:[%s2981 + $0x18] sm:$0xff]
    %s2986 = scalar_lea.vmem %s6, 1
    %v2987 = vld [vmem:[%s2986] sm:$0x1]
    %v2989 = vlaneseq
    %v2990 = vshrl.u32 %v2989, 7
    %v2991 = vsub.s32 0, %v2990
    %v2992 = vrot.slane %v2987, %v2991
    %v2995 = vsel %vm99, %v2973, 0
    %v2998 = vsel %vm99, %v2974, 0
    %v3001 = vsel %vm99, %v2975, 0
    %v3004 = vsel %vm99, %v2976, 0
    %v3007 = vsel %vm99, %v2977, 0
    %v3010 = vsel %vm99, %v2978, 0
    %v3013 = vsel %vm99, %v2979, 0
    %v3016 = vsel %vm99, %v2980, 0
    %3018 = vmatprep.subr.mxu0 0.0
    %3019 = vmatpush1.msra.mxu0 %v2982
    %3020 = vmatprep.subr.mxu0 0.0
    %3021 = vmatpush1.msra.mxu0 %v2983
    %3022 = vmatprep.subr.mxu0 0.0
    %3023 = vmatpush1.msra.mxu0 %v2984
    %3024 = vmatprep.subr.mxu0 0.0
    %3025 = vmatpush1.msra.mxu0 %v2985
    %3026 = vmatprep.subr.mxu0 0.0
    %3027 = vmatpush1.msra.mxu0 0.0
    %3028 = vmatprep.subr.mxu0 0.0
    %3029 = vmatpush1.msra.mxu0 0.0
    %3030 = vmatprep.subr.mxu0 0.0
    %3031 = vmatpush1.msra.mxu0 0.0
    %3032 = vmatprep.subr.mxu0 0.0
    %3033 = vmatpush1.msra.mxu0 0.0
    %3034 = vmatprep.subr.mxu0 0.0
    %3035 = vmatpush1.msra.mxu0 0.0
    %3036 = vmatprep.subr.mxu0 0.0
    %3037 = vmatpush1.msra.mxu0 0.0
    %3038 = vmatprep.subr.mxu0 0.0
    %3039 = vmatpush1.msra.mxu0 0.0
    %3040 = vmatprep.subr.mxu0 0.0
    %3041 = vmatpush1.msra.mxu0 0.0
    %3042 = vmatprep.subr.mxu0 0.0
    %3043 = vmatpush1.msra.mxu0 0.0
    %3044 = vmatprep.subr.mxu0 0.0
    %3045 = vmatpush1.msra.mxu0 0.0
    %3046 = vmatprep.subr.mxu0 0.0
    %3047 = vmatpush1.msra.mxu0 0.0
    %3048 = vmatprep.subr.mxu0 0.0
    %3049 = vmatpush1.msra.mxu0 0.0
    %3050 = vmatprep.subr.mxu0 0.0
    %3051 = vmatpush1.msra.mxu0 0.0
    %3052 = vmatprep.subr.mxu0 0.0
    %3053 = vmatpush1.msra.mxu0 0.0
    %3054 = vmatprep.subr.mxu0 0.0
    %3055 = vmatpush1.msra.mxu0 0.0
    %3056 = vmatprep.subr.mxu0 0.0
    %3057 = vmatpush1.msra.mxu0 0.0
    %3058 = vmatprep.subr.mxu0 0.0
    %3059 = vmatpush1.msra.mxu0 0.0
    %3060 = vmatprep.subr.mxu0 0.0
    %3061 = vmatpush1.msra.mxu0 0.0
    %3062 = vmatprep.subr.mxu0 0.0
    %3063 = vmatpush1.msra.mxu0 0.0
    %3064 = vmatprep.subr.mxu0 0.0
    %3065 = vmatpush1.msra.mxu0 0.0
    %3066 = vmatprep.subr.mxu0 0.0
    %3067 = vmatpush1.msra.mxu0 0.0
    %3068 = vmatprep.subr.mxu0 0.0
    %3069 = vmatpush1.msra.mxu0 0.0
    %3070 = vmatprep.subr.mxu0 0.0
    %3071 = vmatpush1.msra.mxu0 0.0
    %3072 = vmatprep.subr.mxu0 0.0
    %3073 = vmatpush1.msra.mxu0 0.0
    %3074 = vmatprep.subr.mxu0 0.0
    %3075 = vmatpush1.msra.mxu0 0.0
    %3076 = vmatprep.subr.mxu0 0.0
    %3077 = vmatpush1.msra.mxu0 0.0
    %3078 = vmatprep.subr.mxu0 0.0
    %3079 = vmatpush1.msra.mxu0 0.0
    %3080 = vmatprep.subr.mxu0 0.0
    %3081 = vmatpush1.msra.mxu0 0.0
    %3082 = vmatprep.mubr.f32.mxu0 0.0
    %3083 = vmatmul.mubr.f32.gmra.mrb[0].mxu0 %v2995
    %v3084 = vpop.f32.mrb[0].mxu0
    %v3085 = vadd.f32 %v2992, %v3084
    %v3086 = vpop.f32.mrb[0].mxu0
    %3087 = vmatprep.mubr.f32.mxu0 0.0
    %3088 = vmatmul.mubr.f32.gmra.mrb[0].mxu0 %v2998
    %v3089 = vpop.f32.mrb[0].mxu0
    %v3090 = vadd.f32 %v2992, %v3089
    %v3091 = vpop.f32.mrb[0].mxu0
    %3092 = vmatprep.mubr.f32.mxu0 0.0
    %3093 = vmatmul.mubr.f32.gmra.mrb[0].mxu0 %v3001
    %v3094 = vpop.f32.mrb[0].mxu0
    %v3095 = vadd.f32 %v2992, %v3094
    %v3096 = vpop.f32.mrb[0].mxu0
    %3097 = vmatprep.mubr.f32.mxu0 0.0
    %3098 = vmatmul.mubr.f32.gmra.mrb[0].mxu0 %v3004
    %v3099 = vpop.f32.mrb[0].mxu0
    %v3100 = vadd.f32 %v2992, %v3099
    %v3101 = vpop.f32.mrb[0].mxu0
    %3102 = vmatprep.mubr.f32.mxu0 0.0
    %3103 = vmatmul.mubr.f32.gmra.mrb[0].mxu0 %v3007
    %v3104 = vpop.f32.mrb[0].mxu0
    %v3105 = vadd.f32 %v2992, %v3104
    %v3106 = vpop.f32.mrb[0].mxu0
    %3107 = vmatprep.mubr.f32.mxu0 0.0
    %3108 = vmatmul.mubr.f32.gmra.mrb[0].mxu0 %v3010
    %v3109 = vpop.f32.mrb[0].mxu0
    %v3110 = vadd.f32 %v2992, %v3109
    %v3111 = vpop.f32.mrb[0].mxu0
    %3112 = vmatprep.mubr.f32.mxu0 0.0
    %3113 = vmatmul.mubr.f32.gmra.mrb[0].mxu0 %v3013
    %v3114 = vpop.f32.mrb[0].mxu0
    %v3115 = vadd.f32 %v2992, %v3114
    %v3116 = vpop.f32.mrb[0].mxu0
    %3117 = vmatprep.mubr.f32.mxu0 0.0
    %3118 = vmatmul.mubr.f32.gmra.mrb[0].mxu0 %v3016
    %v3119 = vpop.f32.mrb[0].mxu0
    %v3120 = vadd.f32 %v2992, %v3119
    %v3121 = vpop.f32.mrb[0].mxu0
    %3122 = vdwg.mxu0
    %3131 = vrot.lane.b32.xlu0 %v3085, 96
    %v3132 = vpop.permute.xlu0 %3131
    %3133 = vrot.lane.b32.xlu0 %v3090, 96
    %v3134 = vpop.permute.xlu0 %3133
    %3135 = vrot.lane.b32.xlu0 %v3095, 96
    %v3136 = vpop.permute.xlu0 %3135
    %3137 = vrot.lane.b32.xlu0 %v3100, 96
    %v3138 = vpop.permute.xlu0 %3137
    %3139 = vrot.lane.b32.xlu0 %v3105, 96
    %v3140 = vpop.permute.xlu0 %3139
    %3141 = vrot.lane.b32.xlu0 %v3110, 96
    %v3142 = vpop.permute.xlu0 %3141
    %3143 = vrot.lane.b32.xlu0 %v3115, 96
    %v3144 = vpop.permute.xlu0 %3143
    %3145 = vrot.lane.b32.xlu0 %v3120, 96
    %v3146 = vpop.permute.xlu0 %3145
    %v3147 = vsel %vm397, %v3085, 0
    %v3149 = vsel %vm397, %v3090, 0
    %v3151 = vsel %vm397, %v3095, 0
    %v3153 = vsel %vm397, %v3100, 0
    %v3155 = vsel %vm397, %v3105, 0
    %v3157 = vsel %vm397, %v3110, 0
    %v3159 = vsel %vm397, %v3115, 0
    %v3161 = vsel %vm397, %v3120, 0
    %v3163 = vsel %vm397, %v3132, 0
    %v3165 = vsel %vm397, %v3134, 0
    %v3167 = vsel %vm397, %v3136, 0
    %v3169 = vsel %vm397, %v3138, 0
    %v3171 = vsel %vm397, %v3140, 0
    %v3173 = vsel %vm397, %v3142, 0
    %v3175 = vsel %vm397, %v3144, 0
    %v3177 = vsel %vm397, %v3146, 0
    %3179 = vmatprep.subr.mxu0 0.0
    %3180 = vmatpush1.xpose.msra.mxu0 %v3163
    %3181 = vmatprep.subr.mxu0 0.0
    %3182 = vmatpush1.xpose.msra.mxu0 %v3165
    %3183 = vmatprep.subr.mxu0 0.0
    %3184 = vmatpush1.xpose.msra.mxu0 %v3167
    %3185 = vmatprep.subr.mxu0 0.0
    %3186 = vmatpush1.xpose.msra.mxu0 %v3169
    %3187 = vmatprep.subr.mxu0 0.0
    %3188 = vmatpush1.xpose.msra.mxu0 %v3171
    %3189 = vmatprep.subr.mxu0 0.0
    %3190 = vmatpush1.xpose.msra.mxu0 %v3173
    %3191 = vmatprep.subr.mxu0 0.0
    %3192 = vmatpush1.xpose.msra.mxu0 %v3175
    %3193 = vmatprep.subr.mxu0 0.0
    %3194 = vmatpush1.xpose.msra.mxu0 %v3177
    %3195 = vmatprep.subr.mxu0 0.0
    %3196 = vmatpush1.xpose.msra.mxu0 0.0
    %3197 = vmatprep.subr.mxu0 0.0
    %3198 = vmatpush1.xpose.msra.mxu0 0.0
    %3199 = vmatprep.subr.mxu0 0.0
    %3200 = vmatpush1.xpose.msra.mxu0 0.0
    %3201 = vmatprep.subr.mxu0 0.0
    %3202 = vmatpush1.xpose.msra.mxu0 0.0
    %3203 = vmatprep.subr.mxu0 0.0
    %3204 = vmatpush1.xpose.msra.mxu0 0.0
    %3205 = vmatprep.subr.mxu0 0.0
    %3206 = vmatpush1.xpose.msra.mxu0 0.0
    %3207 = vmatprep.subr.mxu0 0.0
    %3208 = vmatpush1.xpose.msra.mxu0 0.0
    %3209 = vmatprep.subr.mxu0 0.0
    %3210 = vmatpush1.xpose.msra.mxu0 0.0
    %3211 = vmatprep.subr.mxu0 0.0
    %3212 = vmatpush1.xpose.msra.mxu0 0.0
    %3213 = vmatprep.subr.mxu0 0.0
    %3214 = vmatpush1.xpose.msra.mxu0 0.0
    %3215 = vmatprep.subr.mxu0 0.0
    %3216 = vmatpush1.xpose.msra.mxu0 0.0
    %3217 = vmatprep.subr.mxu0 0.0
    %3218 = vmatpush1.xpose.msra.mxu0 0.0
    %3219 = vmatprep.subr.mxu0 0.0
    %3220 = vmatpush1.xpose.msra.mxu0 0.0
    %3221 = vmatprep.subr.mxu0 0.0
    %3222 = vmatpush1.xpose.msra.mxu0 0.0
    %3223 = vmatprep.subr.mxu0 0.0
    %3224 = vmatpush1.xpose.msra.mxu0 0.0
    %3225 = vmatprep.subr.mxu0 0.0
    %3226 = vmatpush1.xpose.msra.mxu0 0.0
    %3227 = vmatprep.subr.mxu0 0.0
    %3228 = vmatpush1.xpose.msra.mxu0 0.0
    %3229 = vmatprep.subr.mxu0 0.0
    %3230 = vmatpush1.xpose.msra.mxu0 0.0
    %3231 = vmatprep.subr.mxu0 0.0
    %3232 = vmatpush1.xpose.msra.mxu0 0.0
    %3233 = vmatprep.subr.mxu0 0.0
    %3234 = vmatpush1.xpose.msra.mxu0 0.0
    %3235 = vmatprep.subr.mxu0 0.0
    %3236 = vmatpush1.xpose.msra.mxu0 0.0
    %3237 = vmatprep.subr.mxu0 0.0
    %3238 = vmatpush1.xpose.msra.mxu0 0.0
    %3239 = vmatprep.subr.mxu0 0.0
    %3240 = vmatpush1.xpose.msra.mxu0 0.0
    %3241 = vmatprep.subr.mxu0 0.0
    %3242 = vmatpush1.xpose.msra.mxu0 0.0
    %3243 = vmatprep.mubr.f32.mxu0 0.0
    %3244 = vmatmul.mubr.f32.gmra.mrb[0].mxu0 %v3147
    %v3245 = vpop.f32.mrb[0].mxu0
    %v3246 = vadd.f32 0.0, %v3245
    %v3247 = vpop.f32.mrb[0].mxu0
    %3248 = vmatprep.mubr.f32.mxu0 0.0
    %3249 = vmatmul.mubr.f32.gmra.mrb[0].mxu0 %v3149
    %v3250 = vpop.f32.mrb[0].mxu0
    %v3251 = vadd.f32 0.0, %v3250
    %v3252 = vpop.f32.mrb[0].mxu0
    %3253 = vmatprep.mubr.f32.mxu0 0.0
    %3254 = vmatmul.mubr.f32.gmra.mrb[0].mxu0 %v3151
    %v3255 = vpop.f32.mrb[0].mxu0
    %v3256 = vadd.f32 0.0, %v3255
    %v3257 = vpop.f32.mrb[0].mxu0
    %3258 = vmatprep.mubr.f32.mxu0 0.0
    %3259 = vmatmul.mubr.f32.gmra.mrb[0].mxu0 %v3153
    %v3260 = vpop.f32.mrb[0].mxu0
    %v3261 = vadd.f32 0.0, %v3260
    %v3262 = vpop.f32.mrb[0].mxu0
    %3263 = vmatprep.mubr.f32.mxu0 0.0
    %3264 = vmatmul.mubr.f32.gmra.mrb[0].mxu0 %v3155
    %v3265 = vpop.f32.mrb[0].mxu0
    %v3266 = vadd.f32 0.0, %v3265
    %v3267 = vpop.f32.mrb[0].mxu0
    %3268 = vmatprep.mubr.f32.mxu0 0.0
    %3269 = vmatmul.mubr.f32.gmra.mrb[0].mxu0 %v3157
    %v3270 = vpop.f32.mrb[0].mxu0
    %v3271 = vadd.f32 0.0, %v3270
    %v3272 = vpop.f32.mrb[0].mxu0
    %3273 = vmatprep.mubr.f32.mxu0 0.0
    %3274 = vmatmul.mubr.f32.gmra.mrb[0].mxu0 %v3159
    %v3275 = vpop.f32.mrb[0].mxu0
    %v3276 = vadd.f32 0.0, %v3275
    %v3277 = vpop.f32.mrb[0].mxu0
    %3278 = vmatprep.mubr.f32.mxu0 0.0
    %3279 = vmatmul.mubr.f32.gmra.mrb[0].mxu0 %v3161
    %v3280 = vpop.f32.mrb[0].mxu0
    %v3281 = vadd.f32 0.0, %v3280
    %v3282 = vpop.f32.mrb[0].mxu0
    %3283 = vdwg.mxu0
    %v3284 = vmul.f32 %v3246, 0.35355338
    %v3285 = vmul.f32 %v3251, 0.35355338
    %v3286 = vmul.f32 %v3256, 0.35355338
    %v3287 = vmul.f32 %v3261, 0.35355338
    %v3288 = vmul.f32 %v3266, 0.35355338
    %v3289 = vmul.f32 %v3271, 0.35355338
    %v3290 = vmul.f32 %v3276, 0.35355338
    %v3291 = vmul.f32 %v3281, 0.35355338
    %v3292 = vadd.f32 %v3284, %v81
    %v3293 = vadd.f32 %v3285, %v82
    %v3294 = vadd.f32 %v3286, %v83
    %v3295 = vadd.f32 %v3287, %v84
    %v3296 = vadd.f32 %v3288, %v85
    %v3297 = vadd.f32 %v3289, %v86
    %v3298 = vadd.f32 %v3290, %v87
    %v3299 = vadd.f32 %v3291, %v88
    %v3300 = vsel %vm551, %v3292, -inf
    %3301 = vmax.xlane.f32.xlu0 %v3300
    %v3302 = vpop.xlane.xlu0 %3301
    %v3303 = vsel %vm551, %v3293, -inf
    %3304 = vmax.xlane.f32.xlu0 %v3303
    %v3305 = vpop.xlane.xlu0 %3304
    %v3306 = vsel %vm551, %v3294, -inf
    %3307 = vmax.xlane.f32.xlu0 %v3306
    %v3308 = vpop.xlane.xlu0 %3307
    %v3309 = vsel %vm551, %v3295, -inf
    %3310 = vmax.xlane.f32.xlu0 %v3309
    %v3311 = vpop.xlane.xlu0 %3310
    %v3312 = vsel %vm551, %v3296, -inf
    %3313 = vmax.xlane.f32.xlu0 %v3312
    %v3314 = vpop.xlane.xlu0 %3313
    %v3315 = vsel %vm551, %v3297, -inf
    %3316 = vmax.xlane.f32.xlu0 %v3315
    %v3317 = vpop.xlane.xlu0 %3316
    %v3318 = vsel %vm551, %v3298, -inf
    %3319 = vmax.xlane.f32.xlu0 %v3318
    %v3320 = vpop.xlane.xlu0 %3319
    %v3321 = vsel %vm551, %v3299, -inf
    %3322 = vmax.xlane.f32.xlu0 %v3321
    %v3323 = vpop.xlane.xlu0 %3322
    %v3324 = vsub.f32 %v3292, %v3302
    %v3325 = vsub.f32 %v3293, %v3305
    %v3326 = vsub.f32 %v3294, %v3308
    %v3327 = vsub.f32 %v3295, %v3311
    %v3328 = vsub.f32 %v3296, %v3314
    %v3329 = vsub.f32 %v3297, %v3317
    %v3330 = vsub.f32 %v3298, %v3320
    %v3331 = vsub.f32 %v3299, %v3323
    %v3332 = vmul.f32 %v3324, 1.442695
    %v3333 = vpow.pop %v3332
    %v3334 = vmul.f32 %v3325, 1.442695
    %v3335 = vpow.pop %v3334
    %v3336 = vmul.f32 %v3326, 1.442695
    %v3337 = vpow.pop %v3336
    %v3338 = vmul.f32 %v3327, 1.442695
    %v3339 = vpow.pop %v3338
    %v3340 = vmul.f32 %v3328, 1.442695
    %v3341 = vpow.pop %v3340
    %v3342 = vmul.f32 %v3329, 1.442695
    %v3343 = vpow.pop %v3342
    %v3344 = vmul.f32 %v3330, 1.442695
    %v3345 = vpow.pop %v3344
    %v3346 = vmul.f32 %v3331, 1.442695
    %v3347 = vpow.pop %v3346
    %v3348 = vsel %vm551, %v3333, 0.0
    %3349 = vadd.xlane.f32.xlu0 %v3348
    %v3350 = vpop.xlane.xlu0 %3349
    %v3351 = vsel %vm551, %v3335, 0.0
    %3352 = vadd.xlane.f32.xlu0 %v3351
    %v3353 = vpop.xlane.xlu0 %3352
    %v3354 = vsel %vm551, %v3337, 0.0
    %3355 = vadd.xlane.f32.xlu0 %v3354
    %v3356 = vpop.xlane.xlu0 %3355
    %v3357 = vsel %vm551, %v3339, 0.0
    %3358 = vadd.xlane.f32.xlu0 %v3357
    %v3359 = vpop.xlane.xlu0 %3358
    %v3360 = vsel %vm551, %v3341, 0.0
    %3361 = vadd.xlane.f32.xlu0 %v3360
    %v3362 = vpop.xlane.xlu0 %3361
    %v3363 = vsel %vm551, %v3343, 0.0
    %3364 = vadd.xlane.f32.xlu0 %v3363
    %v3365 = vpop.xlane.xlu0 %3364
    %v3366 = vsel %vm551, %v3345, 0.0
    %3367 = vadd.xlane.f32.xlu0 %v3366
    %v3368 = vpop.xlane.xlu0 %3367
    %v3369 = vsel %vm551, %v3347, 0.0
    %3370 = vadd.xlane.f32.xlu0 %v3369
    %v3371 = vpop.xlane.xlu0 %3370
    %v3372 = vrcp.pop %v3350
    %v3373 = vmul.f32 %v3333, %v3372
    %v3374 = vrcp.pop %v3353
    %v3375 = vmul.f32 %v3335, %v3374
    %v3376 = vrcp.pop %v3356
    %v3377 = vmul.f32 %v3337, %v3376
    %v3378 = vrcp.pop %v3359
    %v3379 = vmul.f32 %v3339, %v3378
    %v3380 = vrcp.pop %v3362
    %v3381 = vmul.f32 %v3341, %v3380
    %v3382 = vrcp.pop %v3365
    %v3383 = vmul.f32 %v3343, %v3382
    %v3384 = vrcp.pop %v3368
    %v3385 = vmul.f32 %v3345, %v3384
    %v3386 = vrcp.pop %v3371
    %v3387 = vmul.f32 %v3347, %v3386
    %3388 = vrot.lane.b32.xlu0 %v3085, 64
    %v3389 = vpop.permute.xlu0 %3388
    %3390 = vrot.lane.b32.xlu0 %v3090, 64
    %v3391 = vpop.permute.xlu0 %3390
    %3392 = vrot.lane.b32.xlu0 %v3095, 64
    %v3393 = vpop.permute.xlu0 %3392
    %3394 = vrot.lane.b32.xlu0 %v3100, 64
    %v3395 = vpop.permute.xlu0 %3394
    %3396 = vrot.lane.b32.xlu0 %v3105, 64
    %v3397 = vpop.permute.xlu0 %3396
    %3398 = vrot.lane.b32.xlu0 %v3110, 64
    %v3399 = vpop.permute.xlu0 %3398
    %3400 = vrot.lane.b32.xlu0 %v3115, 64
    %v3401 = vpop.permute.xlu0 %3400
    %3402 = vrot.lane.b32.xlu0 %v3120, 64
    %v3403 = vpop.permute.xlu0 %3402
    %v3413 = vsel %vm551, %v3373, 0
    %v3416 = vsel %vm551, %v3375, 0
    %v3419 = vsel %vm551, %v3377, 0
    %v3422 = vsel %vm551, %v3379, 0
    %v3425 = vsel %vm551, %v3381, 0
    %v3428 = vsel %vm551, %v3383, 0
    %v3431 = vsel %vm551, %v3385, 0
    %v3434 = vsel %vm551, %v3387, 0
    %3436 = vmatprep.subr.mxu0 0.0
    %3437 = vmatpush1.msra.mxu0 %v3389
    %3438 = vmatprep.subr.mxu0 0.0
    %3439 = vmatpush1.msra.mxu0 %v3391
    %3440 = vmatprep.subr.mxu0 0.0
    %3441 = vmatpush1.msra.mxu0 %v3393
    %3442 = vmatprep.subr.mxu0 0.0
    %3443 = vmatpush1.msra.mxu0 %v3395
    %3444 = vmatprep.subr.mxu0 0.0
    %3445 = vmatpush1.msra.mxu0 %v3397
    %3446 = vmatprep.subr.mxu0 0.0
    %3447 = vmatpush1.msra.mxu0 %v3399
    %3448 = vmatprep.subr.mxu0 0.0
    %3449 = vmatpush1.msra.mxu0 %v3401
    %3450 = vmatprep.subr.mxu0 0.0
    %3451 = vmatpush1.msra.mxu0 %v3403
    %3452 = vmatprep.subr.mxu0 0.0
    %3453 = vmatpush1.msra.mxu0 0.0
    %3454 = vmatprep.subr.mxu0 0.0
    %3455 = vmatpush1.msra.mxu0 0.0
    %3456 = vmatprep.subr.mxu0 0.0
    %3457 = vmatpush1.msra.mxu0 0.0
    %3458 = vmatprep.subr.mxu0 0.0
    %3459 = vmatpush1.msra.mxu0 0.0
    %3460 = vmatprep.subr.mxu0 0.0
    %3461 = vmatpush1.msra.mxu0 0.0
    %3462 = vmatprep.subr.mxu0 0.0
    %3463 = vmatpush1.msra.mxu0 0.0
    %3464 = vmatprep.subr.mxu0 0.0
    %3465 = vmatpush1.msra.mxu0 0.0
    %3466 = vmatprep.subr.mxu0 0.0
    %3467 = vmatpush1.msra.mxu0 0.0
    %3468 = vmatprep.subr.mxu0 0.0
    %3469 = vmatpush1.msra.mxu0 0.0
    %3470 = vmatprep.subr.mxu0 0.0
    %3471 = vmatpush1.msra.mxu0 0.0
    %3472 = vmatprep.subr.mxu0 0.0
    %3473 = vmatpush1.msra.mxu0 0.0
    %3474 = vmatprep.subr.mxu0 0.0
    %3475 = vmatpush1.msra.mxu0 0.0
    %3476 = vmatprep.subr.mxu0 0.0
    %3477 = vmatpush1.msra.mxu0 0.0
    %3478 = vmatprep.subr.mxu0 0.0
    %3479 = vmatpush1.msra.mxu0 0.0
    %3480 = vmatprep.subr.mxu0 0.0
    %3481 = vmatpush1.msra.mxu0 0.0
    %3482 = vmatprep.subr.mxu0 0.0
    %3483 = vmatpush1.msra.mxu0 0.0
    %3484 = vmatprep.subr.mxu0 0.0
    %3485 = vmatpush1.msra.mxu0 0.0
    %3486 = vmatprep.subr.mxu0 0.0
    %3487 = vmatpush1.msra.mxu0 0.0
    %3488 = vmatprep.subr.mxu0 0.0
    %3489 = vmatpush1.msra.mxu0 0.0
    %3490 = vmatprep.subr.mxu0 0.0
    %3491 = vmatpush1.msra.mxu0 0.0
    %3492 = vmatprep.subr.mxu0 0.0
    %3493 = vmatpush1.msra.mxu0 0.0
    %3494 = vmatprep.subr.mxu0 0.0
    %3495 = vmatpush1.msra.mxu0 0.0
    %3496 = vmatprep.subr.mxu0 0.0
    %3497 = vmatpush1.msra.mxu0 0.0
    %3498 = vmatprep.subr.mxu0 0.0
    %3499 = vmatpush1.msra.mxu0 0.0
    %3500 = vmatprep.mubr.f32.mxu0 0.0
    %3501 = vmatmul.mubr.f32.gmra.mrb[0].mxu0 %v3413
    %v3502 = vpop.f32.mrb[0].mxu0
    %v3503 = vadd.f32 0.0, %v3502
    %v3504 = vpop.f32.mrb[0].mxu0
    %3505 = vmatprep.mubr.f32.mxu0 0.0
    %3506 = vmatmul.mubr.f32.gmra.mrb[0].mxu0 %v3416
    %v3507 = vpop.f32.mrb[0].mxu0
    %v3508 = vadd.f32 0.0, %v3507
    %v3509 = vpop.f32.mrb[0].mxu0
    %3510 = vmatprep.mubr.f32.mxu0 0.0
    %3511 = vmatmul.mubr.f32.gmra.mrb[0].mxu0 %v3419
    %v3512 = vpop.f32.mrb[0].mxu0
    %v3513 = vadd.f32 0.0, %v3512
    %v3514 = vpop.f32.mrb[0].mxu0
    %3515 = vmatprep.mubr.f32.mxu0 0.0
    %3516 = vmatmul.mubr.f32.gmra.mrb[0].mxu0 %v3422
    %v3517 = vpop.f32.mrb[0].mxu0
    %v3518 = vadd.f32 0.0, %v3517
    %v3519 = vpop.f32.mrb[0].mxu0
    %3520 = vmatprep.mubr.f32.mxu0 0.0
    %3521 = vmatmul.mubr.f32.gmra.mrb[0].mxu0 %v3425
    %v3522 = vpop.f32.mrb[0].mxu0
    %v3523 = vadd.f32 0.0, %v3522
    %v3524 = vpop.f32.mrb[0].mxu0
    %3525 = vmatprep.mubr.f32.mxu0 0.0
    %3526 = vmatmul.mubr.f32.gmra.mrb[0].mxu0 %v3428
    %v3527 = vpop.f32.mrb[0].mxu0
    %v3528 = vadd.f32 0.0, %v3527
    %v3529 = vpop.f32.mrb[0].mxu0
    %3530 = vmatprep.mubr.f32.mxu0 0.0
    %3531 = vmatmul.mubr.f32.gmra.mrb[0].mxu0 %v3431
    %v3532 = vpop.f32.mrb[0].mxu0
    %v3533 = vadd.f32 0.0, %v3532
    %v3534 = vpop.f32.mrb[0].mxu0
    %3535 = vmatprep.mubr.f32.mxu0 0.0
    %3536 = vmatmul.mubr.f32.gmra.mrb[0].mxu0 %v3434
    %v3537 = vpop.f32.mrb[0].mxu0
    %v3538 = vadd.f32 0.0, %v3537
    %v3539 = vpop.f32.mrb[0].mxu0
    %3540 = vdwg.mxu0
    %3541 = vrot.lane.b32.xlu0 %v3085, 120
    %v3542 = vpop.permute.xlu0 %3541
    %3543 = vrot.lane.b32.xlu0 %v3090, 120
    %v3544 = vpop.permute.xlu0 %3543
    %3545 = vrot.lane.b32.xlu0 %v3095, 120
    %v3546 = vpop.permute.xlu0 %3545
    %3547 = vrot.lane.b32.xlu0 %v3100, 120
    %v3548 = vpop.permute.xlu0 %3547
    %3549 = vrot.lane.b32.xlu0 %v3105, 120
    %v3550 = vpop.permute.xlu0 %3549
    %3551 = vrot.lane.b32.xlu0 %v3110, 120
    %v3552 = vpop.permute.xlu0 %3551
    %3553 = vrot.lane.b32.xlu0 %v3115, 120
    %v3554 = vpop.permute.xlu0 %3553
    %3555 = vrot.lane.b32.xlu0 %v3120, 120
    %v3556 = vpop.permute.xlu0 %3555
    %3557 = vrot.lane.b32.xlu0 %v3085, 88
    %v3558 = vpop.permute.xlu0 %3557
    %3559 = vrot.lane.b32.xlu0 %v3090, 88
    %v3560 = vpop.permute.xlu0 %3559
    %3561 = vrot.lane.b32.xlu0 %v3095, 88
    %v3562 = vpop.permute.xlu0 %3561
    %3563 = vrot.lane.b32.xlu0 %v3100, 88
    %v3564 = vpop.permute.xlu0 %3563
    %3565 = vrot.lane.b32.xlu0 %v3105, 88
    %v3566 = vpop.permute.xlu0 %3565
    %3567 = vrot.lane.b32.xlu0 %v3110, 88
    %v3568 = vpop.permute.xlu0 %3567
    %3569 = vrot.lane.b32.xlu0 %v3115, 88
    %v3570 = vpop.permute.xlu0 %3569
    %3571 = vrot.lane.b32.xlu0 %v3120, 88
    %v3572 = vpop.permute.xlu0 %3571
    %v3573 = vsel %vm397, %v3542, 0
    %v3575 = vsel %vm397, %v3544, 0
    %v3577 = vsel %vm397, %v3546, 0
    %v3579 = vsel %vm397, %v3548, 0
    %v3581 = vsel %vm397, %v3550, 0
    %v3583 = vsel %vm397, %v3552, 0
    %v3585 = vsel %vm397, %v3554, 0
    %v3587 = vsel %vm397, %v3556, 0
    %v3589 = vsel %vm397, %v3558, 0
    %v3591 = vsel %vm397, %v3560, 0
    %v3593 = vsel %vm397, %v3562, 0
    %v3595 = vsel %vm397, %v3564, 0
    %v3597 = vsel %vm397, %v3566, 0
    %v3599 = vsel %vm397, %v3568, 0
    %v3601 = vsel %vm397, %v3570, 0
    %v3603 = vsel %vm397, %v3572, 0
    %3605 = vmatprep.subr.mxu0 0.0
    %3606 = vmatpush1.xpose.msra.mxu0 %v3589
    %3607 = vmatprep.subr.mxu0 0.0
    %3608 = vmatpush1.xpose.msra.mxu0 %v3591
    %3609 = vmatprep.subr.mxu0 0.0
    %3610 = vmatpush1.xpose.msra.mxu0 %v3593
    %3611 = vmatprep.subr.mxu0 0.0
    %3612 = vmatpush1.xpose.msra.mxu0 %v3595
    %3613 = vmatprep.subr.mxu0 0.0
    %3614 = vmatpush1.xpose.msra.mxu0 %v3597
    %3615 = vmatprep.subr.mxu0 0.0
    %3616 = vmatpush1.xpose.msra.mxu0 %v3599
    %3617 = vmatprep.subr.mxu0 0.0
    %3618 = vmatpush1.xpose.msra.mxu0 %v3601
    %3619 = vmatprep.subr.mxu0 0.0
    %3620 = vmatpush1.xpose.msra.mxu0 %v3603
    %3621 = vmatprep.subr.mxu0 0.0
    %3622 = vmatpush1.xpose.msra.mxu0 0.0
    %3623 = vmatprep.subr.mxu0 0.0
    %3624 = vmatpush1.xpose.msra.mxu0 0.0
    %3625 = vmatprep.subr.mxu0 0.0
    %3626 = vmatpush1.xpose.msra.mxu0 0.0
    %3627 = vmatprep.subr.mxu0 0.0
    %3628 = vmatpush1.xpose.msra.mxu0 0.0
    %3629 = vmatprep.subr.mxu0 0.0
    %3630 = vmatpush1.xpose.msra.mxu0 0.0
    %3631 = vmatprep.subr.mxu0 0.0
    %3632 = vmatpush1.xpose.msra.mxu0 0.0
    %3633 = vmatprep.subr.mxu0 0.0
    %3634 = vmatpush1.xpose.msra.mxu0 0.0
    %3635 = vmatprep.subr.mxu0 0.0
    %3636 = vmatpush1.xpose.msra.mxu0 0.0
    %3637 = vmatprep.subr.mxu0 0.0
    %3638 = vmatpush1.xpose.msra.mxu0 0.0
    %3639 = vmatprep.subr.mxu0 0.0
    %3640 = vmatpush1.xpose.msra.mxu0 0.0
    %3641 = vmatprep.subr.mxu0 0.0
    %3642 = vmatpush1.xpose.msra.mxu0 0.0
    %3643 = vmatprep.subr.mxu0 0.0
    %3644 = vmatpush1.xpose.msra.mxu0 0.0
    %3645 = vmatprep.subr.mxu0 0.0
    %3646 = vmatpush1.xpose.msra.mxu0 0.0
    %3647 = vmatprep.subr.mxu0 0.0
    %3648 = vmatpush1.xpose.msra.mxu0 0.0
    %3649 = vmatprep.subr.mxu0 0.0
    %3650 = vmatpush1.xpose.msra.mxu0 0.0
    %3651 = vmatprep.subr.mxu0 0.0
    %3652 = vmatpush1.xpose.msra.mxu0 0.0
    %3653 = vmatprep.subr.mxu0 0.0
    %3654 = vmatpush1.xpose.msra.mxu0 0.0
    %3655 = vmatprep.subr.mxu0 0.0
    %3656 = vmatpush1.xpose.msra.mxu0 0.0
    %3657 = vmatprep.subr.mxu0 0.0
    %3658 = vmatpush1.xpose.msra.mxu0 0.0
    %3659 = vmatprep.subr.mxu0 0.0
    %3660 = vmatpush1.xpose.msra.mxu0 0.0
    %3661 = vmatprep.subr.mxu0 0.0
    %3662 = vmatpush1.xpose.msra.mxu0 0.0
    %3663 = vmatprep.subr.mxu0 0.0
    %3664 = vmatpush1.xpose.msra.mxu0 0.0
    %3665 = vmatprep.subr.mxu0 0.0
    %3666 = vmatpush1.xpose.msra.mxu0 0.0
    %3667 = vmatprep.subr.mxu0 0.0
    %3668 = vmatpush1.xpose.msra.mxu0 0.0
    %3669 = vmatprep.mubr.f32.mxu0 0.0
    %3670 = vmatmul.mubr.f32.gmra.mrb[0].mxu0 %v3573
    %v3671 = vpop.f32.mrb[0].mxu0
    %v3672 = vadd.f32 0.0, %v3671
    %v3673 = vpop.f32.mrb[0].mxu0
    %3674 = vmatprep.mubr.f32.mxu0 0.0
    %3675 = vmatmul.mubr.f32.gmra.mrb[0].mxu0 %v3575
    %v3676 = vpop.f32.mrb[0].mxu0
    %v3677 = vadd.f32 0.0, %v3676
    %v3678 = vpop.f32.mrb[0].mxu0
    %3679 = vmatprep.mubr.f32.mxu0 0.0
    %3680 = vmatmul.mubr.f32.gmra.mrb[0].mxu0 %v3577
    %v3681 = vpop.f32.mrb[0].mxu0
    %v3682 = vadd.f32 0.0, %v3681
    %v3683 = vpop.f32.mrb[0].mxu0
    %3684 = vmatprep.mubr.f32.mxu0 0.0
    %3685 = vmatmul.mubr.f32.gmra.mrb[0].mxu0 %v3579
    %v3686 = vpop.f32.mrb[0].mxu0
    %v3687 = vadd.f32 0.0, %v3686
    %v3688 = vpop.f32.mrb[0].mxu0
    %3689 = vmatprep.mubr.f32.mxu0 0.0
    %3690 = vmatmul.mubr.f32.gmra.mrb[0].mxu0 %v3581
    %v3691 = vpop.f32.mrb[0].mxu0
    %v3692 = vadd.f32 0.0, %v3691
    %v3693 = vpop.f32.mrb[0].mxu0
    %3694 = vmatprep.mubr.f32.mxu0 0.0
    %3695 = vmatmul.mubr.f32.gmra.mrb[0].mxu0 %v3583
    %v3696 = vpop.f32.mrb[0].mxu0
    %v3697 = vadd.f32 0.0, %v3696
    %v3698 = vpop.f32.mrb[0].mxu0
    %3699 = vmatprep.mubr.f32.mxu0 0.0
    %3700 = vmatmul.mubr.f32.gmra.mrb[0].mxu0 %v3585
    %v3701 = vpop.f32.mrb[0].mxu0
    %v3702 = vadd.f32 0.0, %v3701
    %v3703 = vpop.f32.mrb[0].mxu0
    %3704 = vmatprep.mubr.f32.mxu0 0.0
    %3705 = vmatmul.mubr.f32.gmra.mrb[0].mxu0 %v3587
    %v3706 = vpop.f32.mrb[0].mxu0
    %v3707 = vadd.f32 0.0, %v3706
    %v3708 = vpop.f32.mrb[0].mxu0
    %3709 = vdwg.mxu0
    %v3710 = vmul.f32 %v3672, 0.35355338
    %v3711 = vmul.f32 %v3677, 0.35355338
    %v3712 = vmul.f32 %v3682, 0.35355338
    %v3713 = vmul.f32 %v3687, 0.35355338
    %v3714 = vmul.f32 %v3692, 0.35355338
    %v3715 = vmul.f32 %v3697, 0.35355338
    %v3716 = vmul.f32 %v3702, 0.35355338
    %v3717 = vmul.f32 %v3707, 0.35355338
    %v3718 = vadd.f32 %v3710, %v81
    %v3719 = vadd.f32 %v3711, %v82
    %v3720 = vadd.f32 %v3712, %v83
    %v3721 = vadd.f32 %v3713, %v84
    %v3722 = vadd.f32 %v3714, %v85
    %v3723 = vadd.f32 %v3715, %v86
    %v3724 = vadd.f32 %v3716, %v87
    %v3725 = vadd.f32 %v3717, %v88
    %v3726 = vsel %vm551, %v3718, -inf
    %3727 = vmax.xlane.f32.xlu0 %v3726
    %v3728 = vpop.xlane.xlu0 %3727
    %v3729 = vsel %vm551, %v3719, -inf
    %3730 = vmax.xlane.f32.xlu0 %v3729
    %v3731 = vpop.xlane.xlu0 %3730
    %v3732 = vsel %vm551, %v3720, -inf
    %3733 = vmax.xlane.f32.xlu0 %v3732
    %v3734 = vpop.xlane.xlu0 %3733
    %v3735 = vsel %vm551, %v3721, -inf
    %3736 = vmax.xlane.f32.xlu0 %v3735
    %v3737 = vpop.xlane.xlu0 %3736
    %v3738 = vsel %vm551, %v3722, -inf
    %3739 = vmax.xlane.f32.xlu0 %v3738
    %v3740 = vpop.xlane.xlu0 %3739
    %v3741 = vsel %vm551, %v3723, -inf
    %3742 = vmax.xlane.f32.xlu0 %v3741
    %v3743 = vpop.xlane.xlu0 %3742
    %v3744 = vsel %vm551, %v3724, -inf
    %3745 = vmax.xlane.f32.xlu0 %v3744
    %v3746 = vpop.xlane.xlu0 %3745
    %v3747 = vsel %vm551, %v3725, -inf
    %3748 = vmax.xlane.f32.xlu0 %v3747
    %v3749 = vpop.xlane.xlu0 %3748
    %v3750 = vsub.f32 %v3718, %v3728
    %v3751 = vsub.f32 %v3719, %v3731
    %v3752 = vsub.f32 %v3720, %v3734
    %v3753 = vsub.f32 %v3721, %v3737
    %v3754 = vsub.f32 %v3722, %v3740
    %v3755 = vsub.f32 %v3723, %v3743
    %v3756 = vsub.f32 %v3724, %v3746
    %v3757 = vsub.f32 %v3725, %v3749
    %v3758 = vmul.f32 %v3750, 1.442695
    %v3759 = vpow.pop %v3758
    %v3760 = vmul.f32 %v3751, 1.442695
    %v3761 = vpow.pop %v3760
    %v3762 = vmul.f32 %v3752, 1.442695
    %v3763 = vpow.pop %v3762
    %v3764 = vmul.f32 %v3753, 1.442695
    %v3765 = vpow.pop %v3764
    %v3766 = vmul.f32 %v3754, 1.442695
    %v3767 = vpow.pop %v3766
    %v3768 = vmul.f32 %v3755, 1.442695
    %v3769 = vpow.pop %v3768
    %v3770 = vmul.f32 %v3756, 1.442695
    %v3771 = vpow.pop %v3770
    %v3772 = vmul.f32 %v3757, 1.442695
    %v3773 = vpow.pop %v3772
    %v3774 = vsel %vm551, %v3759, 0.0
    %3775 = vadd.xlane.f32.xlu0 %v3774
    %v3776 = vpop.xlane.xlu0 %3775
    %v3777 = vsel %vm551, %v3761, 0.0
    %3778 = vadd.xlane.f32.xlu0 %v3777
    %v3779 = vpop.xlane.xlu0 %3778
    %v3780 = vsel %vm551, %v3763, 0.0
    %3781 = vadd.xlane.f32.xlu0 %v3780
    %v3782 = vpop.xlane.xlu0 %3781
    %v3783 = vsel %vm551, %v3765, 0.0
    %3784 = vadd.xlane.f32.xlu0 %v3783
    %v3785 = vpop.xlane.xlu0 %3784
    %v3786 = vsel %vm551, %v3767, 0.0
    %3787 = vadd.xlane.f32.xlu0 %v3786
    %v3788 = vpop.xlane.xlu0 %3787
    %v3789 = vsel %vm551, %v3769, 0.0
    %3790 = vadd.xlane.f32.xlu0 %v3789
    %v3791 = vpop.xlane.xlu0 %3790
    %v3792 = vsel %vm551, %v3771, 0.0
    %3793 = vadd.xlane.f32.xlu0 %v3792
    %v3794 = vpop.xlane.xlu0 %3793
    %v3795 = vsel %vm551, %v3773, 0.0
    %3796 = vadd.xlane.f32.xlu0 %v3795
    %v3797 = vpop.xlane.xlu0 %3796
    %v3798 = vrcp.pop %v3776
    %v3799 = vmul.f32 %v3759, %v3798
    %v3800 = vrcp.pop %v3779
    %v3801 = vmul.f32 %v3761, %v3800
    %v3802 = vrcp.pop %v3782
    %v3803 = vmul.f32 %v3763, %v3802
    %v3804 = vrcp.pop %v3785
    %v3805 = vmul.f32 %v3765, %v3804
    %v3806 = vrcp.pop %v3788
    %v3807 = vmul.f32 %v3767, %v3806
    %v3808 = vrcp.pop %v3791
    %v3809 = vmul.f32 %v3769, %v3808
    %v3810 = vrcp.pop %v3794
    %v3811 = vmul.f32 %v3771, %v3810
    %v3812 = vrcp.pop %v3797
    %v3813 = vmul.f32 %v3773, %v3812
    %3814 = vrot.lane.b32.xlu0 %v3085, 56
    %v3815 = vpop.permute.xlu0 %3814
    %3816 = vrot.lane.b32.xlu0 %v3090, 56
    %v3817 = vpop.permute.xlu0 %3816
    %3818 = vrot.lane.b32.xlu0 %v3095, 56
    %v3819 = vpop.permute.xlu0 %3818
    %3820 = vrot.lane.b32.xlu0 %v3100, 56
    %v3821 = vpop.permute.xlu0 %3820
    %3822 = vrot.lane.b32.xlu0 %v3105, 56
    %v3823 = vpop.permute.xlu0 %3822
    %3824 = vrot.lane.b32.xlu0 %v3110, 56
    %v3825 = vpop.permute.xlu0 %3824
    %3826 = vrot.lane.b32.xlu0 %v3115, 56
    %v3827 = vpop.permute.xlu0 %3826
    %3828 = vrot.lane.b32.xlu0 %v3120, 56
    %v3829 = vpop.permute.xlu0 %3828
    %v3839 = vsel %vm551, %v3799, 0
    %v3842 = vsel %vm551, %v3801, 0
    %v3845 = vsel %vm551, %v3803, 0
    %v3848 = vsel %vm551, %v3805, 0
    %v3851 = vsel %vm551, %v3807, 0
    %v3854 = vsel %vm551, %v3809, 0
    %v3857 = vsel %vm551, %v3811, 0
    %v3860 = vsel %vm551, %v3813, 0
    %3862 = vmatprep.subr.mxu0 0.0
    %3863 = vmatpush1.msra.mxu0 %v3815
    %3864 = vmatprep.subr.mxu0 0.0
    %3865 = vmatpush1.msra.mxu0 %v3817
    %3866 = vmatprep.subr.mxu0 0.0
    %3867 = vmatpush1.msra.mxu0 %v3819
    %3868 = vmatprep.subr.mxu0 0.0
    %3869 = vmatpush1.msra.mxu0 %v3821
    %3870 = vmatprep.subr.mxu0 0.0
    %3871 = vmatpush1.msra.mxu0 %v3823
    %3872 = vmatprep.subr.mxu0 0.0
    %3873 = vmatpush1.msra.mxu0 %v3825
    %3874 = vmatprep.subr.mxu0 0.0
    %3875 = vmatpush1.msra.mxu0 %v3827
    %3876 = vmatprep.subr.mxu0 0.0
    %3877 = vmatpush1.msra.mxu0 %v3829
    %3878 = vmatprep.subr.mxu0 0.0
    %3879 = vmatpush1.msra.mxu0 0.0
    %3880 = vmatprep.subr.mxu0 0.0
    %3881 = vmatpush1.msra.mxu0 0.0
    %3882 = vmatprep.subr.mxu0 0.0
    %3883 = vmatpush1.msra.mxu0 0.0
    %3884 = vmatprep.subr.mxu0 0.0
    %3885 = vmatpush1.msra.mxu0 0.0
    %3886 = vmatprep.subr.mxu0 0.0
    %3887 = vmatpush1.msra.mxu0 0.0
    %3888 = vmatprep.subr.mxu0 0.0
    %3889 = vmatpush1.msra.mxu0 0.0
    %3890 = vmatprep.subr.mxu0 0.0
    %3891 = vmatpush1.msra.mxu0 0.0
    %3892 = vmatprep.subr.mxu0 0.0
    %3893 = vmatpush1.msra.mxu0 0.0
    %3894 = vmatprep.subr.mxu0 0.0
    %3895 = vmatpush1.msra.mxu0 0.0
    %3896 = vmatprep.subr.mxu0 0.0
    %3897 = vmatpush1.msra.mxu0 0.0
    %3898 = vmatprep.subr.mxu0 0.0
    %3899 = vmatpush1.msra.mxu0 0.0
    %3900 = vmatprep.subr.mxu0 0.0
    %3901 = vmatpush1.msra.mxu0 0.0
    %3902 = vmatprep.subr.mxu0 0.0
    %3903 = vmatpush1.msra.mxu0 0.0
    %3904 = vmatprep.subr.mxu0 0.0
    %3905 = vmatpush1.msra.mxu0 0.0
    %3906 = vmatprep.subr.mxu0 0.0
    %3907 = vmatpush1.msra.mxu0 0.0
    %3908 = vmatprep.subr.mxu0 0.0
    %3909 = vmatpush1.msra.mxu0 0.0
    %3910 = vmatprep.subr.mxu0 0.0
    %3911 = vmatpush1.msra.mxu0 0.0
    %3912 = vmatprep.subr.mxu0 0.0
    %3913 = vmatpush1.msra.mxu0 0.0
    %3914 = vmatprep.subr.mxu0 0.0
    %3915 = vmatpush1.msra.mxu0 0.0
    %3916 = vmatprep.subr.mxu0 0.0
    %3917 = vmatpush1.msra.mxu0 0.0
    %3918 = vmatprep.subr.mxu0 0.0
    %3919 = vmatpush1.msra.mxu0 0.0
    %3920 = vmatprep.subr.mxu0 0.0
    %3921 = vmatpush1.msra.mxu0 0.0
    %3922 = vmatprep.subr.mxu0 0.0
    %3923 = vmatpush1.msra.mxu0 0.0
    %3924 = vmatprep.subr.mxu0 0.0
    %3925 = vmatpush1.msra.mxu0 0.0
    %3926 = vmatprep.mubr.f32.mxu0 0.0
    %3927 = vmatmul.mubr.f32.gmra.mrb[0].mxu0 %v3839
    %v3928 = vpop.f32.mrb[0].mxu0
    %v3929 = vadd.f32 0.0, %v3928
    %v3930 = vpop.f32.mrb[0].mxu0
    %3931 = vmatprep.mubr.f32.mxu0 0.0
    %3932 = vmatmul.mubr.f32.gmra.mrb[0].mxu0 %v3842
    %v3933 = vpop.f32.mrb[0].mxu0
    %v3934 = vadd.f32 0.0, %v3933
    %v3935 = vpop.f32.mrb[0].mxu0
    %3936 = vmatprep.mubr.f32.mxu0 0.0
    %3937 = vmatmul.mubr.f32.gmra.mrb[0].mxu0 %v3845
    %v3938 = vpop.f32.mrb[0].mxu0
    %v3939 = vadd.f32 0.0, %v3938
    %v3940 = vpop.f32.mrb[0].mxu0
    %3941 = vmatprep.mubr.f32.mxu0 0.0
    %3942 = vmatmul.mubr.f32.gmra.mrb[0].mxu0 %v3848
    %v3943 = vpop.f32.mrb[0].mxu0
    %v3944 = vadd.f32 0.0, %v3943
    %v3945 = vpop.f32.mrb[0].mxu0
    %3946 = vmatprep.mubr.f32.mxu0 0.0
    %3947 = vmatmul.mubr.f32.gmra.mrb[0].mxu0 %v3851
    %v3948 = vpop.f32.mrb[0].mxu0
    %v3949 = vadd.f32 0.0, %v3948
    %v3950 = vpop.f32.mrb[0].mxu0
    %3951 = vmatprep.mubr.f32.mxu0 0.0
    %3952 = vmatmul.mubr.f32.gmra.mrb[0].mxu0 %v3854
    %v3953 = vpop.f32.mrb[0].mxu0
    %v3954 = vadd.f32 0.0, %v3953
    %v3955 = vpop.f32.mrb[0].mxu0
    %3956 = vmatprep.mubr.f32.mxu0 0.0
    %3957 = vmatmul.mubr.f32.gmra.mrb[0].mxu0 %v3857
    %v3958 = vpop.f32.mrb[0].mxu0
    %v3959 = vadd.f32 0.0, %v3958
    %v3960 = vpop.f32.mrb[0].mxu0
    %3961 = vmatprep.mubr.f32.mxu0 0.0
    %3962 = vmatmul.mubr.f32.gmra.mrb[0].mxu0 %v3860
    %v3963 = vpop.f32.mrb[0].mxu0
    %v3964 = vadd.f32 0.0, %v3963
    %v3965 = vpop.f32.mrb[0].mxu0
    %3966 = vdwg.mxu0
    %3967 = vrot.lane.b32.xlu0 %v3085, 112
    %v3968 = vpop.permute.xlu0 %3967
    %3969 = vrot.lane.b32.xlu0 %v3090, 112
    %v3970 = vpop.permute.xlu0 %3969
    %3971 = vrot.lane.b32.xlu0 %v3095, 112
    %v3972 = vpop.permute.xlu0 %3971
    %3973 = vrot.lane.b32.xlu0 %v3100, 112
    %v3974 = vpop.permute.xlu0 %3973
    %3975 = vrot.lane.b32.xlu0 %v3105, 112
    %v3976 = vpop.permute.xlu0 %3975
    %3977 = vrot.lane.b32.xlu0 %v3110, 112
    %v3978 = vpop.permute.xlu0 %3977
    %3979 = vrot.lane.b32.xlu0 %v3115, 112
    %v3980 = vpop.permute.xlu0 %3979
    %3981 = vrot.lane.b32.xlu0 %v3120, 112
    %v3982 = vpop.permute.xlu0 %3981
    %3983 = vrot.lane.b32.xlu0 %v3085, 80
    %v3984 = vpop.permute.xlu0 %3983
    %3985 = vrot.lane.b32.xlu0 %v3090, 80
    %v3986 = vpop.permute.xlu0 %3985
    %3987 = vrot.lane.b32.xlu0 %v3095, 80
    %v3988 = vpop.permute.xlu0 %3987
    %3989 = vrot.lane.b32.xlu0 %v3100, 80
    %v3990 = vpop.permute.xlu0 %3989
    %3991 = vrot.lane.b32.xlu0 %v3105, 80
    %v3992 = vpop.permute.xlu0 %3991
    %3993 = vrot.lane.b32.xlu0 %v3110, 80
    %v3994 = vpop.permute.xlu0 %3993
    %3995 = vrot.lane.b32.xlu0 %v3115, 80
    %v3996 = vpop.permute.xlu0 %3995
    %3997 = vrot.lane.b32.xlu0 %v3120, 80
    %v3998 = vpop.permute.xlu0 %3997
    %v3999 = vsel %vm397, %v3968, 0
    %v4001 = vsel %vm397, %v3970, 0
    %v4003 = vsel %vm397, %v3972, 0
    %v4005 = vsel %vm397, %v3974, 0
    %v4007 = vsel %vm397, %v3976, 0
    %v4009 = vsel %vm397, %v3978, 0
    %v4011 = vsel %vm397, %v3980, 0
    %v4013 = vsel %vm397, %v3982, 0
    %v4015 = vsel %vm397, %v3984, 0
    %v4017 = vsel %vm397, %v3986, 0
    %v4019 = vsel %vm397, %v3988, 0
    %v4021 = vsel %vm397, %v3990, 0
    %v4023 = vsel %vm397, %v3992, 0
    %v4025 = vsel %vm397, %v3994, 0
    %v4027 = vsel %vm397, %v3996, 0
    %v4029 = vsel %vm397, %v3998, 0
    %4031 = vmatprep.subr.mxu0 0.0
    %4032 = vmatpush1.xpose.msra.mxu0 %v4015
    %4033 = vmatprep.subr.mxu0 0.0
    %4034 = vmatpush1.xpose.msra.mxu0 %v4017
    %4035 = vmatprep.subr.mxu0 0.0
    %4036 = vmatpush1.xpose.msra.mxu0 %v4019
    %4037 = vmatprep.subr.mxu0 0.0
    %4038 = vmatpush1.xpose.msra.mxu0 %v4021
    %4039 = vmatprep.subr.mxu0 0.0
    %4040 = vmatpush1.xpose.msra.mxu0 %v4023
    %4041 = vmatprep.subr.mxu0 0.0
    %4042 = vmatpush1.xpose.msra.mxu0 %v4025
    %4043 = vmatprep.subr.mxu0 0.0
    %4044 = vmatpush1.xpose.msra.mxu0 %v4027
    %4045 = vmatprep.subr.mxu0 0.0
    %4046 = vmatpush1.xpose.msra.mxu0 %v4029
    %4047 = vmatprep.subr.mxu0 0.0
    %4048 = vmatpush1.xpose.msra.mxu0 0.0
    %4049 = vmatprep.subr.mxu0 0.0
    %4050 = vmatpush1.xpose.msra.mxu0 0.0
    %4051 = vmatprep.subr.mxu0 0.0
    %4052 = vmatpush1.xpose.msra.mxu0 0.0
    %4053 = vmatprep.subr.mxu0 0.0
    %4054 = vmatpush1.xpose.msra.mxu0 0.0
    %4055 = vmatprep.subr.mxu0 0.0
    %4056 = vmatpush1.xpose.msra.mxu0 0.0
    %4057 = vmatprep.subr.mxu0 0.0
    %4058 = vmatpush1.xpose.msra.mxu0 0.0
    %4059 = vmatprep.subr.mxu0 0.0
    %4060 = vmatpush1.xpose.msra.mxu0 0.0
    %4061 = vmatprep.subr.mxu0 0.0
    %4062 = vmatpush1.xpose.msra.mxu0 0.0
    %4063 = vmatprep.subr.mxu0 0.0
    %4064 = vmatpush1.xpose.msra.mxu0 0.0
    %4065 = vmatprep.subr.mxu0 0.0
    %4066 = vmatpush1.xpose.msra.mxu0 0.0
    %4067 = vmatprep.subr.mxu0 0.0
    %4068 = vmatpush1.xpose.msra.mxu0 0.0
    %4069 = vmatprep.subr.mxu0 0.0
    %4070 = vmatpush1.xpose.msra.mxu0 0.0
    %4071 = vmatprep.subr.mxu0 0.0
    %4072 = vmatpush1.xpose.msra.mxu0 0.0
    %4073 = vmatprep.subr.mxu0 0.0
    %4074 = vmatpush1.xpose.msra.mxu0 0.0
    %4075 = vmatprep.subr.mxu0 0.0
    %4076 = vmatpush1.xpose.msra.mxu0 0.0
    %4077 = vmatprep.subr.mxu0 0.0
    %4078 = vmatpush1.xpose.msra.mxu0 0.0
    %4079 = vmatprep.subr.mxu0 0.0
    %4080 = vmatpush1.xpose.msra.mxu0 0.0
    %4081 = vmatprep.subr.mxu0 0.0
    %4082 = vmatpush1.xpose.msra.mxu0 0.0
    %4083 = vmatprep.subr.mxu0 0.0
    %4084 = vmatpush1.xpose.msra.mxu0 0.0
    %4085 = vmatprep.subr.mxu0 0.0
    %4086 = vmatpush1.xpose.msra.mxu0 0.0
    %4087 = vmatprep.subr.mxu0 0.0
    %4088 = vmatpush1.xpose.msra.mxu0 0.0
    %4089 = vmatprep.subr.mxu0 0.0
    %4090 = vmatpush1.xpose.msra.mxu0 0.0
    %4091 = vmatprep.subr.mxu0 0.0
    %4092 = vmatpush1.xpose.msra.mxu0 0.0
    %4093 = vmatprep.subr.mxu0 0.0
    %4094 = vmatpush1.xpose.msra.mxu0 0.0
    %4095 = vmatprep.mubr.f32.mxu0 0.0
    %4096 = vmatmul.mubr.f32.gmra.mrb[0].mxu0 %v3999
    %v4097 = vpop.f32.mrb[0].mxu0
    %v4098 = vadd.f32 0.0, %v4097
    %v4099 = vpop.f32.mrb[0].mxu0
    %4100 = vmatprep.mubr.f32.mxu0 0.0
    %4101 = vmatmul.mubr.f32.gmra.mrb[0].mxu0 %v4001
    %v4102 = vpop.f32.mrb[0].mxu0
    %v4103 = vadd.f32 0.0, %v4102
    %v4104 = vpop.f32.mrb[0].mxu0
    %4105 = vmatprep.mubr.f32.mxu0 0.0
    %4106 = vmatmul.mubr.f32.gmra.mrb[0].mxu0 %v4003
    %v4107 = vpop.f32.mrb[0].mxu0
    %v4108 = vadd.f32 0.0, %v4107
    %v4109 = vpop.f32.mrb[0].mxu0
    %4110 = vmatprep.mubr.f32.mxu0 0.0
    %4111 = vmatmul.mubr.f32.gmra.mrb[0].mxu0 %v4005
    %v4112 = vpop.f32.mrb[0].mxu0
    %v4113 = vadd.f32 0.0, %v4112
    %v4114 = vpop.f32.mrb[0].mxu0
    %4115 = vmatprep.mubr.f32.mxu0 0.0
    %4116 = vmatmul.mubr.f32.gmra.mrb[0].mxu0 %v4007
    %v4117 = vpop.f32.mrb[0].mxu0
    %v4118 = vadd.f32 0.0, %v4117
    %v4119 = vpop.f32.mrb[0].mxu0
    %4120 = vmatprep.mubr.f32.mxu0 0.0
    %4121 = vmatmul.mubr.f32.gmra.mrb[0].mxu0 %v4009
    %v4122 = vpop.f32.mrb[0].mxu0
    %v4123 = vadd.f32 0.0, %v4122
    %v4124 = vpop.f32.mrb[0].mxu0
    %4125 = vmatprep.mubr.f32.mxu0 0.0
    %4126 = vmatmul.mubr.f32.gmra.mrb[0].mxu0 %v4011
    %v4127 = vpop.f32.mrb[0].mxu0
    %v4128 = vadd.f32 0.0, %v4127
    %v4129 = vpop.f32.mrb[0].mxu0
    %4130 = vmatprep.mubr.f32.mxu0 0.0
    %4131 = vmatmul.mubr.f32.gmra.mrb[0].mxu0 %v4013
    %v4132 = vpop.f32.mrb[0].mxu0
    %v4133 = vadd.f32 0.0, %v4132
    %v4134 = vpop.f32.mrb[0].mxu0
    %4135 = vdwg.mxu0
    %v4136 = vmul.f32 %v4098, 0.35355338
    %v4137 = vmul.f32 %v4103, 0.35355338
    %v4138 = vmul.f32 %v4108, 0.35355338
    %v4139 = vmul.f32 %v4113, 0.35355338
    %v4140 = vmul.f32 %v4118, 0.35355338
    %v4141 = vmul.f32 %v4123, 0.35355338
    %v4142 = vmul.f32 %v4128, 0.35355338
    %v4143 = vmul.f32 %v4133, 0.35355338
    %v4144 = vadd.f32 %v4136, %v81
    %v4145 = vadd.f32 %v4137, %v82
    %v4146 = vadd.f32 %v4138, %v83
    %v4147 = vadd.f32 %v4139, %v84
    %v4148 = vadd.f32 %v4140, %v85
    %v4149 = vadd.f32 %v4141, %v86
    %v4150 = vadd.f32 %v4142, %v87
    %v4151 = vadd.f32 %v4143, %v88
    %v4152 = vsel %vm551, %v4144, -inf
    %4153 = vmax.xlane.f32.xlu0 %v4152
    %v4154 = vpop.xlane.xlu0 %4153
    %v4155 = vsel %vm551, %v4145, -inf
    %4156 = vmax.xlane.f32.xlu0 %v4155
    %v4157 = vpop.xlane.xlu0 %4156
    %v4158 = vsel %vm551, %v4146, -inf
    %4159 = vmax.xlane.f32.xlu0 %v4158
    %v4160 = vpop.xlane.xlu0 %4159
    %v4161 = vsel %vm551, %v4147, -inf
    %4162 = vmax.xlane.f32.xlu0 %v4161
    %v4163 = vpop.xlane.xlu0 %4162
    %v4164 = vsel %vm551, %v4148, -inf
    %4165 = vmax.xlane.f32.xlu0 %v4164
    %v4166 = vpop.xlane.xlu0 %4165
    %v4167 = vsel %vm551, %v4149, -inf
    %4168 = vmax.xlane.f32.xlu0 %v4167
    %v4169 = vpop.xlane.xlu0 %4168
    %v4170 = vsel %vm551, %v4150, -inf
    %4171 = vmax.xlane.f32.xlu0 %v4170
    %v4172 = vpop.xlane.xlu0 %4171
    %v4173 = vsel %vm551, %v4151, -inf
    %4174 = vmax.xlane.f32.xlu0 %v4173
    %v4175 = vpop.xlane.xlu0 %4174
    %v4176 = vsub.f32 %v4144, %v4154
    %v4177 = vsub.f32 %v4145, %v4157
    %v4178 = vsub.f32 %v4146, %v4160
    %v4179 = vsub.f32 %v4147, %v4163
    %v4180 = vsub.f32 %v4148, %v4166
    %v4181 = vsub.f32 %v4149, %v4169
    %v4182 = vsub.f32 %v4150, %v4172
    %v4183 = vsub.f32 %v4151, %v4175
    %v4184 = vmul.f32 %v4176, 1.442695
    %v4185 = vpow.pop %v4184
    %v4186 = vmul.f32 %v4177, 1.442695
    %v4187 = vpow.pop %v4186
    %v4188 = vmul.f32 %v4178, 1.442695
    %v4189 = vpow.pop %v4188
    %v4190 = vmul.f32 %v4179, 1.442695
    %v4191 = vpow.pop %v4190
    %v4192 = vmul.f32 %v4180, 1.442695
    %v4193 = vpow.pop %v4192
    %v4194 = vmul.f32 %v4181, 1.442695
    %v4195 = vpow.pop %v4194
    %v4196 = vmul.f32 %v4182, 1.442695
    %v4197 = vpow.pop %v4196
    %v4198 = vmul.f32 %v4183, 1.442695
    %v4199 = vpow.pop %v4198
    %v4200 = vsel %vm551, %v4185, 0.0
    %4201 = vadd.xlane.f32.xlu0 %v4200
    %v4202 = vpop.xlane.xlu0 %4201
    %v4203 = vsel %vm551, %v4187, 0.0
    %4204 = vadd.xlane.f32.xlu0 %v4203
    %v4205 = vpop.xlane.xlu0 %4204
    %v4206 = vsel %vm551, %v4189, 0.0
    %4207 = vadd.xlane.f32.xlu0 %v4206
    %v4208 = vpop.xlane.xlu0 %4207
    %v4209 = vsel %vm551, %v4191, 0.0
    %4210 = vadd.xlane.f32.xlu0 %v4209
    %v4211 = vpop.xlane.xlu0 %4210
    %v4212 = vsel %vm551, %v4193, 0.0
    %4213 = vadd.xlane.f32.xlu0 %v4212
    %v4214 = vpop.xlane.xlu0 %4213
    %v4215 = vsel %vm551, %v4195, 0.0
    %4216 = vadd.xlane.f32.xlu0 %v4215
    %v4217 = vpop.xlane.xlu0 %4216
    %v4218 = vsel %vm551, %v4197, 0.0
    %4219 = vadd.xlane.f32.xlu0 %v4218
    %v4220 = vpop.xlane.xlu0 %4219
    %v4221 = vsel %vm551, %v4199, 0.0
    %4222 = vadd.xlane.f32.xlu0 %v4221
    %v4223 = vpop.xlane.xlu0 %4222
    %v4224 = vrcp.pop %v4202
    %v4225 = vmul.f32 %v4185, %v4224
    %v4226 = vrcp.pop %v4205
    %v4227 = vmul.f32 %v4187, %v4226
    %v4228 = vrcp.pop %v4208
    %v4229 = vmul.f32 %v4189, %v4228
    %v4230 = vrcp.pop %v4211
    %v4231 = vmul.f32 %v4191, %v4230
    %v4232 = vrcp.pop %v4214
    %v4233 = vmul.f32 %v4193, %v4232
    %v4234 = vrcp.pop %v4217
    %v4235 = vmul.f32 %v4195, %v4234
    %v4236 = vrcp.pop %v4220
    %v4237 = vmul.f32 %v4197, %v4236
    %v4238 = vrcp.pop %v4223
    %v4239 = vmul.f32 %v4199, %v4238
    %4240 = vrot.lane.b32.xlu0 %v3085, 48
    %v4241 = vpop.permute.xlu0 %4240
    %4242 = vrot.lane.b32.xlu0 %v3090, 48
    %v4243 = vpop.permute.xlu0 %4242
    %4244 = vrot.lane.b32.xlu0 %v3095, 48
    %v4245 = vpop.permute.xlu0 %4244
    %4246 = vrot.lane.b32.xlu0 %v3100, 48
    %v4247 = vpop.permute.xlu0 %4246
    %4248 = vrot.lane.b32.xlu0 %v3105, 48
    %v4249 = vpop.permute.xlu0 %4248
    %4250 = vrot.lane.b32.xlu0 %v3110, 48
    %v4251 = vpop.permute.xlu0 %4250
    %4252 = vrot.lane.b32.xlu0 %v3115, 48
    %v4253 = vpop.permute.xlu0 %4252
    %4254 = vrot.lane.b32.xlu0 %v3120, 48
    %v4255 = vpop.permute.xlu0 %4254
    %v4265 = vsel %vm551, %v4225, 0
    %v4268 = vsel %vm551, %v4227, 0
    %v4271 = vsel %vm551, %v4229, 0
    %v4274 = vsel %vm551, %v4231, 0
    %v4277 = vsel %vm551, %v4233, 0
    %v4280 = vsel %vm551, %v4235, 0
    %v4283 = vsel %vm551, %v4237, 0
    %v4286 = vsel %vm551, %v4239, 0
    %4288 = vmatprep.subr.mxu0 0.0
    %4289 = vmatpush1.msra.mxu0 %v4241
    %4290 = vmatprep.subr.mxu0 0.0
    %4291 = vmatpush1.msra.mxu0 %v4243
    %4292 = vmatprep.subr.mxu0 0.0
    %4293 = vmatpush1.msra.mxu0 %v4245
    %4294 = vmatprep.subr.mxu0 0.0
    %4295 = vmatpush1.msra.mxu0 %v4247
    %4296 = vmatprep.subr.mxu0 0.0
    %4297 = vmatpush1.msra.mxu0 %v4249
    %4298 = vmatprep.subr.mxu0 0.0
    %4299 = vmatpush1.msra.mxu0 %v4251
    %4300 = vmatprep.subr.mxu0 0.0
    %4301 = vmatpush1.msra.mxu0 %v4253
    %4302 = vmatprep.subr.mxu0 0.0
    %4303 = vmatpush1.msra.mxu0 %v4255
    %4304 = vmatprep.subr.mxu0 0.0
    %4305 = vmatpush1.msra.mxu0 0.0
    %4306 = vmatprep.subr.mxu0 0.0
    %4307 = vmatpush1.msra.mxu0 0.0
    %4308 = vmatprep.subr.mxu0 0.0
    %4309 = vmatpush1.msra.mxu0 0.0
    %4310 = vmatprep.subr.mxu0 0.0
    %4311 = vmatpush1.msra.mxu0 0.0
    %4312 = vmatprep.subr.mxu0 0.0
    %4313 = vmatpush1.msra.mxu0 0.0
    %4314 = vmatprep.subr.mxu0 0.0
    %4315 = vmatpush1.msra.mxu0 0.0
    %4316 = vmatprep.subr.mxu0 0.0
    %4317 = vmatpush1.msra.mxu0 0.0
    %4318 = vmatprep.subr.mxu0 0.0
    %4319 = vmatpush1.msra.mxu0 0.0
    %4320 = vmatprep.subr.mxu0 0.0
    %4321 = vmatpush1.msra.mxu0 0.0
    %4322 = vmatprep.subr.mxu0 0.0
    %4323 = vmatpush1.msra.mxu0 0.0
    %4324 = vmatprep.subr.mxu0 0.0
    %4325 = vmatpush1.msra.mxu0 0.0
    %4326 = vmatprep.subr.mxu0 0.0
    %4327 = vmatpush1.msra.mxu0 0.0
    %4328 = vmatprep.subr.mxu0 0.0
    %4329 = vmatpush1.msra.mxu0 0.0
    %4330 = vmatprep.subr.mxu0 0.0
    %4331 = vmatpush1.msra.mxu0 0.0
    %4332 = vmatprep.subr.mxu0 0.0
    %4333 = vmatpush1.msra.mxu0 0.0
    %4334 = vmatprep.subr.mxu0 0.0
    %4335 = vmatpush1.msra.mxu0 0.0
    %4336 = vmatprep.subr.mxu0 0.0
    %4337 = vmatpush1.msra.mxu0 0.0
    %4338 = vmatprep.subr.mxu0 0.0
    %4339 = vmatpush1.msra.mxu0 0.0
    %4340 = vmatprep.subr.mxu0 0.0
    %4341 = vmatpush1.msra.mxu0 0.0
    %4342 = vmatprep.subr.mxu0 0.0
    %4343 = vmatpush1.msra.mxu0 0.0
    %4344 = vmatprep.subr.mxu0 0.0
    %4345 = vmatpush1.msra.mxu0 0.0
    %4346 = vmatprep.subr.mxu0 0.0
    %4347 = vmatpush1.msra.mxu0 0.0
    %4348 = vmatprep.subr.mxu0 0.0
    %4349 = vmatpush1.msra.mxu0 0.0
    %4350 = vmatprep.subr.mxu0 0.0
    %4351 = vmatpush1.msra.mxu0 0.0
    %4352 = vmatprep.mubr.f32.mxu0 0.0
    %4353 = vmatmul.mubr.f32.gmra.mrb[0].mxu0 %v4265
    %v4354 = vpop.f32.mrb[0].mxu0
    %v4355 = vadd.f32 0.0, %v4354
    %v4356 = vpop.f32.mrb[0].mxu0
    %4357 = vmatprep.mubr.f32.mxu0 0.0
    %4358 = vmatmul.mubr.f32.gmra.mrb[0].mxu0 %v4268
    %v4359 = vpop.f32.mrb[0].mxu0
    %v4360 = vadd.f32 0.0, %v4359
    %v4361 = vpop.f32.mrb[0].mxu0
    %4362 = vmatprep.mubr.f32.mxu0 0.0
    %4363 = vmatmul.mubr.f32.gmra.mrb[0].mxu0 %v4271
    %v4364 = vpop.f32.mrb[0].mxu0
    %v4365 = vadd.f32 0.0, %v4364
    %v4366 = vpop.f32.mrb[0].mxu0
    %4367 = vmatprep.mubr.f32.mxu0 0.0
    %4368 = vmatmul.mubr.f32.gmra.mrb[0].mxu0 %v4274
    %v4369 = vpop.f32.mrb[0].mxu0
    %v4370 = vadd.f32 0.0, %v4369
    %v4371 = vpop.f32.mrb[0].mxu0
    %4372 = vmatprep.mubr.f32.mxu0 0.0
    %4373 = vmatmul.mubr.f32.gmra.mrb[0].mxu0 %v4277
    %v4374 = vpop.f32.mrb[0].mxu0
    %v4375 = vadd.f32 0.0, %v4374
    %v4376 = vpop.f32.mrb[0].mxu0
    %4377 = vmatprep.mubr.f32.mxu0 0.0
    %4378 = vmatmul.mubr.f32.gmra.mrb[0].mxu0 %v4280
    %v4379 = vpop.f32.mrb[0].mxu0
    %v4380 = vadd.f32 0.0, %v4379
    %v4381 = vpop.f32.mrb[0].mxu0
    %4382 = vmatprep.mubr.f32.mxu0 0.0
    %4383 = vmatmul.mubr.f32.gmra.mrb[0].mxu0 %v4283
    %v4384 = vpop.f32.mrb[0].mxu0
    %v4385 = vadd.f32 0.0, %v4384
    %v4386 = vpop.f32.mrb[0].mxu0
    %4387 = vmatprep.mubr.f32.mxu0 0.0
    %4388 = vmatmul.mubr.f32.gmra.mrb[0].mxu0 %v4286
    %v4389 = vpop.f32.mrb[0].mxu0
    %v4390 = vadd.f32 0.0, %v4389
    %v4391 = vpop.f32.mrb[0].mxu0
    %4392 = vdwg.mxu0
    %4393 = vrot.lane.b32.xlu0 %v3085, 104
    %v4394 = vpop.permute.xlu0 %4393
    %4395 = vrot.lane.b32.xlu0 %v3090, 104
    %v4396 = vpop.permute.xlu0 %4395
    %4397 = vrot.lane.b32.xlu0 %v3095, 104
    %v4398 = vpop.permute.xlu0 %4397
    %4399 = vrot.lane.b32.xlu0 %v3100, 104
    %v4400 = vpop.permute.xlu0 %4399
    %4401 = vrot.lane.b32.xlu0 %v3105, 104
    %v4402 = vpop.permute.xlu0 %4401
    %4403 = vrot.lane.b32.xlu0 %v3110, 104
    %v4404 = vpop.permute.xlu0 %4403
    %4405 = vrot.lane.b32.xlu0 %v3115, 104
    %v4406 = vpop.permute.xlu0 %4405
    %4407 = vrot.lane.b32.xlu0 %v3120, 104
    %v4408 = vpop.permute.xlu0 %4407
    %4409 = vrot.lane.b32.xlu0 %v3085, 72
    %v4410 = vpop.permute.xlu0 %4409
    %4411 = vrot.lane.b32.xlu0 %v3090, 72
    %v4412 = vpop.permute.xlu0 %4411
    %4413 = vrot.lane.b32.xlu0 %v3095, 72
    %v4414 = vpop.permute.xlu0 %4413
    %4415 = vrot.lane.b32.xlu0 %v3100, 72
    %v4416 = vpop.permute.xlu0 %4415
    %4417 = vrot.lane.b32.xlu0 %v3105, 72
    %v4418 = vpop.permute.xlu0 %4417
    %4419 = vrot.lane.b32.xlu0 %v3110, 72
    %v4420 = vpop.permute.xlu0 %4419
    %4421 = vrot.lane.b32.xlu0 %v3115, 72
    %v4422 = vpop.permute.xlu0 %4421
    %4423 = vrot.lane.b32.xlu0 %v3120, 72
    %v4424 = vpop.permute.xlu0 %4423
    %v4425 = vsel %vm397, %v4394, 0
    %v4427 = vsel %vm397, %v4396, 0
    %v4429 = vsel %vm397, %v4398, 0
    %v4431 = vsel %vm397, %v4400, 0
    %v4433 = vsel %vm397, %v4402, 0
    %v4435 = vsel %vm397, %v4404, 0
    %v4437 = vsel %vm397, %v4406, 0
    %v4439 = vsel %vm397, %v4408, 0
    %v4441 = vsel %vm397, %v4410, 0
    %v4443 = vsel %vm397, %v4412, 0
    %v4445 = vsel %vm397, %v4414, 0
    %v4447 = vsel %vm397, %v4416, 0
    %v4449 = vsel %vm397, %v4418, 0
    %v4451 = vsel %vm397, %v4420, 0
    %v4453 = vsel %vm397, %v4422, 0
    %v4455 = vsel %vm397, %v4424, 0
    %4457 = vmatprep.subr.mxu0 0.0
    %4458 = vmatpush1.xpose.msra.mxu0 %v4441
    %4459 = vmatprep.subr.mxu0 0.0
    %4460 = vmatpush1.xpose.msra.mxu0 %v4443
    %4461 = vmatprep.subr.mxu0 0.0
    %4462 = vmatpush1.xpose.msra.mxu0 %v4445
    %4463 = vmatprep.subr.mxu0 0.0
    %4464 = vmatpush1.xpose.msra.mxu0 %v4447
    %4465 = vmatprep.subr.mxu0 0.0
    %4466 = vmatpush1.xpose.msra.mxu0 %v4449
    %4467 = vmatprep.subr.mxu0 0.0
    %4468 = vmatpush1.xpose.msra.mxu0 %v4451
    %4469 = vmatprep.subr.mxu0 0.0
    %4470 = vmatpush1.xpose.msra.mxu0 %v4453
    %4471 = vmatprep.subr.mxu0 0.0
    %4472 = vmatpush1.xpose.msra.mxu0 %v4455
    %4473 = vmatprep.subr.mxu0 0.0
    %4474 = vmatpush1.xpose.msra.mxu0 0.0
    %4475 = vmatprep.subr.mxu0 0.0
    %4476 = vmatpush1.xpose.msra.mxu0 0.0
    %4477 = vmatprep.subr.mxu0 0.0
    %4478 = vmatpush1.xpose.msra.mxu0 0.0
    %4479 = vmatprep.subr.mxu0 0.0
    %4480 = vmatpush1.xpose.msra.mxu0 0.0
    %4481 = vmatprep.subr.mxu0 0.0
    %4482 = vmatpush1.xpose.msra.mxu0 0.0
    %4483 = vmatprep.subr.mxu0 0.0
    %4484 = vmatpush1.xpose.msra.mxu0 0.0
    %4485 = vmatprep.subr.mxu0 0.0
    %4486 = vmatpush1.xpose.msra.mxu0 0.0
    %4487 = vmatprep.subr.mxu0 0.0
    %4488 = vmatpush1.xpose.msra.mxu0 0.0
    %4489 = vmatprep.subr.mxu0 0.0
    %4490 = vmatpush1.xpose.msra.mxu0 0.0
    %4491 = vmatprep.subr.mxu0 0.0
    %4492 = vmatpush1.xpose.msra.mxu0 0.0
    %4493 = vmatprep.subr.mxu0 0.0
    %4494 = vmatpush1.xpose.msra.mxu0 0.0
    %4495 = vmatprep.subr.mxu0 0.0
    %4496 = vmatpush1.xpose.msra.mxu0 0.0
    %4497 = vmatprep.subr.mxu0 0.0
    %4498 = vmatpush1.xpose.msra.mxu0 0.0
    %4499 = vmatprep.subr.mxu0 0.0
    %4500 = vmatpush1.xpose.msra.mxu0 0.0
    %4501 = vmatprep.subr.mxu0 0.0
    %4502 = vmatpush1.xpose.msra.mxu0 0.0
    %4503 = vmatprep.subr.mxu0 0.0
    %4504 = vmatpush1.xpose.msra.mxu0 0.0
    %4505 = vmatprep.subr.mxu0 0.0
    %4506 = vmatpush1.xpose.msra.mxu0 0.0
    %4507 = vmatprep.subr.mxu0 0.0
    %4508 = vmatpush1.xpose.msra.mxu0 0.0
    %4509 = vmatprep.subr.mxu0 0.0
    %4510 = vmatpush1.xpose.msra.mxu0 0.0
    %4511 = vmatprep.subr.mxu0 0.0
    %4512 = vmatpush1.xpose.msra.mxu0 0.0
    %4513 = vmatprep.subr.mxu0 0.0
    %4514 = vmatpush1.xpose.msra.mxu0 0.0
    %4515 = vmatprep.subr.mxu0 0.0
    %4516 = vmatpush1.xpose.msra.mxu0 0.0
    %4517 = vmatprep.subr.mxu0 0.0
    %4518 = vmatpush1.xpose.msra.mxu0 0.0
    %4519 = vmatprep.subr.mxu0 0.0
    %4520 = vmatpush1.xpose.msra.mxu0 0.0
    %4521 = vmatprep.mubr.f32.mxu0 0.0
    %4522 = vmatmul.mubr.f32.gmra.mrb[0].mxu0 %v4425
    %v4523 = vpop.f32.mrb[0].mxu0
    %v4524 = vadd.f32 0.0, %v4523
    %v4525 = vpop.f32.mrb[0].mxu0
    %4526 = vmatprep.mubr.f32.mxu0 0.0
    %4527 = vmatmul.mubr.f32.gmra.mrb[0].mxu0 %v4427
    %v4528 = vpop.f32.mrb[0].mxu0
    %v4529 = vadd.f32 0.0, %v4528
    %v4530 = vpop.f32.mrb[0].mxu0
    %4531 = vmatprep.mubr.f32.mxu0 0.0
    %4532 = vmatmul.mubr.f32.gmra.mrb[0].mxu0 %v4429
    %v4533 = vpop.f32.mrb[0].mxu0
    %v4534 = vadd.f32 0.0, %v4533
    %v4535 = vpop.f32.mrb[0].mxu0
    %4536 = vmatprep.mubr.f32.mxu0 0.0
    %4537 = vmatmul.mubr.f32.gmra.mrb[0].mxu0 %v4431
    %v4538 = vpop.f32.mrb[0].mxu0
    %v4539 = vadd.f32 0.0, %v4538
    %v4540 = vpop.f32.mrb[0].mxu0
    %4541 = vmatprep.mubr.f32.mxu0 0.0
    %4542 = vmatmul.mubr.f32.gmra.mrb[0].mxu0 %v4433
    %v4543 = vpop.f32.mrb[0].mxu0
    %v4544 = vadd.f32 0.0, %v4543
    %v4545 = vpop.f32.mrb[0].mxu0
    %4546 = vmatprep.mubr.f32.mxu0 0.0
    %4547 = vmatmul.mubr.f32.gmra.mrb[0].mxu0 %v4435
    %v4548 = vpop.f32.mrb[0].mxu0
    %v4549 = vadd.f32 0.0, %v4548
    %v4550 = vpop.f32.mrb[0].mxu0
    %4551 = vmatprep.mubr.f32.mxu0 0.0
    %4552 = vmatmul.mubr.f32.gmra.mrb[0].mxu0 %v4437
    %v4553 = vpop.f32.mrb[0].mxu0
    %v4554 = vadd.f32 0.0, %v4553
    %v4555 = vpop.f32.mrb[0].mxu0
    %4556 = vmatprep.mubr.f32.mxu0 0.0
    %4557 = vmatmul.mubr.f32.gmra.mrb[0].mxu0 %v4439
    %v4558 = vpop.f32.mrb[0].mxu0
    %v4559 = vadd.f32 0.0, %v4558
    %v4560 = vpop.f32.mrb[0].mxu0
    %4561 = vdwg.mxu0
    %v4562 = vmul.f32 %v4524, 0.35355338
    %v4563 = vmul.f32 %v4529, 0.35355338
    %v4564 = vmul.f32 %v4534, 0.35355338
    %v4565 = vmul.f32 %v4539, 0.35355338
    %v4566 = vmul.f32 %v4544, 0.35355338
    %v4567 = vmul.f32 %v4549, 0.35355338
    %v4568 = vmul.f32 %v4554, 0.35355338
    %v4569 = vmul.f32 %v4559, 0.35355338
    %v4570 = vadd.f32 %v4562, %v81
    %v4571 = vadd.f32 %v4563, %v82
    %v4572 = vadd.f32 %v4564, %v83
    %v4573 = vadd.f32 %v4565, %v84
    %v4574 = vadd.f32 %v4566, %v85
    %v4575 = vadd.f32 %v4567, %v86
    %v4576 = vadd.f32 %v4568, %v87
    %v4577 = vadd.f32 %v4569, %v88
    %v4578 = vsel %vm551, %v4570, -inf
    %4579 = vmax.xlane.f32.xlu0 %v4578
    %v4580 = vpop.xlane.xlu0 %4579
    %v4581 = vsel %vm551, %v4571, -inf
    %4582 = vmax.xlane.f32.xlu0 %v4581
    %v4583 = vpop.xlane.xlu0 %4582
    %v4584 = vsel %vm551, %v4572, -inf
    %4585 = vmax.xlane.f32.xlu0 %v4584
    %v4586 = vpop.xlane.xlu0 %4585
    %v4587 = vsel %vm551, %v4573, -inf
    %4588 = vmax.xlane.f32.xlu0 %v4587
    %v4589 = vpop.xlane.xlu0 %4588
    %v4590 = vsel %vm551, %v4574, -inf
    %4591 = vmax.xlane.f32.xlu0 %v4590
    %v4592 = vpop.xlane.xlu0 %4591
    %v4593 = vsel %vm551, %v4575, -inf
    %4594 = vmax.xlane.f32.xlu0 %v4593
    %v4595 = vpop.xlane.xlu0 %4594
    %v4596 = vsel %vm551, %v4576, -inf
    %4597 = vmax.xlane.f32.xlu0 %v4596
    %v4598 = vpop.xlane.xlu0 %4597
    %v4599 = vsel %vm551, %v4577, -inf
    %4600 = vmax.xlane.f32.xlu0 %v4599
    %v4601 = vpop.xlane.xlu0 %4600
    %v4602 = vsub.f32 %v4570, %v4580
    %v4603 = vsub.f32 %v4571, %v4583
    %v4604 = vsub.f32 %v4572, %v4586
    %v4605 = vsub.f32 %v4573, %v4589
    %v4606 = vsub.f32 %v4574, %v4592
    %v4607 = vsub.f32 %v4575, %v4595
    %v4608 = vsub.f32 %v4576, %v4598
    %v4609 = vsub.f32 %v4577, %v4601
    %v4610 = vmul.f32 %v4602, 1.442695
    %v4611 = vpow.pop %v4610
    %v4612 = vmul.f32 %v4603, 1.442695
    %v4613 = vpow.pop %v4612
    %v4614 = vmul.f32 %v4604, 1.442695
    %v4615 = vpow.pop %v4614
    %v4616 = vmul.f32 %v4605, 1.442695
    %v4617 = vpow.pop %v4616
    %v4618 = vmul.f32 %v4606, 1.442695
    %v4619 = vpow.pop %v4618
    %v4620 = vmul.f32 %v4607, 1.442695
    %v4621 = vpow.pop %v4620
    %v4622 = vmul.f32 %v4608, 1.442695
    %v4623 = vpow.pop %v4622
    %v4624 = vmul.f32 %v4609, 1.442695
    %v4625 = vpow.pop %v4624
    %v4626 = vsel %vm551, %v4611, 0.0
    %4627 = vadd.xlane.f32.xlu0 %v4626
    %v4628 = vpop.xlane.xlu0 %4627
    %v4629 = vsel %vm551, %v4613, 0.0
    %4630 = vadd.xlane.f32.xlu0 %v4629
    %v4631 = vpop.xlane.xlu0 %4630
    %v4632 = vsel %vm551, %v4615, 0.0
    %4633 = vadd.xlane.f32.xlu0 %v4632
    %v4634 = vpop.xlane.xlu0 %4633
    %v4635 = vsel %vm551, %v4617, 0.0
    %4636 = vadd.xlane.f32.xlu0 %v4635
    %v4637 = vpop.xlane.xlu0 %4636
    %v4638 = vsel %vm551, %v4619, 0.0
    %4639 = vadd.xlane.f32.xlu0 %v4638
    %v4640 = vpop.xlane.xlu0 %4639
    %v4641 = vsel %vm551, %v4621, 0.0
    %4642 = vadd.xlane.f32.xlu0 %v4641
    %v4643 = vpop.xlane.xlu0 %4642
    %v4644 = vsel %vm551, %v4623, 0.0
    %4645 = vadd.xlane.f32.xlu0 %v4644
    %v4646 = vpop.xlane.xlu0 %4645
    %v4647 = vsel %vm551, %v4625, 0.0
    %4648 = vadd.xlane.f32.xlu0 %v4647
    %v4649 = vpop.xlane.xlu0 %4648
    %v4650 = vrcp.pop %v4628
    %v4651 = vmul.f32 %v4611, %v4650
    %v4652 = vrcp.pop %v4631
    %v4653 = vmul.f32 %v4613, %v4652
    %v4654 = vrcp.pop %v4634
    %v4655 = vmul.f32 %v4615, %v4654
    %v4656 = vrcp.pop %v4637
    %v4657 = vmul.f32 %v4617, %v4656
    %v4658 = vrcp.pop %v4640
    %v4659 = vmul.f32 %v4619, %v4658
    %v4660 = vrcp.pop %v4643
    %v4661 = vmul.f32 %v4621, %v4660
    %v4662 = vrcp.pop %v4646
    %v4663 = vmul.f32 %v4623, %v4662
    %v4664 = vrcp.pop %v4649
    %v4665 = vmul.f32 %v4625, %v4664
    %4666 = vrot.lane.b32.xlu0 %v3085, 40
    %v4667 = vpop.permute.xlu0 %4666
    %4668 = vrot.lane.b32.xlu0 %v3090, 40
    %v4669 = vpop.permute.xlu0 %4668
    %4670 = vrot.lane.b32.xlu0 %v3095, 40
    %v4671 = vpop.permute.xlu0 %4670
    %4672 = vrot.lane.b32.xlu0 %v3100, 40
    %v4673 = vpop.permute.xlu0 %4672
    %4674 = vrot.lane.b32.xlu0 %v3105, 40
    %v4675 = vpop.permute.xlu0 %4674
    %4676 = vrot.lane.b32.xlu0 %v3110, 40
    %v4677 = vpop.permute.xlu0 %4676
    %4678 = vrot.lane.b32.xlu0 %v3115, 40
    %v4679 = vpop.permute.xlu0 %4678
    %4680 = vrot.lane.b32.xlu0 %v3120, 40
    %v4681 = vpop.permute.xlu0 %4680
    %v4691 = vsel %vm551, %v4651, 0
    %v4694 = vsel %vm551, %v4653, 0
    %v4697 = vsel %vm551, %v4655, 0
    %v4700 = vsel %vm551, %v4657, 0
    %v4703 = vsel %vm551, %v4659, 0
    %v4706 = vsel %vm551, %v4661, 0
    %v4709 = vsel %vm551, %v4663, 0
    %v4712 = vsel %vm551, %v4665, 0
    %4714 = vmatprep.subr.mxu0 0.0
    %4715 = vmatpush1.msra.mxu0 %v4667
    %4716 = vmatprep.subr.mxu0 0.0
    %4717 = vmatpush1.msra.mxu0 %v4669
    %4718 = vmatprep.subr.mxu0 0.0
    %4719 = vmatpush1.msra.mxu0 %v4671
    %4720 = vmatprep.subr.mxu0 0.0
    %4721 = vmatpush1.msra.mxu0 %v4673
    %4722 = vmatprep.subr.mxu0 0.0
    %4723 = vmatpush1.msra.mxu0 %v4675
    %4724 = vmatprep.subr.mxu0 0.0
    %4725 = vmatpush1.msra.mxu0 %v4677
    %4726 = vmatprep.subr.mxu0 0.0
    %4727 = vmatpush1.msra.mxu0 %v4679
    %4728 = vmatprep.subr.mxu0 0.0
    %4729 = vmatpush1.msra.mxu0 %v4681
    %4730 = vmatprep.subr.mxu0 0.0
    %4731 = vmatpush1.msra.mxu0 0.0
    %4732 = vmatprep.subr.mxu0 0.0
    %4733 = vmatpush1.msra.mxu0 0.0
    %4734 = vmatprep.subr.mxu0 0.0
    %4735 = vmatpush1.msra.mxu0 0.0
    %4736 = vmatprep.subr.mxu0 0.0
    %4737 = vmatpush1.msra.mxu0 0.0
    %4738 = vmatprep.subr.mxu0 0.0
    %4739 = vmatpush1.msra.mxu0 0.0
    %4740 = vmatprep.subr.mxu0 0.0
    %4741 = vmatpush1.msra.mxu0 0.0
    %4742 = vmatprep.subr.mxu0 0.0
    %4743 = vmatpush1.msra.mxu0 0.0
    %4744 = vmatprep.subr.mxu0 0.0
    %4745 = vmatpush1.msra.mxu0 0.0
    %4746 = vmatprep.subr.mxu0 0.0
    %4747 = vmatpush1.msra.mxu0 0.0
    %4748 = vmatprep.subr.mxu0 0.0
    %4749 = vmatpush1.msra.mxu0 0.0
    %4750 = vmatprep.subr.mxu0 0.0
    %4751 = vmatpush1.msra.mxu0 0.0
    %4752 = vmatprep.subr.mxu0 0.0
    %4753 = vmatpush1.msra.mxu0 0.0
    %4754 = vmatprep.subr.mxu0 0.0
    %4755 = vmatpush1.msra.mxu0 0.0
    %4756 = vmatprep.subr.mxu0 0.0
    %4757 = vmatpush1.msra.mxu0 0.0
    %4758 = vmatprep.subr.mxu0 0.0
    %4759 = vmatpush1.msra.mxu0 0.0
    %4760 = vmatprep.subr.mxu0 0.0
    %4761 = vmatpush1.msra.mxu0 0.0
    %4762 = vmatprep.subr.mxu0 0.0
    %4763 = vmatpush1.msra.mxu0 0.0
    %4764 = vmatprep.subr.mxu0 0.0
    %4765 = vmatpush1.msra.mxu0 0.0
    %4766 = vmatprep.subr.mxu0 0.0
    %4767 = vmatpush1.msra.mxu0 0.0
    %4768 = vmatprep.subr.mxu0 0.0
    %4769 = vmatpush1.msra.mxu0 0.0
    %4770 = vmatprep.subr.mxu0 0.0
    %4771 = vmatpush1.msra.mxu0 0.0
    %4772 = vmatprep.subr.mxu0 0.0
    %4773 = vmatpush1.msra.mxu0 0.0
    %4774 = vmatprep.subr.mxu0 0.0
    %4775 = vmatpush1.msra.mxu0 0.0
    %4776 = vmatprep.subr.mxu0 0.0
    %4777 = vmatpush1.msra.mxu0 0.0
    %4778 = vmatprep.mubr.f32.mxu0 0.0
    %4779 = vmatmul.mubr.f32.gmra.mrb[0].mxu0 %v4691
    %v4780 = vpop.f32.mrb[0].mxu0
    %v4781 = vadd.f32 0.0, %v4780
    %v4782 = vpop.f32.mrb[0].mxu0
    %4783 = vmatprep.mubr.f32.mxu0 0.0
    %4784 = vmatmul.mubr.f32.gmra.mrb[0].mxu0 %v4694
    %v4785 = vpop.f32.mrb[0].mxu0
    %v4786 = vadd.f32 0.0, %v4785
    %v4787 = vpop.f32.mrb[0].mxu0
    %4788 = vmatprep.mubr.f32.mxu0 0.0
    %4789 = vmatmul.mubr.f32.gmra.mrb[0].mxu0 %v4697
    %v4790 = vpop.f32.mrb[0].mxu0
    %v4791 = vadd.f32 0.0, %v4790
    %v4792 = vpop.f32.mrb[0].mxu0
    %4793 = vmatprep.mubr.f32.mxu0 0.0
    %4794 = vmatmul.mubr.f32.gmra.mrb[0].mxu0 %v4700
    %v4795 = vpop.f32.mrb[0].mxu0
    %v4796 = vadd.f32 0.0, %v4795
    %v4797 = vpop.f32.mrb[0].mxu0
    %4798 = vmatprep.mubr.f32.mxu0 0.0
    %4799 = vmatmul.mubr.f32.gmra.mrb[0].mxu0 %v4703
    %v4800 = vpop.f32.mrb[0].mxu0
    %v4801 = vadd.f32 0.0, %v4800
    %v4802 = vpop.f32.mrb[0].mxu0
    %4803 = vmatprep.mubr.f32.mxu0 0.0
    %4804 = vmatmul.mubr.f32.gmra.mrb[0].mxu0 %v4706
    %v4805 = vpop.f32.mrb[0].mxu0
    %v4806 = vadd.f32 0.0, %v4805
    %v4807 = vpop.f32.mrb[0].mxu0
    %4808 = vmatprep.mubr.f32.mxu0 0.0
    %4809 = vmatmul.mubr.f32.gmra.mrb[0].mxu0 %v4709
    %v4810 = vpop.f32.mrb[0].mxu0
    %v4811 = vadd.f32 0.0, %v4810
    %v4812 = vpop.f32.mrb[0].mxu0
    %4813 = vmatprep.mubr.f32.mxu0 0.0
    %4814 = vmatmul.mubr.f32.gmra.mrb[0].mxu0 %v4712
    %v4815 = vpop.f32.mrb[0].mxu0
    %v4816 = vadd.f32 0.0, %v4815
    %v4817 = vpop.f32.mrb[0].mxu0
    %4818 = vdwg.mxu0
    %4827 = vrot.lane.b32.xlu0 %v3929, 8
    %v4828 = vpop.permute.xlu0 %4827
    %4829 = vrot.lane.b32.xlu0 %v3934, 8
    %v4830 = vpop.permute.xlu0 %4829
    %4831 = vrot.lane.b32.xlu0 %v3939, 8
    %v4832 = vpop.permute.xlu0 %4831
    %4833 = vrot.lane.b32.xlu0 %v3944, 8
    %v4834 = vpop.permute.xlu0 %4833
    %4835 = vrot.lane.b32.xlu0 %v3949, 8
    %v4836 = vpop.permute.xlu0 %4835
    %4837 = vrot.lane.b32.xlu0 %v3954, 8
    %v4838 = vpop.permute.xlu0 %4837
    %4839 = vrot.lane.b32.xlu0 %v3959, 8
    %v4840 = vpop.permute.xlu0 %4839
    %4841 = vrot.lane.b32.xlu0 %v3964, 8
    %v4842 = vpop.permute.xlu0 %4841
    %4859 = vrot.lane.b32.xlu0 %v4355, 16
    %v4860 = vpop.permute.xlu0 %4859
    %4861 = vrot.lane.b32.xlu0 %v4360, 16
    %v4862 = vpop.permute.xlu0 %4861
    %4863 = vrot.lane.b32.xlu0 %v4365, 16
    %v4864 = vpop.permute.xlu0 %4863
    %4865 = vrot.lane.b32.xlu0 %v4370, 16
    %v4866 = vpop.permute.xlu0 %4865
    %4867 = vrot.lane.b32.xlu0 %v4375, 16
    %v4868 = vpop.permute.xlu0 %4867
    %4869 = vrot.lane.b32.xlu0 %v4380, 16
    %v4870 = vpop.permute.xlu0 %4869
    %4871 = vrot.lane.b32.xlu0 %v4385, 16
    %v4872 = vpop.permute.xlu0 %4871
    %4873 = vrot.lane.b32.xlu0 %v4390, 16
    %v4874 = vpop.permute.xlu0 %4873
    %4891 = vrot.lane.b32.xlu0 %v4781, 24
    %v4892 = vpop.permute.xlu0 %4891
    %4893 = vrot.lane.b32.xlu0 %v4786, 24
    %v4894 = vpop.permute.xlu0 %4893
    %4895 = vrot.lane.b32.xlu0 %v4791, 24
    %v4896 = vpop.permute.xlu0 %4895
    %4897 = vrot.lane.b32.xlu0 %v4796, 24
    %v4898 = vpop.permute.xlu0 %4897
    %4899 = vrot.lane.b32.xlu0 %v4801, 24
    %v4900 = vpop.permute.xlu0 %4899
    %4901 = vrot.lane.b32.xlu0 %v4806, 24
    %v4902 = vpop.permute.xlu0 %4901
    %4903 = vrot.lane.b32.xlu0 %v4811, 24
    %v4904 = vpop.permute.xlu0 %4903
    %4905 = vrot.lane.b32.xlu0 %v4816, 24
    %v4906 = vpop.permute.xlu0 %4905
    %v4915 = vsel %vm397, %v3503, %v4828
    %v4916 = vsel %vm397, %v3508, %v4830
    %v4917 = vsel %vm397, %v3513, %v4832
    %v4918 = vsel %vm397, %v3518, %v4834
    %v4919 = vsel %vm397, %v3523, %v4836
    %v4920 = vsel %vm397, %v3528, %v4838
    %v4921 = vsel %vm397, %v3533, %v4840
    %v4922 = vsel %vm397, %v3538, %v4842
    %v4923 = vsel %vm2175, %v4915, %v4860
    %v4924 = vsel %vm2175, %v4916, %v4862
    %v4925 = vsel %vm2175, %v4917, %v4864
    %v4926 = vsel %vm2175, %v4918, %v4866
    %v4927 = vsel %vm2175, %v4919, %v4868
    %v4928 = vsel %vm2175, %v4920, %v4870
    %v4929 = vsel %vm2175, %v4921, %v4872
    %v4930 = vsel %vm2175, %v4922, %v4874
    %v4931 = vsel %vm2184, %v4923, %v4892
    %v4932 = vsel %vm2184, %v4924, %v4894
    %v4933 = vsel %vm2184, %v4925, %v4896
    %v4934 = vsel %vm2184, %v4926, %v4898
    %v4935 = vsel %vm2184, %v4927, %v4900
    %v4936 = vsel %vm2184, %v4928, %v4902
    %v4937 = vsel %vm2184, %v4929, %v4904
    %v4938 = vsel %vm2184, %v4930, %v4906
    %s4939 = scalar_lea.vmem %s7, 32
    %v4940 = vld [vmem:[%s4939] sm:$0xff]
    %v4941 = vld [vmem:[%s4939 + $0x8] sm:$0xff]
    %v4942 = vld [vmem:[%s4939 + $0x10] sm:$0xff]
    %v4943 = vld [vmem:[%s4939 + $0x18] sm:$0xff]
    %v4945 = vsel %vm99, %v4931, 0
    %v4948 = vsel %vm99, %v4932, 0
    %v4951 = vsel %vm99, %v4933, 0
    %v4954 = vsel %vm99, %v4934, 0
    %v4957 = vsel %vm99, %v4935, 0
    %v4960 = vsel %vm99, %v4936, 0
    %v4963 = vsel %vm99, %v4937, 0
    %v4966 = vsel %vm99, %v4938, 0
    %4968 = vmatprep.subr.mxu0 0.0
    %4969 = vmatpush1.msra.mxu0 %v4940
    %4970 = vmatprep.subr.mxu0 0.0
    %4971 = vmatpush1.msra.mxu0 %v4941
    %4972 = vmatprep.subr.mxu0 0.0
    %4973 = vmatpush1.msra.mxu0 %v4942
    %4974 = vmatprep.subr.mxu0 0.0
    %4975 = vmatpush1.msra.mxu0 %v4943
    %4976 = vmatprep.subr.mxu0 0.0
    %4977 = vmatpush1.msra.mxu0 0.0
    %4978 = vmatprep.subr.mxu0 0.0
    %4979 = vmatpush1.msra.mxu0 0.0
    %4980 = vmatprep.subr.mxu0 0.0
    %4981 = vmatpush1.msra.mxu0 0.0
    %4982 = vmatprep.subr.mxu0 0.0
    %4983 = vmatpush1.msra.mxu0 0.0
    %4984 = vmatprep.subr.mxu0 0.0
    %4985 = vmatpush1.msra.mxu0 0.0
    %4986 = vmatprep.subr.mxu0 0.0
    %4987 = vmatpush1.msra.mxu0 0.0
    %4988 = vmatprep.subr.mxu0 0.0
    %4989 = vmatpush1.msra.mxu0 0.0
    %4990 = vmatprep.subr.mxu0 0.0
    %4991 = vmatpush1.msra.mxu0 0.0
    %4992 = vmatprep.subr.mxu0 0.0
    %4993 = vmatpush1.msra.mxu0 0.0
    %4994 = vmatprep.subr.mxu0 0.0
    %4995 = vmatpush1.msra.mxu0 0.0
    %4996 = vmatprep.subr.mxu0 0.0
    %4997 = vmatpush1.msra.mxu0 0.0
    %4998 = vmatprep.subr.mxu0 0.0
    %4999 = vmatpush1.msra.mxu0 0.0
    %5000 = vmatprep.subr.mxu0 0.0
    %5001 = vmatpush1.msra.mxu0 0.0
    %5002 = vmatprep.subr.mxu0 0.0
    %5003 = vmatpush1.msra.mxu0 0.0
    %5004 = vmatprep.subr.mxu0 0.0
    %5005 = vmatpush1.msra.mxu0 0.0
    %5006 = vmatprep.subr.mxu0 0.0
    %5007 = vmatpush1.msra.mxu0 0.0
    %5008 = vmatprep.subr.mxu0 0.0
    %5009 = vmatpush1.msra.mxu0 0.0
    %5010 = vmatprep.subr.mxu0 0.0
    %5011 = vmatpush1.msra.mxu0 0.0
    %5012 = vmatprep.subr.mxu0 0.0
    %5013 = vmatpush1.msra.mxu0 0.0
    %5014 = vmatprep.subr.mxu0 0.0
    %5015 = vmatpush1.msra.mxu0 0.0
    %5016 = vmatprep.subr.mxu0 0.0
    %5017 = vmatpush1.msra.mxu0 0.0
    %5018 = vmatprep.subr.mxu0 0.0
    %5019 = vmatpush1.msra.mxu0 0.0
    %5020 = vmatprep.subr.mxu0 0.0
    %5021 = vmatpush1.msra.mxu0 0.0
    %5022 = vmatprep.subr.mxu0 0.0
    %5023 = vmatpush1.msra.mxu0 0.0
    %5024 = vmatprep.subr.mxu0 0.0
    %5025 = vmatpush1.msra.mxu0 0.0
    %5026 = vmatprep.subr.mxu0 0.0
    %5027 = vmatpush1.msra.mxu0 0.0
    %5028 = vmatprep.subr.mxu0 0.0
    %5029 = vmatpush1.msra.mxu0 0.0
    %5030 = vmatprep.subr.mxu0 0.0
    %5031 = vmatpush1.msra.mxu0 0.0
    %5032 = vmatprep.mubr.f32.mxu0 0.0
    %5033 = vmatmul.mubr.f32.gmra.mrb[0].mxu0 %v4945
    %v5034 = vpop.f32.mrb[0].mxu0
    %v5035 = vadd.f32 0.0, %v5034
    %v5036 = vpop.f32.mrb[0].mxu0
    %5037 = vmatprep.mubr.f32.mxu0 0.0
    %5038 = vmatmul.mubr.f32.gmra.mrb[0].mxu0 %v4948
    %v5039 = vpop.f32.mrb[0].mxu0
    %v5040 = vadd.f32 0.0, %v5039
    %v5041 = vpop.f32.mrb[0].mxu0
    %5042 = vmatprep.mubr.f32.mxu0 0.0
    %5043 = vmatmul.mubr.f32.gmra.mrb[0].mxu0 %v4951
    %v5044 = vpop.f32.mrb[0].mxu0
    %v5045 = vadd.f32 0.0, %v5044
    %v5046 = vpop.f32.mrb[0].mxu0
    %5047 = vmatprep.mubr.f32.mxu0 0.0
    %5048 = vmatmul.mubr.f32.gmra.mrb[0].mxu0 %v4954
    %v5049 = vpop.f32.mrb[0].mxu0
    %v5050 = vadd.f32 0.0, %v5049
    %v5051 = vpop.f32.mrb[0].mxu0
    %5052 = vmatprep.mubr.f32.mxu0 0.0
    %5053 = vmatmul.mubr.f32.gmra.mrb[0].mxu0 %v4957
    %v5054 = vpop.f32.mrb[0].mxu0
    %v5055 = vadd.f32 0.0, %v5054
    %v5056 = vpop.f32.mrb[0].mxu0
    %5057 = vmatprep.mubr.f32.mxu0 0.0
    %5058 = vmatmul.mubr.f32.gmra.mrb[0].mxu0 %v4960
    %v5059 = vpop.f32.mrb[0].mxu0
    %v5060 = vadd.f32 0.0, %v5059
    %v5061 = vpop.f32.mrb[0].mxu0
    %5062 = vmatprep.mubr.f32.mxu0 0.0
    %5063 = vmatmul.mubr.f32.gmra.mrb[0].mxu0 %v4963
    %v5064 = vpop.f32.mrb[0].mxu0
    %v5065 = vadd.f32 0.0, %v5064
    %v5066 = vpop.f32.mrb[0].mxu0
    %5067 = vmatprep.mubr.f32.mxu0 0.0
    %5068 = vmatmul.mubr.f32.gmra.mrb[0].mxu0 %v4966
    %v5069 = vpop.f32.mrb[0].mxu0
    %v5070 = vadd.f32 0.0, %v5069
    %v5071 = vpop.f32.mrb[0].mxu0
    %5072 = vdwg.mxu0
    %v5073 = vadd.f32 %v2973, %v5035
    %v5074 = vadd.f32 %v2974, %v5040
    %v5075 = vadd.f32 %v2975, %v5045
    %v5076 = vadd.f32 %v2976, %v5050
    %v5077 = vadd.f32 %v2977, %v5055
    %v5078 = vadd.f32 %v2978, %v5060
    %v5079 = vadd.f32 %v2979, %v5065
    %v5080 = vadd.f32 %v2980, %v5070
    %s5081 = scalar_lea.vmem %s8, 1
    %v5082 = vld [vmem:[%s5081] sm:$0x1]
    %v5084 = vlaneseq
    %v5085 = vshrl.u32 %v5084, 7
    %v5086 = vsub.s32 0, %v5085
    %v5087 = vrot.slane %v5082, %v5086
    %v5089 = vadd.f32 %v5073, %v5087
    %v5090 = vadd.f32 %v5074, %v5087
    %v5091 = vadd.f32 %v5075, %v5087
    %v5092 = vadd.f32 %v5076, %v5087
    %v5093 = vadd.f32 %v5077, %v5087
    %v5094 = vadd.f32 %v5078, %v5087
    %v5095 = vadd.f32 %v5079, %v5087
    %v5096 = vadd.f32 %v5080, %v5087
    %s5097 = scalar_lea.vmem %s9, 1
    %v5098 = vld [vmem:[%s5097] sm:$0x1]
    %s5099 = scalar_lea.vmem %s10, 1
    %v5100 = vld [vmem:[%s5099] sm:$0x1]
    %v5101 = vsel %vm99, %v5089, 0.0
    %5102 = vadd.xlane.f32.xlu0 %v5101
    %v5103 = vpop.xlane.xlu0 %5102
    %v5104 = vsel %vm99, %v5090, 0.0
    %5105 = vadd.xlane.f32.xlu0 %v5104
    %v5106 = vpop.xlane.xlu0 %5105
    %v5107 = vsel %vm99, %v5091, 0.0
    %5108 = vadd.xlane.f32.xlu0 %v5107
    %v5109 = vpop.xlane.xlu0 %5108
    %v5110 = vsel %vm99, %v5092, 0.0
    %5111 = vadd.xlane.f32.xlu0 %v5110
    %v5112 = vpop.xlane.xlu0 %5111
    %v5113 = vsel %vm99, %v5093, 0.0
    %5114 = vadd.xlane.f32.xlu0 %v5113
    %v5115 = vpop.xlane.xlu0 %5114
    %v5116 = vsel %vm99, %v5094, 0.0
    %5117 = vadd.xlane.f32.xlu0 %v5116
    %v5118 = vpop.xlane.xlu0 %5117
    %v5119 = vsel %vm99, %v5095, 0.0
    %5120 = vadd.xlane.f32.xlu0 %v5119
    %v5121 = vpop.xlane.xlu0 %5120
    %v5122 = vsel %vm99, %v5096, 0.0
    %5123 = vadd.xlane.f32.xlu0 %v5122
    %v5124 = vpop.xlane.xlu0 %5123
    %v5125 = vmul.f32 %v5103, %v124
    %v5126 = vmul.f32 %v5106, %v124
    %v5127 = vmul.f32 %v5109, %v124
    %v5128 = vmul.f32 %v5112, %v124
    %v5129 = vmul.f32 %v5115, %v124
    %v5130 = vmul.f32 %v5118, %v124
    %v5131 = vmul.f32 %v5121, %v124
    %v5132 = vmul.f32 %v5124, %v124
    %v5133 = vsub.f32 %v5089, %v5125
    %v5134 = vsub.f32 %v5090, %v5126
    %v5135 = vsub.f32 %v5091, %v5127
    %v5136 = vsub.f32 %v5092, %v5128
    %v5137 = vsub.f32 %v5093, %v5129
    %v5138 = vsub.f32 %v5094, %v5130
    %v5139 = vsub.f32 %v5095, %v5131
    %v5140 = vsub.f32 %v5096, %v5132
    %v5141 = vmul.f32 %v5133, %v5133
    %v5142 = vmul.f32 %v5134, %v5134
    %v5143 = vmul.f32 %v5135, %v5135
    %v5144 = vmul.f32 %v5136, %v5136
    %v5145 = vmul.f32 %v5137, %v5137
    %v5146 = vmul.f32 %v5138, %v5138
    %v5147 = vmul.f32 %v5139, %v5139
    %v5148 = vmul.f32 %v5140, %v5140
    %v5149 = vsel %vm99, %v5141, 0.0
    %5150 = vadd.xlane.f32.xlu0 %v5149
    %v5151 = vpop.xlane.xlu0 %5150
    %v5152 = vsel %vm99, %v5142, 0.0
    %5153 = vadd.xlane.f32.xlu0 %v5152
    %v5154 = vpop.xlane.xlu0 %5153
    %v5155 = vsel %vm99, %v5143, 0.0
    %5156 = vadd.xlane.f32.xlu0 %v5155
    %v5157 = vpop.xlane.xlu0 %5156
    %v5158 = vsel %vm99, %v5144, 0.0
    %5159 = vadd.xlane.f32.xlu0 %v5158
    %v5160 = vpop.xlane.xlu0 %5159
    %v5161 = vsel %vm99, %v5145, 0.0
    %5162 = vadd.xlane.f32.xlu0 %v5161
    %v5163 = vpop.xlane.xlu0 %5162
    %v5164 = vsel %vm99, %v5146, 0.0
    %5165 = vadd.xlane.f32.xlu0 %v5164
    %v5166 = vpop.xlane.xlu0 %5165
    %v5167 = vsel %vm99, %v5147, 0.0
    %5168 = vadd.xlane.f32.xlu0 %v5167
    %v5169 = vpop.xlane.xlu0 %5168
    %v5170 = vsel %vm99, %v5148, 0.0
    %5171 = vadd.xlane.f32.xlu0 %v5170
    %v5172 = vpop.xlane.xlu0 %5171
    %v5173 = vmul.f32 %v5151, %v124
    %v5174 = vmul.f32 %v5154, %v124
    %v5175 = vmul.f32 %v5157, %v124
    %v5176 = vmul.f32 %v5160, %v124
    %v5177 = vmul.f32 %v5163, %v124
    %v5178 = vmul.f32 %v5166, %v124
    %v5179 = vmul.f32 %v5169, %v124
    %v5180 = vmul.f32 %v5172, %v124
    %v5181 = vadd.f32 %v5173, 1e-12
    %v5182 = vadd.f32 %v5174, 1e-12
    %v5183 = vadd.f32 %v5175, 1e-12
    %v5184 = vadd.f32 %v5176, 1e-12
    %v5185 = vadd.f32 %v5177, 1e-12
    %v5186 = vadd.f32 %v5178, 1e-12
    %v5187 = vadd.f32 %v5179, 1e-12
    %v5188 = vadd.f32 %v5180, 1e-12
    %v5189 = vrsqrt.pop %v5181
    %v5190 = vrsqrt.pop %v5182
    %v5191 = vrsqrt.pop %v5183
    %v5192 = vrsqrt.pop %v5184
    %v5193 = vrsqrt.pop %v5185
    %v5194 = vrsqrt.pop %v5186
    %v5195 = vrsqrt.pop %v5187
    %v5196 = vrsqrt.pop %v5188
    %v5197 = vmul.f32 %v5133, %v5189
    %v5198 = vmul.f32 %v5134, %v5190
    %v5199 = vmul.f32 %v5135, %v5191
    %v5200 = vmul.f32 %v5136, %v5192
    %v5201 = vmul.f32 %v5137, %v5193
    %v5202 = vmul.f32 %v5138, %v5194
    %v5203 = vmul.f32 %v5139, %v5195
    %v5204 = vmul.f32 %v5140, %v5196
    %v5206 = vlaneseq
    %v5207 = vshrl.u32 %v5206, 7
    %v5208 = vsub.s32 0, %v5207
    %v5209 = vrot.slane %v5098, %v5208
    %v5211 = vmul.f32 %v5197, %v5209
    %v5212 = vmul.f32 %v5198, %v5209
    %v5213 = vmul.f32 %v5199, %v5209
    %v5214 = vmul.f32 %v5200, %v5209
    %v5215 = vmul.f32 %v5201, %v5209
    %v5216 = vmul.f32 %v5202, %v5209
    %v5217 = vmul.f32 %v5203, %v5209
    %v5218 = vmul.f32 %v5204, %v5209
    %v5220 = vlaneseq
    %v5221 = vshrl.u32 %v5220, 7
    %v5222 = vsub.s32 0, %v5221
    %v5223 = vrot.slane %v5100, %v5222
    %v5225 = vadd.f32 %v5211, %v5223
    %v5226 = vadd.f32 %v5212, %v5223
    %v5227 = vadd.f32 %v5213, %v5223
    %v5228 = vadd.f32 %v5214, %v5223
    %v5229 = vadd.f32 %v5215, %v5223
    %v5230 = vadd.f32 %v5216, %v5223
    %v5231 = vadd.f32 %v5217, %v5223
    %v5232 = vadd.f32 %v5218, %v5223
    %s5233 = scalar_lea.vmem %s11, 32
    %v5234 = vld [vmem:[%s5233] sm:$0xff]
    %v5235 = vld [vmem:[%s5233 + $0x8] sm:$0xff]
    %v5236 = vld [vmem:[%s5233 + $0x10] sm:$0xff]
    %v5237 = vld [vmem:[%s5233 + $0x18] sm:$0xff]
    %s5238 = scalar_lea.vmem %s12, 1
    %v5239 = vld [vmem:[%s5238] sm:$0x1]
    %v5241 = vlaneseq
    %v5242 = vshrl.u32 %v5241, 7
    %v5243 = vsub.s32 0, %v5242
    %v5244 = vrot.slane %v5239, %v5243
    %v5247 = vsel %vm99, %v5225, 0
    %v5250 = vsel %vm99, %v5226, 0
    %v5253 = vsel %vm99, %v5227, 0
    %v5256 = vsel %vm99, %v5228, 0
    %v5259 = vsel %vm99, %v5229, 0
    %v5262 = vsel %vm99, %v5230, 0
    %v5265 = vsel %vm99, %v5231, 0
    %v5268 = vsel %vm99, %v5232, 0
    %5270 = vmatprep.subr.mxu0 0.0
    %5271 = vmatpush1.msra.mxu0 %v5234
    %5272 = vmatprep.subr.mxu0 0.0
    %5273 = vmatpush1.msra.mxu0 %v5235
    %5274 = vmatprep.subr.mxu0 0.0
    %5275 = vmatpush1.msra.mxu0 %v5236
    %5276 = vmatprep.subr.mxu0 0.0
    %5277 = vmatpush1.msra.mxu0 %v5237
    %5278 = vmatprep.subr.mxu0 0.0
    %5279 = vmatpush1.msra.mxu0 0.0
    %5280 = vmatprep.subr.mxu0 0.0
    %5281 = vmatpush1.msra.mxu0 0.0
    %5282 = vmatprep.subr.mxu0 0.0
    %5283 = vmatpush1.msra.mxu0 0.0
    %5284 = vmatprep.subr.mxu0 0.0
    %5285 = vmatpush1.msra.mxu0 0.0
    %5286 = vmatprep.subr.mxu0 0.0
    %5287 = vmatpush1.msra.mxu0 0.0
    %5288 = vmatprep.subr.mxu0 0.0
    %5289 = vmatpush1.msra.mxu0 0.0
    %5290 = vmatprep.subr.mxu0 0.0
    %5291 = vmatpush1.msra.mxu0 0.0
    %5292 = vmatprep.subr.mxu0 0.0
    %5293 = vmatpush1.msra.mxu0 0.0
    %5294 = vmatprep.subr.mxu0 0.0
    %5295 = vmatpush1.msra.mxu0 0.0
    %5296 = vmatprep.subr.mxu0 0.0
    %5297 = vmatpush1.msra.mxu0 0.0
    %5298 = vmatprep.subr.mxu0 0.0
    %5299 = vmatpush1.msra.mxu0 0.0
    %5300 = vmatprep.subr.mxu0 0.0
    %5301 = vmatpush1.msra.mxu0 0.0
    %5302 = vmatprep.subr.mxu0 0.0
    %5303 = vmatpush1.msra.mxu0 0.0
    %5304 = vmatprep.subr.mxu0 0.0
    %5305 = vmatpush1.msra.mxu0 0.0
    %5306 = vmatprep.subr.mxu0 0.0
    %5307 = vmatpush1.msra.mxu0 0.0
    %5308 = vmatprep.subr.mxu0 0.0
    %5309 = vmatpush1.msra.mxu0 0.0
    %5310 = vmatprep.subr.mxu0 0.0
    %5311 = vmatpush1.msra.mxu0 0.0
    %5312 = vmatprep.subr.mxu0 0.0
    %5313 = vmatpush1.msra.mxu0 0.0
    %5314 = vmatprep.subr.mxu0 0.0
    %5315 = vmatpush1.msra.mxu0 0.0
    %5316 = vmatprep.subr.mxu0 0.0
    %5317 = vmatpush1.msra.mxu0 0.0
    %5318 = vmatprep.subr.mxu0 0.0
    %5319 = vmatpush1.msra.mxu0 0.0
    %5320 = vmatprep.subr.mxu0 0.0
    %5321 = vmatpush1.msra.mxu0 0.0
    %5322 = vmatprep.subr.mxu0 0.0
    %5323 = vmatpush1.msra.mxu0 0.0
    %5324 = vmatprep.subr.mxu0 0.0
    %5325 = vmatpush1.msra.mxu0 0.0
    %5326 = vmatprep.subr.mxu0 0.0
    %5327 = vmatpush1.msra.mxu0 0.0
    %5328 = vmatprep.subr.mxu0 0.0
    %5329 = vmatpush1.msra.mxu0 0.0
    %5330 = vmatprep.subr.mxu0 0.0
    %5331 = vmatpush1.msra.mxu0 0.0
    %5332 = vmatprep.subr.mxu0 0.0
    %5333 = vmatpush1.msra.mxu0 0.0
    %5334 = vmatprep.mubr.f32.mxu0 0.0
    %5335 = vmatmul.mubr.f32.gmra.mrb[0].mxu0 %v5247
    %v5336 = vpop.f32.mrb[0].mxu0
    %v5337 = vadd.f32 %v5244, %v5336
    %v5338 = vpop.f32.mrb[0].mxu0
    %5339 = vmatprep.mubr.f32.mxu0 0.0
    %5340 = vmatmul.mubr.f32.gmra.mrb[0].mxu0 %v5250
    %v5341 = vpop.f32.mrb[0].mxu0
    %v5342 = vadd.f32 %v5244, %v5341
    %v5343 = vpop.f32.mrb[0].mxu0
    %5344 = vmatprep.mubr.f32.mxu0 0.0
    %5345 = vmatmul.mubr.f32.gmra.mrb[0].mxu0 %v5253
    %v5346 = vpop.f32.mrb[0].mxu0
    %v5347 = vadd.f32 %v5244, %v5346
    %v5348 = vpop.f32.mrb[0].mxu0
    %5349 = vmatprep.mubr.f32.mxu0 0.0
    %5350 = vmatmul.mubr.f32.gmra.mrb[0].mxu0 %v5256
    %v5351 = vpop.f32.mrb[0].mxu0
    %v5352 = vadd.f32 %v5244, %v5351
    %v5353 = vpop.f32.mrb[0].mxu0
    %5354 = vmatprep.mubr.f32.mxu0 0.0
    %5355 = vmatmul.mubr.f32.gmra.mrb[0].mxu0 %v5259
    %v5356 = vpop.f32.mrb[0].mxu0
    %v5357 = vadd.f32 %v5244, %v5356
    %v5358 = vpop.f32.mrb[0].mxu0
    %5359 = vmatprep.mubr.f32.mxu0 0.0
    %5360 = vmatmul.mubr.f32.gmra.mrb[0].mxu0 %v5262
    %v5361 = vpop.f32.mrb[0].mxu0
    %v5362 = vadd.f32 %v5244, %v5361
    %v5363 = vpop.f32.mrb[0].mxu0
    %5364 = vmatprep.mubr.f32.mxu0 0.0
    %5365 = vmatmul.mubr.f32.gmra.mrb[0].mxu0 %v5265
    %v5366 = vpop.f32.mrb[0].mxu0
    %v5367 = vadd.f32 %v5244, %v5366
    %v5368 = vpop.f32.mrb[0].mxu0
    %5369 = vmatprep.mubr.f32.mxu0 0.0
    %5370 = vmatmul.mubr.f32.gmra.mrb[0].mxu0 %v5268
    %v5371 = vpop.f32.mrb[0].mxu0
    %v5372 = vadd.f32 %v5244, %v5371
    %v5373 = vpop.f32.mrb[0].mxu0
    %5374 = vdwg.mxu0
    %v5375 = vmul.f32 %v5337, 0.5
    %v5376 = vmul.f32 %v5342, 0.5
    %v5377 = vmul.f32 %v5347, 0.5
    %v5378 = vmul.f32 %v5352, 0.5
    %v5379 = vmul.f32 %v5357, 0.5
    %v5380 = vmul.f32 %v5362, 0.5
    %v5381 = vmul.f32 %v5367, 0.5
    %v5382 = vmul.f32 %v5372, 0.5
    %v5383 = vmul.f32 %v5337, 0.044715
    %v5384 = vmul.f32 %v5342, 0.044715
    %v5385 = vmul.f32 %v5347, 0.044715
    %v5386 = vmul.f32 %v5352, 0.044715
    %v5387 = vmul.f32 %v5357, 0.044715
    %v5388 = vmul.f32 %v5362, 0.044715
    %v5389 = vmul.f32 %v5367, 0.044715
    %v5390 = vmul.f32 %v5372, 0.044715
    %v5391 = vmul.f32 %v5383, %v5337
    %v5392 = vmul.f32 %v5384, %v5342
    %v5393 = vmul.f32 %v5385, %v5347
    %v5394 = vmul.f32 %v5386, %v5352
    %v5395 = vmul.f32 %v5387, %v5357
    %v5396 = vmul.f32 %v5388, %v5362
    %v5397 = vmul.f32 %v5389, %v5367
    %v5398 = vmul.f32 %v5390, %v5372
    %v5399 = vmul.f32 %v5391, %v5337
    %v5400 = vmul.f32 %v5392, %v5342
    %v5401 = vmul.f32 %v5393, %v5347
    %v5402 = vmul.f32 %v5394, %v5352
    %v5403 = vmul.f32 %v5395, %v5357
    %v5404 = vmul.f32 %v5396, %v5362
    %v5405 = vmul.f32 %v5397, %v5367
    %v5406 = vmul.f32 %v5398, %v5372
    %v5407 = vadd.f32 %v5337, %v5399
    %v5408 = vadd.f32 %v5342, %v5400
    %v5409 = vadd.f32 %v5347, %v5401
    %v5410 = vadd.f32 %v5352, %v5402
    %v5411 = vadd.f32 %v5357, %v5403
    %v5412 = vadd.f32 %v5362, %v5404
    %v5413 = vadd.f32 %v5367, %v5405
    %v5414 = vadd.f32 %v5372, %v5406
    %v5415 = vmul.f32 %v5407, 0.7978846
    %v5416 = vmul.f32 %v5408, 0.7978846
    %v5417 = vmul.f32 %v5409, 0.7978846
    %v5418 = vmul.f32 %v5410, 0.7978846
    %v5419 = vmul.f32 %v5411, 0.7978846
    %v5420 = vmul.f32 %v5412, 0.7978846
    %v5421 = vmul.f32 %v5413, 0.7978846
    %v5422 = vmul.f32 %v5414, 0.7978846
    %v5423 = vtanh.pop %v5415
    %v5424 = vtanh.pop %v5416
    %v5425 = vtanh.pop %v5417
    %v5426 = vtanh.pop %v5418
    %v5427 = vtanh.pop %v5419
    %v5428 = vtanh.pop %v5420
    %v5429 = vtanh.pop %v5421
    %v5430 = vtanh.pop %v5422
    %v5431 = vadd.f32 %v5423, 1.0
    %v5432 = vadd.f32 %v5424, 1.0
    %v5433 = vadd.f32 %v5425, 1.0
    %v5434 = vadd.f32 %v5426, 1.0
    %v5435 = vadd.f32 %v5427, 1.0
    %v5436 = vadd.f32 %v5428, 1.0
    %v5437 = vadd.f32 %v5429, 1.0
    %v5438 = vadd.f32 %v5430, 1.0
    %v5439 = vmul.f32 %v5375, %v5431
    %v5440 = vmul.f32 %v5376, %v5432
    %v5441 = vmul.f32 %v5377, %v5433
    %v5442 = vmul.f32 %v5378, %v5434
    %v5443 = vmul.f32 %v5379, %v5435
    %v5444 = vmul.f32 %v5380, %v5436
    %v5445 = vmul.f32 %v5381, %v5437
    %v5446 = vmul.f32 %v5382, %v5438
    %s5447 = scalar_lea.vmem %s13, 64
    %v5448 = vld [vmem:[%s5447] sm:$0xff]
    %v5449 = vld [vmem:[%s5447 + $0x8] sm:$0xff]
    %v5450 = vld [vmem:[%s5447 + $0x10] sm:$0xff]
    %v5451 = vld [vmem:[%s5447 + $0x18] sm:$0xff]
    %v5452 = vld [vmem:[%s5447 + $0x20] sm:$0xff]
    %v5453 = vld [vmem:[%s5447 + $0x28] sm:$0xff]
    %v5454 = vld [vmem:[%s5447 + $0x30] sm:$0xff]
    %v5455 = vld [vmem:[%s5447 + $0x38] sm:$0xff]
    %s5456 = scalar_lea.vmem %s14, 1
    %v5457 = vld [vmem:[%s5456] sm:$0x1]
    %v5459 = vlaneseq
    %v5460 = vshrl.u32 %v5459, 7
    %v5461 = vsub.s32 0, %v5460
    %v5462 = vrot.slane %v5457, %v5461
    %v5465 = vsel %vm551, %v5439, 0
    %v5468 = vsel %vm551, %v5440, 0
    %v5471 = vsel %vm551, %v5441, 0
    %v5474 = vsel %vm551, %v5442, 0
    %v5477 = vsel %vm551, %v5443, 0
    %v5480 = vsel %vm551, %v5444, 0
    %v5483 = vsel %vm551, %v5445, 0
    %v5486 = vsel %vm551, %v5446, 0
    %5488 = vmatprep.subr.mxu0 0.0
    %5489 = vmatpush1.msra.mxu0 %v5448
    %5490 = vmatprep.subr.mxu0 0.0
    %5491 = vmatpush1.msra.mxu0 %v5449
    %5492 = vmatprep.subr.mxu0 0.0
    %5493 = vmatpush1.msra.mxu0 %v5450
    %5494 = vmatprep.subr.mxu0 0.0
    %5495 = vmatpush1.msra.mxu0 %v5451
    %5496 = vmatprep.subr.mxu0 0.0
    %5497 = vmatpush1.msra.mxu0 %v5452
    %5498 = vmatprep.subr.mxu0 0.0
    %5499 = vmatpush1.msra.mxu0 %v5453
    %5500 = vmatprep.subr.mxu0 0.0
    %5501 = vmatpush1.msra.mxu0 %v5454
    %5502 = vmatprep.subr.mxu0 0.0
    %5503 = vmatpush1.msra.mxu0 %v5455
    %5504 = vmatprep.subr.mxu0 0.0
    %5505 = vmatpush1.msra.mxu0 0.0
    %5506 = vmatprep.subr.mxu0 0.0
    %5507 = vmatpush1.msra.mxu0 0.0
    %5508 = vmatprep.subr.mxu0 0.0
    %5509 = vmatpush1.msra.mxu0 0.0
    %5510 = vmatprep.subr.mxu0 0.0
    %5511 = vmatpush1.msra.mxu0 0.0
    %5512 = vmatprep.subr.mxu0 0.0
    %5513 = vmatpush1.msra.mxu0 0.0
    %5514 = vmatprep.subr.mxu0 0.0
    %5515 = vmatpush1.msra.mxu0 0.0
    %5516 = vmatprep.subr.mxu0 0.0
    %5517 = vmatpush1.msra.mxu0 0.0
    %5518 = vmatprep.subr.mxu0 0.0
    %5519 = vmatpush1.msra.mxu0 0.0
    %5520 = vmatprep.subr.mxu0 0.0
    %5521 = vmatpush1.msra.mxu0 0.0
    %5522 = vmatprep.subr.mxu0 0.0
    %5523 = vmatpush1.msra.mxu0 0.0
    %5524 = vmatprep.subr.mxu0 0.0
    %5525 = vmatpush1.msra.mxu0 0.0
    %5526 = vmatprep.subr.mxu0 0.0
    %5527 = vmatpush1.msra.mxu0 0.0
    %5528 = vmatprep.subr.mxu0 0.0
    %5529 = vmatpush1.msra.mxu0 0.0
    %5530 = vmatprep.subr.mxu0 0.0
    %5531 = vmatpush1.msra.mxu0 0.0
    %5532 = vmatprep.subr.mxu0 0.0
    %5533 = vmatpush1.msra.mxu0 0.0
    %5534 = vmatprep.subr.mxu0 0.0
    %5535 = vmatpush1.msra.mxu0 0.0
    %5536 = vmatprep.subr.mxu0 0.0
    %5537 = vmatpush1.msra.mxu0 0.0
    %5538 = vmatprep.subr.mxu0 0.0
    %5539 = vmatpush1.msra.mxu0 0.0
    %5540 = vmatprep.subr.mxu0 0.0
    %5541 = vmatpush1.msra.mxu0 0.0
    %5542 = vmatprep.subr.mxu0 0.0
    %5543 = vmatpush1.msra.mxu0 0.0
    %5544 = vmatprep.subr.mxu0 0.0
    %5545 = vmatpush1.msra.mxu0 0.0
    %5546 = vmatprep.subr.mxu0 0.0
    %5547 = vmatpush1.msra.mxu0 0.0
    %5548 = vmatprep.subr.mxu0 0.0
    %5549 = vmatpush1.msra.mxu0 0.0
    %5550 = vmatprep.subr.mxu0 0.0
    %5551 = vmatpush1.msra.mxu0 0.0
    %5552 = vmatprep.mubr.f32.mxu0 0.0
    %5553 = vmatmul.mubr.f32.gmra.mrb[0].mxu0 %v5465
    %v5554 = vpop.f32.mrb[0].mxu0
    %v5555 = vadd.f32 %v5462, %v5554
    %v5556 = vpop.f32.mrb[0].mxu0
    %5557 = vmatprep.mubr.f32.mxu0 0.0
    %5558 = vmatmul.mubr.f32.gmra.mrb[0].mxu0 %v5468
    %v5559 = vpop.f32.mrb[0].mxu0
    %v5560 = vadd.f32 %v5462, %v5559
    %v5561 = vpop.f32.mrb[0].mxu0
    %5562 = vmatprep.mubr.f32.mxu0 0.0
    %5563 = vmatmul.mubr.f32.gmra.mrb[0].mxu0 %v5471
    %v5564 = vpop.f32.mrb[0].mxu0
    %v5565 = vadd.f32 %v5462, %v5564
    %v5566 = vpop.f32.mrb[0].mxu0
    %5567 = vmatprep.mubr.f32.mxu0 0.0
    %5568 = vmatmul.mubr.f32.gmra.mrb[0].mxu0 %v5474
    %v5569 = vpop.f32.mrb[0].mxu0
    %v5570 = vadd.f32 %v5462, %v5569
    %v5571 = vpop.f32.mrb[0].mxu0
    %5572 = vmatprep.mubr.f32.mxu0 0.0
    %5573 = vmatmul.mubr.f32.gmra.mrb[0].mxu0 %v5477
    %v5574 = vpop.f32.mrb[0].mxu0
    %v5575 = vadd.f32 %v5462, %v5574
    %v5576 = vpop.f32.mrb[0].mxu0
    %5577 = vmatprep.mubr.f32.mxu0 0.0
    %5578 = vmatmul.mubr.f32.gmra.mrb[0].mxu0 %v5480
    %v5579 = vpop.f32.mrb[0].mxu0
    %v5580 = vadd.f32 %v5462, %v5579
    %v5581 = vpop.f32.mrb[0].mxu0
    %5582 = vmatprep.mubr.f32.mxu0 0.0
    %5583 = vmatmul.mubr.f32.gmra.mrb[0].mxu0 %v5483
    %v5584 = vpop.f32.mrb[0].mxu0
    %v5585 = vadd.f32 %v5462, %v5584
    %v5586 = vpop.f32.mrb[0].mxu0
    %5587 = vmatprep.mubr.f32.mxu0 0.0
    %5588 = vmatmul.mubr.f32.gmra.mrb[0].mxu0 %v5486
    %v5589 = vpop.f32.mrb[0].mxu0
    %v5590 = vadd.f32 %v5462, %v5589
    %v5591 = vpop.f32.mrb[0].mxu0
    %5592 = vdwg.mxu0
    %v5593 = vadd.f32 %v5225, %v5555
    %v5594 = vadd.f32 %v5226, %v5560
    %v5595 = vadd.f32 %v5227, %v5565
    %v5596 = vadd.f32 %v5228, %v5570
    %v5597 = vadd.f32 %v5229, %v5575
    %v5598 = vadd.f32 %v5230, %v5580
    %v5599 = vadd.f32 %v5231, %v5585
    %v5600 = vadd.f32 %v5232, %v5590
    %s5601 = scalar_lea.vmem %s15, 1
    %v5602 = vld [vmem:[%s5601] sm:$0x1]
    %s5603 = scalar_lea.vmem %s16, 1
    %v5604 = vld [vmem:[%s5603] sm:$0x1]
    %v5605 = vsel %vm99, %v5593, 0.0
    %5606 = vadd.xlane.f32.xlu0 %v5605
    %v5607 = vpop.xlane.xlu0 %5606
    %v5608 = vsel %vm99, %v5594, 0.0
    %5609 = vadd.xlane.f32.xlu0 %v5608
    %v5610 = vpop.xlane.xlu0 %5609
    %v5611 = vsel %vm99, %v5595, 0.0
    %5612 = vadd.xlane.f32.xlu0 %v5611
    %v5613 = vpop.xlane.xlu0 %5612
    %v5614 = vsel %vm99, %v5596, 0.0
    %5615 = vadd.xlane.f32.xlu0 %v5614
    %v5616 = vpop.xlane.xlu0 %5615
    %v5617 = vsel %vm99, %v5597, 0.0
    %5618 = vadd.xlane.f32.xlu0 %v5617
    %v5619 = vpop.xlane.xlu0 %5618
    %v5620 = vsel %vm99, %v5598, 0.0
    %5621 = vadd.xlane.f32.xlu0 %v5620
    %v5622 = vpop.xlane.xlu0 %5621
    %v5623 = vsel %vm99, %v5599, 0.0
    %5624 = vadd.xlane.f32.xlu0 %v5623
    %v5625 = vpop.xlane.xlu0 %5624
    %v5626 = vsel %vm99, %v5600, 0.0
    %5627 = vadd.xlane.f32.xlu0 %v5626
    %v5628 = vpop.xlane.xlu0 %5627
    %v5629 = vmul.f32 %v5607, %v124
    %v5630 = vmul.f32 %v5610, %v124
    %v5631 = vmul.f32 %v5613, %v124
    %v5632 = vmul.f32 %v5616, %v124
    %v5633 = vmul.f32 %v5619, %v124
    %v5634 = vmul.f32 %v5622, %v124
    %v5635 = vmul.f32 %v5625, %v124
    %v5636 = vmul.f32 %v5628, %v124
    %v5637 = vsub.f32 %v5593, %v5629
    %v5638 = vsub.f32 %v5594, %v5630
    %v5639 = vsub.f32 %v5595, %v5631
    %v5640 = vsub.f32 %v5596, %v5632
    %v5641 = vsub.f32 %v5597, %v5633
    %v5642 = vsub.f32 %v5598, %v5634
    %v5643 = vsub.f32 %v5599, %v5635
    %v5644 = vsub.f32 %v5600, %v5636
    %v5645 = vmul.f32 %v5637, %v5637
    %v5646 = vmul.f32 %v5638, %v5638
    %v5647 = vmul.f32 %v5639, %v5639
    %v5648 = vmul.f32 %v5640, %v5640
    %v5649 = vmul.f32 %v5641, %v5641
    %v5650 = vmul.f32 %v5642, %v5642
    %v5651 = vmul.f32 %v5643, %v5643
    %v5652 = vmul.f32 %v5644, %v5644
    %v5653 = vsel %vm99, %v5645, 0.0
    %5654 = vadd.xlane.f32.xlu0 %v5653
    %v5655 = vpop.xlane.xlu0 %5654
    %v5656 = vsel %vm99, %v5646, 0.0
    %5657 = vadd.xlane.f32.xlu0 %v5656
    %v5658 = vpop.xlane.xlu0 %5657
    %v5659 = vsel %vm99, %v5647, 0.0
    %5660 = vadd.xlane.f32.xlu0 %v5659
    %v5661 = vpop.xlane.xlu0 %5660
    %v5662 = vsel %vm99, %v5648, 0.0
    %5663 = vadd.xlane.f32.xlu0 %v5662
    %v5664 = vpop.xlane.xlu0 %5663
    %v5665 = vsel %vm99, %v5649, 0.0
    %5666 = vadd.xlane.f32.xlu0 %v5665
    %v5667 = vpop.xlane.xlu0 %5666
    %v5668 = vsel %vm99, %v5650, 0.0
    %5669 = vadd.xlane.f32.xlu0 %v5668
    %v5670 = vpop.xlane.xlu0 %5669
    %v5671 = vsel %vm99, %v5651, 0.0
    %5672 = vadd.xlane.f32.xlu0 %v5671
    %v5673 = vpop.xlane.xlu0 %5672
    %v5674 = vsel %vm99, %v5652, 0.0
    %5675 = vadd.xlane.f32.xlu0 %v5674
    %v5676 = vpop.xlane.xlu0 %5675
    %v5677 = vmul.f32 %v5655, %v124
    %v5678 = vmul.f32 %v5658, %v124
    %v5679 = vmul.f32 %v5661, %v124
    %v5680 = vmul.f32 %v5664, %v124
    %v5681 = vmul.f32 %v5667, %v124
    %v5682 = vmul.f32 %v5670, %v124
    %v5683 = vmul.f32 %v5673, %v124
    %v5684 = vmul.f32 %v5676, %v124
    %v5685 = vadd.f32 %v5677, 1e-12
    %v5686 = vadd.f32 %v5678, 1e-12
    %v5687 = vadd.f32 %v5679, 1e-12
    %v5688 = vadd.f32 %v5680, 1e-12
    %v5689 = vadd.f32 %v5681, 1e-12
    %v5690 = vadd.f32 %v5682, 1e-12
    %v5691 = vadd.f32 %v5683, 1e-12
    %v5692 = vadd.f32 %v5684, 1e-12
    %v5693 = vrsqrt.pop %v5685
    %v5694 = vrsqrt.pop %v5686
    %v5695 = vrsqrt.pop %v5687
    %v5696 = vrsqrt.pop %v5688
    %v5697 = vrsqrt.pop %v5689
    %v5698 = vrsqrt.pop %v5690
    %v5699 = vrsqrt.pop %v5691
    %v5700 = vrsqrt.pop %v5692
    %v5701 = vmul.f32 %v5637, %v5693
    %v5702 = vmul.f32 %v5638, %v5694
    %v5703 = vmul.f32 %v5639, %v5695
    %v5704 = vmul.f32 %v5640, %v5696
    %v5705 = vmul.f32 %v5641, %v5697
    %v5706 = vmul.f32 %v5642, %v5698
    %v5707 = vmul.f32 %v5643, %v5699
    %v5708 = vmul.f32 %v5644, %v5700
    %v5710 = vlaneseq
    %v5711 = vshrl.u32 %v5710, 7
    %v5712 = vsub.s32 0, %v5711
    %v5713 = vrot.slane %v5602, %v5712
    %v5715 = vmul.f32 %v5701, %v5713
    %v5716 = vmul.f32 %v5702, %v5713
    %v5717 = vmul.f32 %v5703, %v5713
    %v5718 = vmul.f32 %v5704, %v5713
    %v5719 = vmul.f32 %v5705, %v5713
    %v5720 = vmul.f32 %v5706, %v5713
    %v5721 = vmul.f32 %v5707, %v5713
    %v5722 = vmul.f32 %v5708, %v5713
    %v5724 = vlaneseq
    %v5725 = vshrl.u32 %v5724, 7
    %v5726 = vsub.s32 0, %v5725
    %v5727 = vrot.slane %v5604, %v5726
    %v5729 = vadd.f32 %v5715, %v5727
    %v5730 = vadd.f32 %v5716, %v5727
    %v5731 = vadd.f32 %v5717, %v5727
    %v5732 = vadd.f32 %v5718, %v5727
    %v5733 = vadd.f32 %v5719, %v5727
    %v5734 = vadd.f32 %v5720, %v5727
    %v5735 = vadd.f32 %v5721, %v5727
    %v5736 = vadd.f32 %v5722, %v5727
    %v5737 = vld [vmem:[%s2] sm:$0xff]
    %v5739 = vsel %vm551, %v5737, 0
    %5741 = vmatprep.subr.mxu0 0.0
    %5742 = vmatpush1.msra.mxu0 %v5729
    %5743 = vmatprep.subr.mxu0 0.0
    %5744 = vmatpush1.msra.mxu0 %v5730
    %5745 = vmatprep.subr.mxu0 0.0
    %5746 = vmatpush1.msra.mxu0 %v5731
    %5747 = vmatprep.subr.mxu0 0.0
    %5748 = vmatpush1.msra.mxu0 %v5732
    %5749 = vmatprep.subr.mxu0 0.0
    %5750 = vmatpush1.msra.mxu0 %v5733
    %5751 = vmatprep.subr.mxu0 0.0
    %5752 = vmatpush1.msra.mxu0 %v5734
    %5753 = vmatprep.subr.mxu0 0.0
    %5754 = vmatpush1.msra.mxu0 %v5735
    %5755 = vmatprep.subr.mxu0 0.0
    %5756 = vmatpush1.msra.mxu0 %v5736
    %5757 = vmatprep.subr.mxu0 0.0
    %5758 = vmatpush1.msra.mxu0 0.0
    %5759 = vmatprep.subr.mxu0 0.0
    %5760 = vmatpush1.msra.mxu0 0.0
    %5761 = vmatprep.subr.mxu0 0.0
    %5762 = vmatpush1.msra.mxu0 0.0
    %5763 = vmatprep.subr.mxu0 0.0
    %5764 = vmatpush1.msra.mxu0 0.0
    %5765 = vmatprep.subr.mxu0 0.0
    %5766 = vmatpush1.msra.mxu0 0.0
    %5767 = vmatprep.subr.mxu0 0.0
    %5768 = vmatpush1.msra.mxu0 0.0
    %5769 = vmatprep.subr.mxu0 0.0
    %5770 = vmatpush1.msra.mxu0 0.0
    %5771 = vmatprep.subr.mxu0 0.0
    %5772 = vmatpush1.msra.mxu0 0.0
    %5773 = vmatprep.subr.mxu0 0.0
    %5774 = vmatpush1.msra.mxu0 0.0
    %5775 = vmatprep.subr.mxu0 0.0
    %5776 = vmatpush1.msra.mxu0 0.0
    %5777 = vmatprep.subr.mxu0 0.0
    %5778 = vmatpush1.msra.mxu0 0.0
    %5779 = vmatprep.subr.mxu0 0.0
    %5780 = vmatpush1.msra.mxu0 0.0
    %5781 = vmatprep.subr.mxu0 0.0
    %5782 = vmatpush1.msra.mxu0 0.0
    %5783 = vmatprep.subr.mxu0 0.0
    %5784 = vmatpush1.msra.mxu0 0.0
    %5785 = vmatprep.subr.mxu0 0.0
    %5786 = vmatpush1.msra.mxu0 0.0
    %5787 = vmatprep.subr.mxu0 0.0
    %5788 = vmatpush1.msra.mxu0 0.0
    %5789 = vmatprep.subr.mxu0 0.0
    %5790 = vmatpush1.msra.mxu0 0.0
    %5791 = vmatprep.subr.mxu0 0.0
    %5792 = vmatpush1.msra.mxu0 0.0
    %5793 = vmatprep.subr.mxu0 0.0
    %5794 = vmatpush1.msra.mxu0 0.0
    %5795 = vmatprep.subr.mxu0 0.0
    %5796 = vmatpush1.msra.mxu0 0.0
    %5797 = vmatprep.subr.mxu0 0.0
    %5798 = vmatpush1.msra.mxu0 0.0
    %5799 = vmatprep.subr.mxu0 0.0
    %5800 = vmatpush1.msra.mxu0 0.0
    %5801 = vmatprep.subr.mxu0 0.0
    %5802 = vmatpush1.msra.mxu0 0.0
    %5803 = vmatprep.subr.mxu0 0.0
    %5804 = vmatpush1.msra.mxu0 0.0
    %5805 = vmatprep.mubr.f32.mxu0 0.0
    %5806 = vmatmul.mubr.f32.gmra.mrb[0].mxu0 %v5739
    %v5807 = vpop.f32.mrb[0].mxu0
    %v5808 = vadd.f32 0.0, %v5807
    %v5809 = vpop.f32.mrb[0].mxu0
    %5810 = vdwg.mxu0
    %v5811 = vld [vmem:[%s17] sm:$0xff]
    %v5812 = vld [vmem:[%s17 + $0x8] sm:$0xff]
    %v5813 = vld [vmem:[%s17 + $0x10] sm:$0xff]
    %v5814 = vld [vmem:[%s17 + $0x18] sm:$0xff]
    %v5815 = vld [vmem:[%s18] sm:$0x1]
    %v5817 = vlaneseq
    %v5818 = vshrl.u32 %v5817, 7
    %v5819 = vsub.s32 0, %v5818
    %v5820 = vrot.slane %v5815, %v5819
    %v5823 = vsel %vm99, %v5808, 0
    %5825 = vmatprep.subr.mxu0 0.0
    %5826 = vmatpush1.msra.mxu0 %v5811
    %5827 = vmatprep.subr.mxu0 0.0
    %5828 = vmatpush1.msra.mxu0 %v5812
    %5829 = vmatprep.subr.mxu0 0.0
    %5830 = vmatpush1.msra.mxu0 %v5813
    %5831 = vmatprep.subr.mxu0 0.0
    %5832 = vmatpush1.msra.mxu0 %v5814
    %5833 = vmatprep.subr.mxu0 0.0
    %5834 = vmatpush1.msra.mxu0 0.0
    %5835 = vmatprep.subr.mxu0 0.0
    %5836 = vmatpush1.msra.mxu0 0.0
    %5837 = vmatprep.subr.mxu0 0.0
    %5838 = vmatpush1.msra.mxu0 0.0
    %5839 = vmatprep.subr.mxu0 0.0
    %5840 = vmatpush1.msra.mxu0 0.0
    %5841 = vmatprep.subr.mxu0 0.0
    %5842 = vmatpush1.msra.mxu0 0.0
    %5843 = vmatprep.subr.mxu0 0.0
    %5844 = vmatpush1.msra.mxu0 0.0
    %5845 = vmatprep.subr.mxu0 0.0
    %5846 = vmatpush1.msra.mxu0 0.0
    %5847 = vmatprep.subr.mxu0 0.0
    %5848 = vmatpush1.msra.mxu0 0.0
    %5849 = vmatprep.subr.mxu0 0.0
    %5850 = vmatpush1.msra.mxu0 0.0
    %5851 = vmatprep.subr.mxu0 0.0
    %5852 = vmatpush1.msra.mxu0 0.0
    %5853 = vmatprep.subr.mxu0 0.0
    %5854 = vmatpush1.msra.mxu0 0.0
    %5855 = vmatprep.subr.mxu0 0.0
    %5856 = vmatpush1.msra.mxu0 0.0
    %5857 = vmatprep.subr.mxu0 0.0
    %5858 = vmatpush1.msra.mxu0 0.0
    %5859 = vmatprep.subr.mxu0 0.0
    %5860 = vmatpush1.msra.mxu0 0.0
    %5861 = vmatprep.subr.mxu0 0.0
    %5862 = vmatpush1.msra.mxu0 0.0
    %5863 = vmatprep.subr.mxu0 0.0
    %5864 = vmatpush1.msra.mxu0 0.0
    %5865 = vmatprep.subr.mxu0 0.0
    %5866 = vmatpush1.msra.mxu0 0.0
    %5867 = vmatprep.subr.mxu0 0.0
    %5868 = vmatpush1.msra.mxu0 0.0
    %5869 = vmatprep.subr.mxu0 0.0
    %5870 = vmatpush1.msra.mxu0 0.0
    %5871 = vmatprep.subr.mxu0 0.0
    %5872 = vmatpush1.msra.mxu0 0.0
    %5873 = vmatprep.subr.mxu0 0.0
    %5874 = vmatpush1.msra.mxu0 0.0
    %5875 = vmatprep.subr.mxu0 0.0
    %5876 = vmatpush1.msra.mxu0 0.0
    %5877 = vmatprep.subr.mxu0 0.0
    %5878 = vmatpush1.msra.mxu0 0.0
    %5879 = vmatprep.subr.mxu0 0.0
    %5880 = vmatpush1.msra.mxu0 0.0
    %5881 = vmatprep.subr.mxu0 0.0
    %5882 = vmatpush1.msra.mxu0 0.0
    %5883 = vmatprep.subr.mxu0 0.0
    %5884 = vmatpush1.msra.mxu0 0.0
    %5885 = vmatprep.subr.mxu0 0.0
    %5886 = vmatpush1.msra.mxu0 0.0
    %5887 = vmatprep.subr.mxu0 0.0
    %5888 = vmatpush1.msra.mxu0 0.0
    %5889 = vmatprep.mubr.f32.mxu0 0.0
    %5890 = vmatmul.mubr.f32.gmra.mrb[0].mxu0 %v5823
    %v5891 = vpop.f32.mrb[0].mxu0
    %v5892 = vadd.f32 %v5820, %v5891
    %v5893 = vpop.f32.mrb[0].mxu0
    %5894 = vdwg.mxu0
    %v5895 = vtanh.pop %v5892
    %v5896 = vld [vmem:[%s19] sm:$0xff]
    %v5897 = vld [vmem:[%s19 + $0x8] sm:$0xff]
    %v5898 = vld [vmem:[%s19 + $0x10] sm:$0xff]
    %v5899 = vld [vmem:[%s19 + $0x18] sm:$0xff]
    %v5900 = vld [vmem:[%s20] sm:$0x1]
    %v5902 = vlaneseq
    %v5903 = vshrl.u32 %v5902, 7
    %v5904 = vsub.s32 0, %v5903
    %v5905 = vrot.slane %v5900, %v5904
    %v5908 = vsel %vm99, %v5895, 0
    %5910 = vmatprep.subr.mxu0 0.0
    %5911 = vmatpush1.msra.mxu0 %v5896
    %5912 = vmatprep.subr.mxu0 0.0
    %5913 = vmatpush1.msra.mxu0 %v5897
    %5914 = vmatprep.subr.mxu0 0.0
    %5915 = vmatpush1.msra.mxu0 %v5898
    %5916 = vmatprep.subr.mxu0 0.0
    %5917 = vmatpush1.msra.mxu0 %v5899
    %5918 = vmatprep.subr.mxu0 0.0
    %5919 = vmatpush1.msra.mxu0 0.0
    %5920 = vmatprep.subr.mxu0 0.0
    %5921 = vmatpush1.msra.mxu0 0.0
    %5922 = vmatprep.subr.mxu0 0.0
    %5923 = vmatpush1.msra.mxu0 0.0
    %5924 = vmatprep.subr.mxu0 0.0
    %5925 = vmatpush1.msra.mxu0 0.0
    %5926 = vmatprep.subr.mxu0 0.0
    %5927 = vmatpush1.msra.mxu0 0.0
    %5928 = vmatprep.subr.mxu0 0.0
    %5929 = vmatpush1.msra.mxu0 0.0
    %5930 = vmatprep.subr.mxu0 0.0
    %5931 = vmatpush1.msra.mxu0 0.0
    %5932 = vmatprep.subr.mxu0 0.0
    %5933 = vmatpush1.msra.mxu0 0.0
    %5934 = vmatprep.subr.mxu0 0.0
    %5935 = vmatpush1.msra.mxu0 0.0
    %5936 = vmatprep.subr.mxu0 0.0
    %5937 = vmatpush1.msra.mxu0 0.0
    %5938 = vmatprep.subr.mxu0 0.0
    %5939 = vmatpush1.msra.mxu0 0.0
    %5940 = vmatprep.subr.mxu0 0.0
    %5941 = vmatpush1.msra.mxu0 0.0
    %5942 = vmatprep.subr.mxu0 0.0
    %5943 = vmatpush1.msra.mxu0 0.0
    %5944 = vmatprep.subr.mxu0 0.0
    %5945 = vmatpush1.msra.mxu0 0.0
    %5946 = vmatprep.subr.mxu0 0.0
    %5947 = vmatpush1.msra.mxu0 0.0
    %5948 = vmatprep.subr.mxu0 0.0
    %5949 = vmatpush1.msra.mxu0 0.0
    %5950 = vmatprep.subr.mxu0 0.0
    %5951 = vmatpush1.msra.mxu0 0.0
    %5952 = vmatprep.subr.mxu0 0.0
    %5953 = vmatpush1.msra.mxu0 0.0
    %5954 = vmatprep.subr.mxu0 0.0
    %5955 = vmatpush1.msra.mxu0 0.0
    %5956 = vmatprep.subr.mxu0 0.0
    %5957 = vmatpush1.msra.mxu0 0.0
    %5958 = vmatprep.subr.mxu0 0.0
    %5959 = vmatpush1.msra.mxu0 0.0
    %5960 = vmatprep.subr.mxu0 0.0
    %5961 = vmatpush1.msra.mxu0 0.0
    %5962 = vmatprep.subr.mxu0 0.0
    %5963 = vmatpush1.msra.mxu0 0.0
    %5964 = vmatprep.subr.mxu0 0.0
    %5965 = vmatpush1.msra.mxu0 0.0
    %5966 = vmatprep.subr.mxu0 0.0
    %5967 = vmatpush1.msra.mxu0 0.0
    %5968 = vmatprep.subr.mxu0 0.0
    %5969 = vmatpush1.msra.mxu0 0.0
    %5970 = vmatprep.subr.mxu0 0.0
    %5971 = vmatpush1.msra.mxu0 0.0
    %5972 = vmatprep.subr.mxu0 0.0
    %5973 = vmatpush1.msra.mxu0 0.0
    %5974 = vmatprep.mubr.f32.mxu0 0.0
    %5975 = vmatmul.mubr.f32.gmra.mrb[0].mxu0 %v5908
    %v5976 = vpop.f32.mrb[0].mxu0
    %v5977 = vadd.f32 %v5905, %v5976
    %v5978 = vpop.f32.mrb[0].mxu0
    %5979 = vdwg.mxu0
    %v5980 = vld [vmem:[%s21] sm:$0xff]
    %v5981 = vld [vmem:[%s21 + $0x8] sm:$0xff]
    %v5982 = vld [vmem:[%s22] sm:$0x1]
    %v5984 = vlaneseq
    %v5985 = vshrl.u32 %v5984, 7
    %v5986 = vsub.s32 0, %v5985
    %v5987 = vrot.slane %v5982, %v5986
    %v5990 = vsel %vm2175, 0.0, 0
    %5992 = vmatprep.subr.mxu0 0.0
    %5993 = vmatpush1.msra.mxu0 %v5980
    %5994 = vmatprep.subr.mxu0 0.0
    %5995 = vmatpush1.msra.mxu0 %v5981
    %5996 = vmatprep.subr.mxu0 0.0
    %5997 = vmatpush1.msra.mxu0 0.0
    %5998 = vmatprep.subr.mxu0 0.0
    %5999 = vmatpush1.msra.mxu0 0.0
    %6000 = vmatprep.subr.mxu0 0.0
    %6001 = vmatpush1.msra.mxu0 0.0
    %6002 = vmatprep.subr.mxu0 0.0
    %6003 = vmatpush1.msra.mxu0 0.0
    %6004 = vmatprep.subr.mxu0 0.0
    %6005 = vmatpush1.msra.mxu0 0.0
    %6006 = vmatprep.subr.mxu0 0.0
    %6007 = vmatpush1.msra.mxu0 0.0
    %6008 = vmatprep.subr.mxu0 0.0
    %6009 = vmatpush1.msra.mxu0 0.0
    %6010 = vmatprep.subr.mxu0 0.0
    %6011 = vmatpush1.msra.mxu0 0.0
    %6012 = vmatprep.subr.mxu0 0.0
    %6013 = vmatpush1.msra.mxu0 0.0
    %6014 = vmatprep.subr.mxu0 0.0
    %6015 = vmatpush1.msra.mxu0 0.0
    %6016 = vmatprep.subr.mxu0 0.0
    %6017 = vmatpush1.msra.mxu0 0.0
    %6018 = vmatprep.subr.mxu0 0.0
    %6019 = vmatpush1.msra.mxu0 0.0
    %6020 = vmatprep.subr.mxu0 0.0
    %6021 = vmatpush1.msra.mxu0 0.0
    %6022 = vmatprep.subr.mxu0 0.0
    %6023 = vmatpush1.msra.mxu0 0.0
    %6024 = vmatprep.subr.mxu0 0.0
    %6025 = vmatpush1.msra.mxu0 0.0
    %6026 = vmatprep.subr.mxu0 0.0
    %6027 = vmatpush1.msra.mxu0 0.0
    %6028 = vmatprep.subr.mxu0 0.0
    %6029 = vmatpush1.msra.mxu0 0.0
    %6030 = vmatprep.subr.mxu0 0.0
    %6031 = vmatpush1.msra.mxu0 0.0
    %6032 = vmatprep.subr.mxu0 0.0
    %6033 = vmatpush1.msra.mxu0 0.0
    %6034 = vmatprep.subr.mxu0 0.0
    %6035 = vmatpush1.msra.mxu0 0.0
    %6036 = vmatprep.subr.mxu0 0.0
    %6037 = vmatpush1.msra.mxu0 0.0
    %6038 = vmatprep.subr.mxu0 0.0
    %6039 = vmatpush1.msra.mxu0 0.0
    %6040 = vmatprep.subr.mxu0 0.0
    %6041 = vmatpush1.msra.mxu0 0.0
    %6042 = vmatprep.subr.mxu0 0.0
    %6043 = vmatpush1.msra.mxu0 0.0
    %6044 = vmatprep.subr.mxu0 0.0
    %6045 = vmatpush1.msra.mxu0 0.0
    %6046 = vmatprep.subr.mxu0 0.0
    %6047 = vmatpush1.msra.mxu0 0.0
    %6048 = vmatprep.subr.mxu0 0.0
    %6049 = vmatpush1.msra.mxu0 0.0
    %6050 = vmatprep.subr.mxu0 0.0
    %6051 = vmatpush1.msra.mxu0 0.0
    %6052 = vmatprep.subr.mxu0 0.0
    %6053 = vmatpush1.msra.mxu0 0.0
    %6054 = vmatprep.subr.mxu0 0.0
    %6055 = vmatpush1.msra.mxu0 0.0
    %6056 = vmatprep.mubr.f32.mxu0 0.0
    %6057 = vmatmul.mubr.f32.gmra.mrb[0].mxu0 %v5990
    %v6058 = vpop.f32.mrb[0].mxu0
    %v6059 = vadd.f32 %v5987, %v6058
    %v6060 = vpop.f32.mrb[0].mxu0
    %6061 = vdwg.mxu0
    %v6062 = vadd.f32 %v5977, %v6059
    %v6063 = vxor.u32 %v6062, 2147483648
    %v6064 = vmul.f32 %v6063, 1.442695
    %v6065 = vpow.pop %v6064
    %v6066 = vadd.f32 %v6065, 1.0
    %v6067 = vrcp.pop %v6066
    %v6068 = vmul.f32 1.0, %v6067
    %6070 = vrot.lane.b32.xlu0 %v6059, 96
    %v6071 = vpop.permute.xlu0 %6070
    %v6073 = vmul.f32 %v6068, %v6071
    %6075 = vrot.lane.b32.xlu0 %v6073, 32
    %v6076 = vpop.permute.xlu0 %6075
    %v6078 = vadd.f32 %v5977, %v6076
    %v6079 = vtanh.pop %v6078
    %v6080 = vsub.f32 1.0, %v6068
    %6082 = vrot.lane.b32.xlu0 %v6079, 112
    %v6083 = vpop.permute.xlu0 %6082
    %v6085 = vmul.f32 %v6080, %v6083
    %v6086 = vmul.f32 %v6068, 0.0
    %v6087 = vadd.f32 %v6085, %v6086
    %6089 = vrot.lane.b32.xlu0 %v6087, 112
    %v6090 = vpop.permute.xlu0 %6089
    %v6091 = vsel %vm2175, %v6090, 0
    %6093 = vmatprep.subr.mxu0 0.0
    %6094 = vmatpush1.msra.mxu0 %v5980
    %6095 = vmatprep.subr.mxu0 0.0
    %6096 = vmatpush1.msra.mxu0 %v5981
    %6097 = vmatprep.subr.mxu0 0.0
    %6098 = vmatpush1.msra.mxu0 0.0
    %6099 = vmatprep.subr.mxu0 0.0
    %6100 = vmatpush1.msra.mxu0 0.0
    %6101 = vmatprep.subr.mxu0 0.0
    %6102 = vmatpush1.msra.mxu0 0.0
    %6103 = vmatprep.subr.mxu0 0.0
    %6104 = vmatpush1.msra.mxu0 0.0
    %6105 = vmatprep.subr.mxu0 0.0
    %6106 = vmatpush1.msra.mxu0 0.0
    %6107 = vmatprep.subr.mxu0 0.0
    %6108 = vmatpush1.msra.mxu0 0.0
    %6109 = vmatprep.subr.mxu0 0.0
    %6110 = vmatpush1.msra.mxu0 0.0
    %6111 = vmatprep.subr.mxu0 0.0
    %6112 = vmatpush1.msra.mxu0 0.0
    %6113 = vmatprep.subr.mxu0 0.0
    %6114 = vmatpush1.msra.mxu0 0.0
    %6115 = vmatprep.subr.mxu0 0.0
    %6116 = vmatpush1.msra.mxu0 0.0
    %6117 = vmatprep.subr.mxu0 0.0
    %6118 = vmatpush1.msra.mxu0 0.0
    %6119 = vmatprep.subr.mxu0 0.0
    %6120 = vmatpush1.msra.mxu0 0.0
    %6121 = vmatprep.subr.mxu0 0.0
    %6122 = vmatpush1.msra.mxu0 0.0
    %6123 = vmatprep.subr.mxu0 0.0
    %6124 = vmatpush1.msra.mxu0 0.0
    %6125 = vmatprep.subr.mxu0 0.0
    %6126 = vmatpush1.msra.mxu0 0.0
    %6127 = vmatprep.subr.mxu0 0.0
    %6128 = vmatpush1.msra.mxu0 0.0
    %6129 = vmatprep.subr.mxu0 0.0
    %6130 = vmatpush1.msra.mxu0 0.0
    %6131 = vmatprep.subr.mxu0 0.0
    %6132 = vmatpush1.msra.mxu0 0.0
    %6133 = vmatprep.subr.mxu0 0.0
    %6134 = vmatpush1.msra.mxu0 0.0
    %6135 = vmatprep.subr.mxu0 0.0
    %6136 = vmatpush1.msra.mxu0 0.0
    %6137 = vmatprep.subr.mxu0 0.0
    %6138 = vmatpush1.msra.mxu0 0.0
    %6139 = vmatprep.subr.mxu0 0.0
    %6140 = vmatpush1.msra.mxu0 0.0
    %6141 = vmatprep.subr.mxu0 0.0
    %6142 = vmatpush1.msra.mxu0 0.0
    %6143 = vmatprep.subr.mxu0 0.0
    %6144 = vmatpush1.msra.mxu0 0.0
    %6145 = vmatprep.subr.mxu0 0.0
    %6146 = vmatpush1.msra.mxu0 0.0
    %6147 = vmatprep.subr.mxu0 0.0
    %6148 = vmatpush1.msra.mxu0 0.0
    %6149 = vmatprep.subr.mxu0 0.0
    %6150 = vmatpush1.msra.mxu0 0.0
    %6151 = vmatprep.subr.mxu0 0.0
    %6152 = vmatpush1.msra.mxu0 0.0
    %6153 = vmatprep.subr.mxu0 0.0
    %6154 = vmatpush1.msra.mxu0 0.0
    %6155 = vmatprep.subr.mxu0 0.0
    %6156 = vmatpush1.msra.mxu0 0.0
    %6157 = vmatprep.mubr.f32.mxu0 0.0
    %6158 = vmatmul.mubr.f32.gmra.mrb[0].mxu0 %v6091
    %v6159 = vpop.f32.mrb[0].mxu0
    %v6160 = vadd.f32 %v5987, %v6159
    %v6161 = vpop.f32.mrb[0].mxu0
    %6162 = vdwg.mxu0
    %v6164 = vrot.slane %v6160, 6
    %v6166 = vadd.f32 %v5977, %v6164
    %v6167 = vxor.u32 %v6166, 2147483648
    %v6168 = vmul.f32 %v6167, 1.442695
    %v6169 = vpow.pop %v6168
    %v6170 = vadd.f32 %v6169, 1.0
    %v6171 = vrcp.pop %v6170
    %v6172 = vmul.f32 1.0, %v6171
    %6173 = vrot.lane.b32.xlu0 %v6164, 96
    %v6174 = vpop.permute.xlu0 %6173
    %v6176 = vmul.f32 %v6172, %v6174
    %6178 = vrot.lane.b32.xlu0 %v6176, 32
    %v6179 = vpop.permute.xlu0 %6178
    %v6181 = vadd.f32 %v5977, %v6179
    %v6182 = vtanh.pop %v6181
    %v6183 = vsub.f32 1.0, %v6172
    %6185 = vrot.lane.b32.xlu0 %v6182, 112
    %v6186 = vpop.permute.xlu0 %6185
    %v6188 = vmul.f32 %v6183, %v6186
    %v6189 = vrot.slane %v6087, 6
    %v6191 = vmul.f32 %v6172, %v6189
    %v6192 = vadd.f32 %v6188, %v6191
    %v6194 = vrot.slane %v6192, 2
    %6195 = vrot.lane.b32.xlu0 %v6194, 112
    %v6196 = vpop.permute.xlu0 %6195
    %v6197 = vsel %vm2175, %v6196, 0
    %6199 = vmatprep.subr.mxu0 0.0
    %6200 = vmatpush1.msra.mxu0 %v5980
    %6201 = vmatprep.subr.mxu0 0.0
    %6202 = vmatpush1.msra.mxu0 %v5981
    %6203 = vmatprep.subr.mxu0 0.0
    %6204 = vmatpush1.msra.mxu0 0.0
    %6205 = vmatprep.subr.mxu0 0.0
    %6206 = vmatpush1.msra.mxu0 0.0
    %6207 = vmatprep.subr.mxu0 0.0
    %6208 = vmatpush1.msra.mxu0 0.0
    %6209 = vmatprep.subr.mxu0 0.0
    %6210 = vmatpush1.msra.mxu0 0.0
    %6211 = vmatprep.subr.mxu0 0.0
    %6212 = vmatpush1.msra.mxu0 0.0
    %6213 = vmatprep.subr.mxu0 0.0
    %6214 = vmatpush1.msra.mxu0 0.0
    %6215 = vmatprep.subr.mxu0 0.0
    %6216 = vmatpush1.msra.mxu0 0.0
    %6217 = vmatprep.subr.mxu0 0.0
    %6218 = vmatpush1.msra.mxu0 0.0
    %6219 = vmatprep.subr.mxu0 0.0
    %6220 = vmatpush1.msra.mxu0 0.0
    %6221 = vmatprep.subr.mxu0 0.0
    %6222 = vmatpush1.msra.mxu0 0.0
    %6223 = vmatprep.subr.mxu0 0.0
    %6224 = vmatpush1.msra.mxu0 0.0
    %6225 = vmatprep.subr.mxu0 0.0
    %6226 = vmatpush1.msra.mxu0 0.0
    %6227 = vmatprep.subr.mxu0 0.0
    %6228 = vmatpush1.msra.mxu0 0.0
    %6229 = vmatprep.subr.mxu0 0.0
    %6230 = vmatpush1.msra.mxu0 0.0
    %6231 = vmatprep.subr.mxu0 0.0
    %6232 = vmatpush1.msra.mxu0 0.0
    %6233 = vmatprep.subr.mxu0 0.0
    %6234 = vmatpush1.msra.mxu0 0.0
    %6235 = vmatprep.subr.mxu0 0.0
    %6236 = vmatpush1.msra.mxu0 0.0
    %6237 = vmatprep.subr.mxu0 0.0
    %6238 = vmatpush1.msra.mxu0 0.0
    %6239 = vmatprep.subr.mxu0 0.0
    %6240 = vmatpush1.msra.mxu0 0.0
    %6241 = vmatprep.subr.mxu0 0.0
    %6242 = vmatpush1.msra.mxu0 0.0
    %6243 = vmatprep.subr.mxu0 0.0
    %6244 = vmatpush1.msra.mxu0 0.0
    %6245 = vmatprep.subr.mxu0 0.0
    %6246 = vmatpush1.msra.mxu0 0.0
    %6247 = vmatprep.subr.mxu0 0.0
    %6248 = vmatpush1.msra.mxu0 0.0
    %6249 = vmatprep.subr.mxu0 0.0
    %6250 = vmatpush1.msra.mxu0 0.0
    %6251 = vmatprep.subr.mxu0 0.0
    %6252 = vmatpush1.msra.mxu0 0.0
    %6253 = vmatprep.subr.mxu0 0.0
    %6254 = vmatpush1.msra.mxu0 0.0
    %6255 = vmatprep.subr.mxu0 0.0
    %6256 = vmatpush1.msra.mxu0 0.0
    %6257 = vmatprep.subr.mxu0 0.0
    %6258 = vmatpush1.msra.mxu0 0.0
    %6259 = vmatprep.subr.mxu0 0.0
    %6260 = vmatpush1.msra.mxu0 0.0
    %6261 = vmatprep.subr.mxu0 0.0
    %6262 = vmatpush1.msra.mxu0 0.0
    %6263 = vmatprep.mubr.f32.mxu0 0.0
    %6264 = vmatmul.mubr.f32.gmra.mrb[0].mxu0 %v6197
    %v6265 = vpop.f32.mrb[0].mxu0
    %v6266 = vadd.f32 %v5987, %v6265
    %v6267 = vpop.f32.mrb[0].mxu0
    %6268 = vdwg.mxu0
    %v6270 = vrot.slane %v6266, 4
    %v6272 = vadd.f32 %v5977, %v6270
    %v6273 = vxor.u32 %v6272, 2147483648
    %v6274 = vmul.f32 %v6273, 1.442695
    %v6275 = vpow.pop %v6274
    %v6276 = vadd.f32 %v6275, 1.0
    %v6277 = vrcp.pop %v6276
    %v6278 = vmul.f32 1.0, %v6277
    %6279 = vrot.lane.b32.xlu0 %v6270, 96
    %v6280 = vpop.permute.xlu0 %6279
    %v6282 = vmul.f32 %v6278, %v6280
    %6284 = vrot.lane.b32.xlu0 %v6282, 32
    %v6285 = vpop.permute.xlu0 %6284
    %v6287 = vadd.f32 %v5977, %v6285
    %v6288 = vtanh.pop %v6287
    %v6289 = vsub.f32 1.0, %v6278
    %6291 = vrot.lane.b32.xlu0 %v6288, 112
    %v6292 = vpop.permute.xlu0 %6291
    %v6294 = vmul.f32 %v6289, %v6292
    %v6295 = vrot.slane %v6192, 6
    %v6297 = vmul.f32 %v6278, %v6295
    %v6298 = vadd.f32 %v6294, %v6297
    %v6300 = vrot.slane %v6298, 4
    %6301 = vrot.lane.b32.xlu0 %v6300, 112
    %v6302 = vpop.permute.xlu0 %6301
    %v6303 = vsel %vm2175, %v6302, 0
    %6305 = vmatprep.subr.mxu0 0.0
    %6306 = vmatpush1.msra.mxu0 %v5980
    %6307 = vmatprep.subr.mxu0 0.0
    %6308 = vmatpush1.msra.mxu0 %v5981
    %6309 = vmatprep.subr.mxu0 0.0
    %6310 = vmatpush1.msra.mxu0 0.0
    %6311 = vmatprep.subr.mxu0 0.0
    %6312 = vmatpush1.msra.mxu0 0.0
    %6313 = vmatprep.subr.mxu0 0.0
    %6314 = vmatpush1.msra.mxu0 0.0
    %6315 = vmatprep.subr.mxu0 0.0
    %6316 = vmatpush1.msra.mxu0 0.0
    %6317 = vmatprep.subr.mxu0 0.0
    %6318 = vmatpush1.msra.mxu0 0.0
    %6319 = vmatprep.subr.mxu0 0.0
    %6320 = vmatpush1.msra.mxu0 0.0
    %6321 = vmatprep.subr.mxu0 0.0
    %6322 = vmatpush1.msra.mxu0 0.0
    %6323 = vmatprep.subr.mxu0 0.0
    %6324 = vmatpush1.msra.mxu0 0.0
    %6325 = vmatprep.subr.mxu0 0.0
    %6326 = vmatpush1.msra.mxu0 0.0
    %6327 = vmatprep.subr.mxu0 0.0
    %6328 = vmatpush1.msra.mxu0 0.0
    %6329 = vmatprep.subr.mxu0 0.0
    %6330 = vmatpush1.msra.mxu0 0.0
    %6331 = vmatprep.subr.mxu0 0.0
    %6332 = vmatpush1.msra.mxu0 0.0
    %6333 = vmatprep.subr.mxu0 0.0
    %6334 = vmatpush1.msra.mxu0 0.0
    %6335 = vmatprep.subr.mxu0 0.0
    %6336 = vmatpush1.msra.mxu0 0.0
    %6337 = vmatprep.subr.mxu0 0.0
    %6338 = vmatpush1.msra.mxu0 0.0
    %6339 = vmatprep.subr.mxu0 0.0
    %6340 = vmatpush1.msra.mxu0 0.0
    %6341 = vmatprep.subr.mxu0 0.0
    %6342 = vmatpush1.msra.mxu0 0.0
    %6343 = vmatprep.subr.mxu0 0.0
    %6344 = vmatpush1.msra.mxu0 0.0
    %6345 = vmatprep.subr.mxu0 0.0
    %6346 = vmatpush1.msra.mxu0 0.0
    %6347 = vmatprep.subr.mxu0 0.0
    %6348 = vmatpush1.msra.mxu0 0.0
    %6349 = vmatprep.subr.mxu0 0.0
    %6350 = vmatpush1.msra.mxu0 0.0
    %6351 = vmatprep.subr.mxu0 0.0
    %6352 = vmatpush1.msra.mxu0 0.0
    %6353 = vmatprep.subr.mxu0 0.0
    %6354 = vmatpush1.msra.mxu0 0.0
    %6355 = vmatprep.subr.mxu0 0.0
    %6356 = vmatpush1.msra.mxu0 0.0
    %6357 = vmatprep.subr.mxu0 0.0
    %6358 = vmatpush1.msra.mxu0 0.0
    %6359 = vmatprep.subr.mxu0 0.0
    %6360 = vmatpush1.msra.mxu0 0.0
    %6361 = vmatprep.subr.mxu0 0.0
    %6362 = vmatpush1.msra.mxu0 0.0
    %6363 = vmatprep.subr.mxu0 0.0
    %6364 = vmatpush1.msra.mxu0 0.0
    %6365 = vmatprep.subr.mxu0 0.0
    %6366 = vmatpush1.msra.mxu0 0.0
    %6367 = vmatprep.subr.mxu0 0.0
    %6368 = vmatpush1.msra.mxu0 0.0
    %6369 = vmatprep.mubr.f32.mxu0 0.0
    %6370 = vmatmul.mubr.f32.gmra.mrb[0].mxu0 %v6303
    %v6371 = vpop.f32.mrb[0].mxu0
    %v6372 = vadd.f32 %v5987, %v6371
    %v6373 = vpop.f32.mrb[0].mxu0
    %6374 = vdwg.mxu0
    %v6376 = vrot.slane %v6372, 2
    %v6378 = vadd.f32 %v5977, %v6376
    %v6379 = vxor.u32 %v6378, 2147483648
    %v6380 = vmul.f32 %v6379, 1.442695
    %v6381 = vpow.pop %v6380
    %v6382 = vadd.f32 %v6381, 1.0
    %v6383 = vrcp.pop %v6382
    %v6384 = vmul.f32 1.0, %v6383
    %6385 = vrot.lane.b32.xlu0 %v6376, 96
    %v6386 = vpop.permute.xlu0 %6385
    %v6388 = vmul.f32 %v6384, %v6386
    %6390 = vrot.lane.b32.xlu0 %v6388, 32
    %v6391 = vpop.permute.xlu0 %6390
    %v6393 = vadd.f32 %v5977, %v6391
    %v6394 = vtanh.pop %v6393
    %v6395 = vsub.f32 1.0, %v6384
    %6397 = vrot.lane.b32.xlu0 %v6394, 112
    %v6398 = vpop.permute.xlu0 %6397
    %v6400 = vmul.f32 %v6395, %v6398
    %v6401 = vrot.slane %v6298, 6
    %v6403 = vmul.f32 %v6384, %v6401
    %v6404 = vadd.f32 %v6400, %v6403
    %s6405 = scalar_lea.vmem %s21, 16
    %v6406 = vld [vmem:[%s6405] sm:$0xff]
    %v6407 = vld [vmem:[%s6405 + $0x8] sm:$0xff]
    %s6408 = scalar_lea.vmem %s22, 1
    %v6409 = vld [vmem:[%s6408] sm:$0x1]
    %v6411 = vlaneseq
    %v6412 = vshrl.u32 %v6411, 7
    %v6413 = vsub.s32 0, %v6412
    %v6414 = vrot.slane %v6409, %v6413
    %6416 = vmatprep.subr.mxu0 0.0
    %6417 = vmatpush1.msra.mxu0 %v6406
    %6418 = vmatprep.subr.mxu0 0.0
    %6419 = vmatpush1.msra.mxu0 %v6407
    %6420 = vmatprep.subr.mxu0 0.0
    %6421 = vmatpush1.msra.mxu0 0.0
    %6422 = vmatprep.subr.mxu0 0.0
    %6423 = vmatpush1.msra.mxu0 0.0
    %6424 = vmatprep.subr.mxu0 0.0
    %6425 = vmatpush1.msra.mxu0 0.0
    %6426 = vmatprep.subr.mxu0 0.0
    %6427 = vmatpush1.msra.mxu0 0.0
    %6428 = vmatprep.subr.mxu0 0.0
    %6429 = vmatpush1.msra.mxu0 0.0
    %6430 = vmatprep.subr.mxu0 0.0
    %6431 = vmatpush1.msra.mxu0 0.0
    %6432 = vmatprep.subr.mxu0 0.0
    %6433 = vmatpush1.msra.mxu0 0.0
    %6434 = vmatprep.subr.mxu0 0.0
    %6435 = vmatpush1.msra.mxu0 0.0
    %6436 = vmatprep.subr.mxu0 0.0
    %6437 = vmatpush1.msra.mxu0 0.0
    %6438 = vmatprep.subr.mxu0 0.0
    %6439 = vmatpush1.msra.mxu0 0.0
    %6440 = vmatprep.subr.mxu0 0.0
    %6441 = vmatpush1.msra.mxu0 0.0
    %6442 = vmatprep.subr.mxu0 0.0
    %6443 = vmatpush1.msra.mxu0 0.0
    %6444 = vmatprep.subr.mxu0 0.0
    %6445 = vmatpush1.msra.mxu0 0.0
    %6446 = vmatprep.subr.mxu0 0.0
    %6447 = vmatpush1.msra.mxu0 0.0
    %6448 = vmatprep.subr.mxu0 0.0
    %6449 = vmatpush1.msra.mxu0 0.0
    %6450 = vmatprep.subr.mxu0 0.0
    %6451 = vmatpush1.msra.mxu0 0.0
    %6452 = vmatprep.subr.mxu0 0.0
    %6453 = vmatpush1.msra.mxu0 0.0
    %6454 = vmatprep.subr.mxu0 0.0
    %6455 = vmatpush1.msra.mxu0 0.0
    %6456 = vmatprep.subr.mxu0 0.0
    %6457 = vmatpush1.msra.mxu0 0.0
    %6458 = vmatprep.subr.mxu0 0.0
    %6459 = vmatpush1.msra.mxu0 0.0
    %6460 = vmatprep.subr.mxu0 0.0
    %6461 = vmatpush1.msra.mxu0 0.0
    %6462 = vmatprep.subr.mxu0 0.0
    %6463 = vmatpush1.msra.mxu0 0.0
    %6464 = vmatprep.subr.mxu0 0.0
    %6465 = vmatpush1.msra.mxu0 0.0
    %6466 = vmatprep.subr.mxu0 0.0
    %6467 = vmatpush1.msra.mxu0 0.0
    %6468 = vmatprep.subr.mxu0 0.0
    %6469 = vmatpush1.msra.mxu0 0.0
    %6470 = vmatprep.subr.mxu0 0.0
    %6471 = vmatpush1.msra.mxu0 0.0
    %6472 = vmatprep.subr.mxu0 0.0
    %6473 = vmatpush1.msra.mxu0 0.0
    %6474 = vmatprep.subr.mxu0 0.0
    %6475 = vmatpush1.msra.mxu0 0.0
    %6476 = vmatprep.subr.mxu0 0.0
    %6477 = vmatpush1.msra.mxu0 0.0
    %6478 = vmatprep.subr.mxu0 0.0
    %6479 = vmatpush1.msra.mxu0 0.0
    %6480 = vmatprep.mubr.f32.mxu0 0.0
    %6481 = vmatmul.mubr.f32.gmra.mrb[0].mxu0 %v5990
    %v6482 = vpop.f32.mrb[0].mxu0
    %v6483 = vadd.f32 %v6414, %v6482
    %v6484 = vpop.f32.mrb[0].mxu0
    %6485 = vdwg.mxu0
    %v6487 = vrot.slane %v6483, 2
    %6488 = vrot.lane.b32.xlu0 %v6487, 48
    %v6489 = vpop.permute.xlu0 %6488
    %v6491 = vadd.f32 %v5977, %v6489
    %v6492 = vxor.u32 %v6491, 2147483648
    %v6493 = vmul.f32 %v6492, 1.442695
    %v6494 = vpow.pop %v6493
    %v6495 = vadd.f32 %v6494, 1.0
    %v6496 = vrcp.pop %v6495
    %v6497 = vmul.f32 1.0, %v6496
    %6498 = vrot.lane.b32.xlu0 %v6487, 16
    %v6499 = vpop.permute.xlu0 %6498
    %v6501 = vmul.f32 %v6497, %v6499
    %6503 = vrot.lane.b32.xlu0 %v6501, 32
    %v6504 = vpop.permute.xlu0 %6503
    %v6506 = vadd.f32 %v5977, %v6504
    %v6507 = vtanh.pop %v6506
    %v6508 = vsub.f32 1.0, %v6497
    %6510 = vrot.lane.b32.xlu0 %v6507, 112
    %v6511 = vpop.permute.xlu0 %6510
    %v6513 = vmul.f32 %v6508, %v6511
    %v6514 = vmul.f32 %v6497, 0.0
    %v6515 = vadd.f32 %v6513, %v6514
    %v6517 = vrot.slane %v6515, 6
    %6518 = vrot.lane.b32.xlu0 %v6517, 64
    %v6519 = vpop.permute.xlu0 %6518
    %v6520 = vsel %vm2175, %v6519, 0
    %6522 = vmatprep.subr.mxu0 0.0
    %6523 = vmatpush1.msra.mxu0 %v6406
    %6524 = vmatprep.subr.mxu0 0.0
    %6525 = vmatpush1.msra.mxu0 %v6407
    %6526 = vmatprep.subr.mxu0 0.0
    %6527 = vmatpush1.msra.mxu0 0.0
    %6528 = vmatprep.subr.mxu0 0.0
    %6529 = vmatpush1.msra.mxu0 0.0
    %6530 = vmatprep.subr.mxu0 0.0
    %6531 = vmatpush1.msra.mxu0 0.0
    %6532 = vmatprep.subr.mxu0 0.0
    %6533 = vmatpush1.msra.mxu0 0.0
    %6534 = vmatprep.subr.mxu0 0.0
    %6535 = vmatpush1.msra.mxu0 0.0
    %6536 = vmatprep.subr.mxu0 0.0
    %6537 = vmatpush1.msra.mxu0 0.0
    %6538 = vmatprep.subr.mxu0 0.0
    %6539 = vmatpush1.msra.mxu0 0.0
    %6540 = vmatprep.subr.mxu0 0.0
    %6541 = vmatpush1.msra.mxu0 0.0
    %6542 = vmatprep.subr.mxu0 0.0
    %6543 = vmatpush1.msra.mxu0 0.0
    %6544 = vmatprep.subr.mxu0 0.0
    %6545 = vmatpush1.msra.mxu0 0.0
    %6546 = vmatprep.subr.mxu0 0.0
    %6547 = vmatpush1.msra.mxu0 0.0
    %6548 = vmatprep.subr.mxu0 0.0
    %6549 = vmatpush1.msra.mxu0 0.0
    %6550 = vmatprep.subr.mxu0 0.0
    %6551 = vmatpush1.msra.mxu0 0.0
    %6552 = vmatprep.subr.mxu0 0.0
    %6553 = vmatpush1.msra.mxu0 0.0
    %6554 = vmatprep.subr.mxu0 0.0
    %6555 = vmatpush1.msra.mxu0 0.0
    %6556 = vmatprep.subr.mxu0 0.0
    %6557 = vmatpush1.msra.mxu0 0.0
    %6558 = vmatprep.subr.mxu0 0.0
    %6559 = vmatpush1.msra.mxu0 0.0
    %6560 = vmatprep.subr.mxu0 0.0
    %6561 = vmatpush1.msra.mxu0 0.0
    %6562 = vmatprep.subr.mxu0 0.0
    %6563 = vmatpush1.msra.mxu0 0.0
    %6564 = vmatprep.subr.mxu0 0.0
    %6565 = vmatpush1.msra.mxu0 0.0
    %6566 = vmatprep.subr.mxu0 0.0
    %6567 = vmatpush1.msra.mxu0 0.0
    %6568 = vmatprep.subr.mxu0 0.0
    %6569 = vmatpush1.msra.mxu0 0.0
    %6570 = vmatprep.subr.mxu0 0.0
    %6571 = vmatpush1.msra.mxu0 0.0
    %6572 = vmatprep.subr.mxu0 0.0
    %6573 = vmatpush1.msra.mxu0 0.0
    %6574 = vmatprep.subr.mxu0 0.0
    %6575 = vmatpush1.msra.mxu0 0.0
    %6576 = vmatprep.subr.mxu0 0.0
    %6577 = vmatpush1.msra.mxu0 0.0
    %6578 = vmatprep.subr.mxu0 0.0
    %6579 = vmatpush1.msra.mxu0 0.0
    %6580 = vmatprep.subr.mxu0 0.0
    %6581 = vmatpush1.msra.mxu0 0.0
    %6582 = vmatprep.subr.mxu0 0.0
    %6583 = vmatpush1.msra.mxu0 0.0
    %6584 = vmatprep.subr.mxu0 0.0
    %6585 = vmatpush1.msra.mxu0 0.0
    %6586 = vmatprep.mubr.f32.mxu0 0.0
    %6587 = vmatmul.mubr.f32.gmra.mrb[0].mxu0 %v6520
    %v6588 = vpop.f32.mrb[0].mxu0
    %v6589 = vadd.f32 %v6414, %v6588
    %v6590 = vpop.f32.mrb[0].mxu0
    %6591 = vdwg.mxu0
    %v6593 = vrot.slane %v6589, 4
    %6594 = vrot.lane.b32.xlu0 %v6593, 48
    %v6595 = vpop.permute.xlu0 %6594
    %v6597 = vadd.f32 %v5977, %v6595
    %v6598 = vxor.u32 %v6597, 2147483648
    %v6599 = vmul.f32 %v6598, 1.442695
    %v6600 = vpow.pop %v6599
    %v6601 = vadd.f32 %v6600, 1.0
    %v6602 = vrcp.pop %v6601
    %v6603 = vmul.f32 1.0, %v6602
    %6604 = vrot.lane.b32.xlu0 %v6593, 16
    %v6605 = vpop.permute.xlu0 %6604
    %v6607 = vmul.f32 %v6603, %v6605
    %6609 = vrot.lane.b32.xlu0 %v6607, 32
    %v6610 = vpop.permute.xlu0 %6609
    %v6612 = vadd.f32 %v5977, %v6610
    %v6613 = vtanh.pop %v6612
    %v6614 = vsub.f32 1.0, %v6603
    %6616 = vrot.lane.b32.xlu0 %v6613, 112
    %v6617 = vpop.permute.xlu0 %6616
    %v6619 = vmul.f32 %v6614, %v6617
    %v6620 = vrot.slane %v6515, 2
    %v6622 = vmul.f32 %v6603, %v6620
    %v6623 = vadd.f32 %v6619, %v6622
    %v6625 = vrot.slane %v6623, 4
    %6626 = vrot.lane.b32.xlu0 %v6625, 64
    %v6627 = vpop.permute.xlu0 %6626
    %v6628 = vsel %vm2175, %v6627, 0
    %6630 = vmatprep.subr.mxu0 0.0
    %6631 = vmatpush1.msra.mxu0 %v6406
    %6632 = vmatprep.subr.mxu0 0.0
    %6633 = vmatpush1.msra.mxu0 %v6407
    %6634 = vmatprep.subr.mxu0 0.0
    %6635 = vmatpush1.msra.mxu0 0.0
    %6636 = vmatprep.subr.mxu0 0.0
    %6637 = vmatpush1.msra.mxu0 0.0
    %6638 = vmatprep.subr.mxu0 0.0
    %6639 = vmatpush1.msra.mxu0 0.0
    %6640 = vmatprep.subr.mxu0 0.0
    %6641 = vmatpush1.msra.mxu0 0.0
    %6642 = vmatprep.subr.mxu0 0.0
    %6643 = vmatpush1.msra.mxu0 0.0
    %6644 = vmatprep.subr.mxu0 0.0
    %6645 = vmatpush1.msra.mxu0 0.0
    %6646 = vmatprep.subr.mxu0 0.0
    %6647 = vmatpush1.msra.mxu0 0.0
    %6648 = vmatprep.subr.mxu0 0.0
    %6649 = vmatpush1.msra.mxu0 0.0
    %6650 = vmatprep.subr.mxu0 0.0
    %6651 = vmatpush1.msra.mxu0 0.0
    %6652 = vmatprep.subr.mxu0 0.0
    %6653 = vmatpush1.msra.mxu0 0.0
    %6654 = vmatprep.subr.mxu0 0.0
    %6655 = vmatpush1.msra.mxu0 0.0
    %6656 = vmatprep.subr.mxu0 0.0
    %6657 = vmatpush1.msra.mxu0 0.0
    %6658 = vmatprep.subr.mxu0 0.0
    %6659 = vmatpush1.msra.mxu0 0.0
    %6660 = vmatprep.subr.mxu0 0.0
    %6661 = vmatpush1.msra.mxu0 0.0
    %6662 = vmatprep.subr.mxu0 0.0
    %6663 = vmatpush1.msra.mxu0 0.0
    %6664 = vmatprep.subr.mxu0 0.0
    %6665 = vmatpush1.msra.mxu0 0.0
    %6666 = vmatprep.subr.mxu0 0.0
    %6667 = vmatpush1.msra.mxu0 0.0
    %6668 = vmatprep.subr.mxu0 0.0
    %6669 = vmatpush1.msra.mxu0 0.0
    %6670 = vmatprep.subr.mxu0 0.0
    %6671 = vmatpush1.msra.mxu0 0.0
    %6672 = vmatprep.subr.mxu0 0.0
    %6673 = vmatpush1.msra.mxu0 0.0
    %6674 = vmatprep.subr.mxu0 0.0
    %6675 = vmatpush1.msra.mxu0 0.0
    %6676 = vmatprep.subr.mxu0 0.0
    %6677 = vmatpush1.msra.mxu0 0.0
    %6678 = vmatprep.subr.mxu0 0.0
    %6679 = vmatpush1.msra.mxu0 0.0
    %6680 = vmatprep.subr.mxu0 0.0
    %6681 = vmatpush1.msra.mxu0 0.0
    %6682 = vmatprep.subr.mxu0 0.0
    %6683 = vmatpush1.msra.mxu0 0.0
    %6684 = vmatprep.subr.mxu0 0.0
    %6685 = vmatpush1.msra.mxu0 0.0
    %6686 = vmatprep.subr.mxu0 0.0
    %6687 = vmatpush1.msra.mxu0 0.0
    %6688 = vmatprep.subr.mxu0 0.0
    %6689 = vmatpush1.msra.mxu0 0.0
    %6690 = vmatprep.subr.mxu0 0.0
    %6691 = vmatpush1.msra.mxu0 0.0
    %6692 = vmatprep.subr.mxu0 0.0
    %6693 = vmatpush1.msra.mxu0 0.0
    %6694 = vmatprep.mubr.f32.mxu0 0.0
    %6695 = vmatmul.mubr.f32.gmra.mrb[0].mxu0 %v6628
    %v6696 = vpop.f32.mrb[0].mxu0
    %v6697 = vadd.f32 %v6414, %v6696
    %v6698 = vpop.f32.mrb[0].mxu0
    %6699 = vdwg.mxu0
    %v6701 = vrot.slane %v6697, 6
    %6702 = vrot.lane.b32.xlu0 %v6701, 48
    %v6703 = vpop.permute.xlu0 %6702
    %v6705 = vadd.f32 %v5977, %v6703
    %v6706 = vxor.u32 %v6705, 2147483648
    %v6707 = vmul.f32 %v6706, 1.442695
    %v6708 = vpow.pop %v6707
    %v6709 = vadd.f32 %v6708, 1.0
    %v6710 = vrcp.pop %v6709
    %v6711 = vmul.f32 1.0, %v6710
    %6712 = vrot.lane.b32.xlu0 %v6701, 16
    %v6713 = vpop.permute.xlu0 %6712
    %v6715 = vmul.f32 %v6711, %v6713
    %6717 = vrot.lane.b32.xlu0 %v6715, 32
    %v6718 = vpop.permute.xlu0 %6717
    %v6720 = vadd.f32 %v5977, %v6718
    %v6721 = vtanh.pop %v6720
    %v6722 = vsub.f32 1.0, %v6711
    %6724 = vrot.lane.b32.xlu0 %v6721, 112
    %v6725 = vpop.permute.xlu0 %6724
    %v6727 = vmul.f32 %v6722, %v6725
    %v6728 = vrot.slane %v6623, 2
    %v6730 = vmul.f32 %v6711, %v6728
    %v6731 = vadd.f32 %v6727, %v6730
    %v6733 = vrot.slane %v6731, 2
    %6734 = vrot.lane.b32.xlu0 %v6733, 64
    %v6735 = vpop.permute.xlu0 %6734
    %v6736 = vsel %vm2175, %v6735, 0
    %6738 = vmatprep.subr.mxu0 0.0
    %6739 = vmatpush1.msra.mxu0 %v6406
    %6740 = vmatprep.subr.mxu0 0.0
    %6741 = vmatpush1.msra.mxu0 %v6407
    %6742 = vmatprep.subr.mxu0 0.0
    %6743 = vmatpush1.msra.mxu0 0.0
    %6744 = vmatprep.subr.mxu0 0.0
    %6745 = vmatpush1.msra.mxu0 0.0
    %6746 = vmatprep.subr.mxu0 0.0
    %6747 = vmatpush1.msra.mxu0 0.0
    %6748 = vmatprep.subr.mxu0 0.0
    %6749 = vmatpush1.msra.mxu0 0.0
    %6750 = vmatprep.subr.mxu0 0.0
    %6751 = vmatpush1.msra.mxu0 0.0
    %6752 = vmatprep.subr.mxu0 0.0
    %6753 = vmatpush1.msra.mxu0 0.0
    %6754 = vmatprep.subr.mxu0 0.0
    %6755 = vmatpush1.msra.mxu0 0.0
    %6756 = vmatprep.subr.mxu0 0.0
    %6757 = vmatpush1.msra.mxu0 0.0
    %6758 = vmatprep.subr.mxu0 0.0
    %6759 = vmatpush1.msra.mxu0 0.0
    %6760 = vmatprep.subr.mxu0 0.0
    %6761 = vmatpush1.msra.mxu0 0.0
    %6762 = vmatprep.subr.mxu0 0.0
    %6763 = vmatpush1.msra.mxu0 0.0
    %6764 = vmatprep.subr.mxu0 0.0
    %6765 = vmatpush1.msra.mxu0 0.0
    %6766 = vmatprep.subr.mxu0 0.0
    %6767 = vmatpush1.msra.mxu0 0.0
    %6768 = vmatprep.subr.mxu0 0.0
    %6769 = vmatpush1.msra.mxu0 0.0
    %6770 = vmatprep.subr.mxu0 0.0
    %6771 = vmatpush1.msra.mxu0 0.0
    %6772 = vmatprep.subr.mxu0 0.0
    %6773 = vmatpush1.msra.mxu0 0.0
    %6774 = vmatprep.subr.mxu0 0.0
    %6775 = vmatpush1.msra.mxu0 0.0
    %6776 = vmatprep.subr.mxu0 0.0
    %6777 = vmatpush1.msra.mxu0 0.0
    %6778 = vmatprep.subr.mxu0 0.0
    %6779 = vmatpush1.msra.mxu0 0.0
    %6780 = vmatprep.subr.mxu0 0.0
    %6781 = vmatpush1.msra.mxu0 0.0
    %6782 = vmatprep.subr.mxu0 0.0
    %6783 = vmatpush1.msra.mxu0 0.0
    %6784 = vmatprep.subr.mxu0 0.0
    %6785 = vmatpush1.msra.mxu0 0.0
    %6786 = vmatprep.subr.mxu0 0.0
    %6787 = vmatpush1.msra.mxu0 0.0
    %6788 = vmatprep.subr.mxu0 0.0
    %6789 = vmatpush1.msra.mxu0 0.0
    %6790 = vmatprep.subr.mxu0 0.0
    %6791 = vmatpush1.msra.mxu0 0.0
    %6792 = vmatprep.subr.mxu0 0.0
    %6793 = vmatpush1.msra.mxu0 0.0
    %6794 = vmatprep.subr.mxu0 0.0
    %6795 = vmatpush1.msra.mxu0 0.0
    %6796 = vmatprep.subr.mxu0 0.0
    %6797 = vmatpush1.msra.mxu0 0.0
    %6798 = vmatprep.subr.mxu0 0.0
    %6799 = vmatpush1.msra.mxu0 0.0
    %6800 = vmatprep.subr.mxu0 0.0
    %6801 = vmatpush1.msra.mxu0 0.0
    %6802 = vmatprep.mubr.f32.mxu0 0.0
    %6803 = vmatmul.mubr.f32.gmra.mrb[0].mxu0 %v6736
    %v6804 = vpop.f32.mrb[0].mxu0
    %v6805 = vadd.f32 %v6414, %v6804
    %v6806 = vpop.f32.mrb[0].mxu0
    %6807 = vdwg.mxu0
    %6809 = vrot.lane.b32.xlu0 %v6805, 48
    %v6810 = vpop.permute.xlu0 %6809
    %v6812 = vadd.f32 %v5977, %v6810
    %v6813 = vxor.u32 %v6812, 2147483648
    %v6814 = vmul.f32 %v6813, 1.442695
    %v6815 = vpow.pop %v6814
    %v6816 = vadd.f32 %v6815, 1.0
    %v6817 = vrcp.pop %v6816
    %v6818 = vmul.f32 1.0, %v6817
    %6819 = vrot.lane.b32.xlu0 %v6805, 16
    %v6820 = vpop.permute.xlu0 %6819
    %v6822 = vmul.f32 %v6818, %v6820
    %6824 = vrot.lane.b32.xlu0 %v6822, 32
    %v6825 = vpop.permute.xlu0 %6824
    %v6827 = vadd.f32 %v5977, %v6825
    %v6828 = vtanh.pop %v6827
    %v6829 = vsub.f32 1.0, %v6818
    %6831 = vrot.lane.b32.xlu0 %v6828, 112
    %v6832 = vpop.permute.xlu0 %6831
    %v6834 = vmul.f32 %v6829, %v6832
    %v6836 = vmul.f32 %v6818, %v6733
    %v6837 = vadd.f32 %v6834, %v6836
    %v6838 = vld [vmem:[%s23] sm:$0xff]
    %v6839 = vld [vmem:[%s23 + $0x8] sm:$0xff]
    %v6840 = vld [vmem:[%s23 + $0x10] sm:$0xff]
    %v6841 = vld [vmem:[%s23 + $0x18] sm:$0xff]
    %6843 = vrot.lane.b32.xlu0 %v6837, 64
    %v6844 = vpop.permute.xlu0 %6843
    %v6845 = vsel %vm2175, %v6844, 0
    %6847 = vmatprep.subr.mxu0 0.0
    %6848 = vmatpush1.msra.mxu0 %v6840
    %6849 = vmatprep.subr.mxu0 0.0
    %6850 = vmatpush1.msra.mxu0 %v6841
    %6851 = vmatprep.subr.mxu0 0.0
    %6852 = vmatpush1.msra.mxu0 0.0
    %6853 = vmatprep.subr.mxu0 0.0
    %6854 = vmatpush1.msra.mxu0 0.0
    %6855 = vmatprep.subr.mxu0 0.0
    %6856 = vmatpush1.msra.mxu0 0.0
    %6857 = vmatprep.subr.mxu0 0.0
    %6858 = vmatpush1.msra.mxu0 0.0
    %6859 = vmatprep.subr.mxu0 0.0
    %6860 = vmatpush1.msra.mxu0 0.0
    %6861 = vmatprep.subr.mxu0 0.0
    %6862 = vmatpush1.msra.mxu0 0.0
    %6863 = vmatprep.subr.mxu0 0.0
    %6864 = vmatpush1.msra.mxu0 0.0
    %6865 = vmatprep.subr.mxu0 0.0
    %6866 = vmatpush1.msra.mxu0 0.0
    %6867 = vmatprep.subr.mxu0 0.0
    %6868 = vmatpush1.msra.mxu0 0.0
    %6869 = vmatprep.subr.mxu0 0.0
    %6870 = vmatpush1.msra.mxu0 0.0
    %6871 = vmatprep.subr.mxu0 0.0
    %6872 = vmatpush1.msra.mxu0 0.0
    %6873 = vmatprep.subr.mxu0 0.0
    %6874 = vmatpush1.msra.mxu0 0.0
    %6875 = vmatprep.subr.mxu0 0.0
    %6876 = vmatpush1.msra.mxu0 0.0
    %6877 = vmatprep.subr.mxu0 0.0
    %6878 = vmatpush1.msra.mxu0 0.0
    %6879 = vmatprep.subr.mxu0 0.0
    %6880 = vmatpush1.msra.mxu0 0.0
    %6881 = vmatprep.subr.mxu0 0.0
    %6882 = vmatpush1.msra.mxu0 0.0
    %6883 = vmatprep.subr.mxu0 0.0
    %6884 = vmatpush1.msra.mxu0 0.0
    %6885 = vmatprep.subr.mxu0 0.0
    %6886 = vmatpush1.msra.mxu0 0.0
    %6887 = vmatprep.subr.mxu0 0.0
    %6888 = vmatpush1.msra.mxu0 0.0
    %6889 = vmatprep.subr.mxu0 0.0
    %6890 = vmatpush1.msra.mxu0 0.0
    %6891 = vmatprep.subr.mxu0 0.0
    %6892 = vmatpush1.msra.mxu0 0.0
    %6893 = vmatprep.subr.mxu0 0.0
    %6894 = vmatpush1.msra.mxu0 0.0
    %6895 = vmatprep.subr.mxu0 0.0
    %6896 = vmatpush1.msra.mxu0 0.0
    %6897 = vmatprep.subr.mxu0 0.0
    %6898 = vmatpush1.msra.mxu0 0.0
    %6899 = vmatprep.subr.mxu0 0.0
    %6900 = vmatpush1.msra.mxu0 0.0
    %6901 = vmatprep.subr.mxu0 0.0
    %6902 = vmatpush1.msra.mxu0 0.0
    %6903 = vmatprep.subr.mxu0 0.0
    %6904 = vmatpush1.msra.mxu0 0.0
    %6905 = vmatprep.subr.mxu0 0.0
    %6906 = vmatpush1.msra.mxu0 0.0
    %6907 = vmatprep.subr.mxu0 0.0
    %6908 = vmatpush1.msra.mxu0 0.0
    %6909 = vmatprep.subr.mxu0 0.0
    %6910 = vmatpush1.msra.mxu0 0.0
    %6911 = vmatprep.mubr.f32.mxu0 0.0
    %6912 = vmatmul.mubr.f32.gmra.mrb[0].mxu0 %v6845
    %v6913 = vpop.f32.mrb[0].mxu0
    %v6914 = vadd.f32 0.0, %v6913
    %v6915 = vpop.f32.mrb[0].mxu0
    %6916 = vdwg.mxu0
    %v6918 = vrot.slane %v6404, 6
    %6919 = vrot.lane.b32.xlu0 %v6918, 112
    %v6920 = vpop.permute.xlu0 %6919
    %v6921 = vsel %vm2175, %v6920, 0
    %6923 = vmatprep.subr.mxu0 0.0
    %6924 = vmatpush1.msra.mxu0 %v6838
    %6925 = vmatprep.subr.mxu0 0.0
    %6926 = vmatpush1.msra.mxu0 %v6839
    %6927 = vmatprep.subr.mxu0 0.0
    %6928 = vmatpush1.msra.mxu0 0.0
    %6929 = vmatprep.subr.mxu0 0.0
    %6930 = vmatpush1.msra.mxu0 0.0
    %6931 = vmatprep.subr.mxu0 0.0
    %6932 = vmatpush1.msra.mxu0 0.0
    %6933 = vmatprep.subr.mxu0 0.0
    %6934 = vmatpush1.msra.mxu0 0.0
    %6935 = vmatprep.subr.mxu0 0.0
    %6936 = vmatpush1.msra.mxu0 0.0
    %6937 = vmatprep.subr.mxu0 0.0
    %6938 = vmatpush1.msra.mxu0 0.0
    %6939 = vmatprep.subr.mxu0 0.0
    %6940 = vmatpush1.msra.mxu0 0.0
    %6941 = vmatprep.subr.mxu0 0.0
    %6942 = vmatpush1.msra.mxu0 0.0
    %6943 = vmatprep.subr.mxu0 0.0
    %6944 = vmatpush1.msra.mxu0 0.0
    %6945 = vmatprep.subr.mxu0 0.0
    %6946 = vmatpush1.msra.mxu0 0.0
    %6947 = vmatprep.subr.mxu0 0.0
    %6948 = vmatpush1.msra.mxu0 0.0
    %6949 = vmatprep.subr.mxu0 0.0
    %6950 = vmatpush1.msra.mxu0 0.0
    %6951 = vmatprep.subr.mxu0 0.0
    %6952 = vmatpush1.msra.mxu0 0.0
    %6953 = vmatprep.subr.mxu0 0.0
    %6954 = vmatpush1.msra.mxu0 0.0
    %6955 = vmatprep.subr.mxu0 0.0
    %6956 = vmatpush1.msra.mxu0 0.0
    %6957 = vmatprep.subr.mxu0 0.0
    %6958 = vmatpush1.msra.mxu0 0.0
    %6959 = vmatprep.subr.mxu0 0.0
    %6960 = vmatpush1.msra.mxu0 0.0
    %6961 = vmatprep.subr.mxu0 0.0
    %6962 = vmatpush1.msra.mxu0 0.0
    %6963 = vmatprep.subr.mxu0 0.0
    %6964 = vmatpush1.msra.mxu0 0.0
    %6965 = vmatprep.subr.mxu0 0.0
    %6966 = vmatpush1.msra.mxu0 0.0
    %6967 = vmatprep.subr.mxu0 0.0
    %6968 = vmatpush1.msra.mxu0 0.0
    %6969 = vmatprep.subr.mxu0 0.0
    %6970 = vmatpush1.msra.mxu0 0.0
    %6971 = vmatprep.subr.mxu0 0.0
    %6972 = vmatpush1.msra.mxu0 0.0
    %6973 = vmatprep.subr.mxu0 0.0
    %6974 = vmatpush1.msra.mxu0 0.0
    %6975 = vmatprep.subr.mxu0 0.0
    %6976 = vmatpush1.msra.mxu0 0.0
    %6977 = vmatprep.subr.mxu0 0.0
    %6978 = vmatpush1.msra.mxu0 0.0
    %6979 = vmatprep.subr.mxu0 0.0
    %6980 = vmatpush1.msra.mxu0 0.0
    %6981 = vmatprep.subr.mxu0 0.0
    %6982 = vmatpush1.msra.mxu0 0.0
    %6983 = vmatprep.subr.mxu0 0.0
    %6984 = vmatpush1.msra.mxu0 0.0
    %6985 = vmatprep.subr.mxu0 0.0
    %6986 = vmatpush1.msra.mxu0 0.0
    %6987 = vmatprep.mubr.f32.mxu0 0.0
    %6988 = vmatmul.mubr.f32.gmra.mrb[0].mxu0 %v6921
    %v6989 = vpop.f32.mrb[0].mxu0
    %v6990 = vadd.f32 %v6914, %v6989
    %v6991 = vpop.f32.mrb[0].mxu0
    %6992 = vdwg.mxu0
    %v6993 = vld [vmem:[%s24] sm:$0x1]
    %v6995 = vlaneseq
    %v6996 = vshrl.u32 %v6995, 7
    %v6997 = vsub.s32 0, %v6996
    %v6998 = vrot.slane %v6993, %v6997
    %v7000 = vadd.f32 %v6990, %v6998
    %vm7001 = vcmask 17408
    %7002 = vst.msk [vmem:[#allocation2] sm:$0x3] %vm7001, %v7000
    // Predicated region
    $region102: #{model_forward.1} parent=1 // pred_check
      _
    $region103: #{model_forward.1} parent=1 // pred_check_branch
      %7004 = sbr.rel (0) target = $region105
    $region104: #{model_forward.1} parent=1 // pred_region
      %s7006 = ssub.s32 32, 32
      %7007 = vsyncadd [#allocation3], %s7006
      %s7009 = sshll.u32 [#allocation2], 4
      %s7010 = int_to_ptr.vmem [resolvable:$true] %s7009
      %7012 = dma.vmem_to_hbm [thread:$0]  %s7010, 32, %s25, [#allocation3]
    $region105: #{model_forward.1} parent=1 // pred_fallthru
      _
    // Predicated region
    $region106: #{model_forward.1} parent=1 // pred_check
      _
    $region107: #{model_forward.1} parent=1 // pred_check_branch
      %7014 = sbr.rel (0) target = $region109
    $region108: #{model_forward.1} parent=1 // pred_region
      %7015 = dma.done [#allocation3], 32
    $region109: #{model_forward.1} parent=1 // pred_fallthru
      _
    %7016 = vsyncpa [#allocation3], 1

</llo_original>
